<compile_context>
chip_gen: v6e
topology: v6e:2x2x1
jax: 0.10.0
libtpu: 0.0.40
codegen_flags: <defaults>
</compile_context>

<pallas_src>
import math
import functools

import jax
import jax.numpy as jnp
import numpy as np
from jax.experimental import pallas as pl
from jax.experimental.pallas import tpu as pltpu


def _round_up(x, m):
    return ((x + m - 1) // m) * m


# ----------------------------------------------------------------------------
# Fused encoder kernel: one grid step == B_TILE batch elements, ALL layers
# ----------------------------------------------------------------------------
def _encoder_kernel(scale, h, dk, d, d_pad, L, b_tile, S, cdt,
                    r_ref, mcol_ref, mrow_ref,
                    wqkv_ref, bqkv_ref, g1_ref, be1_ref,
                    w1t_ref, b1_ref, w2t_ref, b2_ref, g2_ref, be2_ref,
                    o_ref, attn_ref):
    f32 = jnp.float32
    inv_d = 1.0 / d
    # Channel mask over the real d channels; padded lanes contribute 0 to LN.
    cmask = (jax.lax.broadcasted_iota(jnp.int32, (1, d_pad), 1) < d).astype(f32)

    # Padded lanes of the attention scratch stay 0 for every layer.
    attn_ref[...] = jnp.zeros_like(attn_ref)

    mcol = mcol_ref[...]                       # (b_tile*S, 1) per-token mask
    R = r_ref[...]                             # (b_tile*S, d_pad), padded lanes == 0

    def layer_norm(y, g, b):
        # padded lanes of y are exactly 0, so a plain sum / d is the true mean
        mu = jnp.sum(y, axis=-1, keepdims=True) * inv_d
        yc = y - mu
        var = jnp.sum(jnp.square(yc) * cmask, axis=-1, keepdims=True) * inv_d
        # padded gamma/beta are 0 -> padded output lanes stay 0
        return yc * jax.lax.rsqrt(var + 1e-5) * g + b

    for li in range(L):                        # static unroll: weights VMEM-resident
        # ---- fused Q/K/V projection over all b_tile*S rows: one fat MXU push
        qkv = jnp.dot(R.astype(cdt), wqkv_ref[li].astype(cdt),
                      preferred_element_type=f32) + bqkv_ref[li]   # (b_tile*S, 3*d_pad)

        # ---- per-batch-element (S, S) attention blocks ----------------------
        for bb in range(b_tile):
            rs = bb * S
            m_col = mcol[rs:rs + S, :]                         # (S, 1)
            m_row = mrow_ref[bb]                               # (1, S)
            nbias = (1.0 - m_col * m_row) * 100000.0           # (S, S), in-kernel
            for hh in range(h):                                # static head unroll
                lo = hh * dk
                qh = qkv[rs:rs + S, lo:lo + dk]
                kh = qkv[rs:rs + S, d_pad + lo:d_pad + lo + dk]
                vh = qkv[rs:rs + S, 2 * d_pad + lo:2 * d_pad + lo + dk]
                s = jax.lax.dot_general(qh.astype(cdt), kh.astype(cdt),
                                        (((1,), (1,)), ((), ())),
                                        preferred_element_type=f32)   # (S, S)
                # same order as the PyTorch code: mask penalty, then 1/sqrt(dk)
                s = (s - nbias) * scale
                s = s - jnp.max(s, axis=-1, keepdims=True)
                e = jnp.exp(s)
                denom = jnp.sum(e, axis=-1, keepdims=True)
                inv = pl.reciprocal(denom, approx=True)        # EUP
                inv = inv * (2.0 - denom * inv)                # Newton -> ~f32
                p = e * inv
                # direct write into a static lane slice: no concat, no extra vregs
                attn_ref[rs:rs + S, lo:lo + dk] = jnp.dot(
                    p.astype(cdt), vh.astype(cdt), preferred_element_type=f32)

        attn = attn_ref[...] * mcol                            # masked rows -> 0

        # ---- residual + LayerNorm 1 (eps = 1e-5, PyTorch default) ----------
        r1 = layer_norm(attn + R, g1_ref[li], be1_ref[li])

        # ---- FFN -------------------------------------------------------------
        hmid = jnp.dot(r1.astype(cdt), w1t_ref[li].astype(cdt),
                       preferred_element_type=f32) + b1_ref[li]
        hmid = jnp.maximum(hmid, 0.0)
        f = jnp.dot(hmid.astype(cdt), w2t_ref[li].astype(cdt),
                    preferred_element_type=f32) + b2_ref[li]
        f = f * mcol

        # ---- residual + LayerNorm 2 -----------------------------------------
        R = layer_norm(f + r1, g2_ref[li], be2_ref[li])

    o_ref[...] = R                                             # lane-dense store


# ----------------------------------------------------------------------------
# Weight packing (once, off the hot path)
# ----------------------------------------------------------------------------
def pack_params(params, h, *, lane=128, matmul_dtype=jnp.float32):
    """Pre-pack per-layer weights for the fused kernel.

    - WQ/WK/WV (dk, dk) become block-diagonal (d, d) matrices (transposed)
      concatenated into a single (d_pad, 3*d_pad) QKV matrix.
    - Channel dims are zero-padded to a multiple of `lane` (128) so every
      kernel load/store is lane-dense; padded biases/gammas/betas are 0.
    - Big matrices are cast to `matmul_dtype` (bf16 on v6e/v7x for native MXU
      throughput + half the weight DMA); biases/LN params stay f32.
    - Everything stacked along a leading num_layers axis; the kernel keeps
      all layers resident in VMEM.
    """
    d = params["layers"][0]["g1"].shape[0]
    hidden = params["layers"][0]["b1"].shape[0]
    d_pad = _round_up(d, lane)
    hidden_pad = _round_up(hidden, lane)
    eye = jnp.eye(h, dtype=jnp.float32)

    def pad2(x, r, c):
        return jnp.pad(x, ((0, r - x.shape[0]), (0, c - x.shape[1])))

    def pad_row(x, c):
        return jnp.pad(x, (0, c - x.shape[0]))[None, :]

    def one(lp):
        wq = pad2(jnp.kron(eye, lp["wq"].T), d_pad, d_pad)
        wk = pad2(jnp.kron(eye, lp["wk"].T), d_pad, d_pad)
        wv = pad2(jnp.kron(eye, lp["wv"].T), d_pad, d_pad)
        wqkv = jnp.concatenate([wq, wk, wv], axis=1).astype(matmul_dtype)
        bqkv = jnp.concatenate([pad_row(jnp.tile(lp["bq"], h), d_pad),
                                pad_row(jnp.tile(lp["bk"], h), d_pad),
                                pad_row(jnp.tile(lp["bv"], h), d_pad)], axis=1)
        return dict(
            wqkv=wqkv, bqkv=bqkv,
            g1=pad_row(lp["g1"], d_pad), be1=pad_row(lp["be1"], d_pad),
            w1t=pad2(lp["w1"].T, d_pad, hidden_pad).astype(matmul_dtype),
            b1=pad_row(lp["b1"], hidden_pad),
            w2t=pad2(lp["w2"].T, hidden_pad, d_pad).astype(matmul_dtype),
            b2=pad_row(lp["b2"], d_pad),
            g2=pad_row(lp["g2"], d_pad), be2=pad_row(lp["be2"], d_pad))

    per = [one(lp) for lp in params["layers"]]
    packed = {k: jnp.stack([p[k] for p in per], axis=0) for k in per[0]}
    packed["row_emb"] = params["row_emb"]
    packed["col_emb"] = params["col_emb"]
    return packed


# ----------------------------------------------------------------------------
# Encoder forward: one pallas_call, grid = (bs // b_tile,)
# ----------------------------------------------------------------------------
@functools.partial(jax.jit, static_argnames=("h", "b_tile"))
def encoder_forward(R, R_mas, packed, *, h, b_tile=1):
    bs, ne, _, d = R.shape
    assert d % h == 0 and bs % b_tile == 0
    dk = d // h
    S = ne * ne
    L = packed["wqkv"].shape[0]
    d_pad = packed["wqkv"].shape[1]
    hidden_pad = packed["w1t"].shape[-1]
    n_steps = bs // b_tile
    M = b_tile * S
    cdt = packed["wqkv"].dtype

    # Tiny XLA-side prep (fused by jit): pos-emb add folded in, channels padded
    # to the lane-dense width, per-token mask in both column / row layouts.
    mas = R_mas.reshape(bs, S).astype(jnp.float32)
    mcol = mas.reshape(bs * S, 1)
    mrow = mas.reshape(bs, 1, S)
    pos = (packed["row_emb"][:ne, None] + packed["col_emb"][None, :ne]).reshape(1, S, 1)
    r_in = R.reshape(bs, S, d) + pos
    r_in = jnp.pad(r_in, ((0, 0), (0, 0), (0, d_pad - d))).reshape(bs * S, d_pad)

    kern = functools.partial(_encoder_kernel, 1.0 / math.sqrt(dk),
                             h, dk, d, d_pad, L, b_tile, S, cdt)
    const3 = lambda b: (0, 0, 0)   # all-layer weights: fetched once, VMEM-resident

    out = pl.pallas_call(
        kern,
        out_shape=jax.ShapeDtypeStruct((bs * S, d_pad), jnp.float32),
        grid=(n_steps,),                        # >= 2 parallel steps: both v7x TCs busy
        in_specs=[
            pl.BlockSpec((M, d_pad), lambda b: (b, 0)),          # R input (padded, +pos)
            pl.BlockSpec((M, 1), lambda b: (b, 0)),              # per-token mask (column)
            pl.BlockSpec((b_tile, 1, S), lambda b: (b, 0, 0)),   # per-token mask (row)
            pl.BlockSpec((L, d_pad, 3 * d_pad), const3),         # packed WQKV^T (all layers)
            pl.BlockSpec((L, 1, 3 * d_pad), const3),             # packed bQKV
            pl.BlockSpec((L, 1, d_pad), const3),                 # LN1 gamma
            pl.BlockSpec((L, 1, d_pad), const3),                 # LN1 beta
            pl.BlockSpec((L, d_pad, hidden_pad), const3),        # FFN W1^T
            pl.BlockSpec((L, 1, hidden_pad), const3),            # FFN b1
            pl.BlockSpec((L, hidden_pad, d_pad), const3),        # FFN W2^T
            pl.BlockSpec((L, 1, d_pad), const3),                 # FFN b2
            pl.BlockSpec((L, 1, d_pad), const3),                 # LN2 gamma
            pl.BlockSpec((L, 1, d_pad), const3),                 # LN2 beta
        ],
        out_specs=pl.BlockSpec((M, d_pad), lambda b: (b, 0)),    # lane-dense output
        scratch_shapes=[pltpu.VMEM((M, d_pad), jnp.float32)],    # attention scratch
        compiler_params=pltpu.CompilerParams(
            dimension_semantics=("parallel",)),
    )(r_in, mcol, mrow,
      packed["wqkv"], packed["bqkv"], packed["g1"], packed["be1"],
      packed["w1t"], packed["b1"], packed["w2t"], packed["b2"],
      packed["g2"], packed["be2"])

    return out.reshape(bs, ne, ne, d_pad)[..., :d]


# ----------------------------------------------------------------------------
# Pure-JAX reference (mirrors the PyTorch code) for verification
# ----------------------------------------------------------------------------
def encoder_reference(R, R_mas, params, h):
    bs, ne, _, d = R.shape
    dk = d // h
    S = ne * ne
    mas = R_mas.reshape(bs, ne, ne, 1).astype(jnp.float32)
    R = (R + params["row_emb"][:ne].reshape(1, ne, 1, 1)
           + params["col_emb"][:ne].reshape(1, 1, ne, 1))

    def layer_norm(x, g, b):
        mu = jnp.mean(x, axis=-1, keepdims=True)
        var = jnp.mean(jnp.square(x - mu), axis=-1, keepdims=True)
        return (x - mu) * jax.lax.rsqrt(var + 1e-5) * g + b

    for lp in params["layers"]:
        x = R.reshape(bs, ne, ne, h, dk).transpose(0, 3, 1, 2, 4)
        Q = x @ lp["wq"].T + lp["bq"]
        K = x @ lp["wk"].T + lp["bk"]
        V = x @ lp["wv"].T + lp["bv"]
        Q = Q.reshape(bs, h, S, dk)
        K = K.reshape(bs, h, S, dk)
        V = V.reshape(bs, h, S, dk)
        m = mas.reshape(bs, 1, S, 1)
        att_mas = m * m.reshape(bs, 1, 1, S)
        alpha = Q @ jnp.swapaxes(K, -1, -2)
        alpha = alpha - (1.0 - att_mas) * 100000.0
        alpha = jax.nn.softmax(alpha / dk ** 0.5, axis=-1)
        RZ = (alpha @ V) * m
        RZ = RZ.reshape(bs, h, ne, ne, dk).transpose(0, 2, 3, 1, 4)
        RZ = RZ.reshape(bs, ne, ne, d)
        R1 = layer_norm(RZ + R, lp["g1"], lp["be1"])
        F = jnp.maximum(R1 @ lp["w1"].T + lp["b1"], 0.0) @ lp["w2"].T + lp["b2"]
        F = F * mas
        R = layer_norm(F + R1, lp["g2"], lp["be2"])
    return R


# ----------------------------------------------------------------------------
# Deterministic parameter init
# ----------------------------------------------------------------------------
def init_params(key, h, d_model, hidden, num_layers, ne):
    dk = d_model // h
    keys = jax.random.split(key, num_layers + 1)
    rk, ck = jax.random.split(keys[0])
    params = {
        "row_emb": 1e-4 * jax.random.normal(rk, (ne,), jnp.float32),
        "col_emb": 1e-4 * jax.random.normal(ck, (ne,), jnp.float32),
        "layers": [],
    }
    for li in range(num_layers):
        ks = jax.random.split(keys[li + 1], 14)
        lp = {
            "wq": 0.2 * jax.random.normal(ks[0], (dk, dk), jnp.float32),
            "bq": 0.05 * jax.random.normal(ks[1], (dk,), jnp.float32),
            "wk": 0.2 * jax.random.normal(ks[2], (dk, dk), jnp.float32),
            "bk": 0.05 * jax.random.normal(ks[3], (dk,), jnp.float32),
            "wv": 0.2 * jax.random.normal(ks[4], (dk, dk), jnp.float32),
            "bv": 0.05 * jax.random.normal(ks[5], (dk,), jnp.float32),
            "g1": 1.0 + 0.05 * jax.random.normal(ks[6], (d_model,), jnp.float32),
            "be1": 0.05 * jax.random.normal(ks[7], (d_model,), jnp.float32),
            "w1": 0.1 * jax.random.normal(ks[8], (hidden, d_model), jnp.float32),
            "b1": 0.05 * jax.random.normal(ks[9], (hidden,), jnp.float32),
            "w2": 0.1 * jax.random.normal(ks[10], (d_model, hidden), jnp.float32),
            "b2": 0.05 * jax.random.normal(ks[11], (d_model,), jnp.float32),
            "g2": 1.0 + 0.05 * jax.random.normal(ks[12], (d_model,), jnp.float32),
            "be2": 0.05 * jax.random.normal(ks[13], (d_model,), jnp.float32),
        }
        params["layers"].append(lp)
    return params


# ----------------------------------------------------------------------------
if __name__ == "__main__":
    bs, ne = 4, 4
    h, d_model, hidden, num_layers = 4, 32, 64, 2

    key = jax.random.PRNGKey(0)
    k_r, k_m, k_p = jax.random.split(key, 3)

    R = jax.random.normal(k_r, (bs, ne, ne, d_model), jnp.float32)
    R_mas = jax.random.bernoulli(k_m, 0.8, (bs, ne, ne)).astype(jnp.float32)

    params = init_params(k_p, h, d_model, hidden, num_layers, ne)
    ref = jax.block_until_ready(encoder_reference(R, R_mas, params, h))

    # --- f32 MXU operands: parity with the f32 reference ---------------------
    packed_f32 = pack_params(params, h, matmul_dtype=jnp.float32)
    out = jax.block_until_ready(encoder_forward(R, R_mas, packed_f32, h=h, b_tile=2))
    assert out.shape == (bs, ne, ne, d_model)
    np.testing.assert_allclose(np.asarray(out), np.asarray(ref), rtol=1e-3, atol=1e-3)

    # --- bf16 MXU operands (native MXU path on v6e/v7x), f32 accum/softmax/LN
    packed_bf16 = pack_params(params, h, matmul_dtype=jnp.bfloat16)
    out_bf16 = jax.block_until_ready(encoder_forward(R, R_mas, packed_bf16, h=h, b_tile=2))
    np.testing.assert_allclose(np.asarray(out_bf16), np.asarray(ref), rtol=5e-2, atol=5e-2)

    print("KERNEL_OK")
</pallas_src>

<mosaic_0001>
module attributes {stable_mosaic.version = 11 : i64} {
  func.func @_encoder_kernel(%arg0: i32, %arg1: memref<32x128xf32, #tpu.memory_space<vmem>>, %arg2: memref<32x1xf32, #tpu.memory_space<vmem>>, %arg3: memref<2x1x16xf32, #tpu.memory_space<vmem>>, %arg4: memref<2x128x384xf32, #tpu.memory_space<vmem>>, %arg5: memref<2x1x384xf32, #tpu.memory_space<vmem>>, %arg6: memref<2x1x128xf32, #tpu.memory_space<vmem>>, %arg7: memref<2x1x128xf32, #tpu.memory_space<vmem>>, %arg8: memref<2x128x128xf32, #tpu.memory_space<vmem>>, %arg9: memref<2x1x128xf32, #tpu.memory_space<vmem>>, %arg10: memref<2x128x128xf32, #tpu.memory_space<vmem>>, %arg11: memref<2x1x128xf32, #tpu.memory_space<vmem>>, %arg12: memref<2x1x128xf32, #tpu.memory_space<vmem>>, %arg13: memref<2x1x128xf32, #tpu.memory_space<vmem>>, %arg14: memref<32x128xf32, #tpu.memory_space<vmem>>, %arg15: memref<32x128xf32, #tpu.memory_space<vmem>>) attributes {dimension_semantics = [#tpu.dimension_semantics<parallel>], iteration_bounds = array<i64: 2>, scalar_prefetch = 0 : i64, scratch_operands = 1 : i64, tpu.core_type = #tpu.core_type<tc>, window_params = [{transform_indices = @transform_0, window_bounds = array<i64: 32, 128>}, {transform_indices = @transform_1, window_bounds = array<i64: 32, 1>}, {transform_indices = @transform_2, window_bounds = array<i64: 2, 1, 16>}, {pipeline_mode = #tpu.pipeline_mode<synchronous>, transform_indices = @transform_3, window_bounds = array<i64: 2, 128, 384>}, {pipeline_mode = #tpu.pipeline_mode<synchronous>, transform_indices = @transform_4, window_bounds = array<i64: 2, 1, 384>}, {pipeline_mode = #tpu.pipeline_mode<synchronous>, transform_indices = @transform_5, window_bounds = array<i64: 2, 1, 128>}, {pipeline_mode = #tpu.pipeline_mode<synchronous>, transform_indices = @transform_6, window_bounds = array<i64: 2, 1, 128>}, {pipeline_mode = #tpu.pipeline_mode<synchronous>, transform_indices = @transform_7, window_bounds = array<i64: 2, 128, 128>}, {pipeline_mode = #tpu.pipeline_mode<synchronous>, transform_indices = @transform_8, window_bounds = array<i64: 2, 1, 128>}, {pipeline_mode = #tpu.pipeline_mode<synchronous>, transform_indices = @transform_9, window_bounds = array<i64: 2, 128, 128>}, {pipeline_mode = #tpu.pipeline_mode<synchronous>, transform_indices = @transform_10, window_bounds = array<i64: 2, 1, 128>}, {pipeline_mode = #tpu.pipeline_mode<synchronous>, transform_indices = @transform_11, window_bounds = array<i64: 2, 1, 128>}, {pipeline_mode = #tpu.pipeline_mode<synchronous>, transform_indices = @transform_12, window_bounds = array<i64: 2, 1, 128>}, {transform_indices = @transform_13, window_bounds = array<i64: 32, 128>}]} {
    %0 = tpu.iota {dimensions = array<i32: 1>} : vector<1x128xi32>
    %c32_i32 = arith.constant 32 : i32
    %1 = vector.broadcast %c32_i32 : i32 to vector<1x128xi32>
    %2 = arith.cmpi slt, %0, %1 : vector<1x128xi32>
    %3 = arith.extui %2 : vector<1x128xi1> to vector<1x128xi32>
    %4 = arith.sitofp %3 : vector<1x128xi32> to vector<1x128xf32>
    %cst = arith.constant 0.000000e+00 : f32
    %5 = vector.broadcast %cst : f32 to vector<32x128xf32>
    %c0 = arith.constant 0 : index
    %c0_0 = arith.constant 0 : index
    %6 = vector.load %arg15[%c0, %c0_0] : memref<32x128xf32, #tpu.memory_space<vmem>>, vector<32x128xf32>
    tpu.vector_store %arg15[%c0, %c0_0], %5 {strides = array<i32>} : memref<32x128xf32, #tpu.memory_space<vmem>>, vector<32x128xf32>,
    %c0_1 = arith.constant 0 : index
    %c0_2 = arith.constant 0 : index
    %7 = vector.load %arg2[%c0_1, %c0_2] : memref<32x1xf32, #tpu.memory_space<vmem>>, vector<32x1xf32>
    %c0_3 = arith.constant 0 : index
    %c0_4 = arith.constant 0 : index
    %8 = vector.load %arg1[%c0_3, %c0_4] : memref<32x128xf32, #tpu.memory_space<vmem>>, vector<32x128xf32>
    %c0_5 = arith.constant 0 : index
    %c0_6 = arith.constant 0 : index
    %c0_7 = arith.constant 0 : index
    %9 = vector.load %arg4[%c0_5, %c0_6, %c0_7] : memref<2x128x384xf32, #tpu.memory_space<vmem>>, vector<1x128x384xf32>
    %10 = vector.shape_cast %9 : vector<1x128x384xf32> to vector<128x384xf32>
    %cst_8 = arith.constant dense<0.000000e+00> : vector<32x384xf32>
    %11 = tpu.matmul %8, %10, %cst_8 {dimension_numbers = #tpu.dot_dimension_numbers<[1], [0], [0], [1], [0, 0, 1, 1], [], []>} : vector<32x128xf32>, vector<128x384xf32>, vector<32x384xf32> -> vector<32x384xf32>
    %c0_9 = arith.constant 0 : index
    %c0_10 = arith.constant 0 : index
    %c0_11 = arith.constant 0 : index
    %12 = vector.load %arg5[%c0_9, %c0_10, %c0_11] : memref<2x1x384xf32, #tpu.memory_space<vmem>>, vector<1x1x384xf32>
    %13 = vector.shape_cast %12 : vector<1x1x384xf32> to vector<1x384xf32>
    %14 = vector.broadcast %13 : vector<1x384xf32> to vector<32x384xf32>
    %15 = arith.addf %11, %14 : vector<32x384xf32>
    %16 = vector.extract_strided_slice %7 {offsets = [0, 0], sizes = [16, 1], strides = [1, 1]} : vector<32x1xf32> to vector<16x1xf32>
    %c0_12 = arith.constant 0 : index
    %c0_13 = arith.constant 0 : index
    %c0_14 = arith.constant 0 : index
    %17 = vector.load %arg3[%c0_12, %c0_13, %c0_14] : memref<2x1x16xf32, #tpu.memory_space<vmem>>, vector<1x1x16xf32>
    %18 = vector.shape_cast %17 : vector<1x1x16xf32> to vector<1x16xf32>
    %19 = vector.broadcast %16 : vector<16x1xf32> to vector<16x16xf32>
    %20 = vector.broadcast %18 : vector<1x16xf32> to vector<16x16xf32>
    %21 = arith.mulf %19, %20 : vector<16x16xf32>
    %cst_15 = arith.constant 1.000000e+00 : f32
    %22 = vector.broadcast %cst_15 : f32 to vector<16x16xf32>
    %23 = arith.subf %22, %21 : vector<16x16xf32>
    %cst_16 = arith.constant 1.000000e+05 : f32
    %24 = vector.broadcast %cst_16 : f32 to vector<16x16xf32>
    %25 = arith.mulf %23, %24 : vector<16x16xf32>
    %26 = vector.extract_strided_slice %15 {offsets = [0, 0], sizes = [16, 8], strides = [1, 1]} : vector<32x384xf32> to vector<16x8xf32>
    %27 = vector.extract_strided_slice %15 {offsets = [0, 128], sizes = [16, 8], strides = [1, 1]} : vector<32x384xf32> to vector<16x8xf32>
    %28 = vector.extract_strided_slice %15 {offsets = [0, 256], sizes = [16, 8], strides = [1, 1]} : vector<32x384xf32> to vector<16x8xf32>
    %cst_17 = arith.constant dense<0.000000e+00> : vector<16x16xf32>
    %29 = tpu.matmul %26, %27, %cst_17 {dimension_numbers = #tpu.dot_dimension_numbers<[1], [1], [0], [0], [0, 0, 1, 0], [], []>} : vector<16x8xf32>, vector<16x8xf32>, vector<16x16xf32> -> vector<16x16xf32>
    %30 = arith.subf %29, %25 : vector<16x16xf32>
    %cst_18 = arith.constant 0.353553385 : f32
    %31 = vector.broadcast %cst_18 : f32 to vector<16x16xf32>
    %32 = arith.mulf %30, %31 : vector<16x16xf32>
    %cst_19 = arith.constant dense<0xFF800000> : vector<16xf32>
    %33 = vector.multi_reduction <maximumf>, %32, %cst_19 [1] : vector<16x16xf32> to vector<16xf32>
    %34 = vector.shape_cast %33 : vector<16xf32> to vector<16x1xf32>
    %35 = vector.broadcast %34 : vector<16x1xf32> to vector<16x16xf32>
    %36 = arith.subf %32, %35 : vector<16x16xf32>
    %37 = math.exp %36 : vector<16x16xf32>
    %cst_20 = arith.constant dense<0.000000e+00> : vector<16xf32>
    %38 = vector.multi_reduction <add>, %37, %cst_20 [1] : vector<16x16xf32> to vector<16xf32>
    %39 = vector.shape_cast %38 : vector<16xf32> to vector<16x1xf32>
    %40 = tpu.reciprocal %39 {approx = true} : vector<16x1xf32> -> vector<16x1xf32>
    %41 = arith.mulf %39, %40 : vector<16x1xf32>
    %cst_21 = arith.constant 2.000000e+00 : f32
    %42 = vector.broadcast %cst_21 : f32 to vector<16x1xf32>
    %43 = arith.subf %42, %41 : vector<16x1xf32>
    %44 = arith.mulf %40, %43 : vector<16x1xf32>
    %45 = vector.broadcast %44 : vector<16x1xf32> to vector<16x16xf32>
    %46 = arith.mulf %37, %45 : vector<16x16xf32>
    %cst_22 = arith.constant dense<0.000000e+00> : vector<16x8xf32>
    %47 = tpu.matmul %46, %28, %cst_22 {dimension_numbers = #tpu.dot_dimension_numbers<[1], [0], [0], [1], [0, 0, 1, 1], [], []>} : vector<16x16xf32>, vector<16x8xf32>, vector<16x8xf32> -> vector<16x8xf32>
    %c0_23 = arith.constant 0 : index
    %c0_24 = arith.constant 0 : index
    %48 = vector.load %arg15[%c0_23, %c0_24] : memref<32x128xf32, #tpu.memory_space<vmem>>, vector<16x8xf32>
    tpu.vector_store %arg15[%c0_23, %c0_24], %47 {strides = array<i32>} : memref<32x128xf32, #tpu.memory_space<vmem>>, vector<16x8xf32>,
    %49 = vector.extract_strided_slice %15 {offsets = [0, 8], sizes = [16, 8], strides = [1, 1]} : vector<32x384xf32> to vector<16x8xf32>
    %50 = vector.extract_strided_slice %15 {offsets = [0, 136], sizes = [16, 8], strides = [1, 1]} : vector<32x384xf32> to vector<16x8xf32>
    %51 = vector.extract_strided_slice %15 {offsets = [0, 264], sizes = [16, 8], strides = [1, 1]} : vector<32x384xf32> to vector<16x8xf32>
    %cst_25 = arith.constant dense<0.000000e+00> : vector<16x16xf32>
    %52 = tpu.matmul %49, %50, %cst_25 {dimension_numbers = #tpu.dot_dimension_numbers<[1], [1], [0], [0], [0, 0, 1, 0], [], []>} : vector<16x8xf32>, vector<16x8xf32>, vector<16x16xf32> -> vector<16x16xf32>
    %53 = arith.subf %52, %25 : vector<16x16xf32>
    %cst_26 = arith.constant 0.353553385 : f32
    %54 = vector.broadcast %cst_26 : f32 to vector<16x16xf32>
    %55 = arith.mulf %53, %54 : vector<16x16xf32>
    %cst_27 = arith.constant dense<0xFF800000> : vector<16xf32>
    %56 = vector.multi_reduction <maximumf>, %55, %cst_27 [1] : vector<16x16xf32> to vector<16xf32>
    %57 = vector.shape_cast %56 : vector<16xf32> to vector<16x1xf32>
    %58 = vector.broadcast %57 : vector<16x1xf32> to vector<16x16xf32>
    %59 = arith.subf %55, %58 : vector<16x16xf32>
    %60 = math.exp %59 : vector<16x16xf32>
    %cst_28 = arith.constant dense<0.000000e+00> : vector<16xf32>
    %61 = vector.multi_reduction <add>, %60, %cst_28 [1] : vector<16x16xf32> to vector<16xf32>
    %62 = vector.shape_cast %61 : vector<16xf32> to vector<16x1xf32>
    %63 = tpu.reciprocal %62 {approx = true} : vector<16x1xf32> -> vector<16x1xf32>
    %64 = arith.mulf %62, %63 : vector<16x1xf32>
    %cst_29 = arith.constant 2.000000e+00 : f32
    %65 = vector.broadcast %cst_29 : f32 to vector<16x1xf32>
    %66 = arith.subf %65, %64 : vector<16x1xf32>
    %67 = arith.mulf %63, %66 : vector<16x1xf32>
    %68 = vector.broadcast %67 : vector<16x1xf32> to vector<16x16xf32>
    %69 = arith.mulf %60, %68 : vector<16x16xf32>
    %cst_30 = arith.constant dense<0.000000e+00> : vector<16x8xf32>
    %70 = tpu.matmul %69, %51, %cst_30 {dimension_numbers = #tpu.dot_dimension_numbers<[1], [0], [0], [1], [0, 0, 1, 1], [], []>} : vector<16x16xf32>, vector<16x8xf32>, vector<16x8xf32> -> vector<16x8xf32>
    %c0_31 = arith.constant 0 : index
    %c8 = arith.constant 8 : index
    %71 = vector.load %arg15[%c0_31, %c8] : memref<32x128xf32, #tpu.memory_space<vmem>>, vector<16x8xf32>
    tpu.vector_store %arg15[%c0_31, %c8], %70 {strides = array<i32>} : memref<32x128xf32, #tpu.memory_space<vmem>>, vector<16x8xf32>,
    %72 = vector.extract_strided_slice %15 {offsets = [0, 16], sizes = [16, 8], strides = [1, 1]} : vector<32x384xf32> to vector<16x8xf32>
    %73 = vector.extract_strided_slice %15 {offsets = [0, 144], sizes = [16, 8], strides = [1, 1]} : vector<32x384xf32> to vector<16x8xf32>
    %74 = vector.extract_strided_slice %15 {offsets = [0, 272], sizes = [16, 8], strides = [1, 1]} : vector<32x384xf32> to vector<16x8xf32>
    %cst_32 = arith.constant dense<0.000000e+00> : vector<16x16xf32>
    %75 = tpu.matmul %72, %73, %cst_32 {dimension_numbers = #tpu.dot_dimension_numbers<[1], [1], [0], [0], [0, 0, 1, 0], [], []>} : vector<16x8xf32>, vector<16x8xf32>, vector<16x16xf32> -> vector<16x16xf32>
    %76 = arith.subf %75, %25 : vector<16x16xf32>
    %cst_33 = arith.constant 0.353553385 : f32
    %77 = vector.broadcast %cst_33 : f32 to vector<16x16xf32>
    %78 = arith.mulf %76, %77 : vector<16x16xf32>
    %cst_34 = arith.constant dense<0xFF800000> : vector<16xf32>
    %79 = vector.multi_reduction <maximumf>, %78, %cst_34 [1] : vector<16x16xf32> to vector<16xf32>
    %80 = vector.shape_cast %79 : vector<16xf32> to vector<16x1xf32>
    %81 = vector.broadcast %80 : vector<16x1xf32> to vector<16x16xf32>
    %82 = arith.subf %78, %81 : vector<16x16xf32>
    %83 = math.exp %82 : vector<16x16xf32>
    %cst_35 = arith.constant dense<0.000000e+00> : vector<16xf32>
    %84 = vector.multi_reduction <add>, %83, %cst_35 [1] : vector<16x16xf32> to vector<16xf32>
    %85 = vector.shape_cast %84 : vector<16xf32> to vector<16x1xf32>
    %86 = tpu.reciprocal %85 {approx = true} : vector<16x1xf32> -> vector<16x1xf32>
    %87 = arith.mulf %85, %86 : vector<16x1xf32>
    %cst_36 = arith.constant 2.000000e+00 : f32
    %88 = vector.broadcast %cst_36 : f32 to vector<16x1xf32>
    %89 = arith.subf %88, %87 : vector<16x1xf32>
    %90 = arith.mulf %86, %89 : vector<16x1xf32>
    %91 = vector.broadcast %90 : vector<16x1xf32> to vector<16x16xf32>
    %92 = arith.mulf %83, %91 : vector<16x16xf32>
    %cst_37 = arith.constant dense<0.000000e+00> : vector<16x8xf32>
    %93 = tpu.matmul %92, %74, %cst_37 {dimension_numbers = #tpu.dot_dimension_numbers<[1], [0], [0], [1], [0, 0, 1, 1], [], []>} : vector<16x16xf32>, vector<16x8xf32>, vector<16x8xf32> -> vector<16x8xf32>
    %c0_38 = arith.constant 0 : index
    %c16 = arith.constant 16 : index
    %94 = vector.load %arg15[%c0_38, %c16] : memref<32x128xf32, #tpu.memory_space<vmem>>, vector<16x8xf32>
    tpu.vector_store %arg15[%c0_38, %c16], %93 {strides = array<i32>} : memref<32x128xf32, #tpu.memory_space<vmem>>, vector<16x8xf32>,
    %95 = vector.extract_strided_slice %15 {offsets = [0, 24], sizes = [16, 8], strides = [1, 1]} : vector<32x384xf32> to vector<16x8xf32>
    %96 = vector.extract_strided_slice %15 {offsets = [0, 152], sizes = [16, 8], strides = [1, 1]} : vector<32x384xf32> to vector<16x8xf32>
    %97 = vector.extract_strided_slice %15 {offsets = [0, 280], sizes = [16, 8], strides = [1, 1]} : vector<32x384xf32> to vector<16x8xf32>
    %cst_39 = arith.constant dense<0.000000e+00> : vector<16x16xf32>
    %98 = tpu.matmul %95, %96, %cst_39 {dimension_numbers = #tpu.dot_dimension_numbers<[1], [1], [0], [0], [0, 0, 1, 0], [], []>} : vector<16x8xf32>, vector<16x8xf32>, vector<16x16xf32> -> vector<16x16xf32>
    %99 = arith.subf %98, %25 : vector<16x16xf32>
    %cst_40 = arith.constant 0.353553385 : f32
    %100 = vector.broadcast %cst_40 : f32 to vector<16x16xf32>
    %101 = arith.mulf %99, %100 : vector<16x16xf32>
    %cst_41 = arith.constant dense<0xFF800000> : vector<16xf32>
    %102 = vector.multi_reduction <maximumf>, %101, %cst_41 [1] : vector<16x16xf32> to vector<16xf32>
    %103 = vector.shape_cast %102 : vector<16xf32> to vector<16x1xf32>
    %104 = vector.broadcast %103 : vector<16x1xf32> to vector<16x16xf32>
    %105 = arith.subf %101, %104 : vector<16x16xf32>
    %106 = math.exp %105 : vector<16x16xf32>
    %cst_42 = arith.constant dense<0.000000e+00> : vector<16xf32>
    %107 = vector.multi_reduction <add>, %106, %cst_42 [1] : vector<16x16xf32> to vector<16xf32>
    %108 = vector.shape_cast %107 : vector<16xf32> to vector<16x1xf32>
    %109 = tpu.reciprocal %108 {approx = true} : vector<16x1xf32> -> vector<16x1xf32>
    %110 = arith.mulf %108, %109 : vector<16x1xf32>
    %cst_43 = arith.constant 2.000000e+00 : f32
    %111 = vector.broadcast %cst_43 : f32 to vector<16x1xf32>
    %112 = arith.subf %111, %110 : vector<16x1xf32>
    %113 = arith.mulf %109, %112 : vector<16x1xf32>
    %114 = vector.broadcast %113 : vector<16x1xf32> to vector<16x16xf32>
    %115 = arith.mulf %106, %114 : vector<16x16xf32>
    %cst_44 = arith.constant dense<0.000000e+00> : vector<16x8xf32>
    %116 = tpu.matmul %115, %97, %cst_44 {dimension_numbers = #tpu.dot_dimension_numbers<[1], [0], [0], [1], [0, 0, 1, 1], [], []>} : vector<16x16xf32>, vector<16x8xf32>, vector<16x8xf32> -> vector<16x8xf32>
    %c0_45 = arith.constant 0 : index
    %c24 = arith.constant 24 : index
    %117 = vector.load %arg15[%c0_45, %c24] : memref<32x128xf32, #tpu.memory_space<vmem>>, vector<16x8xf32>
    tpu.vector_store %arg15[%c0_45, %c24], %116 {strides = array<i32>} : memref<32x128xf32, #tpu.memory_space<vmem>>, vector<16x8xf32>,
    %118 = vector.extract_strided_slice %7 {offsets = [16, 0], sizes = [16, 1], strides = [1, 1]} : vector<32x1xf32> to vector<16x1xf32>
    %c1 = arith.constant 1 : index
    %c0_46 = arith.constant 0 : index
    %c0_47 = arith.constant 0 : index
    %119 = vector.load %arg3[%c1, %c0_46, %c0_47] : memref<2x1x16xf32, #tpu.memory_space<vmem>>, vector<1x1x16xf32>
    %120 = vector.shape_cast %119 : vector<1x1x16xf32> to vector<1x16xf32>
    %121 = vector.broadcast %118 : vector<16x1xf32> to vector<16x16xf32>
    %122 = vector.broadcast %120 : vector<1x16xf32> to vector<16x16xf32>
    %123 = arith.mulf %121, %122 : vector<16x16xf32>
    %cst_48 = arith.constant 1.000000e+00 : f32
    %124 = vector.broadcast %cst_48 : f32 to vector<16x16xf32>
    %125 = arith.subf %124, %123 : vector<16x16xf32>
    %cst_49 = arith.constant 1.000000e+05 : f32
    %126 = vector.broadcast %cst_49 : f32 to vector<16x16xf32>
    %127 = arith.mulf %125, %126 : vector<16x16xf32>
    %128 = vector.extract_strided_slice %15 {offsets = [16, 0], sizes = [16, 8], strides = [1, 1]} : vector<32x384xf32> to vector<16x8xf32>
    %129 = vector.extract_strided_slice %15 {offsets = [16, 128], sizes = [16, 8], strides = [1, 1]} : vector<32x384xf32> to vector<16x8xf32>
    %130 = vector.extract_strided_slice %15 {offsets = [16, 256], sizes = [16, 8], strides = [1, 1]} : vector<32x384xf32> to vector<16x8xf32>
    %cst_50 = arith.constant dense<0.000000e+00> : vector<16x16xf32>
    %131 = tpu.matmul %128, %129, %cst_50 {dimension_numbers = #tpu.dot_dimension_numbers<[1], [1], [0], [0], [0, 0, 1, 0], [], []>} : vector<16x8xf32>, vector<16x8xf32>, vector<16x16xf32> -> vector<16x16xf32>
    %132 = arith.subf %131, %127 : vector<16x16xf32>
    %cst_51 = arith.constant 0.353553385 : f32
    %133 = vector.broadcast %cst_51 : f32 to vector<16x16xf32>
    %134 = arith.mulf %132, %133 : vector<16x16xf32>
    %cst_52 = arith.constant dense<0xFF800000> : vector<16xf32>
    %135 = vector.multi_reduction <maximumf>, %134, %cst_52 [1] : vector<16x16xf32> to vector<16xf32>
    %136 = vector.shape_cast %135 : vector<16xf32> to vector<16x1xf32>
    %137 = vector.broadcast %136 : vector<16x1xf32> to vector<16x16xf32>
    %138 = arith.subf %134, %137 : vector<16x16xf32>
    %139 = math.exp %138 : vector<16x16xf32>
    %cst_53 = arith.constant dense<0.000000e+00> : vector<16xf32>
    %140 = vector.multi_reduction <add>, %139, %cst_53 [1] : vector<16x16xf32> to vector<16xf32>
    %141 = vector.shape_cast %140 : vector<16xf32> to vector<16x1xf32>
    %142 = tpu.reciprocal %141 {approx = true} : vector<16x1xf32> -> vector<16x1xf32>
    %143 = arith.mulf %141, %142 : vector<16x1xf32>
    %cst_54 = arith.constant 2.000000e+00 : f32
    %144 = vector.broadcast %cst_54 : f32 to vector<16x1xf32>
    %145 = arith.subf %144, %143 : vector<16x1xf32>
    %146 = arith.mulf %142, %145 : vector<16x1xf32>
    %147 = vector.broadcast %146 : vector<16x1xf32> to vector<16x16xf32>
    %148 = arith.mulf %139, %147 : vector<16x16xf32>
    %cst_55 = arith.constant dense<0.000000e+00> : vector<16x8xf32>
    %149 = tpu.matmul %148, %130, %cst_55 {dimension_numbers = #tpu.dot_dimension_numbers<[1], [0], [0], [1], [0, 0, 1, 1], [], []>} : vector<16x16xf32>, vector<16x8xf32>, vector<16x8xf32> -> vector<16x8xf32>
    %c16_56 = arith.constant 16 : index
    %c0_57 = arith.constant 0 : index
    %150 = vector.load %arg15[%c16_56, %c0_57] : memref<32x128xf32, #tpu.memory_space<vmem>>, vector<16x8xf32>
    tpu.vector_store %arg15[%c16_56, %c0_57], %149 {strides = array<i32>} : memref<32x128xf32, #tpu.memory_space<vmem>>, vector<16x8xf32>,
    %151 = vector.extract_strided_slice %15 {offsets = [16, 8], sizes = [16, 8], strides = [1, 1]} : vector<32x384xf32> to vector<16x8xf32>
    %152 = vector.extract_strided_slice %15 {offsets = [16, 136], sizes = [16, 8], strides = [1, 1]} : vector<32x384xf32> to vector<16x8xf32>
    %153 = vector.extract_strided_slice %15 {offsets = [16, 264], sizes = [16, 8], strides = [1, 1]} : vector<32x384xf32> to vector<16x8xf32>
    %cst_58 = arith.constant dense<0.000000e+00> : vector<16x16xf32>
    %154 = tpu.matmul %151, %152, %cst_58 {dimension_numbers = #tpu.dot_dimension_numbers<[1], [1], [0], [0], [0, 0, 1, 0], [], []>} : vector<16x8xf32>, vector<16x8xf32>, vector<16x16xf32> -> vector<16x16xf32>
    %155 = arith.subf %154, %127 : vector<16x16xf32>
    %cst_59 = arith.constant 0.353553385 : f32
    %156 = vector.broadcast %cst_59 : f32 to vector<16x16xf32>
    %157 = arith.mulf %155, %156 : vector<16x16xf32>
    %cst_60 = arith.constant dense<0xFF800000> : vector<16xf32>
    %158 = vector.multi_reduction <maximumf>, %157, %cst_60 [1] : vector<16x16xf32> to vector<16xf32>
    %159 = vector.shape_cast %158 : vector<16xf32> to vector<16x1xf32>
    %160 = vector.broadcast %159 : vector<16x1xf32> to vector<16x16xf32>
    %161 = arith.subf %157, %160 : vector<16x16xf32>
    %162 = math.exp %161 : vector<16x16xf32>
    %cst_61 = arith.constant dense<0.000000e+00> : vector<16xf32>
    %163 = vector.multi_reduction <add>, %162, %cst_61 [1] : vector<16x16xf32> to vector<16xf32>
    %164 = vector.shape_cast %163 : vector<16xf32> to vector<16x1xf32>
    %165 = tpu.reciprocal %164 {approx = true} : vector<16x1xf32> -> vector<16x1xf32>
    %166 = arith.mulf %164, %165 : vector<16x1xf32>
    %cst_62 = arith.constant 2.000000e+00 : f32
    %167 = vector.broadcast %cst_62 : f32 to vector<16x1xf32>
    %168 = arith.subf %167, %166 : vector<16x1xf32>
    %169 = arith.mulf %165, %168 : vector<16x1xf32>
    %170 = vector.broadcast %169 : vector<16x1xf32> to vector<16x16xf32>
    %171 = arith.mulf %162, %170 : vector<16x16xf32>
    %cst_63 = arith.constant dense<0.000000e+00> : vector<16x8xf32>
    %172 = tpu.matmul %171, %153, %cst_63 {dimension_numbers = #tpu.dot_dimension_numbers<[1], [0], [0], [1], [0, 0, 1, 1], [], []>} : vector<16x16xf32>, vector<16x8xf32>, vector<16x8xf32> -> vector<16x8xf32>
    %c16_64 = arith.constant 16 : index
    %c8_65 = arith.constant 8 : index
    %173 = vector.load %arg15[%c16_64, %c8_65] : memref<32x128xf32, #tpu.memory_space<vmem>>, vector<16x8xf32>
    tpu.vector_store %arg15[%c16_64, %c8_65], %172 {strides = array<i32>} : memref<32x128xf32, #tpu.memory_space<vmem>>, vector<16x8xf32>,
    %174 = vector.extract_strided_slice %15 {offsets = [16, 16], sizes = [16, 8], strides = [1, 1]} : vector<32x384xf32> to vector<16x8xf32>
    %175 = vector.extract_strided_slice %15 {offsets = [16, 144], sizes = [16, 8], strides = [1, 1]} : vector<32x384xf32> to vector<16x8xf32>
    %176 = vector.extract_strided_slice %15 {offsets = [16, 272], sizes = [16, 8], strides = [1, 1]} : vector<32x384xf32> to vector<16x8xf32>
    %cst_66 = arith.constant dense<0.000000e+00> : vector<16x16xf32>
    %177 = tpu.matmul %174, %175, %cst_66 {dimension_numbers = #tpu.dot_dimension_numbers<[1], [1], [0], [0], [0, 0, 1, 0], [], []>} : vector<16x8xf32>, vector<16x8xf32>, vector<16x16xf32> -> vector<16x16xf32>
    %178 = arith.subf %177, %127 : vector<16x16xf32>
    %cst_67 = arith.constant 0.353553385 : f32
    %179 = vector.broadcast %cst_67 : f32 to vector<16x16xf32>
    %180 = arith.mulf %178, %179 : vector<16x16xf32>
    %cst_68 = arith.constant dense<0xFF800000> : vector<16xf32>
    %181 = vector.multi_reduction <maximumf>, %180, %cst_68 [1] : vector<16x16xf32> to vector<16xf32>
    %182 = vector.shape_cast %181 : vector<16xf32> to vector<16x1xf32>
    %183 = vector.broadcast %182 : vector<16x1xf32> to vector<16x16xf32>
    %184 = arith.subf %180, %183 : vector<16x16xf32>
    %185 = math.exp %184 : vector<16x16xf32>
    %cst_69 = arith.constant dense<0.000000e+00> : vector<16xf32>
    %186 = vector.multi_reduction <add>, %185, %cst_69 [1] : vector<16x16xf32> to vector<16xf32>
    %187 = vector.shape_cast %186 : vector<16xf32> to vector<16x1xf32>
    %188 = tpu.reciprocal %187 {approx = true} : vector<16x1xf32> -> vector<16x1xf32>
    %189 = arith.mulf %187, %188 : vector<16x1xf32>
    %cst_70 = arith.constant 2.000000e+00 : f32
    %190 = vector.broadcast %cst_70 : f32 to vector<16x1xf32>
    %191 = arith.subf %190, %189 : vector<16x1xf32>
    %192 = arith.mulf %188, %191 : vector<16x1xf32>
    %193 = vector.broadcast %192 : vector<16x1xf32> to vector<16x16xf32>
    %194 = arith.mulf %185, %193 : vector<16x16xf32>
    %cst_71 = arith.constant dense<0.000000e+00> : vector<16x8xf32>
    %195 = tpu.matmul %194, %176, %cst_71 {dimension_numbers = #tpu.dot_dimension_numbers<[1], [0], [0], [1], [0, 0, 1, 1], [], []>} : vector<16x16xf32>, vector<16x8xf32>, vector<16x8xf32> -> vector<16x8xf32>
    %c16_72 = arith.constant 16 : index
    %c16_73 = arith.constant 16 : index
    %196 = vector.load %arg15[%c16_72, %c16_73] : memref<32x128xf32, #tpu.memory_space<vmem>>, vector<16x8xf32>
    tpu.vector_store %arg15[%c16_72, %c16_73], %195 {strides = array<i32>} : memref<32x128xf32, #tpu.memory_space<vmem>>, vector<16x8xf32>,
    %197 = vector.extract_strided_slice %15 {offsets = [16, 24], sizes = [16, 8], strides = [1, 1]} : vector<32x384xf32> to vector<16x8xf32>
    %198 = vector.extract_strided_slice %15 {offsets = [16, 152], sizes = [16, 8], strides = [1, 1]} : vector<32x384xf32> to vector<16x8xf32>
    %199 = vector.extract_strided_slice %15 {offsets = [16, 280], sizes = [16, 8], strides = [1, 1]} : vector<32x384xf32> to vector<16x8xf32>
    %cst_74 = arith.constant dense<0.000000e+00> : vector<16x16xf32>
    %200 = tpu.matmul %197, %198, %cst_74 {dimension_numbers = #tpu.dot_dimension_numbers<[1], [1], [0], [0], [0, 0, 1, 0], [], []>} : vector<16x8xf32>, vector<16x8xf32>, vector<16x16xf32> -> vector<16x16xf32>
    %201 = arith.subf %200, %127 : vector<16x16xf32>
    %cst_75 = arith.constant 0.353553385 : f32
    %202 = vector.broadcast %cst_75 : f32 to vector<16x16xf32>
    %203 = arith.mulf %201, %202 : vector<16x16xf32>
    %cst_76 = arith.constant dense<0xFF800000> : vector<16xf32>
    %204 = vector.multi_reduction <maximumf>, %203, %cst_76 [1] : vector<16x16xf32> to vector<16xf32>
    %205 = vector.shape_cast %204 : vector<16xf32> to vector<16x1xf32>
    %206 = vector.broadcast %205 : vector<16x1xf32> to vector<16x16xf32>
    %207 = arith.subf %203, %206 : vector<16x16xf32>
    %208 = math.exp %207 : vector<16x16xf32>
    %cst_77 = arith.constant dense<0.000000e+00> : vector<16xf32>
    %209 = vector.multi_reduction <add>, %208, %cst_77 [1] : vector<16x16xf32> to vector<16xf32>
    %210 = vector.shape_cast %209 : vector<16xf32> to vector<16x1xf32>
    %211 = tpu.reciprocal %210 {approx = true} : vector<16x1xf32> -> vector<16x1xf32>
    %212 = arith.mulf %210, %211 : vector<16x1xf32>
    %cst_78 = arith.constant 2.000000e+00 : f32
    %213 = vector.broadcast %cst_78 : f32 to vector<16x1xf32>
    %214 = arith.subf %213, %212 : vector<16x1xf32>
    %215 = arith.mulf %211, %214 : vector<16x1xf32>
    %216 = vector.broadcast %215 : vector<16x1xf32> to vector<16x16xf32>
    %217 = arith.mulf %208, %216 : vector<16x16xf32>
    %cst_79 = arith.constant dense<0.000000e+00> : vector<16x8xf32>
    %218 = tpu.matmul %217, %199, %cst_79 {dimension_numbers = #tpu.dot_dimension_numbers<[1], [0], [0], [1], [0, 0, 1, 1], [], []>} : vector<16x16xf32>, vector<16x8xf32>, vector<16x8xf32> -> vector<16x8xf32>
    %c16_80 = arith.constant 16 : index
    %c24_81 = arith.constant 24 : index
    %219 = vector.load %arg15[%c16_80, %c24_81] : memref<32x128xf32, #tpu.memory_space<vmem>>, vector<16x8xf32>
    tpu.vector_store %arg15[%c16_80, %c24_81], %218 {strides = array<i32>} : memref<32x128xf32, #tpu.memory_space<vmem>>, vector<16x8xf32>,
    %c0_82 = arith.constant 0 : index
    %c0_83 = arith.constant 0 : index
    %220 = vector.load %arg15[%c0_82, %c0_83] : memref<32x128xf32, #tpu.memory_space<vmem>>, vector<32x128xf32>
    %221 = vector.broadcast %7 : vector<32x1xf32> to vector<32x128xf32>
    %222 = arith.mulf %220, %221 : vector<32x128xf32>
    %223 = arith.addf %222, %8 : vector<32x128xf32>
    %c0_84 = arith.constant 0 : index
    %c0_85 = arith.constant 0 : index
    %c0_86 = arith.constant 0 : index
    %224 = vector.load %arg6[%c0_84, %c0_85, %c0_86] : memref<2x1x128xf32, #tpu.memory_space<vmem>>, vector<1x1x128xf32>
    %225 = vector.shape_cast %224 : vector<1x1x128xf32> to vector<1x128xf32>
    %c0_87 = arith.constant 0 : index
    %c0_88 = arith.constant 0 : index
    %c0_89 = arith.constant 0 : index
    %226 = vector.load %arg7[%c0_87, %c0_88, %c0_89] : memref<2x1x128xf32, #tpu.memory_space<vmem>>, vector<1x1x128xf32>
    %227 = vector.shape_cast %226 : vector<1x1x128xf32> to vector<1x128xf32>
    %cst_90 = arith.constant dense<0.000000e+00> : vector<32xf32>
    %228 = vector.multi_reduction <add>, %223, %cst_90 [1] : vector<32x128xf32> to vector<32xf32>
    %229 = vector.shape_cast %228 : vector<32xf32> to vector<32x1xf32>
    %cst_91 = arith.constant 3.125000e-02 : f32
    %230 = vector.broadcast %cst_91 : f32 to vector<32x1xf32>
    %231 = arith.mulf %229, %230 : vector<32x1xf32>
    %232 = vector.broadcast %231 : vector<32x1xf32> to vector<32x128xf32>
    %233 = arith.subf %223, %232 : vector<32x128xf32>
    %234 = arith.mulf %233, %233 : vector<32x128xf32>
    %235 = vector.broadcast %4 : vector<1x128xf32> to vector<32x128xf32>
    %236 = arith.mulf %234, %235 : vector<32x128xf32>
    %cst_92 = arith.constant dense<0.000000e+00> : vector<32xf32>
    %237 = vector.multi_reduction <add>, %236, %cst_92 [1] : vector<32x128xf32> to vector<32xf32>
    %238 = vector.shape_cast %237 : vector<32xf32> to vector<32x1xf32>
    %cst_93 = arith.constant 3.125000e-02 : f32
    %239 = vector.broadcast %cst_93 : f32 to vector<32x1xf32>
    %240 = arith.mulf %238, %239 : vector<32x1xf32>
    %cst_94 = arith.constant 9.99999974E-6 : f32
    %241 = vector.broadcast %cst_94 : f32 to vector<32x1xf32>
    %242 = arith.addf %240, %241 : vector<32x1xf32>
    %243 = math.rsqrt %242 : vector<32x1xf32>
    %244 = vector.broadcast %243 : vector<32x1xf32> to vector<32x128xf32>
    %245 = arith.mulf %233, %244 : vector<32x128xf32>
    %246 = vector.broadcast %225 : vector<1x128xf32> to vector<32x128xf32>
    %247 = arith.mulf %245, %246 : vector<32x128xf32>
    %248 = vector.broadcast %227 : vector<1x128xf32> to vector<32x128xf32>
    %249 = arith.addf %247, %248 : vector<32x128xf32>
    %c0_95 = arith.constant 0 : index
    %c0_96 = arith.constant 0 : index
    %c0_97 = arith.constant 0 : index
    %250 = vector.load %arg8[%c0_95, %c0_96, %c0_97] : memref<2x128x128xf32, #tpu.memory_space<vmem>>, vector<1x128x128xf32>
    %251 = vector.shape_cast %250 : vector<1x128x128xf32> to vector<128x128xf32>
    %cst_98 = arith.constant dense<0.000000e+00> : vector<32x128xf32>
    %252 = tpu.matmul %249, %251, %cst_98 {dimension_numbers = #tpu.dot_dimension_numbers<[1], [0], [0], [1], [0, 0, 1, 1], [], []>} : vector<32x128xf32>, vector<128x128xf32>, vector<32x128xf32> -> vector<32x128xf32>
    %c0_99 = arith.constant 0 : index
    %c0_100 = arith.constant 0 : index
    %c0_101 = arith.constant 0 : index
    %253 = vector.load %arg9[%c0_99, %c0_100, %c0_101] : memref<2x1x128xf32, #tpu.memory_space<vmem>>, vector<1x1x128xf32>
    %254 = vector.shape_cast %253 : vector<1x1x128xf32> to vector<1x128xf32>
    %255 = vector.broadcast %254 : vector<1x128xf32> to vector<32x128xf32>
    %256 = arith.addf %252, %255 : vector<32x128xf32>
    %cst_102 = arith.constant 0.000000e+00 : f32
    %257 = vector.broadcast %cst_102 : f32 to vector<32x128xf32>
    %258 = arith.maximumf %256, %257 : vector<32x128xf32>
    %c0_103 = arith.constant 0 : index
    %c0_104 = arith.constant 0 : index
    %c0_105 = arith.constant 0 : index
    %259 = vector.load %arg10[%c0_103, %c0_104, %c0_105] : memref<2x128x128xf32, #tpu.memory_space<vmem>>, vector<1x128x128xf32>
    %260 = vector.shape_cast %259 : vector<1x128x128xf32> to vector<128x128xf32>
    %cst_106 = arith.constant dense<0.000000e+00> : vector<32x128xf32>
    %261 = tpu.matmul %258, %260, %cst_106 {dimension_numbers = #tpu.dot_dimension_numbers<[1], [0], [0], [1], [0, 0, 1, 1], [], []>} : vector<32x128xf32>, vector<128x128xf32>, vector<32x128xf32> -> vector<32x128xf32>
    %c0_107 = arith.constant 0 : index
    %c0_108 = arith.constant 0 : index
    %c0_109 = arith.constant 0 : index
    %262 = vector.load %arg11[%c0_107, %c0_108, %c0_109] : memref<2x1x128xf32, #tpu.memory_space<vmem>>, vector<1x1x128xf32>
    %263 = vector.shape_cast %262 : vector<1x1x128xf32> to vector<1x128xf32>
    %264 = vector.broadcast %263 : vector<1x128xf32> to vector<32x128xf32>
    %265 = arith.addf %261, %264 : vector<32x128xf32>
    %266 = vector.broadcast %7 : vector<32x1xf32> to vector<32x128xf32>
    %267 = arith.mulf %265, %266 : vector<32x128xf32>
    %268 = arith.addf %267, %249 : vector<32x128xf32>
    %c0_110 = arith.constant 0 : index
    %c0_111 = arith.constant 0 : index
    %c0_112 = arith.constant 0 : index
    %269 = vector.load %arg12[%c0_110, %c0_111, %c0_112] : memref<2x1x128xf32, #tpu.memory_space<vmem>>, vector<1x1x128xf32>
    %270 = vector.shape_cast %269 : vector<1x1x128xf32> to vector<1x128xf32>
    %c0_113 = arith.constant 0 : index
    %c0_114 = arith.constant 0 : index
    %c0_115 = arith.constant 0 : index
    %271 = vector.load %arg13[%c0_113, %c0_114, %c0_115] : memref<2x1x128xf32, #tpu.memory_space<vmem>>, vector<1x1x128xf32>
    %272 = vector.shape_cast %271 : vector<1x1x128xf32> to vector<1x128xf32>
    %cst_116 = arith.constant dense<0.000000e+00> : vector<32xf32>
    %273 = vector.multi_reduction <add>, %268, %cst_116 [1] : vector<32x128xf32> to vector<32xf32>
    %274 = vector.shape_cast %273 : vector<32xf32> to vector<32x1xf32>
    %cst_117 = arith.constant 3.125000e-02 : f32
    %275 = vector.broadcast %cst_117 : f32 to vector<32x1xf32>
    %276 = arith.mulf %274, %275 : vector<32x1xf32>
    %277 = vector.broadcast %276 : vector<32x1xf32> to vector<32x128xf32>
    %278 = arith.subf %268, %277 : vector<32x128xf32>
    %279 = arith.mulf %278, %278 : vector<32x128xf32>
    %280 = vector.broadcast %4 : vector<1x128xf32> to vector<32x128xf32>
    %281 = arith.mulf %279, %280 : vector<32x128xf32>
    %cst_118 = arith.constant dense<0.000000e+00> : vector<32xf32>
    %282 = vector.multi_reduction <add>, %281, %cst_118 [1] : vector<32x128xf32> to vector<32xf32>
    %283 = vector.shape_cast %282 : vector<32xf32> to vector<32x1xf32>
    %cst_119 = arith.constant 3.125000e-02 : f32
    %284 = vector.broadcast %cst_119 : f32 to vector<32x1xf32>
    %285 = arith.mulf %283, %284 : vector<32x1xf32>
    %cst_120 = arith.constant 9.99999974E-6 : f32
    %286 = vector.broadcast %cst_120 : f32 to vector<32x1xf32>
    %287 = arith.addf %285, %286 : vector<32x1xf32>
    %288 = math.rsqrt %287 : vector<32x1xf32>
    %289 = vector.broadcast %288 : vector<32x1xf32> to vector<32x128xf32>
    %290 = arith.mulf %278, %289 : vector<32x128xf32>
    %291 = vector.broadcast %270 : vector<1x128xf32> to vector<32x128xf32>
    %292 = arith.mulf %290, %291 : vector<32x128xf32>
    %293 = vector.broadcast %272 : vector<1x128xf32> to vector<32x128xf32>
    %294 = arith.addf %292, %293 : vector<32x128xf32>
    %c1_121 = arith.constant 1 : index
    %c0_122 = arith.constant 0 : index
    %c0_123 = arith.constant 0 : index
    %295 = vector.load %arg4[%c1_121, %c0_122, %c0_123] : memref<2x128x384xf32, #tpu.memory_space<vmem>>, vector<1x128x384xf32>
    %296 = vector.shape_cast %295 : vector<1x128x384xf32> to vector<128x384xf32>
    %cst_124 = arith.constant dense<0.000000e+00> : vector<32x384xf32>
    %297 = tpu.matmul %294, %296, %cst_124 {dimension_numbers = #tpu.dot_dimension_numbers<[1], [0], [0], [1], [0, 0, 1, 1], [], []>} : vector<32x128xf32>, vector<128x384xf32>, vector<32x384xf32> -> vector<32x384xf32>
    %c1_125 = arith.constant 1 : index
    %c0_126 = arith.constant 0 : index
    %c0_127 = arith.constant 0 : index
    %298 = vector.load %arg5[%c1_125, %c0_126, %c0_127] : memref<2x1x384xf32, #tpu.memory_space<vmem>>, vector<1x1x384xf32>
    %299 = vector.shape_cast %298 : vector<1x1x384xf32> to vector<1x384xf32>
    %300 = vector.broadcast %299 : vector<1x384xf32> to vector<32x384xf32>
    %301 = arith.addf %297, %300 : vector<32x384xf32>
    %302 = vector.extract_strided_slice %7 {offsets = [0, 0], sizes = [16, 1], strides = [1, 1]} : vector<32x1xf32> to vector<16x1xf32>
    %c0_128 = arith.constant 0 : index
    %c0_129 = arith.constant 0 : index
    %c0_130 = arith.constant 0 : index
    %303 = vector.load %arg3[%c0_128, %c0_129, %c0_130] : memref<2x1x16xf32, #tpu.memory_space<vmem>>, vector<1x1x16xf32>
    %304 = vector.shape_cast %303 : vector<1x1x16xf32> to vector<1x16xf32>
    %305 = vector.broadcast %302 : vector<16x1xf32> to vector<16x16xf32>
    %306 = vector.broadcast %304 : vector<1x16xf32> to vector<16x16xf32>
    %307 = arith.mulf %305, %306 : vector<16x16xf32>
    %cst_131 = arith.constant 1.000000e+00 : f32
    %308 = vector.broadcast %cst_131 : f32 to vector<16x16xf32>
    %309 = arith.subf %308, %307 : vector<16x16xf32>
    %cst_132 = arith.constant 1.000000e+05 : f32
    %310 = vector.broadcast %cst_132 : f32 to vector<16x16xf32>
    %311 = arith.mulf %309, %310 : vector<16x16xf32>
    %312 = vector.extract_strided_slice %301 {offsets = [0, 0], sizes = [16, 8], strides = [1, 1]} : vector<32x384xf32> to vector<16x8xf32>
    %313 = vector.extract_strided_slice %301 {offsets = [0, 128], sizes = [16, 8], strides = [1, 1]} : vector<32x384xf32> to vector<16x8xf32>
    %314 = vector.extract_strided_slice %301 {offsets = [0, 256], sizes = [16, 8], strides = [1, 1]} : vector<32x384xf32> to vector<16x8xf32>
    %cst_133 = arith.constant dense<0.000000e+00> : vector<16x16xf32>
    %315 = tpu.matmul %312, %313, %cst_133 {dimension_numbers = #tpu.dot_dimension_numbers<[1], [1], [0], [0], [0, 0, 1, 0], [], []>} : vector<16x8xf32>, vector<16x8xf32>, vector<16x16xf32> -> vector<16x16xf32>
    %316 = arith.subf %315, %311 : vector<16x16xf32>
    %cst_134 = arith.constant 0.353553385 : f32
    %317 = vector.broadcast %cst_134 : f32 to vector<16x16xf32>
    %318 = arith.mulf %316, %317 : vector<16x16xf32>
    %cst_135 = arith.constant dense<0xFF800000> : vector<16xf32>
    %319 = vector.multi_reduction <maximumf>, %318, %cst_135 [1] : vector<16x16xf32> to vector<16xf32>
    %320 = vector.shape_cast %319 : vector<16xf32> to vector<16x1xf32>
    %321 = vector.broadcast %320 : vector<16x1xf32> to vector<16x16xf32>
    %322 = arith.subf %318, %321 : vector<16x16xf32>
    %323 = math.exp %322 : vector<16x16xf32>
    %cst_136 = arith.constant dense<0.000000e+00> : vector<16xf32>
    %324 = vector.multi_reduction <add>, %323, %cst_136 [1] : vector<16x16xf32> to vector<16xf32>
    %325 = vector.shape_cast %324 : vector<16xf32> to vector<16x1xf32>
    %326 = tpu.reciprocal %325 {approx = true} : vector<16x1xf32> -> vector<16x1xf32>
    %327 = arith.mulf %325, %326 : vector<16x1xf32>
    %cst_137 = arith.constant 2.000000e+00 : f32
    %328 = vector.broadcast %cst_137 : f32 to vector<16x1xf32>
    %329 = arith.subf %328, %327 : vector<16x1xf32>
    %330 = arith.mulf %326, %329 : vector<16x1xf32>
    %331 = vector.broadcast %330 : vector<16x1xf32> to vector<16x16xf32>
    %332 = arith.mulf %323, %331 : vector<16x16xf32>
    %cst_138 = arith.constant dense<0.000000e+00> : vector<16x8xf32>
    %333 = tpu.matmul %332, %314, %cst_138 {dimension_numbers = #tpu.dot_dimension_numbers<[1], [0], [0], [1], [0, 0, 1, 1], [], []>} : vector<16x16xf32>, vector<16x8xf32>, vector<16x8xf32> -> vector<16x8xf32>
    %c0_139 = arith.constant 0 : index
    %c0_140 = arith.constant 0 : index
    %334 = vector.load %arg15[%c0_139, %c0_140] : memref<32x128xf32, #tpu.memory_space<vmem>>, vector<16x8xf32>
    tpu.vector_store %arg15[%c0_139, %c0_140], %333 {strides = array<i32>} : memref<32x128xf32, #tpu.memory_space<vmem>>, vector<16x8xf32>,
    %335 = vector.extract_strided_slice %301 {offsets = [0, 8], sizes = [16, 8], strides = [1, 1]} : vector<32x384xf32> to vector<16x8xf32>
    %336 = vector.extract_strided_slice %301 {offsets = [0, 136], sizes = [16, 8], strides = [1, 1]} : vector<32x384xf32> to vector<16x8xf32>
    %337 = vector.extract_strided_slice %301 {offsets = [0, 264], sizes = [16, 8], strides = [1, 1]} : vector<32x384xf32> to vector<16x8xf32>
    %cst_141 = arith.constant dense<0.000000e+00> : vector<16x16xf32>
    %338 = tpu.matmul %335, %336, %cst_141 {dimension_numbers = #tpu.dot_dimension_numbers<[1], [1], [0], [0], [0, 0, 1, 0], [], []>} : vector<16x8xf32>, vector<16x8xf32>, vector<16x16xf32> -> vector<16x16xf32>
    %339 = arith.subf %338, %311 : vector<16x16xf32>
    %cst_142 = arith.constant 0.353553385 : f32
    %340 = vector.broadcast %cst_142 : f32 to vector<16x16xf32>
    %341 = arith.mulf %339, %340 : vector<16x16xf32>
    %cst_143 = arith.constant dense<0xFF800000> : vector<16xf32>
    %342 = vector.multi_reduction <maximumf>, %341, %cst_143 [1] : vector<16x16xf32> to vector<16xf32>
    %343 = vector.shape_cast %342 : vector<16xf32> to vector<16x1xf32>
    %344 = vector.broadcast %343 : vector<16x1xf32> to vector<16x16xf32>
    %345 = arith.subf %341, %344 : vector<16x16xf32>
    %346 = math.exp %345 : vector<16x16xf32>
    %cst_144 = arith.constant dense<0.000000e+00> : vector<16xf32>
    %347 = vector.multi_reduction <add>, %346, %cst_144 [1] : vector<16x16xf32> to vector<16xf32>
    %348 = vector.shape_cast %347 : vector<16xf32> to vector<16x1xf32>
    %349 = tpu.reciprocal %348 {approx = true} : vector<16x1xf32> -> vector<16x1xf32>
    %350 = arith.mulf %348, %349 : vector<16x1xf32>
    %cst_145 = arith.constant 2.000000e+00 : f32
    %351 = vector.broadcast %cst_145 : f32 to vector<16x1xf32>
    %352 = arith.subf %351, %350 : vector<16x1xf32>
    %353 = arith.mulf %349, %352 : vector<16x1xf32>
    %354 = vector.broadcast %353 : vector<16x1xf32> to vector<16x16xf32>
    %355 = arith.mulf %346, %354 : vector<16x16xf32>
    %cst_146 = arith.constant dense<0.000000e+00> : vector<16x8xf32>
    %356 = tpu.matmul %355, %337, %cst_146 {dimension_numbers = #tpu.dot_dimension_numbers<[1], [0], [0], [1], [0, 0, 1, 1], [], []>} : vector<16x16xf32>, vector<16x8xf32>, vector<16x8xf32> -> vector<16x8xf32>
    %c0_147 = arith.constant 0 : index
    %c8_148 = arith.constant 8 : index
    %357 = vector.load %arg15[%c0_147, %c8_148] : memref<32x128xf32, #tpu.memory_space<vmem>>, vector<16x8xf32>
    tpu.vector_store %arg15[%c0_147, %c8_148], %356 {strides = array<i32>} : memref<32x128xf32, #tpu.memory_space<vmem>>, vector<16x8xf32>,
    %358 = vector.extract_strided_slice %301 {offsets = [0, 16], sizes = [16, 8], strides = [1, 1]} : vector<32x384xf32> to vector<16x8xf32>
    %359 = vector.extract_strided_slice %301 {offsets = [0, 144], sizes = [16, 8], strides = [1, 1]} : vector<32x384xf32> to vector<16x8xf32>
    %360 = vector.extract_strided_slice %301 {offsets = [0, 272], sizes = [16, 8], strides = [1, 1]} : vector<32x384xf32> to vector<16x8xf32>
    %cst_149 = arith.constant dense<0.000000e+00> : vector<16x16xf32>
    %361 = tpu.matmul %358, %359, %cst_149 {dimension_numbers = #tpu.dot_dimension_numbers<[1], [1], [0], [0], [0, 0, 1, 0], [], []>} : vector<16x8xf32>, vector<16x8xf32>, vector<16x16xf32> -> vector<16x16xf32>
    %362 = arith.subf %361, %311 : vector<16x16xf32>
    %cst_150 = arith.constant 0.353553385 : f32
    %363 = vector.broadcast %cst_150 : f32 to vector<16x16xf32>
    %364 = arith.mulf %362, %363 : vector<16x16xf32>
    %cst_151 = arith.constant dense<0xFF800000> : vector<16xf32>
    %365 = vector.multi_reduction <maximumf>, %364, %cst_151 [1] : vector<16x16xf32> to vector<16xf32>
    %366 = vector.shape_cast %365 : vector<16xf32> to vector<16x1xf32>
    %367 = vector.broadcast %366 : vector<16x1xf32> to vector<16x16xf32>
    %368 = arith.subf %364, %367 : vector<16x16xf32>
    %369 = math.exp %368 : vector<16x16xf32>
    %cst_152 = arith.constant dense<0.000000e+00> : vector<16xf32>
    %370 = vector.multi_reduction <add>, %369, %cst_152 [1] : vector<16x16xf32> to vector<16xf32>
    %371 = vector.shape_cast %370 : vector<16xf32> to vector<16x1xf32>
    %372 = tpu.reciprocal %371 {approx = true} : vector<16x1xf32> -> vector<16x1xf32>
    %373 = arith.mulf %371, %372 : vector<16x1xf32>
    %cst_153 = arith.constant 2.000000e+00 : f32
    %374 = vector.broadcast %cst_153 : f32 to vector<16x1xf32>
    %375 = arith.subf %374, %373 : vector<16x1xf32>
    %376 = arith.mulf %372, %375 : vector<16x1xf32>
    %377 = vector.broadcast %376 : vector<16x1xf32> to vector<16x16xf32>
    %378 = arith.mulf %369, %377 : vector<16x16xf32>
    %cst_154 = arith.constant dense<0.000000e+00> : vector<16x8xf32>
    %379 = tpu.matmul %378, %360, %cst_154 {dimension_numbers = #tpu.dot_dimension_numbers<[1], [0], [0], [1], [0, 0, 1, 1], [], []>} : vector<16x16xf32>, vector<16x8xf32>, vector<16x8xf32> -> vector<16x8xf32>
    %c0_155 = arith.constant 0 : index
    %c16_156 = arith.constant 16 : index
    %380 = vector.load %arg15[%c0_155, %c16_156] : memref<32x128xf32, #tpu.memory_space<vmem>>, vector<16x8xf32>
    tpu.vector_store %arg15[%c0_155, %c16_156], %379 {strides = array<i32>} : memref<32x128xf32, #tpu.memory_space<vmem>>, vector<16x8xf32>,
    %381 = vector.extract_strided_slice %301 {offsets = [0, 24], sizes = [16, 8], strides = [1, 1]} : vector<32x384xf32> to vector<16x8xf32>
    %382 = vector.extract_strided_slice %301 {offsets = [0, 152], sizes = [16, 8], strides = [1, 1]} : vector<32x384xf32> to vector<16x8xf32>
    %383 = vector.extract_strided_slice %301 {offsets = [0, 280], sizes = [16, 8], strides = [1, 1]} : vector<32x384xf32> to vector<16x8xf32>
    %cst_157 = arith.constant dense<0.000000e+00> : vector<16x16xf32>
    %384 = tpu.matmul %381, %382, %cst_157 {dimension_numbers = #tpu.dot_dimension_numbers<[1], [1], [0], [0], [0, 0, 1, 0], [], []>} : vector<16x8xf32>, vector<16x8xf32>, vector<16x16xf32> -> vector<16x16xf32>
    %385 = arith.subf %384, %311 : vector<16x16xf32>
    %cst_158 = arith.constant 0.353553385 : f32
    %386 = vector.broadcast %cst_158 : f32 to vector<16x16xf32>
    %387 = arith.mulf %385, %386 : vector<16x16xf32>
    %cst_159 = arith.constant dense<0xFF800000> : vector<16xf32>
    %388 = vector.multi_reduction <maximumf>, %387, %cst_159 [1] : vector<16x16xf32> to vector<16xf32>
    %389 = vector.shape_cast %388 : vector<16xf32> to vector<16x1xf32>
    %390 = vector.broadcast %389 : vector<16x1xf32> to vector<16x16xf32>
    %391 = arith.subf %387, %390 : vector<16x16xf32>
    %392 = math.exp %391 : vector<16x16xf32>
    %cst_160 = arith.constant dense<0.000000e+00> : vector<16xf32>
    %393 = vector.multi_reduction <add>, %392, %cst_160 [1] : vector<16x16xf32> to vector<16xf32>
    %394 = vector.shape_cast %393 : vector<16xf32> to vector<16x1xf32>
    %395 = tpu.reciprocal %394 {approx = true} : vector<16x1xf32> -> vector<16x1xf32>
    %396 = arith.mulf %394, %395 : vector<16x1xf32>
    %cst_161 = arith.constant 2.000000e+00 : f32
    %397 = vector.broadcast %cst_161 : f32 to vector<16x1xf32>
    %398 = arith.subf %397, %396 : vector<16x1xf32>
    %399 = arith.mulf %395, %398 : vector<16x1xf32>
    %400 = vector.broadcast %399 : vector<16x1xf32> to vector<16x16xf32>
    %401 = arith.mulf %392, %400 : vector<16x16xf32>
    %cst_162 = arith.constant dense<0.000000e+00> : vector<16x8xf32>
    %402 = tpu.matmul %401, %383, %cst_162 {dimension_numbers = #tpu.dot_dimension_numbers<[1], [0], [0], [1], [0, 0, 1, 1], [], []>} : vector<16x16xf32>, vector<16x8xf32>, vector<16x8xf32> -> vector<16x8xf32>
    %c0_163 = arith.constant 0 : index
    %c24_164 = arith.constant 24 : index
    %403 = vector.load %arg15[%c0_163, %c24_164] : memref<32x128xf32, #tpu.memory_space<vmem>>, vector<16x8xf32>
    tpu.vector_store %arg15[%c0_163, %c24_164], %402 {strides = array<i32>} : memref<32x128xf32, #tpu.memory_space<vmem>>, vector<16x8xf32>,
    %404 = vector.extract_strided_slice %7 {offsets = [16, 0], sizes = [16, 1], strides = [1, 1]} : vector<32x1xf32> to vector<16x1xf32>
    %c1_165 = arith.constant 1 : index
    %c0_166 = arith.constant 0 : index
    %c0_167 = arith.constant 0 : index
    %405 = vector.load %arg3[%c1_165, %c0_166, %c0_167] : memref<2x1x16xf32, #tpu.memory_space<vmem>>, vector<1x1x16xf32>
    %406 = vector.shape_cast %405 : vector<1x1x16xf32> to vector<1x16xf32>
    %407 = vector.broadcast %404 : vector<16x1xf32> to vector<16x16xf32>
    %408 = vector.broadcast %406 : vector<1x16xf32> to vector<16x16xf32>
    %409 = arith.mulf %407, %408 : vector<16x16xf32>
    %cst_168 = arith.constant 1.000000e+00 : f32
    %410 = vector.broadcast %cst_168 : f32 to vector<16x16xf32>
    %411 = arith.subf %410, %409 : vector<16x16xf32>
    %cst_169 = arith.constant 1.000000e+05 : f32
    %412 = vector.broadcast %cst_169 : f32 to vector<16x16xf32>
    %413 = arith.mulf %411, %412 : vector<16x16xf32>
    %414 = vector.extract_strided_slice %301 {offsets = [16, 0], sizes = [16, 8], strides = [1, 1]} : vector<32x384xf32> to vector<16x8xf32>
    %415 = vector.extract_strided_slice %301 {offsets = [16, 128], sizes = [16, 8], strides = [1, 1]} : vector<32x384xf32> to vector<16x8xf32>
    %416 = vector.extract_strided_slice %301 {offsets = [16, 256], sizes = [16, 8], strides = [1, 1]} : vector<32x384xf32> to vector<16x8xf32>
    %cst_170 = arith.constant dense<0.000000e+00> : vector<16x16xf32>
    %417 = tpu.matmul %414, %415, %cst_170 {dimension_numbers = #tpu.dot_dimension_numbers<[1], [1], [0], [0], [0, 0, 1, 0], [], []>} : vector<16x8xf32>, vector<16x8xf32>, vector<16x16xf32> -> vector<16x16xf32>
    %418 = arith.subf %417, %413 : vector<16x16xf32>
    %cst_171 = arith.constant 0.353553385 : f32
    %419 = vector.broadcast %cst_171 : f32 to vector<16x16xf32>
    %420 = arith.mulf %418, %419 : vector<16x16xf32>
    %cst_172 = arith.constant dense<0xFF800000> : vector<16xf32>
    %421 = vector.multi_reduction <maximumf>, %420, %cst_172 [1] : vector<16x16xf32> to vector<16xf32>
    %422 = vector.shape_cast %421 : vector<16xf32> to vector<16x1xf32>
    %423 = vector.broadcast %422 : vector<16x1xf32> to vector<16x16xf32>
    %424 = arith.subf %420, %423 : vector<16x16xf32>
    %425 = math.exp %424 : vector<16x16xf32>
    %cst_173 = arith.constant dense<0.000000e+00> : vector<16xf32>
    %426 = vector.multi_reduction <add>, %425, %cst_173 [1] : vector<16x16xf32> to vector<16xf32>
    %427 = vector.shape_cast %426 : vector<16xf32> to vector<16x1xf32>
    %428 = tpu.reciprocal %427 {approx = true} : vector<16x1xf32> -> vector<16x1xf32>
    %429 = arith.mulf %427, %428 : vector<16x1xf32>
    %cst_174 = arith.constant 2.000000e+00 : f32
    %430 = vector.broadcast %cst_174 : f32 to vector<16x1xf32>
    %431 = arith.subf %430, %429 : vector<16x1xf32>
    %432 = arith.mulf %428, %431 : vector<16x1xf32>
    %433 = vector.broadcast %432 : vector<16x1xf32> to vector<16x16xf32>
    %434 = arith.mulf %425, %433 : vector<16x16xf32>
    %cst_175 = arith.constant dense<0.000000e+00> : vector<16x8xf32>
    %435 = tpu.matmul %434, %416, %cst_175 {dimension_numbers = #tpu.dot_dimension_numbers<[1], [0], [0], [1], [0, 0, 1, 1], [], []>} : vector<16x16xf32>, vector<16x8xf32>, vector<16x8xf32> -> vector<16x8xf32>
    %c16_176 = arith.constant 16 : index
    %c0_177 = arith.constant 0 : index
    %436 = vector.load %arg15[%c16_176, %c0_177] : memref<32x128xf32, #tpu.memory_space<vmem>>, vector<16x8xf32>
    tpu.vector_store %arg15[%c16_176, %c0_177], %435 {strides = array<i32>} : memref<32x128xf32, #tpu.memory_space<vmem>>, vector<16x8xf32>,
    %437 = vector.extract_strided_slice %301 {offsets = [16, 8], sizes = [16, 8], strides = [1, 1]} : vector<32x384xf32> to vector<16x8xf32>
    %438 = vector.extract_strided_slice %301 {offsets = [16, 136], sizes = [16, 8], strides = [1, 1]} : vector<32x384xf32> to vector<16x8xf32>
    %439 = vector.extract_strided_slice %301 {offsets = [16, 264], sizes = [16, 8], strides = [1, 1]} : vector<32x384xf32> to vector<16x8xf32>
    %cst_178 = arith.constant dense<0.000000e+00> : vector<16x16xf32>
    %440 = tpu.matmul %437, %438, %cst_178 {dimension_numbers = #tpu.dot_dimension_numbers<[1], [1], [0], [0], [0, 0, 1, 0], [], []>} : vector<16x8xf32>, vector<16x8xf32>, vector<16x16xf32> -> vector<16x16xf32>
    %441 = arith.subf %440, %413 : vector<16x16xf32>
    %cst_179 = arith.constant 0.353553385 : f32
    %442 = vector.broadcast %cst_179 : f32 to vector<16x16xf32>
    %443 = arith.mulf %441, %442 : vector<16x16xf32>
    %cst_180 = arith.constant dense<0xFF800000> : vector<16xf32>
    %444 = vector.multi_reduction <maximumf>, %443, %cst_180 [1] : vector<16x16xf32> to vector<16xf32>
    %445 = vector.shape_cast %444 : vector<16xf32> to vector<16x1xf32>
    %446 = vector.broadcast %445 : vector<16x1xf32> to vector<16x16xf32>
    %447 = arith.subf %443, %446 : vector<16x16xf32>
    %448 = math.exp %447 : vector<16x16xf32>
    %cst_181 = arith.constant dense<0.000000e+00> : vector<16xf32>
    %449 = vector.multi_reduction <add>, %448, %cst_181 [1] : vector<16x16xf32> to vector<16xf32>
    %450 = vector.shape_cast %449 : vector<16xf32> to vector<16x1xf32>
    %451 = tpu.reciprocal %450 {approx = true} : vector<16x1xf32> -> vector<16x1xf32>
    %452 = arith.mulf %450, %451 : vector<16x1xf32>
    %cst_182 = arith.constant 2.000000e+00 : f32
    %453 = vector.broadcast %cst_182 : f32 to vector<16x1xf32>
    %454 = arith.subf %453, %452 : vector<16x1xf32>
    %455 = arith.mulf %451, %454 : vector<16x1xf32>
    %456 = vector.broadcast %455 : vector<16x1xf32> to vector<16x16xf32>
    %457 = arith.mulf %448, %456 : vector<16x16xf32>
    %cst_183 = arith.constant dense<0.000000e+00> : vector<16x8xf32>
    %458 = tpu.matmul %457, %439, %cst_183 {dimension_numbers = #tpu.dot_dimension_numbers<[1], [0], [0], [1], [0, 0, 1, 1], [], []>} : vector<16x16xf32>, vector<16x8xf32>, vector<16x8xf32> -> vector<16x8xf32>
    %c16_184 = arith.constant 16 : index
    %c8_185 = arith.constant 8 : index
    %459 = vector.load %arg15[%c16_184, %c8_185] : memref<32x128xf32, #tpu.memory_space<vmem>>, vector<16x8xf32>
    tpu.vector_store %arg15[%c16_184, %c8_185], %458 {strides = array<i32>} : memref<32x128xf32, #tpu.memory_space<vmem>>, vector<16x8xf32>,
    %460 = vector.extract_strided_slice %301 {offsets = [16, 16], sizes = [16, 8], strides = [1, 1]} : vector<32x384xf32> to vector<16x8xf32>
    %461 = vector.extract_strided_slice %301 {offsets = [16, 144], sizes = [16, 8], strides = [1, 1]} : vector<32x384xf32> to vector<16x8xf32>
    %462 = vector.extract_strided_slice %301 {offsets = [16, 272], sizes = [16, 8], strides = [1, 1]} : vector<32x384xf32> to vector<16x8xf32>
    %cst_186 = arith.constant dense<0.000000e+00> : vector<16x16xf32>
    %463 = tpu.matmul %460, %461, %cst_186 {dimension_numbers = #tpu.dot_dimension_numbers<[1], [1], [0], [0], [0, 0, 1, 0], [], []>} : vector<16x8xf32>, vector<16x8xf32>, vector<16x16xf32> -> vector<16x16xf32>
    %464 = arith.subf %463, %413 : vector<16x16xf32>
    %cst_187 = arith.constant 0.353553385 : f32
    %465 = vector.broadcast %cst_187 : f32 to vector<16x16xf32>
    %466 = arith.mulf %464, %465 : vector<16x16xf32>
    %cst_188 = arith.constant dense<0xFF800000> : vector<16xf32>
    %467 = vector.multi_reduction <maximumf>, %466, %cst_188 [1] : vector<16x16xf32> to vector<16xf32>
    %468 = vector.shape_cast %467 : vector<16xf32> to vector<16x1xf32>
    %469 = vector.broadcast %468 : vector<16x1xf32> to vector<16x16xf32>
    %470 = arith.subf %466, %469 : vector<16x16xf32>
    %471 = math.exp %470 : vector<16x16xf32>
    %cst_189 = arith.constant dense<0.000000e+00> : vector<16xf32>
    %472 = vector.multi_reduction <add>, %471, %cst_189 [1] : vector<16x16xf32> to vector<16xf32>
    %473 = vector.shape_cast %472 : vector<16xf32> to vector<16x1xf32>
    %474 = tpu.reciprocal %473 {approx = true} : vector<16x1xf32> -> vector<16x1xf32>
    %475 = arith.mulf %473, %474 : vector<16x1xf32>
    %cst_190 = arith.constant 2.000000e+00 : f32
    %476 = vector.broadcast %cst_190 : f32 to vector<16x1xf32>
    %477 = arith.subf %476, %475 : vector<16x1xf32>
    %478 = arith.mulf %474, %477 : vector<16x1xf32>
    %479 = vector.broadcast %478 : vector<16x1xf32> to vector<16x16xf32>
    %480 = arith.mulf %471, %479 : vector<16x16xf32>
    %cst_191 = arith.constant dense<0.000000e+00> : vector<16x8xf32>
    %481 = tpu.matmul %480, %462, %cst_191 {dimension_numbers = #tpu.dot_dimension_numbers<[1], [0], [0], [1], [0, 0, 1, 1], [], []>} : vector<16x16xf32>, vector<16x8xf32>, vector<16x8xf32> -> vector<16x8xf32>
    %c16_192 = arith.constant 16 : index
    %c16_193 = arith.constant 16 : index
    %482 = vector.load %arg15[%c16_192, %c16_193] : memref<32x128xf32, #tpu.memory_space<vmem>>, vector<16x8xf32>
    tpu.vector_store %arg15[%c16_192, %c16_193], %481 {strides = array<i32>} : memref<32x128xf32, #tpu.memory_space<vmem>>, vector<16x8xf32>,
    %483 = vector.extract_strided_slice %301 {offsets = [16, 24], sizes = [16, 8], strides = [1, 1]} : vector<32x384xf32> to vector<16x8xf32>
    %484 = vector.extract_strided_slice %301 {offsets = [16, 152], sizes = [16, 8], strides = [1, 1]} : vector<32x384xf32> to vector<16x8xf32>
    %485 = vector.extract_strided_slice %301 {offsets = [16, 280], sizes = [16, 8], strides = [1, 1]} : vector<32x384xf32> to vector<16x8xf32>
    %cst_194 = arith.constant dense<0.000000e+00> : vector<16x16xf32>
    %486 = tpu.matmul %483, %484, %cst_194 {dimension_numbers = #tpu.dot_dimension_numbers<[1], [1], [0], [0], [0, 0, 1, 0], [], []>} : vector<16x8xf32>, vector<16x8xf32>, vector<16x16xf32> -> vector<16x16xf32>
    %487 = arith.subf %486, %413 : vector<16x16xf32>
    %cst_195 = arith.constant 0.353553385 : f32
    %488 = vector.broadcast %cst_195 : f32 to vector<16x16xf32>
    %489 = arith.mulf %487, %488 : vector<16x16xf32>
    %cst_196 = arith.constant dense<0xFF800000> : vector<16xf32>
    %490 = vector.multi_reduction <maximumf>, %489, %cst_196 [1] : vector<16x16xf32> to vector<16xf32>
    %491 = vector.shape_cast %490 : vector<16xf32> to vector<16x1xf32>
    %492 = vector.broadcast %491 : vector<16x1xf32> to vector<16x16xf32>
    %493 = arith.subf %489, %492 : vector<16x16xf32>
    %494 = math.exp %493 : vector<16x16xf32>
    %cst_197 = arith.constant dense<0.000000e+00> : vector<16xf32>
    %495 = vector.multi_reduction <add>, %494, %cst_197 [1] : vector<16x16xf32> to vector<16xf32>
    %496 = vector.shape_cast %495 : vector<16xf32> to vector<16x1xf32>
    %497 = tpu.reciprocal %496 {approx = true} : vector<16x1xf32> -> vector<16x1xf32>
    %498 = arith.mulf %496, %497 : vector<16x1xf32>
    %cst_198 = arith.constant 2.000000e+00 : f32
    %499 = vector.broadcast %cst_198 : f32 to vector<16x1xf32>
    %500 = arith.subf %499, %498 : vector<16x1xf32>
    %501 = arith.mulf %497, %500 : vector<16x1xf32>
    %502 = vector.broadcast %501 : vector<16x1xf32> to vector<16x16xf32>
    %503 = arith.mulf %494, %502 : vector<16x16xf32>
    %cst_199 = arith.constant dense<0.000000e+00> : vector<16x8xf32>
    %504 = tpu.matmul %503, %485, %cst_199 {dimension_numbers = #tpu.dot_dimension_numbers<[1], [0], [0], [1], [0, 0, 1, 1], [], []>} : vector<16x16xf32>, vector<16x8xf32>, vector<16x8xf32> -> vector<16x8xf32>
    %c16_200 = arith.constant 16 : index
    %c24_201 = arith.constant 24 : index
    %505 = vector.load %arg15[%c16_200, %c24_201] : memref<32x128xf32, #tpu.memory_space<vmem>>, vector<16x8xf32>
    tpu.vector_store %arg15[%c16_200, %c24_201], %504 {strides = array<i32>} : memref<32x128xf32, #tpu.memory_space<vmem>>, vector<16x8xf32>,
    %c0_202 = arith.constant 0 : index
    %c0_203 = arith.constant 0 : index
    %506 = vector.load %arg15[%c0_202, %c0_203] : memref<32x128xf32, #tpu.memory_space<vmem>>, vector<32x128xf32>
    %507 = vector.broadcast %7 : vector<32x1xf32> to vector<32x128xf32>
    %508 = arith.mulf %506, %507 : vector<32x128xf32>
    %509 = arith.addf %508, %294 : vector<32x128xf32>
    %c1_204 = arith.constant 1 : index
    %c0_205 = arith.constant 0 : index
    %c0_206 = arith.constant 0 : index
    %510 = vector.load %arg6[%c1_204, %c0_205, %c0_206] : memref<2x1x128xf32, #tpu.memory_space<vmem>>, vector<1x1x128xf32>
    %511 = vector.shape_cast %510 : vector<1x1x128xf32> to vector<1x128xf32>
    %c1_207 = arith.constant 1 : index
    %c0_208 = arith.constant 0 : index
    %c0_209 = arith.constant 0 : index
    %512 = vector.load %arg7[%c1_207, %c0_208, %c0_209] : memref<2x1x128xf32, #tpu.memory_space<vmem>>, vector<1x1x128xf32>
    %513 = vector.shape_cast %512 : vector<1x1x128xf32> to vector<1x128xf32>
    %cst_210 = arith.constant dense<0.000000e+00> : vector<32xf32>
    %514 = vector.multi_reduction <add>, %509, %cst_210 [1] : vector<32x128xf32> to vector<32xf32>
    %515 = vector.shape_cast %514 : vector<32xf32> to vector<32x1xf32>
    %cst_211 = arith.constant 3.125000e-02 : f32
    %516 = vector.broadcast %cst_211 : f32 to vector<32x1xf32>
    %517 = arith.mulf %515, %516 : vector<32x1xf32>
    %518 = vector.broadcast %517 : vector<32x1xf32> to vector<32x128xf32>
    %519 = arith.subf %509, %518 : vector<32x128xf32>
    %520 = arith.mulf %519, %519 : vector<32x128xf32>
    %521 = vector.broadcast %4 : vector<1x128xf32> to vector<32x128xf32>
    %522 = arith.mulf %520, %521 : vector<32x128xf32>
    %cst_212 = arith.constant dense<0.000000e+00> : vector<32xf32>
    %523 = vector.multi_reduction <add>, %522, %cst_212 [1] : vector<32x128xf32> to vector<32xf32>
    %524 = vector.shape_cast %523 : vector<32xf32> to vector<32x1xf32>
    %cst_213 = arith.constant 3.125000e-02 : f32
    %525 = vector.broadcast %cst_213 : f32 to vector<32x1xf32>
    %526 = arith.mulf %524, %525 : vector<32x1xf32>
    %cst_214 = arith.constant 9.99999974E-6 : f32
    %527 = vector.broadcast %cst_214 : f32 to vector<32x1xf32>
    %528 = arith.addf %526, %527 : vector<32x1xf32>
    %529 = math.rsqrt %528 : vector<32x1xf32>
    %530 = vector.broadcast %529 : vector<32x1xf32> to vector<32x128xf32>
    %531 = arith.mulf %519, %530 : vector<32x128xf32>
    %532 = vector.broadcast %511 : vector<1x128xf32> to vector<32x128xf32>
    %533 = arith.mulf %531, %532 : vector<32x128xf32>
    %534 = vector.broadcast %513 : vector<1x128xf32> to vector<32x128xf32>
    %535 = arith.addf %533, %534 : vector<32x128xf32>
    %c1_215 = arith.constant 1 : index
    %c0_216 = arith.constant 0 : index
    %c0_217 = arith.constant 0 : index
    %536 = vector.load %arg8[%c1_215, %c0_216, %c0_217] : memref<2x128x128xf32, #tpu.memory_space<vmem>>, vector<1x128x128xf32>
    %537 = vector.shape_cast %536 : vector<1x128x128xf32> to vector<128x128xf32>
    %cst_218 = arith.constant dense<0.000000e+00> : vector<32x128xf32>
    %538 = tpu.matmul %535, %537, %cst_218 {dimension_numbers = #tpu.dot_dimension_numbers<[1], [0], [0], [1], [0, 0, 1, 1], [], []>} : vector<32x128xf32>, vector<128x128xf32>, vector<32x128xf32> -> vector<32x128xf32>
    %c1_219 = arith.constant 1 : index
    %c0_220 = arith.constant 0 : index
    %c0_221 = arith.constant 0 : index
    %539 = vector.load %arg9[%c1_219, %c0_220, %c0_221] : memref<2x1x128xf32, #tpu.memory_space<vmem>>, vector<1x1x128xf32>
    %540 = vector.shape_cast %539 : vector<1x1x128xf32> to vector<1x128xf32>
    %541 = vector.broadcast %540 : vector<1x128xf32> to vector<32x128xf32>
    %542 = arith.addf %538, %541 : vector<32x128xf32>
    %cst_222 = arith.constant 0.000000e+00 : f32
    %543 = vector.broadcast %cst_222 : f32 to vector<32x128xf32>
    %544 = arith.maximumf %542, %543 : vector<32x128xf32>
    %c1_223 = arith.constant 1 : index
    %c0_224 = arith.constant 0 : index
    %c0_225 = arith.constant 0 : index
    %545 = vector.load %arg10[%c1_223, %c0_224, %c0_225] : memref<2x128x128xf32, #tpu.memory_space<vmem>>, vector<1x128x128xf32>
    %546 = vector.shape_cast %545 : vector<1x128x128xf32> to vector<128x128xf32>
    %cst_226 = arith.constant dense<0.000000e+00> : vector<32x128xf32>
    %547 = tpu.matmul %544, %546, %cst_226 {dimension_numbers = #tpu.dot_dimension_numbers<[1], [0], [0], [1], [0, 0, 1, 1], [], []>} : vector<32x128xf32>, vector<128x128xf32>, vector<32x128xf32> -> vector<32x128xf32>
    %c1_227 = arith.constant 1 : index
    %c0_228 = arith.constant 0 : index
    %c0_229 = arith.constant 0 : index
    %548 = vector.load %arg11[%c1_227, %c0_228, %c0_229] : memref<2x1x128xf32, #tpu.memory_space<vmem>>, vector<1x1x128xf32>
    %549 = vector.shape_cast %548 : vector<1x1x128xf32> to vector<1x128xf32>
    %550 = vector.broadcast %549 : vector<1x128xf32> to vector<32x128xf32>
    %551 = arith.addf %547, %550 : vector<32x128xf32>
    %552 = vector.broadcast %7 : vector<32x1xf32> to vector<32x128xf32>
    %553 = arith.mulf %551, %552 : vector<32x128xf32>
    %554 = arith.addf %553, %535 : vector<32x128xf32>
    %c1_230 = arith.constant 1 : index
    %c0_231 = arith.constant 0 : index
    %c0_232 = arith.constant 0 : index
    %555 = vector.load %arg12[%c1_230, %c0_231, %c0_232] : memref<2x1x128xf32, #tpu.memory_space<vmem>>, vector<1x1x128xf32>
    %556 = vector.shape_cast %555 : vector<1x1x128xf32> to vector<1x128xf32>
    %c1_233 = arith.constant 1 : index
    %c0_234 = arith.constant 0 : index
    %c0_235 = arith.constant 0 : index
    %557 = vector.load %arg13[%c1_233, %c0_234, %c0_235] : memref<2x1x128xf32, #tpu.memory_space<vmem>>, vector<1x1x128xf32>
    %558 = vector.shape_cast %557 : vector<1x1x128xf32> to vector<1x128xf32>
    %cst_236 = arith.constant dense<0.000000e+00> : vector<32xf32>
    %559 = vector.multi_reduction <add>, %554, %cst_236 [1] : vector<32x128xf32> to vector<32xf32>
    %560 = vector.shape_cast %559 : vector<32xf32> to vector<32x1xf32>
    %cst_237 = arith.constant 3.125000e-02 : f32
    %561 = vector.broadcast %cst_237 : f32 to vector<32x1xf32>
    %562 = arith.mulf %560, %561 : vector<32x1xf32>
    %563 = vector.broadcast %562 : vector<32x1xf32> to vector<32x128xf32>
    %564 = arith.subf %554, %563 : vector<32x128xf32>
    %565 = arith.mulf %564, %564 : vector<32x128xf32>
    %566 = vector.broadcast %4 : vector<1x128xf32> to vector<32x128xf32>
    %567 = arith.mulf %565, %566 : vector<32x128xf32>
    %cst_238 = arith.constant dense<0.000000e+00> : vector<32xf32>
    %568 = vector.multi_reduction <add>, %567, %cst_238 [1] : vector<32x128xf32> to vector<32xf32>
    %569 = vector.shape_cast %568 : vector<32xf32> to vector<32x1xf32>
    %cst_239 = arith.constant 3.125000e-02 : f32
    %570 = vector.broadcast %cst_239 : f32 to vector<32x1xf32>
    %571 = arith.mulf %569, %570 : vector<32x1xf32>
    %cst_240 = arith.constant 9.99999974E-6 : f32
    %572 = vector.broadcast %cst_240 : f32 to vector<32x1xf32>
    %573 = arith.addf %571, %572 : vector<32x1xf32>
    %574 = math.rsqrt %573 : vector<32x1xf32>
    %575 = vector.broadcast %574 : vector<32x1xf32> to vector<32x128xf32>
    %576 = arith.mulf %564, %575 : vector<32x128xf32>
    %577 = vector.broadcast %556 : vector<1x128xf32> to vector<32x128xf32>
    %578 = arith.mulf %576, %577 : vector<32x128xf32>
    %579 = vector.broadcast %558 : vector<1x128xf32> to vector<32x128xf32>
    %580 = arith.addf %578, %579 : vector<32x128xf32>
    %c0_241 = arith.constant 0 : index
    %c0_242 = arith.constant 0 : index
    %581 = vector.load %arg14[%c0_241, %c0_242] : memref<32x128xf32, #tpu.memory_space<vmem>>, vector<32x128xf32>
    tpu.vector_store %arg14[%c0_241, %c0_242], %580 {strides = array<i32>} : memref<32x128xf32, #tpu.memory_space<vmem>>, vector<32x128xf32>,
    return
  }
  func.func @transform_0(%arg0: i32) -> (i32, i32) {
    %c0_i32 = arith.constant 0 : i32
    %c0_i32_0 = arith.constant 0 : i32
    return %arg0, %c0_i32 : i32, i32
  }
  func.func @transform_1(%arg0: i32) -> (i32, i32) {
    %c0_i32 = arith.constant 0 : i32
    %c0_i32_0 = arith.constant 0 : i32
    return %arg0, %c0_i32 : i32, i32
  }
  func.func @transform_2(%arg0: i32) -> (i32, i32, i32) {
    %c0_i32 = arith.constant 0 : i32
    %c0_i32_0 = arith.constant 0 : i32
    %c0_i32_1 = arith.constant 0 : i32
    return %arg0, %c0_i32, %c0_i32_0 : i32, i32, i32
  }
  func.func @transform_3(%arg0: i32) -> (i32, i32, i32) {
    %c0_i32 = arith.constant 0 : i32
    %c0_i32_0 = arith.constant 0 : i32
    %c0_i32_1 = arith.constant 0 : i32
    %c0_i32_2 = arith.constant 0 : i32
    return %c0_i32, %c0_i32_0, %c0_i32_1 : i32, i32, i32
  }
  func.func @transform_4(%arg0: i32) -> (i32, i32, i32) {
    %c0_i32 = arith.constant 0 : i32
    %c0_i32_0 = arith.constant 0 : i32
    %c0_i32_1 = arith.constant 0 : i32
    %c0_i32_2 = arith.constant 0 : i32
    return %c0_i32, %c0_i32_0, %c0_i32_1 : i32, i32, i32
  }
  func.func @transform_5(%arg0: i32) -> (i32, i32, i32) {
    %c0_i32 = arith.constant 0 : i32
    %c0_i32_0 = arith.constant 0 : i32
    %c0_i32_1 = arith.constant 0 : i32
    %c0_i32_2 = arith.constant 0 : i32
    return %c0_i32, %c0_i32_0, %c0_i32_1 : i32, i32, i32
  }
  func.func @transform_6(%arg0: i32) -> (i32, i32, i32) {
    %c0_i32 = arith.constant 0 : i32
    %c0_i32_0 = arith.constant 0 : i32
    %c0_i32_1 = arith.constant 0 : i32
    %c0_i32_2 = arith.constant 0 : i32
    return %c0_i32, %c0_i32_0, %c0_i32_1 : i32, i32, i32
  }
  func.func @transform_7(%arg0: i32) -> (i32, i32, i32) {
    %c0_i32 = arith.constant 0 : i32
    %c0_i32_0 = arith.constant 0 : i32
    %c0_i32_1 = arith.constant 0 : i32
    %c0_i32_2 = arith.constant 0 : i32
    return %c0_i32, %c0_i32_0, %c0_i32_1 : i32, i32, i32
  }
  func.func @transform_8(%arg0: i32) -> (i32, i32, i32) {
    %c0_i32 = arith.constant 0 : i32
    %c0_i32_0 = arith.constant 0 : i32
    %c0_i32_1 = arith.constant 0 : i32
    %c0_i32_2 = arith.constant 0 : i32
    return %c0_i32, %c0_i32_0, %c0_i32_1 : i32, i32, i32
  }
  func.func @transform_9(%arg0: i32) -> (i32, i32, i32) {
    %c0_i32 = arith.constant 0 : i32
    %c0_i32_0 = arith.constant 0 : i32
    %c0_i32_1 = arith.constant 0 : i32
    %c0_i32_2 = arith.constant 0 : i32
    return %c0_i32, %c0_i32_0, %c0_i32_1 : i32, i32, i32
  }
  func.func @transform_10(%arg0: i32) -> (i32, i32, i32) {
    %c0_i32 = arith.constant 0 : i32
    %c0_i32_0 = arith.constant 0 : i32
    %c0_i32_1 = arith.constant 0 : i32
    %c0_i32_2 = arith.constant 0 : i32
    return %c0_i32, %c0_i32_0, %c0_i32_1 : i32, i32, i32
  }
  func.func @transform_11(%arg0: i32) -> (i32, i32, i32) {
    %c0_i32 = arith.constant 0 : i32
    %c0_i32_0 = arith.constant 0 : i32
    %c0_i32_1 = arith.constant 0 : i32
    %c0_i32_2 = arith.constant 0 : i32
    return %c0_i32, %c0_i32_0, %c0_i32_1 : i32, i32, i32
  }
  func.func @transform_12(%arg0: i32) -> (i32, i32, i32) {
    %c0_i32 = arith.constant 0 : i32
    %c0_i32_0 = arith.constant 0 : i32
    %c0_i32_1 = arith.constant 0 : i32
    %c0_i32_2 = arith.constant 0 : i32
    return %c0_i32, %c0_i32_0, %c0_i32_1 : i32, i32, i32
  }
  func.func @transform_13(%arg0: i32) -> (i32, i32) {
    %c0_i32 = arith.constant 0 : i32
    %c0_i32_0 = arith.constant 0 : i32
    return %arg0, %c0_i32 : i32, i32
  }
}

</mosaic_0001>

<llo_original>
// kernel: encoder_forward.1
$region0: #{encoder_forward.1}
  #allocation0 [shape = 'u32[]', space=smem, size = 0x4, offset = 0x4, fixed_abs, tag = 'smem constant byte address 0x4 - core index']
  #allocation1 [shape = 'u32[144,128]{1,0:T(1,128)}', space=vmem, size = 0x12000, scoped, tag = 'internal scratch']
  #allocation2 [shape = 'f32[32,128]{1,0:T(8,128)}', space=vmem, size = 0x4000, scoped, tag = 'scratch operand']
  %s0 = inlined_call_operand.vmem [shape: f32[64,128], index: 0, kind: input, shape index: {}]
  %s1 = inlined_call_operand.vmem [shape: f32[64,1], index: 1, kind: input, shape index: {}]
  %s2 = inlined_call_operand.vmem [shape: f32[4,1,16], index: 2, kind: input, shape index: {}]
  %s3 = inlined_call_operand.hbm [shape: f32[2,128,384], index: 3, kind: input, shape index: {}]
  %s4 = inlined_call_operand.vmem [shape: f32[2,1,384], index: 4, kind: input, shape index: {}]
  %s5 = inlined_call_operand.vmem [shape: f32[2,1,128], index: 5, kind: input, shape index: {}]
  %s6 = inlined_call_operand.vmem [shape: f32[2,1,128], index: 6, kind: input, shape index: {}]
  %s7 = inlined_call_operand.vmem [shape: f32[2,128,128], index: 7, kind: input, shape index: {}]
  %s8 = inlined_call_operand.vmem [shape: f32[2,1,128], index: 8, kind: input, shape index: {}]
  %s9 = inlined_call_operand.hbm [shape: f32[2,128,128], index: 9, kind: input, shape index: {}]
  %s10 = inlined_call_operand.vmem [shape: f32[2,1,128], index: 10, kind: input, shape index: {}]
  %s11 = inlined_call_operand.vmem [shape: f32[2,1,128], index: 11, kind: input, shape index: {}]
  %s12 = inlined_call_operand.vmem [shape: f32[2,1,128], index: 12, kind: input, shape index: {}]
  %s13 = inlined_call_operand.hbm [shape: f32[64,128], index: 13, kind: output, shape index: {}]
  %s14 = sld [smem:[#allocation0]]
  $region93: #{encoder_forward.1} parent=0
    _
  %s16 = ssub.s32 1, %s14
  %s17 = scalar_select 0, %s16, %s14
  $region1: #{encoder_forward.1} parent=0
    #allocation3 [shape = 'u8[393216]{0}', space=vmem, size = 0x60000, scoped, tag = 'input window, operand 3, single buffered']
    #allocation4 [shape = 's32[2]{0}', space=sflag, size = 0x8, scoped, tag = 'scoped memory for encoder_forward.1']
    #allocation5 [shape = 's32[2]{0}', space=sflag, size = 0x8, scoped, tag = 'scoped memory for encoder_forward.1']
    #allocation6 [shape = 'u8[131072]{0}', space=vmem, size = 0x20000, scoped, tag = 'input window, operand 9, single buffered']
    #allocation7 [shape = 's32[1]{0}', space=sflag, size = 0x4, scoped, tag = 'scoped memory for encoder_forward.1']
    #allocation8 [shape = 'u8[32768]{0}', space=vmem, size = 0x8000, scoped, tag = 'output window, operand 0']
    %18 = vsyncpa [#allocation4], 0
    %19 = vsyncpa [#allocation7], 0
    %20 = vsyncpa [#allocation5], 0
    %s21 = scalar_lea.sflag [#allocation5], 1
    %22 = vsyncpa %s21, 0
    loop: start=0, step=1, limit=4
    $region2: #{encoder_forward.1} parent=1 // loop_pre_header
      _
    $region3: #{encoder_forward.1} parent=1 // loop_header
      %s24 = sphi 0, %s28
      %p25 = scmp.ge.s32.totalorder %s24, 4
      %s34 = sphi 0, %s36
      %s37 = sphi 0, %s34
      %s38 = sphi 0, %s37
      %s54 = sphi 0, %s38
      %s60 = sphi 0, %s62
      %s63 = sphi 0, %s60
      %s64 = sphi 0, %s63
      %s80 = sphi 0, %s64
      %s86 = sphi 0, %s88
      %s89 = sphi 0, %s86
      %s90 = sphi 0, %s89
      %s106 = sphi 0, %s90
      %s110 = sphi 0, %s110
      %s112 = sphi 0, %s110
      %s113 = sphi 0, %s112
      %s127 = sphi 0, %s113
      %s131 = sphi 0, %s131
      %s133 = sphi 0, %s131
      %s134 = sphi 0, %s133
      %s148 = sphi 0, %s134
      %s152 = sphi 0, %s152
      %s154 = sphi 0, %s152
      %s155 = sphi 0, %s154
      %s169 = sphi 0, %s155
      %s173 = sphi 0, %s173
      %s175 = sphi 0, %s173
      %s176 = sphi 0, %s175
      %s190 = sphi 0, %s176
      %s194 = sphi 0, %s194
      %s196 = sphi 0, %s194
      %s197 = sphi 0, %s196
      %s211 = sphi 0, %s197
      %s215 = sphi 0, %s215
      %s217 = sphi 0, %s215
      %s218 = sphi 0, %s217
      %s232 = sphi 0, %s218
      %s236 = sphi 0, %s236
      %s238 = sphi 0, %s236
      %s239 = sphi 0, %s238
      %s253 = sphi 0, %s239
      %s257 = sphi 0, %s257
      %s259 = sphi 0, %s257
      %s260 = sphi 0, %s259
      %s274 = sphi 0, %s260
      %s278 = sphi 0, %s278
      %s280 = sphi 0, %s278
      %s281 = sphi 0, %s280
      %s295 = sphi 0, %s281
      %s299 = sphi 0, %s299
      %s301 = sphi 0, %s299
      %s302 = sphi 0, %s301
      %s316 = sphi 0, %s302
      %s322 = sphi 0, %s324
      %s325 = sphi 0, %s322
      %s326 = sphi 0, %s325
      %s342 = sphi 0, %s326
    $region4: #{encoder_forward.1} parent=1 // loop_header_branch
      %27 = sbr.rel (%p25) target = $region8
    $region5: #{encoder_forward.1} parent=1 // loop_body
      %s29 = ssub.s32 %s24, 1
      %s30 = ssub.s32 %s24, 2
      %s31 = sadd.s32 %s24, 1
      %s32 = ssub.s32 %s24, %s31
      %p33 = scmp.eq.s32.totalorder %s32, 0
      %s35 = sadd.s32 %s34, 1
      %s36 = scalar_select %p33, %s34, %s35
      %p39 = pneg %p33
      %p40 = scmp.eq.s32.totalorder %s24, 1
      %p41 = por %p39, %p40
      %p42 = scmp.ne.s32.totalorder %s34, %s37
      %p43 = scmp.eq.s32.totalorder %s24, 0
      %p44 = por %p42, %p43
      %p45 = scmp.ne.s32.totalorder %s34, %s37
      %p46 = scmp.eq.s32.totalorder %s29, 1
      %p47 = por %p45, %p46
      %p48 = scmp.ne.s32.totalorder %s37, %s38
      %p49 = scmp.eq.s32.totalorder %s29, 0
      %p50 = por %p48, %p49
      %p51 = scmp.ne.s32.totalorder %s37, %s38
      %p52 = scmp.eq.s32.totalorder %s30, 1
      %p53 = por %p51, %p52
      %p55 = scmp.ne.s32.totalorder %s38, %s54
      %p56 = scmp.eq.s32.totalorder %s30, 0
      %p57 = por %p55, %p56
      %s58 = ssub.s32 %s24, %s31
      %p59 = scmp.eq.s32.totalorder %s58, 0
      %s61 = sadd.s32 %s60, 1
      %s62 = scalar_select %p59, %s60, %s61
      %p65 = pneg %p59
      %p66 = scmp.eq.s32.totalorder %s24, 1
      %p67 = por %p65, %p66
      %p68 = scmp.ne.s32.totalorder %s60, %s63
      %p69 = scmp.eq.s32.totalorder %s24, 0
      %p70 = por %p68, %p69
      %p71 = scmp.ne.s32.totalorder %s60, %s63
      %p72 = scmp.eq.s32.totalorder %s29, 1
      %p73 = por %p71, %p72
      %p74 = scmp.ne.s32.totalorder %s63, %s64
      %p75 = scmp.eq.s32.totalorder %s29, 0
      %p76 = por %p74, %p75
      %p77 = scmp.ne.s32.totalorder %s63, %s64
      %p78 = scmp.eq.s32.totalorder %s30, 1
      %p79 = por %p77, %p78
      %p81 = scmp.ne.s32.totalorder %s64, %s80
      %p82 = scmp.eq.s32.totalorder %s30, 0
      %p83 = por %p81, %p82
      %s84 = ssub.s32 %s24, %s31
      %p85 = scmp.eq.s32.totalorder %s84, 0
      %s87 = sadd.s32 %s86, 1
      %s88 = scalar_select %p85, %s86, %s87
      %p91 = pneg %p85
      %p92 = scmp.eq.s32.totalorder %s24, 1
      %p93 = por %p91, %p92
      %p94 = scmp.ne.s32.totalorder %s86, %s89
      %p95 = scmp.eq.s32.totalorder %s24, 0
      %p96 = por %p94, %p95
      %p97 = scmp.ne.s32.totalorder %s86, %s89
      %p98 = scmp.eq.s32.totalorder %s29, 1
      %p99 = por %p97, %p98
      %p100 = scmp.ne.s32.totalorder %s89, %s90
      %p101 = scmp.eq.s32.totalorder %s29, 0
      %p102 = por %p100, %p101
      %p103 = scmp.ne.s32.totalorder %s89, %s90
      %p104 = scmp.eq.s32.totalorder %s30, 1
      %p105 = por %p103, %p104
      %p107 = scmp.ne.s32.totalorder %s90, %s106
      %p108 = scmp.eq.s32.totalorder %s30, 0
      %p109 = por %p107, %p108
      %s111 = sadd.s32 %s110, 1
      %p114 = scmp.eq.s32.totalorder %s24, 1
      %p115 = scmp.ne.s32.totalorder %s110, %s112
      %p116 = scmp.eq.s32.totalorder %s24, 0
      %p117 = por %p115, %p116
      %p118 = scmp.ne.s32.totalorder %s110, %s112
      %p119 = scmp.eq.s32.totalorder %s29, 1
      %p120 = por %p118, %p119
      %p121 = scmp.ne.s32.totalorder %s112, %s113
      %p122 = scmp.eq.s32.totalorder %s29, 0
      %p123 = por %p121, %p122
      %p124 = scmp.ne.s32.totalorder %s112, %s113
      %p125 = scmp.eq.s32.totalorder %s30, 1
      %p126 = por %p124, %p125
      %p128 = scmp.ne.s32.totalorder %s113, %s127
      %p129 = scmp.eq.s32.totalorder %s30, 0
      %p130 = por %p128, %p129
      %s132 = sadd.s32 %s131, 1
      %p135 = scmp.eq.s32.totalorder %s24, 1
      %p136 = scmp.ne.s32.totalorder %s131, %s133
      %p137 = scmp.eq.s32.totalorder %s24, 0
      %p138 = por %p136, %p137
      %p139 = scmp.ne.s32.totalorder %s131, %s133
      %p140 = scmp.eq.s32.totalorder %s29, 1
      %p141 = por %p139, %p140
      %p142 = scmp.ne.s32.totalorder %s133, %s134
      %p143 = scmp.eq.s32.totalorder %s29, 0
      %p144 = por %p142, %p143
      %p145 = scmp.ne.s32.totalorder %s133, %s134
      %p146 = scmp.eq.s32.totalorder %s30, 1
      %p147 = por %p145, %p146
      %p149 = scmp.ne.s32.totalorder %s134, %s148
      %p150 = scmp.eq.s32.totalorder %s30, 0
      %p151 = por %p149, %p150
      %s153 = sadd.s32 %s152, 1
      %p156 = scmp.eq.s32.totalorder %s24, 1
      %p157 = scmp.ne.s32.totalorder %s152, %s154
      %p158 = scmp.eq.s32.totalorder %s24, 0
      %p159 = por %p157, %p158
      %p160 = scmp.ne.s32.totalorder %s152, %s154
      %p161 = scmp.eq.s32.totalorder %s29, 1
      %p162 = por %p160, %p161
      %p163 = scmp.ne.s32.totalorder %s154, %s155
      %p164 = scmp.eq.s32.totalorder %s29, 0
      %p165 = por %p163, %p164
      %p166 = scmp.ne.s32.totalorder %s154, %s155
      %p167 = scmp.eq.s32.totalorder %s30, 1
      %p168 = por %p166, %p167
      %p170 = scmp.ne.s32.totalorder %s155, %s169
      %p171 = scmp.eq.s32.totalorder %s30, 0
      %p172 = por %p170, %p171
      %s174 = sadd.s32 %s173, 1
      %p177 = scmp.eq.s32.totalorder %s24, 1
      %p178 = scmp.ne.s32.totalorder %s173, %s175
      %p179 = scmp.eq.s32.totalorder %s24, 0
      %p180 = por %p178, %p179
      %p181 = scmp.ne.s32.totalorder %s173, %s175
      %p182 = scmp.eq.s32.totalorder %s29, 1
      %p183 = por %p181, %p182
      %p184 = scmp.ne.s32.totalorder %s175, %s176
      %p185 = scmp.eq.s32.totalorder %s29, 0
      %p186 = por %p184, %p185
      %p187 = scmp.ne.s32.totalorder %s175, %s176
      %p188 = scmp.eq.s32.totalorder %s30, 1
      %p189 = por %p187, %p188
      %p191 = scmp.ne.s32.totalorder %s176, %s190
      %p192 = scmp.eq.s32.totalorder %s30, 0
      %p193 = por %p191, %p192
      %s195 = sadd.s32 %s194, 1
      %p198 = scmp.eq.s32.totalorder %s24, 1
      %p199 = scmp.ne.s32.totalorder %s194, %s196
      %p200 = scmp.eq.s32.totalorder %s24, 0
      %p201 = por %p199, %p200
      %p202 = scmp.ne.s32.totalorder %s194, %s196
      %p203 = scmp.eq.s32.totalorder %s29, 1
      %p204 = por %p202, %p203
      %p205 = scmp.ne.s32.totalorder %s196, %s197
      %p206 = scmp.eq.s32.totalorder %s29, 0
      %p207 = por %p205, %p206
      %p208 = scmp.ne.s32.totalorder %s196, %s197
      %p209 = scmp.eq.s32.totalorder %s30, 1
      %p210 = por %p208, %p209
      %p212 = scmp.ne.s32.totalorder %s197, %s211
      %p213 = scmp.eq.s32.totalorder %s30, 0
      %p214 = por %p212, %p213
      %s216 = sadd.s32 %s215, 1
      %p219 = scmp.eq.s32.totalorder %s24, 1
      %p220 = scmp.ne.s32.totalorder %s215, %s217
      %p221 = scmp.eq.s32.totalorder %s24, 0
      %p222 = por %p220, %p221
      %p223 = scmp.ne.s32.totalorder %s215, %s217
      %p224 = scmp.eq.s32.totalorder %s29, 1
      %p225 = por %p223, %p224
      %p226 = scmp.ne.s32.totalorder %s217, %s218
      %p227 = scmp.eq.s32.totalorder %s29, 0
      %p228 = por %p226, %p227
      %p229 = scmp.ne.s32.totalorder %s217, %s218
      %p230 = scmp.eq.s32.totalorder %s30, 1
      %p231 = por %p229, %p230
      %p233 = scmp.ne.s32.totalorder %s218, %s232
      %p234 = scmp.eq.s32.totalorder %s30, 0
      %p235 = por %p233, %p234
      %s237 = sadd.s32 %s236, 1
      %p240 = scmp.eq.s32.totalorder %s24, 1
      %p241 = scmp.ne.s32.totalorder %s236, %s238
      %p242 = scmp.eq.s32.totalorder %s24, 0
      %p243 = por %p241, %p242
      %p244 = scmp.ne.s32.totalorder %s236, %s238
      %p245 = scmp.eq.s32.totalorder %s29, 1
      %p246 = por %p244, %p245
      %p247 = scmp.ne.s32.totalorder %s238, %s239
      %p248 = scmp.eq.s32.totalorder %s29, 0
      %p249 = por %p247, %p248
      %p250 = scmp.ne.s32.totalorder %s238, %s239
      %p251 = scmp.eq.s32.totalorder %s30, 1
      %p252 = por %p250, %p251
      %p254 = scmp.ne.s32.totalorder %s239, %s253
      %p255 = scmp.eq.s32.totalorder %s30, 0
      %p256 = por %p254, %p255
      %s258 = sadd.s32 %s257, 1
      %p261 = scmp.eq.s32.totalorder %s24, 1
      %p262 = scmp.ne.s32.totalorder %s257, %s259
      %p263 = scmp.eq.s32.totalorder %s24, 0
      %p264 = por %p262, %p263
      %p265 = scmp.ne.s32.totalorder %s257, %s259
      %p266 = scmp.eq.s32.totalorder %s29, 1
      %p267 = por %p265, %p266
      %p268 = scmp.ne.s32.totalorder %s259, %s260
      %p269 = scmp.eq.s32.totalorder %s29, 0
      %p270 = por %p268, %p269
      %p271 = scmp.ne.s32.totalorder %s259, %s260
      %p272 = scmp.eq.s32.totalorder %s30, 1
      %p273 = por %p271, %p272
      %p275 = scmp.ne.s32.totalorder %s260, %s274
      %p276 = scmp.eq.s32.totalorder %s30, 0
      %p277 = por %p275, %p276
      %s279 = sadd.s32 %s278, 1
      %p282 = scmp.eq.s32.totalorder %s24, 1
      %p283 = scmp.ne.s32.totalorder %s278, %s280
      %p284 = scmp.eq.s32.totalorder %s24, 0
      %p285 = por %p283, %p284
      %p286 = scmp.ne.s32.totalorder %s278, %s280
      %p287 = scmp.eq.s32.totalorder %s29, 1
      %p288 = por %p286, %p287
      %p289 = scmp.ne.s32.totalorder %s280, %s281
      %p290 = scmp.eq.s32.totalorder %s29, 0
      %p291 = por %p289, %p290
      %p292 = scmp.ne.s32.totalorder %s280, %s281
      %p293 = scmp.eq.s32.totalorder %s30, 1
      %p294 = por %p292, %p293
      %p296 = scmp.ne.s32.totalorder %s281, %s295
      %p297 = scmp.eq.s32.totalorder %s30, 0
      %p298 = por %p296, %p297
      %s300 = sadd.s32 %s299, 1
      %p303 = scmp.eq.s32.totalorder %s24, 1
      %p304 = scmp.ne.s32.totalorder %s299, %s301
      %p305 = scmp.eq.s32.totalorder %s24, 0
      %p306 = por %p304, %p305
      %p307 = scmp.ne.s32.totalorder %s299, %s301
      %p308 = scmp.eq.s32.totalorder %s29, 1
      %p309 = por %p307, %p308
      %p310 = scmp.ne.s32.totalorder %s301, %s302
      %p311 = scmp.eq.s32.totalorder %s29, 0
      %p312 = por %p310, %p311
      %p313 = scmp.ne.s32.totalorder %s301, %s302
      %p314 = scmp.eq.s32.totalorder %s30, 1
      %p315 = por %p313, %p314
      %p317 = scmp.ne.s32.totalorder %s302, %s316
      %p318 = scmp.eq.s32.totalorder %s30, 0
      %p319 = por %p317, %p318
      %s320 = ssub.s32 %s24, %s31
      %p321 = scmp.eq.s32.totalorder %s320, 0
      %s323 = sadd.s32 %s322, 1
      %s324 = scalar_select %p321, %s322, %s323
      %p327 = pneg %p321
      %p328 = scmp.eq.s32.totalorder %s24, 1
      %p329 = por %p327, %p328
      %p330 = scmp.ne.s32.totalorder %s322, %s325
      %p331 = scmp.eq.s32.totalorder %s24, 0
      %p332 = por %p330, %p331
      %p333 = scmp.ne.s32.totalorder %s322, %s325
      %p334 = scmp.eq.s32.totalorder %s29, 1
      %p335 = por %p333, %p334
      %p336 = scmp.ne.s32.totalorder %s325, %s326
      %p337 = scmp.eq.s32.totalorder %s29, 0
      %p338 = por %p336, %p337
      %p339 = scmp.ne.s32.totalorder %s325, %s326
      %p340 = scmp.eq.s32.totalorder %s30, 1
      %p341 = por %p339, %p340
      %p343 = scmp.ne.s32.totalorder %s326, %s342
      %p344 = scmp.eq.s32.totalorder %s30, 0
      %p345 = por %p343, %p344
      %p346 = scmp.le.s32.totalorder 1, %s24
      %p347 = scmp.lt.s32.totalorder %s24, 3
      %p348 = pnand %p346, %p347
      %p349 = pneg %p348
      // Predicated region
      $region9: #{encoder_forward.1} parent=5 // pred_check
        _
      $region10: #{encoder_forward.1} parent=5 // pred_check_branch
        %351 = sbr.rel (%p348) target = $region12
      $region11: #{encoder_forward.1} parent=5 // pred_region
        %s352 = ssub.s32 %s24, 1
        // Predicated region
        $region13: #{encoder_forward.1} parent=11 // pred_check
          %p353 = pneg %p123
        $region14: #{encoder_forward.1} parent=11 // pred_check_branch
          %355 = sbr.rel (%p353) target = $region16
        $region15: #{encoder_forward.1} parent=11 // pred_region
          %s357 = ssub.s32 12288, 12288
          %358 = vsyncadd [#allocation4], %s357
          %s359 = sshll.u32 [#allocation3], 4
          %s360 = int_to_ptr.vmem [resolvable:$true] %s359
          %365 = dma.hbm_to_vmem [thread:$0]  %s3, 12288, %s360, [#allocation4], 384, 384, 24
        $region16: #{encoder_forward.1} parent=11 // pred_fallthru
          _
        // Predicated region
        $region17: #{encoder_forward.1} parent=11 // pred_check
          %p366 = pneg %p144
        $region18: #{encoder_forward.1} parent=11 // pred_check_branch
          %368 = sbr.rel (%p366) target = $region20
        $region19: #{encoder_forward.1} parent=11 // pred_region
          _
        $region20: #{encoder_forward.1} parent=11 // pred_fallthru
          _
        // Predicated region
        $region21: #{encoder_forward.1} parent=11 // pred_check
          %p369 = pneg %p165
        $region22: #{encoder_forward.1} parent=11 // pred_check_branch
          %371 = sbr.rel (%p369) target = $region24
        $region23: #{encoder_forward.1} parent=11 // pred_region
          _
        $region24: #{encoder_forward.1} parent=11 // pred_fallthru
          _
        // Predicated region
        $region25: #{encoder_forward.1} parent=11 // pred_check
          %p372 = pneg %p186
        $region26: #{encoder_forward.1} parent=11 // pred_check_branch
          %374 = sbr.rel (%p372) target = $region28
        $region27: #{encoder_forward.1} parent=11 // pred_region
          _
        $region28: #{encoder_forward.1} parent=11 // pred_fallthru
          _
        // Predicated region
        $region29: #{encoder_forward.1} parent=11 // pred_check
          %p375 = pneg %p207
        $region30: #{encoder_forward.1} parent=11 // pred_check_branch
          %377 = sbr.rel (%p375) target = $region32
        $region31: #{encoder_forward.1} parent=11 // pred_region
          _
        $region32: #{encoder_forward.1} parent=11 // pred_fallthru
          _
        // Predicated region
        $region33: #{encoder_forward.1} parent=11 // pred_check
          %p378 = pneg %p228
        $region34: #{encoder_forward.1} parent=11 // pred_check_branch
          %380 = sbr.rel (%p378) target = $region36
        $region35: #{encoder_forward.1} parent=11 // pred_region
          _
        $region36: #{encoder_forward.1} parent=11 // pred_fallthru
          _
        // Predicated region
        $region37: #{encoder_forward.1} parent=11 // pred_check
          %p381 = pneg %p249
        $region38: #{encoder_forward.1} parent=11 // pred_check_branch
          %383 = sbr.rel (%p381) target = $region40
        $region39: #{encoder_forward.1} parent=11 // pred_region
          %s385 = ssub.s32 4096, 4096
          %386 = vsyncadd [#allocation7], %s385
          %s387 = sshll.u32 [#allocation6], 4
          %s388 = int_to_ptr.vmem [resolvable:$true] %s387
          %393 = dma.hbm_to_vmem [thread:$0]  %s9, 4096, %s388, [#allocation7], 128, 128, 8
        $region40: #{encoder_forward.1} parent=11 // pred_fallthru
          _
        // Predicated region
        $region41: #{encoder_forward.1} parent=11 // pred_check
          %p394 = pneg %p270
        $region42: #{encoder_forward.1} parent=11 // pred_check_branch
          %396 = sbr.rel (%p394) target = $region44
        $region43: #{encoder_forward.1} parent=11 // pred_region
          _
        $region44: #{encoder_forward.1} parent=11 // pred_fallthru
          _
        // Predicated region
        $region45: #{encoder_forward.1} parent=11 // pred_check
          %p397 = pneg %p291
        $region46: #{encoder_forward.1} parent=11 // pred_check_branch
          %399 = sbr.rel (%p397) target = $region48
        $region47: #{encoder_forward.1} parent=11 // pred_region
          _
        $region48: #{encoder_forward.1} parent=11 // pred_fallthru
          _
        // Predicated region
        $region49: #{encoder_forward.1} parent=11 // pred_check
          %p400 = pneg %p312
        $region50: #{encoder_forward.1} parent=11 // pred_check_branch
          %402 = sbr.rel (%p400) target = $region52
        $region51: #{encoder_forward.1} parent=11 // pred_region
          _
        $region52: #{encoder_forward.1} parent=11 // pred_fallthru
          _
      $region12: #{encoder_forward.1} parent=5 // pred_fallthru
        _
      %p403 = scmp.lt.s32.totalorder %s24, 2
      // Predicated region
      $region53: #{encoder_forward.1} parent=5 // pred_check
        %p404 = pneg %p403
      $region54: #{encoder_forward.1} parent=5 // pred_check_branch
        %406 = sbr.rel (%p404) target = $region56
      $region55: #{encoder_forward.1} parent=5 // pred_region
        // Predicated region
        $region57: #{encoder_forward.1} parent=55 // pred_check
          %p407 = pneg %p44
        $region58: #{encoder_forward.1} parent=55 // pred_check_branch
          %409 = sbr.rel (%p407) target = $region60
        $region59: #{encoder_forward.1} parent=55 // pred_region
          %s410 = smul.u32 4, %s24
          %p411 = scmp.lt.s32.totalorder %s410, 7
          %s412 = scalar_select %p411, %s410, 7
          %s413 = smul.addr %s412, 8
          %s414 = scalar_lea.vmem %s0, %s413
          %s415 = smul.u32 4, %s24
        $region60: #{encoder_forward.1} parent=55 // pred_fallthru
          _
        // Predicated region
        $region61: #{encoder_forward.1} parent=55 // pred_check
          %p416 = pneg %p70
        $region62: #{encoder_forward.1} parent=55 // pred_check_branch
          %418 = sbr.rel (%p416) target = $region64
        $region63: #{encoder_forward.1} parent=55 // pred_region
          %s419 = smul.u32 4, %s24
          %p420 = scmp.lt.s32.totalorder %s419, 7
          %s421 = scalar_select %p420, %s419, 7
          %s422 = smul.addr %s421, 8
          %s423 = scalar_lea.vmem %s1, %s422
          %s424 = smul.u32 4, %s24
        $region64: #{encoder_forward.1} parent=55 // pred_fallthru
          _
        // Predicated region
        $region65: #{encoder_forward.1} parent=55 // pred_check
          %p425 = pneg %p96
        $region66: #{encoder_forward.1} parent=55 // pred_check_branch
          %427 = sbr.rel (%p425) target = $region68
        $region67: #{encoder_forward.1} parent=55 // pred_region
          %s428 = smul.u32 2, %s24
          %p429 = scmp.lt.s32.totalorder %s428, 3
          %s430 = scalar_select %p429, %s428, 3
          %s431 = scalar_lea.vmem %s2, %s430
          %s432 = smul.u32 2, %s24
        $region68: #{encoder_forward.1} parent=55 // pred_fallthru
          _
      $region56: #{encoder_forward.1} parent=5 // pred_fallthru
        _
      %p433 = scmp.le.s32.totalorder 1, %s24
      %p434 = scmp.lt.s32.totalorder %s24, 3
      %p435 = pnand %p433, %p434
      %p436 = pneg %p435
      // Predicated region
      $region69: #{encoder_forward.1} parent=5 // pred_check
        _
      $region70: #{encoder_forward.1} parent=5 // pred_check_branch
        %438 = sbr.rel (%p435) target = $region72
      $region71: #{encoder_forward.1} parent=5 // pred_region
        %s439 = ssub.s32 %s24, 1
        // Predicated region
        $region73: #{encoder_forward.1} parent=71 // pred_check
          %p440 = pneg %p123
        $region74: #{encoder_forward.1} parent=71 // pred_check_branch
          %442 = sbr.rel (%p440) target = $region76
        $region75: #{encoder_forward.1} parent=71 // pred_region
          %443 = dma.done [#allocation4], 12288
        $region76: #{encoder_forward.1} parent=71 // pred_fallthru
          _
        // Predicated region
        $region77: #{encoder_forward.1} parent=71 // pred_check
          %p444 = pneg %p249
        $region78: #{encoder_forward.1} parent=71 // pred_check_branch
          %446 = sbr.rel (%p444) target = $region80
        $region79: #{encoder_forward.1} parent=71 // pred_region
          %447 = dma.done [#allocation7], 4096
        $region80: #{encoder_forward.1} parent=71 // pred_fallthru
          _
        %s448 = smul.u32 4, %s29
        %p449 = scmp.lt.s32.totalorder %s448, 7
        %s450 = scalar_select %p449, %s448, 7
        %s451 = smul.addr %s450, 8
        %s452 = scalar_lea.vmem %s0, %s451
        %p453 = pneg %p50
        %p454 = pneg %p47
        %s455 = smul.u32 4, %s29
        %p456 = scmp.lt.s32.totalorder %s455, 7
        %s457 = scalar_select %p456, %s455, 7
        %s458 = smul.addr %s457, 8
        %s459 = scalar_lea.vmem %s1, %s458
        %p460 = pneg %p76
        %p461 = pneg %p73
        %s462 = smul.u32 2, %s29
        %p463 = scmp.lt.s32.totalorder %s462, 3
        %s464 = scalar_select %p463, %s462, 3
        %s465 = scalar_lea.vmem %s2, %s464
        %p466 = pneg %p102
        %p467 = pneg %p99
        %p468 = pneg %p123
        %p469 = pneg %p120
        %p470 = pneg %p144
        %p471 = pneg %p141
        %p472 = pneg %p165
        %p473 = pneg %p162
        %p474 = pneg %p186
        %p475 = pneg %p183
        %p476 = pneg %p207
        %p477 = pneg %p204
        %p478 = pneg %p228
        %p479 = pneg %p225
        %p480 = pneg %p249
        %p481 = pneg %p246
        %p482 = pneg %p270
        %p483 = pneg %p267
        %p484 = pneg %p291
        %p485 = pneg %p288
        %p486 = pneg %p312
        %p487 = pneg %p309
        %p488 = pneg %p338
        %p489 = pneg %p335
        %s490 = sand.u32 %s325, 1
        %s491 = scalar_lea.sflag [#allocation5], %s490
        %s492 = sand.u32 %s325, 1
        %s493 = smul.addr %s492, 32
        %s494 = scalar_lea.vmem [#allocation8], %s493
        %s495 = smul.u32 4, %s29
        %p496 = scmp.lt.s32.totalorder %s495, 7
        %s497 = scalar_select %p496, %s495, 7
        %s498 = smul.addr %s497, 8
        %s499 = scalar_lea.vmem %s0, %s498
        %s500 = smul.u32 4, %s29
        %s501 = smul.u32 4, %s29
        %p502 = scmp.lt.s32.totalorder %s501, 7
        %s503 = scalar_select %p502, %s501, 7
        %s504 = smul.addr %s503, 8
        %s505 = scalar_lea.vmem %s1, %s504
        %s506 = smul.u32 4, %s29
        %s507 = smul.u32 2, %s29
        %p508 = scmp.lt.s32.totalorder %s507, 3
        %s509 = scalar_select %p508, %s507, 3
        %s510 = scalar_lea.vmem %s2, %s509
        %s511 = smul.u32 2, %s29
        %s512 = smul.u32 4, %s29
        %v513 = vlaneseq
        %v514 = vand.u32 %v513, 127
        %vm515 = vcmp.lt.s32.totalorder %v514, 32
        %v516 = vsel %vm515, 1, 0
        %v517 = vcvt.s32.f32 %v516
        %518 = vst [vmem:[#allocation2] sm:$0xff] 0.0
        %519 = vst [vmem:[#allocation2 + $0x8] sm:$0xff] 0.0
        %520 = vst [vmem:[#allocation2 + $0x10] sm:$0xff] 0.0
        %521 = vst [vmem:[#allocation2 + $0x18] sm:$0xff] 0.0
        %v522 = vld [vmem:[%s505] sm:$0xff]
        %v523 = vld [vmem:[%s505 + $0x8] sm:$0xff]
        %v524 = vld [vmem:[%s505 + $0x10] sm:$0xff]
        %v525 = vld [vmem:[%s505 + $0x18] sm:$0xff]
        %v526 = vld [vmem:[%s499] sm:$0xff]
        %v527 = vld [vmem:[%s499 + $0x8] sm:$0xff]
        %v528 = vld [vmem:[%s499 + $0x10] sm:$0xff]
        %v529 = vld [vmem:[%s499 + $0x18] sm:$0xff]
        %v530 = vld [vmem:[#allocation3] sm:$0xff]
        %v531 = vld [vmem:[#allocation3 + $0x8] sm:$0xff]
        %v532 = vld [vmem:[#allocation3 + $0x10] sm:$0xff]
        %v533 = vld [vmem:[#allocation3 + $0x18] sm:$0xff]
        %v534 = vld [vmem:[#allocation3 + $0x20] sm:$0xff]
        %v535 = vld [vmem:[#allocation3 + $0x28] sm:$0xff]
        %v536 = vld [vmem:[#allocation3 + $0x30] sm:$0xff]
        %v537 = vld [vmem:[#allocation3 + $0x38] sm:$0xff]
        %v538 = vld [vmem:[#allocation3 + $0x40] sm:$0xff]
        %v539 = vld [vmem:[#allocation3 + $0x48] sm:$0xff]
        %v540 = vld [vmem:[#allocation3 + $0x50] sm:$0xff]
        %v541 = vld [vmem:[#allocation3 + $0x58] sm:$0xff]
        %v542 = vld [vmem:[#allocation3 + $0x60] sm:$0xff]
        %v543 = vld [vmem:[#allocation3 + $0x68] sm:$0xff]
        %v544 = vld [vmem:[#allocation3 + $0x70] sm:$0xff]
        %v545 = vld [vmem:[#allocation3 + $0x78] sm:$0xff]
        %v546 = vld [vmem:[#allocation3 + $0x80] sm:$0xff]
        %v547 = vld [vmem:[#allocation3 + $0x88] sm:$0xff]
        %v548 = vld [vmem:[#allocation3 + $0x90] sm:$0xff]
        %v549 = vld [vmem:[#allocation3 + $0x98] sm:$0xff]
        %v550 = vld [vmem:[#allocation3 + $0xa0] sm:$0xff]
        %v551 = vld [vmem:[#allocation3 + $0xa8] sm:$0xff]
        %v552 = vld [vmem:[#allocation3 + $0xb0] sm:$0xff]
        %v553 = vld [vmem:[#allocation3 + $0xb8] sm:$0xff]
        %v554 = vld [vmem:[#allocation3 + $0xc0] sm:$0xff]
        %v555 = vld [vmem:[#allocation3 + $0xc8] sm:$0xff]
        %v556 = vld [vmem:[#allocation3 + $0xd0] sm:$0xff]
        %v557 = vld [vmem:[#allocation3 + $0xd8] sm:$0xff]
        %v558 = vld [vmem:[#allocation3 + $0xe0] sm:$0xff]
        %v559 = vld [vmem:[#allocation3 + $0xe8] sm:$0xff]
        %v560 = vld [vmem:[#allocation3 + $0xf0] sm:$0xff]
        %v561 = vld [vmem:[#allocation3 + $0xf8] sm:$0xff]
        %v562 = vld [vmem:[#allocation3 + $0x100] sm:$0xff]
        %v563 = vld [vmem:[#allocation3 + $0x108] sm:$0xff]
        %v564 = vld [vmem:[#allocation3 + $0x110] sm:$0xff]
        %v565 = vld [vmem:[#allocation3 + $0x118] sm:$0xff]
        %v566 = vld [vmem:[#allocation3 + $0x120] sm:$0xff]
        %v567 = vld [vmem:[#allocation3 + $0x128] sm:$0xff]
        %v568 = vld [vmem:[#allocation3 + $0x130] sm:$0xff]
        %v569 = vld [vmem:[#allocation3 + $0x138] sm:$0xff]
        %v570 = vld [vmem:[#allocation3 + $0x140] sm:$0xff]
        %v571 = vld [vmem:[#allocation3 + $0x148] sm:$0xff]
        %v572 = vld [vmem:[#allocation3 + $0x150] sm:$0xff]
        %v573 = vld [vmem:[#allocation3 + $0x158] sm:$0xff]
        %v574 = vld [vmem:[#allocation3 + $0x160] sm:$0xff]
        %v575 = vld [vmem:[#allocation3 + $0x168] sm:$0xff]
        %v576 = vld [vmem:[#allocation3 + $0x170] sm:$0xff]
        %v577 = vld [vmem:[#allocation3 + $0x178] sm:$0xff]
        %v578 = vld [vmem:[%s4] sm:$0x7]
        %v580 = vlaneseq
        %v581 = vshrl.u32 %v580, 7
        %v582 = vsub.s32 0, %v581
        %v583 = vrot.slane %v578, %v582
        %v584 = vlaneseq
        %v585 = vshrl.u32 %v584, 7
        %v586 = vsub.s32 1, %v585
        %v587 = vrot.slane %v578, %v586
        %v588 = vlaneseq
        %v589 = vshrl.u32 %v588, 7
        %v590 = vsub.s32 2, %v589
        %v591 = vrot.slane %v578, %v590
        %595 = vmatprep.subr.mxu0 %v576
        %596 = vmatpush1.msra.mxu0 %v575
        %597 = vmatprep.subr.mxu0 %v573
        %598 = vmatpush1.msra.mxu0 %v572
        %599 = vmatprep.subr.mxu0 %v570
        %600 = vmatpush1.msra.mxu0 %v569
        %601 = vmatprep.subr.mxu0 %v567
        %602 = vmatpush1.msra.mxu0 %v566
        %603 = vmatprep.subr.mxu0 %v564
        %604 = vmatpush1.msra.mxu0 %v563
        %605 = vmatprep.subr.mxu0 %v561
        %606 = vmatpush1.msra.mxu0 %v560
        %607 = vmatprep.subr.mxu0 %v558
        %608 = vmatpush1.msra.mxu0 %v557
        %609 = vmatprep.subr.mxu0 %v555
        %610 = vmatpush1.msra.mxu0 %v554
        %611 = vmatprep.subr.mxu0 %v552
        %612 = vmatpush1.msra.mxu0 %v551
        %613 = vmatprep.subr.mxu0 %v549
        %614 = vmatpush1.msra.mxu0 %v548
        %615 = vmatprep.subr.mxu0 %v546
        %616 = vmatpush1.msra.mxu0 %v545
        %617 = vmatprep.subr.mxu0 %v543
        %618 = vmatpush1.msra.mxu0 %v542
        %619 = vmatprep.subr.mxu0 %v540
        %620 = vmatpush1.msra.mxu0 %v539
        %621 = vmatprep.subr.mxu0 %v537
        %622 = vmatpush1.msra.mxu0 %v536
        %623 = vmatprep.subr.mxu0 %v534
        %624 = vmatpush1.msra.mxu0 %v533
        %625 = vmatprep.subr.mxu0 %v531
        %626 = vmatpush1.msra.mxu0 %v530
        %627 = vmatprep.subr.mxu0 0.0
        %628 = vmatpush2.msra.mxu0 0.0
        %629 = vmatprep.subr.mxu0 0.0
        %630 = vmatpush2.msra.mxu0 0.0
        %631 = vmatprep.subr.mxu0 0.0
        %632 = vmatpush2.msra.mxu0 0.0
        %633 = vmatprep.subr.mxu0 0.0
        %634 = vmatpush2.msra.mxu0 0.0
        %635 = vmatprep.subr.mxu0 0.0
        %636 = vmatpush2.msra.mxu0 0.0
        %637 = vmatprep.subr.mxu0 0.0
        %638 = vmatpush2.msra.mxu0 0.0
        %639 = vmatprep.subr.mxu0 0.0
        %640 = vmatpush2.msra.mxu0 0.0
        %641 = vmatprep.subr.mxu0 0.0
        %642 = vmatpush2.msra.mxu0 0.0
        %643 = vmatprep.subr.mxu0 0.0
        %644 = vmatpush2.msra.mxu0 0.0
        %645 = vmatprep.subr.mxu0 0.0
        %646 = vmatpush2.msra.mxu0 0.0
        %647 = vmatprep.subr.mxu0 0.0
        %648 = vmatpush2.msra.mxu0 0.0
        %649 = vmatprep.subr.mxu0 0.0
        %650 = vmatpush2.msra.mxu0 0.0
        %651 = vmatprep.subr.mxu0 0.0
        %652 = vmatpush2.msra.mxu0 0.0
        %653 = vmatprep.subr.mxu0 0.0
        %654 = vmatpush2.msra.mxu0 0.0
        %655 = vmatprep.subr.mxu0 0.0
        %656 = vmatpush2.msra.mxu0 0.0
        %657 = vmatprep.subr.mxu0 0.0
        %658 = vmatpush2.msra.mxu0 0.0
        %659 = vmatprep.mubr.f32.mxu0 0.0
        %660 = vmatmul.mubr.f32.gmra.mxu0 %v526
        %v661 = vpop.f32.mrf.mxu0
        %v662 = vadd.f32 %v583, %v661
        %v663 = vpop.f32.mrf.mxu0
        %v664 = vadd.f32 %v587, %v663
        %665 = vmatprep.mubr.f32.mxu0 0.0
        %666 = vmatmul.mubr.f32.gmra.mxu0 %v527
        %v667 = vpop.f32.mrf.mxu0
        %v668 = vadd.f32 %v583, %v667
        %v669 = vpop.f32.mrf.mxu0
        %v670 = vadd.f32 %v587, %v669
        %671 = vmatprep.mubr.f32.mxu0 0.0
        %672 = vmatmul.mubr.f32.gmra.mxu0 %v528
        %v673 = vpop.f32.mrf.mxu0
        %v674 = vadd.f32 %v583, %v673
        %v675 = vpop.f32.mrf.mxu0
        %v676 = vadd.f32 %v587, %v675
        %677 = vmatprep.mubr.f32.mxu0 0.0
        %678 = vmatmul.mubr.f32.gmra.mxu0 %v529
        %v679 = vpop.f32.mrf.mxu0
        %v680 = vadd.f32 %v583, %v679
        %v681 = vpop.f32.mrf.mxu0
        %v682 = vadd.f32 %v587, %v681
        %683 = vdwg.mxu0
        %684 = vmatprep.subr.mxu0 0.0
        %685 = vmatpush1.msra.mxu0 %v577
        %686 = vmatprep.subr.mxu0 0.0
        %687 = vmatpush1.msra.mxu0 %v574
        %688 = vmatprep.subr.mxu0 0.0
        %689 = vmatpush1.msra.mxu0 %v571
        %690 = vmatprep.subr.mxu0 0.0
        %691 = vmatpush1.msra.mxu0 %v568
        %692 = vmatprep.subr.mxu0 0.0
        %693 = vmatpush1.msra.mxu0 %v565
        %694 = vmatprep.subr.mxu0 0.0
        %695 = vmatpush1.msra.mxu0 %v562
        %696 = vmatprep.subr.mxu0 0.0
        %697 = vmatpush1.msra.mxu0 %v559
        %698 = vmatprep.subr.mxu0 0.0
        %699 = vmatpush1.msra.mxu0 %v556
        %700 = vmatprep.subr.mxu0 0.0
        %701 = vmatpush1.msra.mxu0 %v553
        %702 = vmatprep.subr.mxu0 0.0
        %703 = vmatpush1.msra.mxu0 %v550
        %704 = vmatprep.subr.mxu0 0.0
        %705 = vmatpush1.msra.mxu0 %v547
        %706 = vmatprep.subr.mxu0 0.0
        %707 = vmatpush1.msra.mxu0 %v544
        %708 = vmatprep.subr.mxu0 0.0
        %709 = vmatpush1.msra.mxu0 %v541
        %710 = vmatprep.subr.mxu0 0.0
        %711 = vmatpush1.msra.mxu0 %v538
        %712 = vmatprep.subr.mxu0 0.0
        %713 = vmatpush1.msra.mxu0 %v535
        %714 = vmatprep.subr.mxu0 0.0
        %715 = vmatpush1.msra.mxu0 %v532
        %716 = vmatprep.subr.mxu0 0.0
        %717 = vmatpush2.msra.mxu0 0.0
        %718 = vmatprep.subr.mxu0 0.0
        %719 = vmatpush2.msra.mxu0 0.0
        %720 = vmatprep.subr.mxu0 0.0
        %721 = vmatpush2.msra.mxu0 0.0
        %722 = vmatprep.subr.mxu0 0.0
        %723 = vmatpush2.msra.mxu0 0.0
        %724 = vmatprep.subr.mxu0 0.0
        %725 = vmatpush2.msra.mxu0 0.0
        %726 = vmatprep.subr.mxu0 0.0
        %727 = vmatpush2.msra.mxu0 0.0
        %728 = vmatprep.subr.mxu0 0.0
        %729 = vmatpush2.msra.mxu0 0.0
        %730 = vmatprep.subr.mxu0 0.0
        %731 = vmatpush2.msra.mxu0 0.0
        %732 = vmatprep.subr.mxu0 0.0
        %733 = vmatpush2.msra.mxu0 0.0
        %734 = vmatprep.subr.mxu0 0.0
        %735 = vmatpush2.msra.mxu0 0.0
        %736 = vmatprep.subr.mxu0 0.0
        %737 = vmatpush2.msra.mxu0 0.0
        %738 = vmatprep.subr.mxu0 0.0
        %739 = vmatpush2.msra.mxu0 0.0
        %740 = vmatprep.subr.mxu0 0.0
        %741 = vmatpush2.msra.mxu0 0.0
        %742 = vmatprep.subr.mxu0 0.0
        %743 = vmatpush2.msra.mxu0 0.0
        %744 = vmatprep.subr.mxu0 0.0
        %745 = vmatpush2.msra.mxu0 0.0
        %746 = vmatprep.subr.mxu0 0.0
        %747 = vmatpush2.msra.mxu0 0.0
        %748 = vmatprep.mubr.f32.mxu0 0.0
        %749 = vmatmul.mubr.f32.gmra.mxu0 %v526
        %v750 = vpop.f32.mrf.mxu0
        %v751 = vadd.f32 %v591, %v750
        %v752 = vpop.f32.mrf.mxu0
        %753 = vmatprep.mubr.f32.mxu0 0.0
        %754 = vmatmul.mubr.f32.gmra.mxu0 %v527
        %v755 = vpop.f32.mrf.mxu0
        %v756 = vadd.f32 %v591, %v755
        %v757 = vpop.f32.mrf.mxu0
        %758 = vmatprep.mubr.f32.mxu0 0.0
        %759 = vmatmul.mubr.f32.gmra.mxu0 %v528
        %v760 = vpop.f32.mrf.mxu0
        %v761 = vadd.f32 %v591, %v760
        %v762 = vpop.f32.mrf.mxu0
        %763 = vmatprep.mubr.f32.mxu0 0.0
        %764 = vmatmul.mubr.f32.gmra.mxu0 %v529
        %v765 = vpop.f32.mrf.mxu0
        %v766 = vadd.f32 %v591, %v765
        %v767 = vpop.f32.mrf.mxu0
        %768 = vdwg.mxu0
        %v769 = vld [vmem:[%s510] sm:$0x1]
        %771 = vset.pattern.permute.xlu0 0
        %772 = vperm.xlu0 %771, %v522
        %v773 = vpop.permute.xlu0 %772
        %776 = vset.pattern.permute.xlu0 0
        %777 = vperm.xlu0 %776, %v523
        %v778 = vpop.permute.xlu0 %777
        %v781 = vlaneseq
        %v782 = vshrl.u32 %v781, 7
        %v783 = vsub.s32 0, %v782
        %v784 = vrot.slane %v769, %v783
        %v786 = vmul.f32 %v773, %v784
        %v787 = vmul.f32 %v778, %v784
        %v788 = vsub.f32 1.0, %v786
        %v789 = vsub.f32 1.0, %v787
        %v790 = vmul.f32 %v788, 100000.0
        %v791 = vmul.f32 %v789, 100000.0
        %vm792 = vcmask 64512
        %v794 = vsel %vm792, %v662, 0
        %v797 = vsel %vm792, %v668, 0
        %v800 = vsel %vm792, %v664, 0
        %v803 = vsel %vm792, %v670, 0
        %805 = vmatprep.subr.mxu0 0.0
        %806 = vmatpush1.xpose.msra.mxu0 0.0
        %807 = vmatprep.subr.mxu0 0.0
        %808 = vmatpush1.xpose.msra.mxu0 0.0
        %809 = vmatprep.subr.mxu0 0.0
        %810 = vmatpush1.xpose.msra.mxu0 0.0
        %811 = vmatprep.subr.mxu0 0.0
        %812 = vmatpush1.xpose.msra.mxu0 0.0
        %813 = vmatprep.subr.mxu0 0.0
        %814 = vmatpush1.xpose.msra.mxu0 0.0
        %815 = vmatprep.subr.mxu0 0.0
        %816 = vmatpush1.xpose.msra.mxu0 0.0
        %817 = vmatprep.subr.mxu0 0.0
        %818 = vmatpush1.xpose.msra.mxu0 0.0
        %819 = vmatprep.subr.mxu0 0.0
        %820 = vmatpush1.xpose.msra.mxu0 0.0
        %821 = vmatprep.subr.mxu0 0.0
        %822 = vmatpush1.xpose.msra.mxu0 0.0
        %823 = vmatprep.subr.mxu0 0.0
        %824 = vmatpush1.xpose.msra.mxu0 0.0
        %825 = vmatprep.subr.mxu0 0.0
        %826 = vmatpush1.xpose.msra.mxu0 0.0
        %827 = vmatprep.subr.mxu0 0.0
        %828 = vmatpush1.xpose.msra.mxu0 0.0
        %829 = vmatprep.subr.mxu0 0.0
        %830 = vmatpush1.xpose.msra.mxu0 0.0
        %831 = vmatprep.subr.mxu0 0.0
        %832 = vmatpush1.xpose.msra.mxu0 0.0
        %833 = vmatprep.subr.mxu0 0.0
        %834 = vmatpush1.xpose.msra.mxu0 %v803
        %835 = vmatprep.subr.mxu0 0.0
        %836 = vmatpush1.xpose.msra.mxu0 %v800
        %837 = vmatprep.subr.mxu0 0.0
        %838 = vmatpush2.xpose.msra.mxu0 0.0
        %839 = vmatprep.subr.mxu0 0.0
        %840 = vmatpush2.xpose.msra.mxu0 0.0
        %841 = vmatprep.subr.mxu0 0.0
        %842 = vmatpush2.xpose.msra.mxu0 0.0
        %843 = vmatprep.subr.mxu0 0.0
        %844 = vmatpush2.xpose.msra.mxu0 0.0
        %845 = vmatprep.subr.mxu0 0.0
        %846 = vmatpush2.xpose.msra.mxu0 0.0
        %847 = vmatprep.subr.mxu0 0.0
        %848 = vmatpush2.xpose.msra.mxu0 0.0
        %849 = vmatprep.subr.mxu0 0.0
        %850 = vmatpush2.xpose.msra.mxu0 0.0
        %851 = vmatprep.subr.mxu0 0.0
        %852 = vmatpush2.xpose.msra.mxu0 0.0
        %853 = vmatprep.subr.mxu0 0.0
        %854 = vmatpush2.xpose.msra.mxu0 0.0
        %855 = vmatprep.subr.mxu0 0.0
        %856 = vmatpush2.xpose.msra.mxu0 0.0
        %857 = vmatprep.subr.mxu0 0.0
        %858 = vmatpush2.xpose.msra.mxu0 0.0
        %859 = vmatprep.subr.mxu0 0.0
        %860 = vmatpush2.xpose.msra.mxu0 0.0
        %861 = vmatprep.subr.mxu0 0.0
        %862 = vmatpush2.xpose.msra.mxu0 0.0
        %863 = vmatprep.subr.mxu0 0.0
        %864 = vmatpush2.xpose.msra.mxu0 0.0
        %865 = vmatprep.subr.mxu0 0.0
        %866 = vmatpush2.xpose.msra.mxu0 0.0
        %867 = vmatprep.subr.mxu0 0.0
        %868 = vmatpush2.xpose.msra.mxu0 0.0
        %869 = vmatprep.mubr.f32.mxu0 0.0
        %870 = vmatmul.mubr.f32.gmra.mxu0 %v794
        %v871 = vpop.f32.mrf.mxu0
        %v872 = vadd.f32 0.0, %v871
        %v873 = vpop.f32.mrf.mxu0
        %874 = vmatprep.mubr.f32.mxu0 0.0
        %875 = vmatmul.mubr.f32.gmra.mxu0 %v797
        %v876 = vpop.f32.mrf.mxu0
        %v877 = vadd.f32 0.0, %v876
        %v878 = vpop.f32.mrf.mxu0
        %879 = vdwg.mxu0
        %v880 = vsub.f32 %v872, %v790
        %v881 = vsub.f32 %v877, %v791
        %v882 = vmul.f32 %v880, 0.35355338
        %v883 = vmul.f32 %v881, 0.35355338
        %vm884 = vcmask 130048
        %v885 = vsel %vm884, %v882, -inf
        %886 = vmax.xlane.f32.xlu0 %v885
        %v887 = vpop.xlane.xlu0 %886
        %v888 = vsel %vm884, %v883, -inf
        %889 = vmax.xlane.f32.xlu0 %v888
        %v890 = vpop.xlane.xlu0 %889
        %v891 = vsub.f32 %v882, %v887
        %v892 = vsub.f32 %v883, %v890
        %v893 = vmul.f32 %v891, 1.442695
        %v894 = vpow.pop %v893
        %v895 = vmul.f32 %v892, 1.442695
        %v896 = vpow.pop %v895
        %v897 = vsel %vm884, %v894, 0.0
        %898 = vadd.xlane.f32.xlu0 %v897
        %v899 = vpop.xlane.xlu0 %898
        %v900 = vsel %vm884, %v896, 0.0
        %901 = vadd.xlane.f32.xlu0 %v900
        %v902 = vpop.xlane.xlu0 %901
        %v903 = vrcp.pop %v899
        %v904 = vrcp.pop %v902
        %v905 = vmul.f32 %v899, %v903
        %v906 = vmul.f32 %v902, %v904
        %v907 = vsub.f32 2.0, %v905
        %v908 = vsub.f32 2.0, %v906
        %v909 = vmul.f32 %v903, %v907
        %v910 = vmul.f32 %v904, %v908
        %v911 = vmul.f32 %v894, %v909
        %v912 = vmul.f32 %v896, %v910
        %v914 = vsel %vm884, %v911, 0
        %v917 = vsel %vm884, %v912, 0
        %919 = vmatprep.subr.mxu0 0.0
        %920 = vmatpush1.msra.mxu0 0.0
        %921 = vmatprep.subr.mxu0 0.0
        %922 = vmatpush1.msra.mxu0 0.0
        %923 = vmatprep.subr.mxu0 0.0
        %924 = vmatpush1.msra.mxu0 0.0
        %925 = vmatprep.subr.mxu0 0.0
        %926 = vmatpush1.msra.mxu0 0.0
        %927 = vmatprep.subr.mxu0 0.0
        %928 = vmatpush1.msra.mxu0 0.0
        %929 = vmatprep.subr.mxu0 0.0
        %930 = vmatpush1.msra.mxu0 0.0
        %931 = vmatprep.subr.mxu0 0.0
        %932 = vmatpush1.msra.mxu0 0.0
        %933 = vmatprep.subr.mxu0 0.0
        %934 = vmatpush1.msra.mxu0 0.0
        %935 = vmatprep.subr.mxu0 0.0
        %936 = vmatpush1.msra.mxu0 0.0
        %937 = vmatprep.subr.mxu0 0.0
        %938 = vmatpush1.msra.mxu0 0.0
        %939 = vmatprep.subr.mxu0 0.0
        %940 = vmatpush1.msra.mxu0 0.0
        %941 = vmatprep.subr.mxu0 0.0
        %942 = vmatpush1.msra.mxu0 0.0
        %943 = vmatprep.subr.mxu0 0.0
        %944 = vmatpush1.msra.mxu0 0.0
        %945 = vmatprep.subr.mxu0 0.0
        %946 = vmatpush1.msra.mxu0 0.0
        %947 = vmatprep.subr.mxu0 0.0
        %948 = vmatpush1.msra.mxu0 %v756
        %949 = vmatprep.subr.mxu0 0.0
        %950 = vmatpush1.msra.mxu0 %v751
        %951 = vmatprep.subr.mxu0 0.0
        %952 = vmatpush2.msra.mxu0 0.0
        %953 = vmatprep.subr.mxu0 0.0
        %954 = vmatpush2.msra.mxu0 0.0
        %955 = vmatprep.subr.mxu0 0.0
        %956 = vmatpush2.msra.mxu0 0.0
        %957 = vmatprep.subr.mxu0 0.0
        %958 = vmatpush2.msra.mxu0 0.0
        %959 = vmatprep.subr.mxu0 0.0
        %960 = vmatpush2.msra.mxu0 0.0
        %961 = vmatprep.subr.mxu0 0.0
        %962 = vmatpush2.msra.mxu0 0.0
        %963 = vmatprep.subr.mxu0 0.0
        %964 = vmatpush2.msra.mxu0 0.0
        %965 = vmatprep.subr.mxu0 0.0
        %966 = vmatpush2.msra.mxu0 0.0
        %967 = vmatprep.subr.mxu0 0.0
        %968 = vmatpush2.msra.mxu0 0.0
        %969 = vmatprep.subr.mxu0 0.0
        %970 = vmatpush2.msra.mxu0 0.0
        %971 = vmatprep.subr.mxu0 0.0
        %972 = vmatpush2.msra.mxu0 0.0
        %973 = vmatprep.subr.mxu0 0.0
        %974 = vmatpush2.msra.mxu0 0.0
        %975 = vmatprep.subr.mxu0 0.0
        %976 = vmatpush2.msra.mxu0 0.0
        %977 = vmatprep.subr.mxu0 0.0
        %978 = vmatpush2.msra.mxu0 0.0
        %979 = vmatprep.subr.mxu0 0.0
        %980 = vmatpush2.msra.mxu0 0.0
        %981 = vmatprep.subr.mxu0 0.0
        %982 = vmatpush2.msra.mxu0 0.0
        %983 = vmatprep.mubr.f32.mxu0 0.0
        %984 = vmatmul.mubr.f32.gmra.mxu0 %v914
        %v985 = vpop.f32.mrf.mxu0
        %v986 = vadd.f32 0.0, %v985
        %v987 = vpop.f32.mrf.mxu0
        %988 = vmatprep.mubr.f32.mxu0 0.0
        %989 = vmatmul.mubr.f32.gmra.mxu0 %v917
        %v990 = vpop.f32.mrf.mxu0
        %v991 = vadd.f32 0.0, %v990
        %v992 = vpop.f32.mrf.mxu0
        %993 = vdwg.mxu0
        %994 = vst.msk [vmem:[#allocation2] sm:$0xff] %vm792, %v986
        %995 = vst.msk [vmem:[#allocation2 + $0x8] sm:$0xff] %vm792, %v991
        %996 = vrot.lane.b32.xlu0 %v662, 120
        %v997 = vpop.permute.xlu0 %996
        %998 = vrot.lane.b32.xlu0 %v668, 120
        %v999 = vpop.permute.xlu0 %998
        %1000 = vrot.lane.b32.xlu0 %v664, 120
        %v1001 = vpop.permute.xlu0 %1000
        %1002 = vrot.lane.b32.xlu0 %v670, 120
        %v1003 = vpop.permute.xlu0 %1002
        %v1004 = vsel %vm792, %v997, 0
        %v1006 = vsel %vm792, %v999, 0
        %v1008 = vsel %vm792, %v1001, 0
        %v1010 = vsel %vm792, %v1003, 0
        %1012 = vmatprep.subr.mxu0 0.0
        %1013 = vmatpush1.xpose.msra.mxu0 0.0
        %1014 = vmatprep.subr.mxu0 0.0
        %1015 = vmatpush1.xpose.msra.mxu0 0.0
        %1016 = vmatprep.subr.mxu0 0.0
        %1017 = vmatpush1.xpose.msra.mxu0 0.0
        %1018 = vmatprep.subr.mxu0 0.0
        %1019 = vmatpush1.xpose.msra.mxu0 0.0
        %1020 = vmatprep.subr.mxu0 0.0
        %1021 = vmatpush1.xpose.msra.mxu0 0.0
        %1022 = vmatprep.subr.mxu0 0.0
        %1023 = vmatpush1.xpose.msra.mxu0 0.0
        %1024 = vmatprep.subr.mxu0 0.0
        %1025 = vmatpush1.xpose.msra.mxu0 0.0
        %1026 = vmatprep.subr.mxu0 0.0
        %1027 = vmatpush1.xpose.msra.mxu0 0.0
        %1028 = vmatprep.subr.mxu0 0.0
        %1029 = vmatpush1.xpose.msra.mxu0 0.0
        %1030 = vmatprep.subr.mxu0 0.0
        %1031 = vmatpush1.xpose.msra.mxu0 0.0
        %1032 = vmatprep.subr.mxu0 0.0
        %1033 = vmatpush1.xpose.msra.mxu0 0.0
        %1034 = vmatprep.subr.mxu0 0.0
        %1035 = vmatpush1.xpose.msra.mxu0 0.0
        %1036 = vmatprep.subr.mxu0 0.0
        %1037 = vmatpush1.xpose.msra.mxu0 0.0
        %1038 = vmatprep.subr.mxu0 0.0
        %1039 = vmatpush1.xpose.msra.mxu0 0.0
        %1040 = vmatprep.subr.mxu0 0.0
        %1041 = vmatpush1.xpose.msra.mxu0 %v1010
        %1042 = vmatprep.subr.mxu0 0.0
        %1043 = vmatpush1.xpose.msra.mxu0 %v1008
        %1044 = vmatprep.subr.mxu0 0.0
        %1045 = vmatpush2.xpose.msra.mxu0 0.0
        %1046 = vmatprep.subr.mxu0 0.0
        %1047 = vmatpush2.xpose.msra.mxu0 0.0
        %1048 = vmatprep.subr.mxu0 0.0
        %1049 = vmatpush2.xpose.msra.mxu0 0.0
        %1050 = vmatprep.subr.mxu0 0.0
        %1051 = vmatpush2.xpose.msra.mxu0 0.0
        %1052 = vmatprep.subr.mxu0 0.0
        %1053 = vmatpush2.xpose.msra.mxu0 0.0
        %1054 = vmatprep.subr.mxu0 0.0
        %1055 = vmatpush2.xpose.msra.mxu0 0.0
        %1056 = vmatprep.subr.mxu0 0.0
        %1057 = vmatpush2.xpose.msra.mxu0 0.0
        %1058 = vmatprep.subr.mxu0 0.0
        %1059 = vmatpush2.xpose.msra.mxu0 0.0
        %1060 = vmatprep.subr.mxu0 0.0
        %1061 = vmatpush2.xpose.msra.mxu0 0.0
        %1062 = vmatprep.subr.mxu0 0.0
        %1063 = vmatpush2.xpose.msra.mxu0 0.0
        %1064 = vmatprep.subr.mxu0 0.0
        %1065 = vmatpush2.xpose.msra.mxu0 0.0
        %1066 = vmatprep.subr.mxu0 0.0
        %1067 = vmatpush2.xpose.msra.mxu0 0.0
        %1068 = vmatprep.subr.mxu0 0.0
        %1069 = vmatpush2.xpose.msra.mxu0 0.0
        %1070 = vmatprep.subr.mxu0 0.0
        %1071 = vmatpush2.xpose.msra.mxu0 0.0
        %1072 = vmatprep.subr.mxu0 0.0
        %1073 = vmatpush2.xpose.msra.mxu0 0.0
        %1074 = vmatprep.subr.mxu0 0.0
        %1075 = vmatpush2.xpose.msra.mxu0 0.0
        %1076 = vmatprep.mubr.f32.mxu0 0.0
        %1077 = vmatmul.mubr.f32.gmra.mxu0 %v1004
        %v1078 = vpop.f32.mrf.mxu0
        %v1079 = vadd.f32 0.0, %v1078
        %v1080 = vpop.f32.mrf.mxu0
        %1081 = vmatprep.mubr.f32.mxu0 0.0
        %1082 = vmatmul.mubr.f32.gmra.mxu0 %v1006
        %v1083 = vpop.f32.mrf.mxu0
        %v1084 = vadd.f32 0.0, %v1083
        %v1085 = vpop.f32.mrf.mxu0
        %1086 = vdwg.mxu0
        %v1087 = vsub.f32 %v1079, %v790
        %v1088 = vsub.f32 %v1084, %v791
        %v1089 = vmul.f32 %v1087, 0.35355338
        %v1090 = vmul.f32 %v1088, 0.35355338
        %v1091 = vsel %vm884, %v1089, -inf
        %1092 = vmax.xlane.f32.xlu0 %v1091
        %v1093 = vpop.xlane.xlu0 %1092
        %v1094 = vsel %vm884, %v1090, -inf
        %1095 = vmax.xlane.f32.xlu0 %v1094
        %v1096 = vpop.xlane.xlu0 %1095
        %v1097 = vsub.f32 %v1089, %v1093
        %v1098 = vsub.f32 %v1090, %v1096
        %v1099 = vmul.f32 %v1097, 1.442695
        %v1100 = vpow.pop %v1099
        %v1101 = vmul.f32 %v1098, 1.442695
        %v1102 = vpow.pop %v1101
        %v1103 = vsel %vm884, %v1100, 0.0
        %1104 = vadd.xlane.f32.xlu0 %v1103
        %v1105 = vpop.xlane.xlu0 %1104
        %v1106 = vsel %vm884, %v1102, 0.0
        %1107 = vadd.xlane.f32.xlu0 %v1106
        %v1108 = vpop.xlane.xlu0 %1107
        %v1109 = vrcp.pop %v1105
        %v1110 = vrcp.pop %v1108
        %v1111 = vmul.f32 %v1105, %v1109
        %v1112 = vmul.f32 %v1108, %v1110
        %v1113 = vsub.f32 2.0, %v1111
        %v1114 = vsub.f32 2.0, %v1112
        %v1115 = vmul.f32 %v1109, %v1113
        %v1116 = vmul.f32 %v1110, %v1114
        %v1117 = vmul.f32 %v1100, %v1115
        %v1118 = vmul.f32 %v1102, %v1116
        %1121 = vrot.lane.b32.xlu0 %v751, 120
        %v1122 = vpop.permute.xlu0 %1121
        %1123 = vrot.lane.b32.xlu0 %v756, 120
        %v1124 = vpop.permute.xlu0 %1123
        %v1128 = vsel %vm884, %v1117, 0
        %v1131 = vsel %vm884, %v1118, 0
        %1133 = vmatprep.subr.mxu0 0.0
        %1134 = vmatpush1.msra.mxu0 0.0
        %1135 = vmatprep.subr.mxu0 0.0
        %1136 = vmatpush1.msra.mxu0 0.0
        %1137 = vmatprep.subr.mxu0 0.0
        %1138 = vmatpush1.msra.mxu0 0.0
        %1139 = vmatprep.subr.mxu0 0.0
        %1140 = vmatpush1.msra.mxu0 0.0
        %1141 = vmatprep.subr.mxu0 0.0
        %1142 = vmatpush1.msra.mxu0 0.0
        %1143 = vmatprep.subr.mxu0 0.0
        %1144 = vmatpush1.msra.mxu0 0.0
        %1145 = vmatprep.subr.mxu0 0.0
        %1146 = vmatpush1.msra.mxu0 0.0
        %1147 = vmatprep.subr.mxu0 0.0
        %1148 = vmatpush1.msra.mxu0 0.0
        %1149 = vmatprep.subr.mxu0 0.0
        %1150 = vmatpush1.msra.mxu0 0.0
        %1151 = vmatprep.subr.mxu0 0.0
        %1152 = vmatpush1.msra.mxu0 0.0
        %1153 = vmatprep.subr.mxu0 0.0
        %1154 = vmatpush1.msra.mxu0 0.0
        %1155 = vmatprep.subr.mxu0 0.0
        %1156 = vmatpush1.msra.mxu0 0.0
        %1157 = vmatprep.subr.mxu0 0.0
        %1158 = vmatpush1.msra.mxu0 0.0
        %1159 = vmatprep.subr.mxu0 0.0
        %1160 = vmatpush1.msra.mxu0 0.0
        %1161 = vmatprep.subr.mxu0 0.0
        %1162 = vmatpush1.msra.mxu0 %v1124
        %1163 = vmatprep.subr.mxu0 0.0
        %1164 = vmatpush1.msra.mxu0 %v1122
        %1165 = vmatprep.subr.mxu0 0.0
        %1166 = vmatpush2.msra.mxu0 0.0
        %1167 = vmatprep.subr.mxu0 0.0
        %1168 = vmatpush2.msra.mxu0 0.0
        %1169 = vmatprep.subr.mxu0 0.0
        %1170 = vmatpush2.msra.mxu0 0.0
        %1171 = vmatprep.subr.mxu0 0.0
        %1172 = vmatpush2.msra.mxu0 0.0
        %1173 = vmatprep.subr.mxu0 0.0
        %1174 = vmatpush2.msra.mxu0 0.0
        %1175 = vmatprep.subr.mxu0 0.0
        %1176 = vmatpush2.msra.mxu0 0.0
        %1177 = vmatprep.subr.mxu0 0.0
        %1178 = vmatpush2.msra.mxu0 0.0
        %1179 = vmatprep.subr.mxu0 0.0
        %1180 = vmatpush2.msra.mxu0 0.0
        %1181 = vmatprep.subr.mxu0 0.0
        %1182 = vmatpush2.msra.mxu0 0.0
        %1183 = vmatprep.subr.mxu0 0.0
        %1184 = vmatpush2.msra.mxu0 0.0
        %1185 = vmatprep.subr.mxu0 0.0
        %1186 = vmatpush2.msra.mxu0 0.0
        %1187 = vmatprep.subr.mxu0 0.0
        %1188 = vmatpush2.msra.mxu0 0.0
        %1189 = vmatprep.subr.mxu0 0.0
        %1190 = vmatpush2.msra.mxu0 0.0
        %1191 = vmatprep.subr.mxu0 0.0
        %1192 = vmatpush2.msra.mxu0 0.0
        %1193 = vmatprep.subr.mxu0 0.0
        %1194 = vmatpush2.msra.mxu0 0.0
        %1195 = vmatprep.subr.mxu0 0.0
        %1196 = vmatpush2.msra.mxu0 0.0
        %1197 = vmatprep.mubr.f32.mxu0 0.0
        %1198 = vmatmul.mubr.f32.gmra.mxu0 %v1128
        %v1199 = vpop.f32.mrf.mxu0
        %v1200 = vadd.f32 0.0, %v1199
        %v1201 = vpop.f32.mrf.mxu0
        %1202 = vmatprep.mubr.f32.mxu0 0.0
        %1203 = vmatmul.mubr.f32.gmra.mxu0 %v1131
        %v1204 = vpop.f32.mrf.mxu0
        %v1205 = vadd.f32 0.0, %v1204
        %v1206 = vpop.f32.mrf.mxu0
        %1207 = vdwg.mxu0
        %1210 = vrot.lane.b32.xlu0 %v1200, 8
        %v1211 = vpop.permute.xlu0 %1210
        %1212 = vrot.lane.b32.xlu0 %v1205, 8
        %v1213 = vpop.permute.xlu0 %1212
        %vm1216 = vcmask 130112
        %1217 = vst.msk [vmem:[#allocation2] sm:$0xff] %vm1216, %v1211
        %1218 = vst.msk [vmem:[#allocation2 + $0x8] sm:$0xff] %vm1216, %v1213
        %1219 = vrot.lane.b32.xlu0 %v662, 112
        %v1220 = vpop.permute.xlu0 %1219
        %1221 = vrot.lane.b32.xlu0 %v668, 112
        %v1222 = vpop.permute.xlu0 %1221
        %1223 = vrot.lane.b32.xlu0 %v664, 112
        %v1224 = vpop.permute.xlu0 %1223
        %1225 = vrot.lane.b32.xlu0 %v670, 112
        %v1226 = vpop.permute.xlu0 %1225
        %v1227 = vsel %vm792, %v1220, 0
        %v1229 = vsel %vm792, %v1222, 0
        %v1231 = vsel %vm792, %v1224, 0
        %v1233 = vsel %vm792, %v1226, 0
        %1235 = vmatprep.subr.mxu0 0.0
        %1236 = vmatpush1.xpose.msra.mxu0 0.0
        %1237 = vmatprep.subr.mxu0 0.0
        %1238 = vmatpush1.xpose.msra.mxu0 0.0
        %1239 = vmatprep.subr.mxu0 0.0
        %1240 = vmatpush1.xpose.msra.mxu0 0.0
        %1241 = vmatprep.subr.mxu0 0.0
        %1242 = vmatpush1.xpose.msra.mxu0 0.0
        %1243 = vmatprep.subr.mxu0 0.0
        %1244 = vmatpush1.xpose.msra.mxu0 0.0
        %1245 = vmatprep.subr.mxu0 0.0
        %1246 = vmatpush1.xpose.msra.mxu0 0.0
        %1247 = vmatprep.subr.mxu0 0.0
        %1248 = vmatpush1.xpose.msra.mxu0 0.0
        %1249 = vmatprep.subr.mxu0 0.0
        %1250 = vmatpush1.xpose.msra.mxu0 0.0
        %1251 = vmatprep.subr.mxu0 0.0
        %1252 = vmatpush1.xpose.msra.mxu0 0.0
        %1253 = vmatprep.subr.mxu0 0.0
        %1254 = vmatpush1.xpose.msra.mxu0 0.0
        %1255 = vmatprep.subr.mxu0 0.0
        %1256 = vmatpush1.xpose.msra.mxu0 0.0
        %1257 = vmatprep.subr.mxu0 0.0
        %1258 = vmatpush1.xpose.msra.mxu0 0.0
        %1259 = vmatprep.subr.mxu0 0.0
        %1260 = vmatpush1.xpose.msra.mxu0 0.0
        %1261 = vmatprep.subr.mxu0 0.0
        %1262 = vmatpush1.xpose.msra.mxu0 0.0
        %1263 = vmatprep.subr.mxu0 0.0
        %1264 = vmatpush1.xpose.msra.mxu0 %v1233
        %1265 = vmatprep.subr.mxu0 0.0
        %1266 = vmatpush1.xpose.msra.mxu0 %v1231
        %1267 = vmatprep.subr.mxu0 0.0
        %1268 = vmatpush2.xpose.msra.mxu0 0.0
        %1269 = vmatprep.subr.mxu0 0.0
        %1270 = vmatpush2.xpose.msra.mxu0 0.0
        %1271 = vmatprep.subr.mxu0 0.0
        %1272 = vmatpush2.xpose.msra.mxu0 0.0
        %1273 = vmatprep.subr.mxu0 0.0
        %1274 = vmatpush2.xpose.msra.mxu0 0.0
        %1275 = vmatprep.subr.mxu0 0.0
        %1276 = vmatpush2.xpose.msra.mxu0 0.0
        %1277 = vmatprep.subr.mxu0 0.0
        %1278 = vmatpush2.xpose.msra.mxu0 0.0
        %1279 = vmatprep.subr.mxu0 0.0
        %1280 = vmatpush2.xpose.msra.mxu0 0.0
        %1281 = vmatprep.subr.mxu0 0.0
        %1282 = vmatpush2.xpose.msra.mxu0 0.0
        %1283 = vmatprep.subr.mxu0 0.0
        %1284 = vmatpush2.xpose.msra.mxu0 0.0
        %1285 = vmatprep.subr.mxu0 0.0
        %1286 = vmatpush2.xpose.msra.mxu0 0.0
        %1287 = vmatprep.subr.mxu0 0.0
        %1288 = vmatpush2.xpose.msra.mxu0 0.0
        %1289 = vmatprep.subr.mxu0 0.0
        %1290 = vmatpush2.xpose.msra.mxu0 0.0
        %1291 = vmatprep.subr.mxu0 0.0
        %1292 = vmatpush2.xpose.msra.mxu0 0.0
        %1293 = vmatprep.subr.mxu0 0.0
        %1294 = vmatpush2.xpose.msra.mxu0 0.0
        %1295 = vmatprep.subr.mxu0 0.0
        %1296 = vmatpush2.xpose.msra.mxu0 0.0
        %1297 = vmatprep.subr.mxu0 0.0
        %1298 = vmatpush2.xpose.msra.mxu0 0.0
        %1299 = vmatprep.mubr.f32.mxu0 0.0
        %1300 = vmatmul.mubr.f32.gmra.mxu0 %v1227
        %v1301 = vpop.f32.mrf.mxu0
        %v1302 = vadd.f32 0.0, %v1301
        %v1303 = vpop.f32.mrf.mxu0
        %1304 = vmatprep.mubr.f32.mxu0 0.0
        %1305 = vmatmul.mubr.f32.gmra.mxu0 %v1229
        %v1306 = vpop.f32.mrf.mxu0
        %v1307 = vadd.f32 0.0, %v1306
        %v1308 = vpop.f32.mrf.mxu0
        %1309 = vdwg.mxu0
        %v1310 = vsub.f32 %v1302, %v790
        %v1311 = vsub.f32 %v1307, %v791
        %v1312 = vmul.f32 %v1310, 0.35355338
        %v1313 = vmul.f32 %v1311, 0.35355338
        %v1314 = vsel %vm884, %v1312, -inf
        %1315 = vmax.xlane.f32.xlu0 %v1314
        %v1316 = vpop.xlane.xlu0 %1315
        %v1317 = vsel %vm884, %v1313, -inf
        %1318 = vmax.xlane.f32.xlu0 %v1317
        %v1319 = vpop.xlane.xlu0 %1318
        %v1320 = vsub.f32 %v1312, %v1316
        %v1321 = vsub.f32 %v1313, %v1319
        %v1322 = vmul.f32 %v1320, 1.442695
        %v1323 = vpow.pop %v1322
        %v1324 = vmul.f32 %v1321, 1.442695
        %v1325 = vpow.pop %v1324
        %v1326 = vsel %vm884, %v1323, 0.0
        %1327 = vadd.xlane.f32.xlu0 %v1326
        %v1328 = vpop.xlane.xlu0 %1327
        %v1329 = vsel %vm884, %v1325, 0.0
        %1330 = vadd.xlane.f32.xlu0 %v1329
        %v1331 = vpop.xlane.xlu0 %1330
        %v1332 = vrcp.pop %v1328
        %v1333 = vrcp.pop %v1331
        %v1334 = vmul.f32 %v1328, %v1332
        %v1335 = vmul.f32 %v1331, %v1333
        %v1336 = vsub.f32 2.0, %v1334
        %v1337 = vsub.f32 2.0, %v1335
        %v1338 = vmul.f32 %v1332, %v1336
        %v1339 = vmul.f32 %v1333, %v1337
        %v1340 = vmul.f32 %v1323, %v1338
        %v1341 = vmul.f32 %v1325, %v1339
        %1342 = vrot.lane.b32.xlu0 %v751, 112
        %v1343 = vpop.permute.xlu0 %1342
        %1344 = vrot.lane.b32.xlu0 %v756, 112
        %v1345 = vpop.permute.xlu0 %1344
        %v1349 = vsel %vm884, %v1340, 0
        %v1352 = vsel %vm884, %v1341, 0
        %1354 = vmatprep.subr.mxu0 0.0
        %1355 = vmatpush1.msra.mxu0 0.0
        %1356 = vmatprep.subr.mxu0 0.0
        %1357 = vmatpush1.msra.mxu0 0.0
        %1358 = vmatprep.subr.mxu0 0.0
        %1359 = vmatpush1.msra.mxu0 0.0
        %1360 = vmatprep.subr.mxu0 0.0
        %1361 = vmatpush1.msra.mxu0 0.0
        %1362 = vmatprep.subr.mxu0 0.0
        %1363 = vmatpush1.msra.mxu0 0.0
        %1364 = vmatprep.subr.mxu0 0.0
        %1365 = vmatpush1.msra.mxu0 0.0
        %1366 = vmatprep.subr.mxu0 0.0
        %1367 = vmatpush1.msra.mxu0 0.0
        %1368 = vmatprep.subr.mxu0 0.0
        %1369 = vmatpush1.msra.mxu0 0.0
        %1370 = vmatprep.subr.mxu0 0.0
        %1371 = vmatpush1.msra.mxu0 0.0
        %1372 = vmatprep.subr.mxu0 0.0
        %1373 = vmatpush1.msra.mxu0 0.0
        %1374 = vmatprep.subr.mxu0 0.0
        %1375 = vmatpush1.msra.mxu0 0.0
        %1376 = vmatprep.subr.mxu0 0.0
        %1377 = vmatpush1.msra.mxu0 0.0
        %1378 = vmatprep.subr.mxu0 0.0
        %1379 = vmatpush1.msra.mxu0 0.0
        %1380 = vmatprep.subr.mxu0 0.0
        %1381 = vmatpush1.msra.mxu0 0.0
        %1382 = vmatprep.subr.mxu0 0.0
        %1383 = vmatpush1.msra.mxu0 %v1345
        %1384 = vmatprep.subr.mxu0 0.0
        %1385 = vmatpush1.msra.mxu0 %v1343
        %1386 = vmatprep.subr.mxu0 0.0
        %1387 = vmatpush2.msra.mxu0 0.0
        %1388 = vmatprep.subr.mxu0 0.0
        %1389 = vmatpush2.msra.mxu0 0.0
        %1390 = vmatprep.subr.mxu0 0.0
        %1391 = vmatpush2.msra.mxu0 0.0
        %1392 = vmatprep.subr.mxu0 0.0
        %1393 = vmatpush2.msra.mxu0 0.0
        %1394 = vmatprep.subr.mxu0 0.0
        %1395 = vmatpush2.msra.mxu0 0.0
        %1396 = vmatprep.subr.mxu0 0.0
        %1397 = vmatpush2.msra.mxu0 0.0
        %1398 = vmatprep.subr.mxu0 0.0
        %1399 = vmatpush2.msra.mxu0 0.0
        %1400 = vmatprep.subr.mxu0 0.0
        %1401 = vmatpush2.msra.mxu0 0.0
        %1402 = vmatprep.subr.mxu0 0.0
        %1403 = vmatpush2.msra.mxu0 0.0
        %1404 = vmatprep.subr.mxu0 0.0
        %1405 = vmatpush2.msra.mxu0 0.0
        %1406 = vmatprep.subr.mxu0 0.0
        %1407 = vmatpush2.msra.mxu0 0.0
        %1408 = vmatprep.subr.mxu0 0.0
        %1409 = vmatpush2.msra.mxu0 0.0
        %1410 = vmatprep.subr.mxu0 0.0
        %1411 = vmatpush2.msra.mxu0 0.0
        %1412 = vmatprep.subr.mxu0 0.0
        %1413 = vmatpush2.msra.mxu0 0.0
        %1414 = vmatprep.subr.mxu0 0.0
        %1415 = vmatpush2.msra.mxu0 0.0
        %1416 = vmatprep.subr.mxu0 0.0
        %1417 = vmatpush2.msra.mxu0 0.0
        %1418 = vmatprep.mubr.f32.mxu0 0.0
        %1419 = vmatmul.mubr.f32.gmra.mxu0 %v1349
        %v1420 = vpop.f32.mrf.mxu0
        %v1421 = vadd.f32 0.0, %v1420
        %v1422 = vpop.f32.mrf.mxu0
        %1423 = vmatprep.mubr.f32.mxu0 0.0
        %1424 = vmatmul.mubr.f32.gmra.mxu0 %v1352
        %v1425 = vpop.f32.mrf.mxu0
        %v1426 = vadd.f32 0.0, %v1425
        %v1427 = vpop.f32.mrf.mxu0
        %1428 = vdwg.mxu0
        %1431 = vrot.lane.b32.xlu0 %v1421, 16
        %v1432 = vpop.permute.xlu0 %1431
        %1433 = vrot.lane.b32.xlu0 %v1426, 16
        %v1434 = vpop.permute.xlu0 %1433
        %vm1437 = vcmask 195712
        %1438 = vst.msk [vmem:[#allocation2] sm:$0xff] %vm1437, %v1432
        %1439 = vst.msk [vmem:[#allocation2 + $0x8] sm:$0xff] %vm1437, %v1434
        %1440 = vrot.lane.b32.xlu0 %v662, 104
        %v1441 = vpop.permute.xlu0 %1440
        %1442 = vrot.lane.b32.xlu0 %v668, 104
        %v1443 = vpop.permute.xlu0 %1442
        %1444 = vrot.lane.b32.xlu0 %v664, 104
        %v1445 = vpop.permute.xlu0 %1444
        %1446 = vrot.lane.b32.xlu0 %v670, 104
        %v1447 = vpop.permute.xlu0 %1446
        %v1448 = vsel %vm792, %v1441, 0
        %v1450 = vsel %vm792, %v1443, 0
        %v1452 = vsel %vm792, %v1445, 0
        %v1454 = vsel %vm792, %v1447, 0
        %1456 = vmatprep.subr.mxu0 0.0
        %1457 = vmatpush1.xpose.msra.mxu0 0.0
        %1458 = vmatprep.subr.mxu0 0.0
        %1459 = vmatpush1.xpose.msra.mxu0 0.0
        %1460 = vmatprep.subr.mxu0 0.0
        %1461 = vmatpush1.xpose.msra.mxu0 0.0
        %1462 = vmatprep.subr.mxu0 0.0
        %1463 = vmatpush1.xpose.msra.mxu0 0.0
        %1464 = vmatprep.subr.mxu0 0.0
        %1465 = vmatpush1.xpose.msra.mxu0 0.0
        %1466 = vmatprep.subr.mxu0 0.0
        %1467 = vmatpush1.xpose.msra.mxu0 0.0
        %1468 = vmatprep.subr.mxu0 0.0
        %1469 = vmatpush1.xpose.msra.mxu0 0.0
        %1470 = vmatprep.subr.mxu0 0.0
        %1471 = vmatpush1.xpose.msra.mxu0 0.0
        %1472 = vmatprep.subr.mxu0 0.0
        %1473 = vmatpush1.xpose.msra.mxu0 0.0
        %1474 = vmatprep.subr.mxu0 0.0
        %1475 = vmatpush1.xpose.msra.mxu0 0.0
        %1476 = vmatprep.subr.mxu0 0.0
        %1477 = vmatpush1.xpose.msra.mxu0 0.0
        %1478 = vmatprep.subr.mxu0 0.0
        %1479 = vmatpush1.xpose.msra.mxu0 0.0
        %1480 = vmatprep.subr.mxu0 0.0
        %1481 = vmatpush1.xpose.msra.mxu0 0.0
        %1482 = vmatprep.subr.mxu0 0.0
        %1483 = vmatpush1.xpose.msra.mxu0 0.0
        %1484 = vmatprep.subr.mxu0 0.0
        %1485 = vmatpush1.xpose.msra.mxu0 %v1454
        %1486 = vmatprep.subr.mxu0 0.0
        %1487 = vmatpush1.xpose.msra.mxu0 %v1452
        %1488 = vmatprep.subr.mxu0 0.0
        %1489 = vmatpush2.xpose.msra.mxu0 0.0
        %1490 = vmatprep.subr.mxu0 0.0
        %1491 = vmatpush2.xpose.msra.mxu0 0.0
        %1492 = vmatprep.subr.mxu0 0.0
        %1493 = vmatpush2.xpose.msra.mxu0 0.0
        %1494 = vmatprep.subr.mxu0 0.0
        %1495 = vmatpush2.xpose.msra.mxu0 0.0
        %1496 = vmatprep.subr.mxu0 0.0
        %1497 = vmatpush2.xpose.msra.mxu0 0.0
        %1498 = vmatprep.subr.mxu0 0.0
        %1499 = vmatpush2.xpose.msra.mxu0 0.0
        %1500 = vmatprep.subr.mxu0 0.0
        %1501 = vmatpush2.xpose.msra.mxu0 0.0
        %1502 = vmatprep.subr.mxu0 0.0
        %1503 = vmatpush2.xpose.msra.mxu0 0.0
        %1504 = vmatprep.subr.mxu0 0.0
        %1505 = vmatpush2.xpose.msra.mxu0 0.0
        %1506 = vmatprep.subr.mxu0 0.0
        %1507 = vmatpush2.xpose.msra.mxu0 0.0
        %1508 = vmatprep.subr.mxu0 0.0
        %1509 = vmatpush2.xpose.msra.mxu0 0.0
        %1510 = vmatprep.subr.mxu0 0.0
        %1511 = vmatpush2.xpose.msra.mxu0 0.0
        %1512 = vmatprep.subr.mxu0 0.0
        %1513 = vmatpush2.xpose.msra.mxu0 0.0
        %1514 = vmatprep.subr.mxu0 0.0
        %1515 = vmatpush2.xpose.msra.mxu0 0.0
        %1516 = vmatprep.subr.mxu0 0.0
        %1517 = vmatpush2.xpose.msra.mxu0 0.0
        %1518 = vmatprep.subr.mxu0 0.0
        %1519 = vmatpush2.xpose.msra.mxu0 0.0
        %1520 = vmatprep.mubr.f32.mxu0 0.0
        %1521 = vmatmul.mubr.f32.gmra.mxu0 %v1448
        %v1522 = vpop.f32.mrf.mxu0
        %v1523 = vadd.f32 0.0, %v1522
        %v1524 = vpop.f32.mrf.mxu0
        %1525 = vmatprep.mubr.f32.mxu0 0.0
        %1526 = vmatmul.mubr.f32.gmra.mxu0 %v1450
        %v1527 = vpop.f32.mrf.mxu0
        %v1528 = vadd.f32 0.0, %v1527
        %v1529 = vpop.f32.mrf.mxu0
        %1530 = vdwg.mxu0
        %v1531 = vsub.f32 %v1523, %v790
        %v1532 = vsub.f32 %v1528, %v791
        %v1533 = vmul.f32 %v1531, 0.35355338
        %v1534 = vmul.f32 %v1532, 0.35355338
        %v1535 = vsel %vm884, %v1533, -inf
        %1536 = vmax.xlane.f32.xlu0 %v1535
        %v1537 = vpop.xlane.xlu0 %1536
        %v1538 = vsel %vm884, %v1534, -inf
        %1539 = vmax.xlane.f32.xlu0 %v1538
        %v1540 = vpop.xlane.xlu0 %1539
        %v1541 = vsub.f32 %v1533, %v1537
        %v1542 = vsub.f32 %v1534, %v1540
        %v1543 = vmul.f32 %v1541, 1.442695
        %v1544 = vpow.pop %v1543
        %v1545 = vmul.f32 %v1542, 1.442695
        %v1546 = vpow.pop %v1545
        %v1547 = vsel %vm884, %v1544, 0.0
        %1548 = vadd.xlane.f32.xlu0 %v1547
        %v1549 = vpop.xlane.xlu0 %1548
        %v1550 = vsel %vm884, %v1546, 0.0
        %1551 = vadd.xlane.f32.xlu0 %v1550
        %v1552 = vpop.xlane.xlu0 %1551
        %v1553 = vrcp.pop %v1549
        %v1554 = vrcp.pop %v1552
        %v1555 = vmul.f32 %v1549, %v1553
        %v1556 = vmul.f32 %v1552, %v1554
        %v1557 = vsub.f32 2.0, %v1555
        %v1558 = vsub.f32 2.0, %v1556
        %v1559 = vmul.f32 %v1553, %v1557
        %v1560 = vmul.f32 %v1554, %v1558
        %v1561 = vmul.f32 %v1544, %v1559
        %v1562 = vmul.f32 %v1546, %v1560
        %1563 = vrot.lane.b32.xlu0 %v751, 104
        %v1564 = vpop.permute.xlu0 %1563
        %1565 = vrot.lane.b32.xlu0 %v756, 104
        %v1566 = vpop.permute.xlu0 %1565
        %v1570 = vsel %vm884, %v1561, 0
        %v1573 = vsel %vm884, %v1562, 0
        %1575 = vmatprep.subr.mxu0 0.0
        %1576 = vmatpush1.msra.mxu0 0.0
        %1577 = vmatprep.subr.mxu0 0.0
        %1578 = vmatpush1.msra.mxu0 0.0
        %1579 = vmatprep.subr.mxu0 0.0
        %1580 = vmatpush1.msra.mxu0 0.0
        %1581 = vmatprep.subr.mxu0 0.0
        %1582 = vmatpush1.msra.mxu0 0.0
        %1583 = vmatprep.subr.mxu0 0.0
        %1584 = vmatpush1.msra.mxu0 0.0
        %1585 = vmatprep.subr.mxu0 0.0
        %1586 = vmatpush1.msra.mxu0 0.0
        %1587 = vmatprep.subr.mxu0 0.0
        %1588 = vmatpush1.msra.mxu0 0.0
        %1589 = vmatprep.subr.mxu0 0.0
        %1590 = vmatpush1.msra.mxu0 0.0
        %1591 = vmatprep.subr.mxu0 0.0
        %1592 = vmatpush1.msra.mxu0 0.0
        %1593 = vmatprep.subr.mxu0 0.0
        %1594 = vmatpush1.msra.mxu0 0.0
        %1595 = vmatprep.subr.mxu0 0.0
        %1596 = vmatpush1.msra.mxu0 0.0
        %1597 = vmatprep.subr.mxu0 0.0
        %1598 = vmatpush1.msra.mxu0 0.0
        %1599 = vmatprep.subr.mxu0 0.0
        %1600 = vmatpush1.msra.mxu0 0.0
        %1601 = vmatprep.subr.mxu0 0.0
        %1602 = vmatpush1.msra.mxu0 0.0
        %1603 = vmatprep.subr.mxu0 0.0
        %1604 = vmatpush1.msra.mxu0 %v1566
        %1605 = vmatprep.subr.mxu0 0.0
        %1606 = vmatpush1.msra.mxu0 %v1564
        %1607 = vmatprep.subr.mxu0 0.0
        %1608 = vmatpush2.msra.mxu0 0.0
        %1609 = vmatprep.subr.mxu0 0.0
        %1610 = vmatpush2.msra.mxu0 0.0
        %1611 = vmatprep.subr.mxu0 0.0
        %1612 = vmatpush2.msra.mxu0 0.0
        %1613 = vmatprep.subr.mxu0 0.0
        %1614 = vmatpush2.msra.mxu0 0.0
        %1615 = vmatprep.subr.mxu0 0.0
        %1616 = vmatpush2.msra.mxu0 0.0
        %1617 = vmatprep.subr.mxu0 0.0
        %1618 = vmatpush2.msra.mxu0 0.0
        %1619 = vmatprep.subr.mxu0 0.0
        %1620 = vmatpush2.msra.mxu0 0.0
        %1621 = vmatprep.subr.mxu0 0.0
        %1622 = vmatpush2.msra.mxu0 0.0
        %1623 = vmatprep.subr.mxu0 0.0
        %1624 = vmatpush2.msra.mxu0 0.0
        %1625 = vmatprep.subr.mxu0 0.0
        %1626 = vmatpush2.msra.mxu0 0.0
        %1627 = vmatprep.subr.mxu0 0.0
        %1628 = vmatpush2.msra.mxu0 0.0
        %1629 = vmatprep.subr.mxu0 0.0
        %1630 = vmatpush2.msra.mxu0 0.0
        %1631 = vmatprep.subr.mxu0 0.0
        %1632 = vmatpush2.msra.mxu0 0.0
        %1633 = vmatprep.subr.mxu0 0.0
        %1634 = vmatpush2.msra.mxu0 0.0
        %1635 = vmatprep.subr.mxu0 0.0
        %1636 = vmatpush2.msra.mxu0 0.0
        %1637 = vmatprep.subr.mxu0 0.0
        %1638 = vmatpush2.msra.mxu0 0.0
        %1639 = vmatprep.mubr.f32.mxu0 0.0
        %1640 = vmatmul.mubr.f32.gmra.mxu0 %v1570
        %v1641 = vpop.f32.mrf.mxu0
        %v1642 = vadd.f32 0.0, %v1641
        %v1643 = vpop.f32.mrf.mxu0
        %1644 = vmatprep.mubr.f32.mxu0 0.0
        %1645 = vmatmul.mubr.f32.gmra.mxu0 %v1573
        %v1646 = vpop.f32.mrf.mxu0
        %v1647 = vadd.f32 0.0, %v1646
        %v1648 = vpop.f32.mrf.mxu0
        %1649 = vdwg.mxu0
        %1652 = vrot.lane.b32.xlu0 %v1642, 24
        %v1653 = vpop.permute.xlu0 %1652
        %1654 = vrot.lane.b32.xlu0 %v1647, 24
        %v1655 = vpop.permute.xlu0 %1654
        %vm1658 = vcmask 261312
        %1659 = vst.msk [vmem:[#allocation2] sm:$0xff] %vm1658, %v1653
        %1660 = vst.msk [vmem:[#allocation2 + $0x8] sm:$0xff] %vm1658, %v1655
        %s1661 = scalar_lea.vmem %s510, 1
        %v1662 = vld [vmem:[%s1661] sm:$0x1]
        %1664 = vset.pattern.permute.xlu0 0
        %1665 = vperm.xlu0 %1664, %v524
        %v1666 = vpop.permute.xlu0 %1665
        %1669 = vset.pattern.permute.xlu0 0
        %1670 = vperm.xlu0 %1669, %v525
        %v1671 = vpop.permute.xlu0 %1670
        %v1674 = vlaneseq
        %v1675 = vshrl.u32 %v1674, 7
        %v1676 = vsub.s32 0, %v1675
        %v1677 = vrot.slane %v1662, %v1676
        %v1679 = vmul.f32 %v1666, %v1677
        %v1680 = vmul.f32 %v1671, %v1677
        %v1681 = vsub.f32 1.0, %v1679
        %v1682 = vsub.f32 1.0, %v1680
        %v1683 = vmul.f32 %v1681, 100000.0
        %v1684 = vmul.f32 %v1682, 100000.0
        %v1686 = vsel %vm792, %v674, 0
        %v1689 = vsel %vm792, %v680, 0
        %v1692 = vsel %vm792, %v676, 0
        %v1695 = vsel %vm792, %v682, 0
        %1697 = vmatprep.subr.mxu0 0.0
        %1698 = vmatpush1.xpose.msra.mxu0 0.0
        %1699 = vmatprep.subr.mxu0 0.0
        %1700 = vmatpush1.xpose.msra.mxu0 0.0
        %1701 = vmatprep.subr.mxu0 0.0
        %1702 = vmatpush1.xpose.msra.mxu0 0.0
        %1703 = vmatprep.subr.mxu0 0.0
        %1704 = vmatpush1.xpose.msra.mxu0 0.0
        %1705 = vmatprep.subr.mxu0 0.0
        %1706 = vmatpush1.xpose.msra.mxu0 0.0
        %1707 = vmatprep.subr.mxu0 0.0
        %1708 = vmatpush1.xpose.msra.mxu0 0.0
        %1709 = vmatprep.subr.mxu0 0.0
        %1710 = vmatpush1.xpose.msra.mxu0 0.0
        %1711 = vmatprep.subr.mxu0 0.0
        %1712 = vmatpush1.xpose.msra.mxu0 0.0
        %1713 = vmatprep.subr.mxu0 0.0
        %1714 = vmatpush1.xpose.msra.mxu0 0.0
        %1715 = vmatprep.subr.mxu0 0.0
        %1716 = vmatpush1.xpose.msra.mxu0 0.0
        %1717 = vmatprep.subr.mxu0 0.0
        %1718 = vmatpush1.xpose.msra.mxu0 0.0
        %1719 = vmatprep.subr.mxu0 0.0
        %1720 = vmatpush1.xpose.msra.mxu0 0.0
        %1721 = vmatprep.subr.mxu0 0.0
        %1722 = vmatpush1.xpose.msra.mxu0 0.0
        %1723 = vmatprep.subr.mxu0 0.0
        %1724 = vmatpush1.xpose.msra.mxu0 0.0
        %1725 = vmatprep.subr.mxu0 0.0
        %1726 = vmatpush1.xpose.msra.mxu0 %v1695
        %1727 = vmatprep.subr.mxu0 0.0
        %1728 = vmatpush1.xpose.msra.mxu0 %v1692
        %1729 = vmatprep.subr.mxu0 0.0
        %1730 = vmatpush2.xpose.msra.mxu0 0.0
        %1731 = vmatprep.subr.mxu0 0.0
        %1732 = vmatpush2.xpose.msra.mxu0 0.0
        %1733 = vmatprep.subr.mxu0 0.0
        %1734 = vmatpush2.xpose.msra.mxu0 0.0
        %1735 = vmatprep.subr.mxu0 0.0
        %1736 = vmatpush2.xpose.msra.mxu0 0.0
        %1737 = vmatprep.subr.mxu0 0.0
        %1738 = vmatpush2.xpose.msra.mxu0 0.0
        %1739 = vmatprep.subr.mxu0 0.0
        %1740 = vmatpush2.xpose.msra.mxu0 0.0
        %1741 = vmatprep.subr.mxu0 0.0
        %1742 = vmatpush2.xpose.msra.mxu0 0.0
        %1743 = vmatprep.subr.mxu0 0.0
        %1744 = vmatpush2.xpose.msra.mxu0 0.0
        %1745 = vmatprep.subr.mxu0 0.0
        %1746 = vmatpush2.xpose.msra.mxu0 0.0
        %1747 = vmatprep.subr.mxu0 0.0
        %1748 = vmatpush2.xpose.msra.mxu0 0.0
        %1749 = vmatprep.subr.mxu0 0.0
        %1750 = vmatpush2.xpose.msra.mxu0 0.0
        %1751 = vmatprep.subr.mxu0 0.0
        %1752 = vmatpush2.xpose.msra.mxu0 0.0
        %1753 = vmatprep.subr.mxu0 0.0
        %1754 = vmatpush2.xpose.msra.mxu0 0.0
        %1755 = vmatprep.subr.mxu0 0.0
        %1756 = vmatpush2.xpose.msra.mxu0 0.0
        %1757 = vmatprep.subr.mxu0 0.0
        %1758 = vmatpush2.xpose.msra.mxu0 0.0
        %1759 = vmatprep.subr.mxu0 0.0
        %1760 = vmatpush2.xpose.msra.mxu0 0.0
        %1761 = vmatprep.mubr.f32.mxu0 0.0
        %1762 = vmatmul.mubr.f32.gmra.mxu0 %v1686
        %v1763 = vpop.f32.mrf.mxu0
        %v1764 = vadd.f32 0.0, %v1763
        %v1765 = vpop.f32.mrf.mxu0
        %1766 = vmatprep.mubr.f32.mxu0 0.0
        %1767 = vmatmul.mubr.f32.gmra.mxu0 %v1689
        %v1768 = vpop.f32.mrf.mxu0
        %v1769 = vadd.f32 0.0, %v1768
        %v1770 = vpop.f32.mrf.mxu0
        %1771 = vdwg.mxu0
        %v1772 = vsub.f32 %v1764, %v1683
        %v1773 = vsub.f32 %v1769, %v1684
        %v1774 = vmul.f32 %v1772, 0.35355338
        %v1775 = vmul.f32 %v1773, 0.35355338
        %v1776 = vsel %vm884, %v1774, -inf
        %1777 = vmax.xlane.f32.xlu0 %v1776
        %v1778 = vpop.xlane.xlu0 %1777
        %v1779 = vsel %vm884, %v1775, -inf
        %1780 = vmax.xlane.f32.xlu0 %v1779
        %v1781 = vpop.xlane.xlu0 %1780
        %v1782 = vsub.f32 %v1774, %v1778
        %v1783 = vsub.f32 %v1775, %v1781
        %v1784 = vmul.f32 %v1782, 1.442695
        %v1785 = vpow.pop %v1784
        %v1786 = vmul.f32 %v1783, 1.442695
        %v1787 = vpow.pop %v1786
        %v1788 = vsel %vm884, %v1785, 0.0
        %1789 = vadd.xlane.f32.xlu0 %v1788
        %v1790 = vpop.xlane.xlu0 %1789
        %v1791 = vsel %vm884, %v1787, 0.0
        %1792 = vadd.xlane.f32.xlu0 %v1791
        %v1793 = vpop.xlane.xlu0 %1792
        %v1794 = vrcp.pop %v1790
        %v1795 = vrcp.pop %v1793
        %v1796 = vmul.f32 %v1790, %v1794
        %v1797 = vmul.f32 %v1793, %v1795
        %v1798 = vsub.f32 2.0, %v1796
        %v1799 = vsub.f32 2.0, %v1797
        %v1800 = vmul.f32 %v1794, %v1798
        %v1801 = vmul.f32 %v1795, %v1799
        %v1802 = vmul.f32 %v1785, %v1800
        %v1803 = vmul.f32 %v1787, %v1801
        %v1805 = vsel %vm884, %v1802, 0
        %v1808 = vsel %vm884, %v1803, 0
        %1810 = vmatprep.subr.mxu0 0.0
        %1811 = vmatpush1.msra.mxu0 0.0
        %1812 = vmatprep.subr.mxu0 0.0
        %1813 = vmatpush1.msra.mxu0 0.0
        %1814 = vmatprep.subr.mxu0 0.0
        %1815 = vmatpush1.msra.mxu0 0.0
        %1816 = vmatprep.subr.mxu0 0.0
        %1817 = vmatpush1.msra.mxu0 0.0
        %1818 = vmatprep.subr.mxu0 0.0
        %1819 = vmatpush1.msra.mxu0 0.0
        %1820 = vmatprep.subr.mxu0 0.0
        %1821 = vmatpush1.msra.mxu0 0.0
        %1822 = vmatprep.subr.mxu0 0.0
        %1823 = vmatpush1.msra.mxu0 0.0
        %1824 = vmatprep.subr.mxu0 0.0
        %1825 = vmatpush1.msra.mxu0 0.0
        %1826 = vmatprep.subr.mxu0 0.0
        %1827 = vmatpush1.msra.mxu0 0.0
        %1828 = vmatprep.subr.mxu0 0.0
        %1829 = vmatpush1.msra.mxu0 0.0
        %1830 = vmatprep.subr.mxu0 0.0
        %1831 = vmatpush1.msra.mxu0 0.0
        %1832 = vmatprep.subr.mxu0 0.0
        %1833 = vmatpush1.msra.mxu0 0.0
        %1834 = vmatprep.subr.mxu0 0.0
        %1835 = vmatpush1.msra.mxu0 0.0
        %1836 = vmatprep.subr.mxu0 0.0
        %1837 = vmatpush1.msra.mxu0 0.0
        %1838 = vmatprep.subr.mxu0 0.0
        %1839 = vmatpush1.msra.mxu0 %v766
        %1840 = vmatprep.subr.mxu0 0.0
        %1841 = vmatpush1.msra.mxu0 %v761
        %1842 = vmatprep.subr.mxu0 0.0
        %1843 = vmatpush2.msra.mxu0 0.0
        %1844 = vmatprep.subr.mxu0 0.0
        %1845 = vmatpush2.msra.mxu0 0.0
        %1846 = vmatprep.subr.mxu0 0.0
        %1847 = vmatpush2.msra.mxu0 0.0
        %1848 = vmatprep.subr.mxu0 0.0
        %1849 = vmatpush2.msra.mxu0 0.0
        %1850 = vmatprep.subr.mxu0 0.0
        %1851 = vmatpush2.msra.mxu0 0.0
        %1852 = vmatprep.subr.mxu0 0.0
        %1853 = vmatpush2.msra.mxu0 0.0
        %1854 = vmatprep.subr.mxu0 0.0
        %1855 = vmatpush2.msra.mxu0 0.0
        %1856 = vmatprep.subr.mxu0 0.0
        %1857 = vmatpush2.msra.mxu0 0.0
        %1858 = vmatprep.subr.mxu0 0.0
        %1859 = vmatpush2.msra.mxu0 0.0
        %1860 = vmatprep.subr.mxu0 0.0
        %1861 = vmatpush2.msra.mxu0 0.0
        %1862 = vmatprep.subr.mxu0 0.0
        %1863 = vmatpush2.msra.mxu0 0.0
        %1864 = vmatprep.subr.mxu0 0.0
        %1865 = vmatpush2.msra.mxu0 0.0
        %1866 = vmatprep.subr.mxu0 0.0
        %1867 = vmatpush2.msra.mxu0 0.0
        %1868 = vmatprep.subr.mxu0 0.0
        %1869 = vmatpush2.msra.mxu0 0.0
        %1870 = vmatprep.subr.mxu0 0.0
        %1871 = vmatpush2.msra.mxu0 0.0
        %1872 = vmatprep.subr.mxu0 0.0
        %1873 = vmatpush2.msra.mxu0 0.0
        %1874 = vmatprep.mubr.f32.mxu0 0.0
        %1875 = vmatmul.mubr.f32.gmra.mxu0 %v1805
        %v1876 = vpop.f32.mrf.mxu0
        %v1877 = vadd.f32 0.0, %v1876
        %v1878 = vpop.f32.mrf.mxu0
        %1879 = vmatprep.mubr.f32.mxu0 0.0
        %1880 = vmatmul.mubr.f32.gmra.mxu0 %v1808
        %v1881 = vpop.f32.mrf.mxu0
        %v1882 = vadd.f32 0.0, %v1881
        %v1883 = vpop.f32.mrf.mxu0
        %1884 = vdwg.mxu0
        %1885 = vst.msk [vmem:[#allocation2 + $0x10] sm:$0xff] %vm792, %v1877
        %1886 = vst.msk [vmem:[#allocation2 + $0x18] sm:$0xff] %vm792, %v1882
        %1887 = vrot.lane.b32.xlu0 %v674, 120
        %v1888 = vpop.permute.xlu0 %1887
        %1889 = vrot.lane.b32.xlu0 %v680, 120
        %v1890 = vpop.permute.xlu0 %1889
        %1891 = vrot.lane.b32.xlu0 %v676, 120
        %v1892 = vpop.permute.xlu0 %1891
        %1893 = vrot.lane.b32.xlu0 %v682, 120
        %v1894 = vpop.permute.xlu0 %1893
        %v1895 = vsel %vm792, %v1888, 0
        %v1897 = vsel %vm792, %v1890, 0
        %v1899 = vsel %vm792, %v1892, 0
        %v1901 = vsel %vm792, %v1894, 0
        %1903 = vmatprep.subr.mxu0 0.0
        %1904 = vmatpush1.xpose.msra.mxu0 0.0
        %1905 = vmatprep.subr.mxu0 0.0
        %1906 = vmatpush1.xpose.msra.mxu0 0.0
        %1907 = vmatprep.subr.mxu0 0.0
        %1908 = vmatpush1.xpose.msra.mxu0 0.0
        %1909 = vmatprep.subr.mxu0 0.0
        %1910 = vmatpush1.xpose.msra.mxu0 0.0
        %1911 = vmatprep.subr.mxu0 0.0
        %1912 = vmatpush1.xpose.msra.mxu0 0.0
        %1913 = vmatprep.subr.mxu0 0.0
        %1914 = vmatpush1.xpose.msra.mxu0 0.0
        %1915 = vmatprep.subr.mxu0 0.0
        %1916 = vmatpush1.xpose.msra.mxu0 0.0
        %1917 = vmatprep.subr.mxu0 0.0
        %1918 = vmatpush1.xpose.msra.mxu0 0.0
        %1919 = vmatprep.subr.mxu0 0.0
        %1920 = vmatpush1.xpose.msra.mxu0 0.0
        %1921 = vmatprep.subr.mxu0 0.0
        %1922 = vmatpush1.xpose.msra.mxu0 0.0
        %1923 = vmatprep.subr.mxu0 0.0
        %1924 = vmatpush1.xpose.msra.mxu0 0.0
        %1925 = vmatprep.subr.mxu0 0.0
        %1926 = vmatpush1.xpose.msra.mxu0 0.0
        %1927 = vmatprep.subr.mxu0 0.0
        %1928 = vmatpush1.xpose.msra.mxu0 0.0
        %1929 = vmatprep.subr.mxu0 0.0
        %1930 = vmatpush1.xpose.msra.mxu0 0.0
        %1931 = vmatprep.subr.mxu0 0.0
        %1932 = vmatpush1.xpose.msra.mxu0 %v1901
        %1933 = vmatprep.subr.mxu0 0.0
        %1934 = vmatpush1.xpose.msra.mxu0 %v1899
        %1935 = vmatprep.subr.mxu0 0.0
        %1936 = vmatpush2.xpose.msra.mxu0 0.0
        %1937 = vmatprep.subr.mxu0 0.0
        %1938 = vmatpush2.xpose.msra.mxu0 0.0
        %1939 = vmatprep.subr.mxu0 0.0
        %1940 = vmatpush2.xpose.msra.mxu0 0.0
        %1941 = vmatprep.subr.mxu0 0.0
        %1942 = vmatpush2.xpose.msra.mxu0 0.0
        %1943 = vmatprep.subr.mxu0 0.0
        %1944 = vmatpush2.xpose.msra.mxu0 0.0
        %1945 = vmatprep.subr.mxu0 0.0
        %1946 = vmatpush2.xpose.msra.mxu0 0.0
        %1947 = vmatprep.subr.mxu0 0.0
        %1948 = vmatpush2.xpose.msra.mxu0 0.0
        %1949 = vmatprep.subr.mxu0 0.0
        %1950 = vmatpush2.xpose.msra.mxu0 0.0
        %1951 = vmatprep.subr.mxu0 0.0
        %1952 = vmatpush2.xpose.msra.mxu0 0.0
        %1953 = vmatprep.subr.mxu0 0.0
        %1954 = vmatpush2.xpose.msra.mxu0 0.0
        %1955 = vmatprep.subr.mxu0 0.0
        %1956 = vmatpush2.xpose.msra.mxu0 0.0
        %1957 = vmatprep.subr.mxu0 0.0
        %1958 = vmatpush2.xpose.msra.mxu0 0.0
        %1959 = vmatprep.subr.mxu0 0.0
        %1960 = vmatpush2.xpose.msra.mxu0 0.0
        %1961 = vmatprep.subr.mxu0 0.0
        %1962 = vmatpush2.xpose.msra.mxu0 0.0
        %1963 = vmatprep.subr.mxu0 0.0
        %1964 = vmatpush2.xpose.msra.mxu0 0.0
        %1965 = vmatprep.subr.mxu0 0.0
        %1966 = vmatpush2.xpose.msra.mxu0 0.0
        %1967 = vmatprep.mubr.f32.mxu0 0.0
        %1968 = vmatmul.mubr.f32.gmra.mxu0 %v1895
        %v1969 = vpop.f32.mrf.mxu0
        %v1970 = vadd.f32 0.0, %v1969
        %v1971 = vpop.f32.mrf.mxu0
        %1972 = vmatprep.mubr.f32.mxu0 0.0
        %1973 = vmatmul.mubr.f32.gmra.mxu0 %v1897
        %v1974 = vpop.f32.mrf.mxu0
        %v1975 = vadd.f32 0.0, %v1974
        %v1976 = vpop.f32.mrf.mxu0
        %1977 = vdwg.mxu0
        %v1978 = vsub.f32 %v1970, %v1683
        %v1979 = vsub.f32 %v1975, %v1684
        %v1980 = vmul.f32 %v1978, 0.35355338
        %v1981 = vmul.f32 %v1979, 0.35355338
        %v1982 = vsel %vm884, %v1980, -inf
        %1983 = vmax.xlane.f32.xlu0 %v1982
        %v1984 = vpop.xlane.xlu0 %1983
        %v1985 = vsel %vm884, %v1981, -inf
        %1986 = vmax.xlane.f32.xlu0 %v1985
        %v1987 = vpop.xlane.xlu0 %1986
        %v1988 = vsub.f32 %v1980, %v1984
        %v1989 = vsub.f32 %v1981, %v1987
        %v1990 = vmul.f32 %v1988, 1.442695
        %v1991 = vpow.pop %v1990
        %v1992 = vmul.f32 %v1989, 1.442695
        %v1993 = vpow.pop %v1992
        %v1994 = vsel %vm884, %v1991, 0.0
        %1995 = vadd.xlane.f32.xlu0 %v1994
        %v1996 = vpop.xlane.xlu0 %1995
        %v1997 = vsel %vm884, %v1993, 0.0
        %1998 = vadd.xlane.f32.xlu0 %v1997
        %v1999 = vpop.xlane.xlu0 %1998
        %v2000 = vrcp.pop %v1996
        %v2001 = vrcp.pop %v1999
        %v2002 = vmul.f32 %v1996, %v2000
        %v2003 = vmul.f32 %v1999, %v2001
        %v2004 = vsub.f32 2.0, %v2002
        %v2005 = vsub.f32 2.0, %v2003
        %v2006 = vmul.f32 %v2000, %v2004
        %v2007 = vmul.f32 %v2001, %v2005
        %v2008 = vmul.f32 %v1991, %v2006
        %v2009 = vmul.f32 %v1993, %v2007
        %2012 = vrot.lane.b32.xlu0 %v761, 120
        %v2013 = vpop.permute.xlu0 %2012
        %2014 = vrot.lane.b32.xlu0 %v766, 120
        %v2015 = vpop.permute.xlu0 %2014
        %v2019 = vsel %vm884, %v2008, 0
        %v2022 = vsel %vm884, %v2009, 0
        %2024 = vmatprep.subr.mxu0 0.0
        %2025 = vmatpush1.msra.mxu0 0.0
        %2026 = vmatprep.subr.mxu0 0.0
        %2027 = vmatpush1.msra.mxu0 0.0
        %2028 = vmatprep.subr.mxu0 0.0
        %2029 = vmatpush1.msra.mxu0 0.0
        %2030 = vmatprep.subr.mxu0 0.0
        %2031 = vmatpush1.msra.mxu0 0.0
        %2032 = vmatprep.subr.mxu0 0.0
        %2033 = vmatpush1.msra.mxu0 0.0
        %2034 = vmatprep.subr.mxu0 0.0
        %2035 = vmatpush1.msra.mxu0 0.0
        %2036 = vmatprep.subr.mxu0 0.0
        %2037 = vmatpush1.msra.mxu0 0.0
        %2038 = vmatprep.subr.mxu0 0.0
        %2039 = vmatpush1.msra.mxu0 0.0
        %2040 = vmatprep.subr.mxu0 0.0
        %2041 = vmatpush1.msra.mxu0 0.0
        %2042 = vmatprep.subr.mxu0 0.0
        %2043 = vmatpush1.msra.mxu0 0.0
        %2044 = vmatprep.subr.mxu0 0.0
        %2045 = vmatpush1.msra.mxu0 0.0
        %2046 = vmatprep.subr.mxu0 0.0
        %2047 = vmatpush1.msra.mxu0 0.0
        %2048 = vmatprep.subr.mxu0 0.0
        %2049 = vmatpush1.msra.mxu0 0.0
        %2050 = vmatprep.subr.mxu0 0.0
        %2051 = vmatpush1.msra.mxu0 0.0
        %2052 = vmatprep.subr.mxu0 0.0
        %2053 = vmatpush1.msra.mxu0 %v2015
        %2054 = vmatprep.subr.mxu0 0.0
        %2055 = vmatpush1.msra.mxu0 %v2013
        %2056 = vmatprep.subr.mxu0 0.0
        %2057 = vmatpush2.msra.mxu0 0.0
        %2058 = vmatprep.subr.mxu0 0.0
        %2059 = vmatpush2.msra.mxu0 0.0
        %2060 = vmatprep.subr.mxu0 0.0
        %2061 = vmatpush2.msra.mxu0 0.0
        %2062 = vmatprep.subr.mxu0 0.0
        %2063 = vmatpush2.msra.mxu0 0.0
        %2064 = vmatprep.subr.mxu0 0.0
        %2065 = vmatpush2.msra.mxu0 0.0
        %2066 = vmatprep.subr.mxu0 0.0
        %2067 = vmatpush2.msra.mxu0 0.0
        %2068 = vmatprep.subr.mxu0 0.0
        %2069 = vmatpush2.msra.mxu0 0.0
        %2070 = vmatprep.subr.mxu0 0.0
        %2071 = vmatpush2.msra.mxu0 0.0
        %2072 = vmatprep.subr.mxu0 0.0
        %2073 = vmatpush2.msra.mxu0 0.0
        %2074 = vmatprep.subr.mxu0 0.0
        %2075 = vmatpush2.msra.mxu0 0.0
        %2076 = vmatprep.subr.mxu0 0.0
        %2077 = vmatpush2.msra.mxu0 0.0
        %2078 = vmatprep.subr.mxu0 0.0
        %2079 = vmatpush2.msra.mxu0 0.0
        %2080 = vmatprep.subr.mxu0 0.0
        %2081 = vmatpush2.msra.mxu0 0.0
        %2082 = vmatprep.subr.mxu0 0.0
        %2083 = vmatpush2.msra.mxu0 0.0
        %2084 = vmatprep.subr.mxu0 0.0
        %2085 = vmatpush2.msra.mxu0 0.0
        %2086 = vmatprep.subr.mxu0 0.0
        %2087 = vmatpush2.msra.mxu0 0.0
        %2088 = vmatprep.mubr.f32.mxu0 0.0
        %2089 = vmatmul.mubr.f32.gmra.mxu0 %v2019
        %v2090 = vpop.f32.mrf.mxu0
        %v2091 = vadd.f32 0.0, %v2090
        %v2092 = vpop.f32.mrf.mxu0
        %2093 = vmatprep.mubr.f32.mxu0 0.0
        %2094 = vmatmul.mubr.f32.gmra.mxu0 %v2022
        %v2095 = vpop.f32.mrf.mxu0
        %v2096 = vadd.f32 0.0, %v2095
        %v2097 = vpop.f32.mrf.mxu0
        %2098 = vdwg.mxu0
        %2101 = vrot.lane.b32.xlu0 %v2091, 8
        %v2102 = vpop.permute.xlu0 %2101
        %2103 = vrot.lane.b32.xlu0 %v2096, 8
        %v2104 = vpop.permute.xlu0 %2103
        %2107 = vst.msk [vmem:[#allocation2 + $0x10] sm:$0xff] %vm1216, %v2102
        %2108 = vst.msk [vmem:[#allocation2 + $0x18] sm:$0xff] %vm1216, %v2104
        %2109 = vrot.lane.b32.xlu0 %v674, 112
        %v2110 = vpop.permute.xlu0 %2109
        %2111 = vrot.lane.b32.xlu0 %v680, 112
        %v2112 = vpop.permute.xlu0 %2111
        %2113 = vrot.lane.b32.xlu0 %v676, 112
        %v2114 = vpop.permute.xlu0 %2113
        %2115 = vrot.lane.b32.xlu0 %v682, 112
        %v2116 = vpop.permute.xlu0 %2115
        %v2117 = vsel %vm792, %v2110, 0
        %v2119 = vsel %vm792, %v2112, 0
        %v2121 = vsel %vm792, %v2114, 0
        %v2123 = vsel %vm792, %v2116, 0
        %2125 = vmatprep.subr.mxu0 0.0
        %2126 = vmatpush1.xpose.msra.mxu0 0.0
        %2127 = vmatprep.subr.mxu0 0.0
        %2128 = vmatpush1.xpose.msra.mxu0 0.0
        %2129 = vmatprep.subr.mxu0 0.0
        %2130 = vmatpush1.xpose.msra.mxu0 0.0
        %2131 = vmatprep.subr.mxu0 0.0
        %2132 = vmatpush1.xpose.msra.mxu0 0.0
        %2133 = vmatprep.subr.mxu0 0.0
        %2134 = vmatpush1.xpose.msra.mxu0 0.0
        %2135 = vmatprep.subr.mxu0 0.0
        %2136 = vmatpush1.xpose.msra.mxu0 0.0
        %2137 = vmatprep.subr.mxu0 0.0
        %2138 = vmatpush1.xpose.msra.mxu0 0.0
        %2139 = vmatprep.subr.mxu0 0.0
        %2140 = vmatpush1.xpose.msra.mxu0 0.0
        %2141 = vmatprep.subr.mxu0 0.0
        %2142 = vmatpush1.xpose.msra.mxu0 0.0
        %2143 = vmatprep.subr.mxu0 0.0
        %2144 = vmatpush1.xpose.msra.mxu0 0.0
        %2145 = vmatprep.subr.mxu0 0.0
        %2146 = vmatpush1.xpose.msra.mxu0 0.0
        %2147 = vmatprep.subr.mxu0 0.0
        %2148 = vmatpush1.xpose.msra.mxu0 0.0
        %2149 = vmatprep.subr.mxu0 0.0
        %2150 = vmatpush1.xpose.msra.mxu0 0.0
        %2151 = vmatprep.subr.mxu0 0.0
        %2152 = vmatpush1.xpose.msra.mxu0 0.0
        %2153 = vmatprep.subr.mxu0 0.0
        %2154 = vmatpush1.xpose.msra.mxu0 %v2123
        %2155 = vmatprep.subr.mxu0 0.0
        %2156 = vmatpush1.xpose.msra.mxu0 %v2121
        %2157 = vmatprep.subr.mxu0 0.0
        %2158 = vmatpush2.xpose.msra.mxu0 0.0
        %2159 = vmatprep.subr.mxu0 0.0
        %2160 = vmatpush2.xpose.msra.mxu0 0.0
        %2161 = vmatprep.subr.mxu0 0.0
        %2162 = vmatpush2.xpose.msra.mxu0 0.0
        %2163 = vmatprep.subr.mxu0 0.0
        %2164 = vmatpush2.xpose.msra.mxu0 0.0
        %2165 = vmatprep.subr.mxu0 0.0
        %2166 = vmatpush2.xpose.msra.mxu0 0.0
        %2167 = vmatprep.subr.mxu0 0.0
        %2168 = vmatpush2.xpose.msra.mxu0 0.0
        %2169 = vmatprep.subr.mxu0 0.0
        %2170 = vmatpush2.xpose.msra.mxu0 0.0
        %2171 = vmatprep.subr.mxu0 0.0
        %2172 = vmatpush2.xpose.msra.mxu0 0.0
        %2173 = vmatprep.subr.mxu0 0.0
        %2174 = vmatpush2.xpose.msra.mxu0 0.0
        %2175 = vmatprep.subr.mxu0 0.0
        %2176 = vmatpush2.xpose.msra.mxu0 0.0
        %2177 = vmatprep.subr.mxu0 0.0
        %2178 = vmatpush2.xpose.msra.mxu0 0.0
        %2179 = vmatprep.subr.mxu0 0.0
        %2180 = vmatpush2.xpose.msra.mxu0 0.0
        %2181 = vmatprep.subr.mxu0 0.0
        %2182 = vmatpush2.xpose.msra.mxu0 0.0
        %2183 = vmatprep.subr.mxu0 0.0
        %2184 = vmatpush2.xpose.msra.mxu0 0.0
        %2185 = vmatprep.subr.mxu0 0.0
        %2186 = vmatpush2.xpose.msra.mxu0 0.0
        %2187 = vmatprep.subr.mxu0 0.0
        %2188 = vmatpush2.xpose.msra.mxu0 0.0
        %2189 = vmatprep.mubr.f32.mxu0 0.0
        %2190 = vmatmul.mubr.f32.gmra.mxu0 %v2117
        %v2191 = vpop.f32.mrf.mxu0
        %v2192 = vadd.f32 0.0, %v2191
        %v2193 = vpop.f32.mrf.mxu0
        %2194 = vmatprep.mubr.f32.mxu0 0.0
        %2195 = vmatmul.mubr.f32.gmra.mxu0 %v2119
        %v2196 = vpop.f32.mrf.mxu0
        %v2197 = vadd.f32 0.0, %v2196
        %v2198 = vpop.f32.mrf.mxu0
        %2199 = vdwg.mxu0
        %v2200 = vsub.f32 %v2192, %v1683
        %v2201 = vsub.f32 %v2197, %v1684
        %v2202 = vmul.f32 %v2200, 0.35355338
        %v2203 = vmul.f32 %v2201, 0.35355338
        %v2204 = vsel %vm884, %v2202, -inf
        %2205 = vmax.xlane.f32.xlu0 %v2204
        %v2206 = vpop.xlane.xlu0 %2205
        %v2207 = vsel %vm884, %v2203, -inf
        %2208 = vmax.xlane.f32.xlu0 %v2207
        %v2209 = vpop.xlane.xlu0 %2208
        %v2210 = vsub.f32 %v2202, %v2206
        %v2211 = vsub.f32 %v2203, %v2209
        %v2212 = vmul.f32 %v2210, 1.442695
        %v2213 = vpow.pop %v2212
        %v2214 = vmul.f32 %v2211, 1.442695
        %v2215 = vpow.pop %v2214
        %v2216 = vsel %vm884, %v2213, 0.0
        %2217 = vadd.xlane.f32.xlu0 %v2216
        %v2218 = vpop.xlane.xlu0 %2217
        %v2219 = vsel %vm884, %v2215, 0.0
        %2220 = vadd.xlane.f32.xlu0 %v2219
        %v2221 = vpop.xlane.xlu0 %2220
        %v2222 = vrcp.pop %v2218
        %v2223 = vrcp.pop %v2221
        %v2224 = vmul.f32 %v2218, %v2222
        %v2225 = vmul.f32 %v2221, %v2223
        %v2226 = vsub.f32 2.0, %v2224
        %v2227 = vsub.f32 2.0, %v2225
        %v2228 = vmul.f32 %v2222, %v2226
        %v2229 = vmul.f32 %v2223, %v2227
        %v2230 = vmul.f32 %v2213, %v2228
        %v2231 = vmul.f32 %v2215, %v2229
        %2232 = vrot.lane.b32.xlu0 %v761, 112
        %v2233 = vpop.permute.xlu0 %2232
        %2234 = vrot.lane.b32.xlu0 %v766, 112
        %v2235 = vpop.permute.xlu0 %2234
        %v2239 = vsel %vm884, %v2230, 0
        %v2242 = vsel %vm884, %v2231, 0
        %2244 = vmatprep.subr.mxu0 0.0
        %2245 = vmatpush1.msra.mxu0 0.0
        %2246 = vmatprep.subr.mxu0 0.0
        %2247 = vmatpush1.msra.mxu0 0.0
        %2248 = vmatprep.subr.mxu0 0.0
        %2249 = vmatpush1.msra.mxu0 0.0
        %2250 = vmatprep.subr.mxu0 0.0
        %2251 = vmatpush1.msra.mxu0 0.0
        %2252 = vmatprep.subr.mxu0 0.0
        %2253 = vmatpush1.msra.mxu0 0.0
        %2254 = vmatprep.subr.mxu0 0.0
        %2255 = vmatpush1.msra.mxu0 0.0
        %2256 = vmatprep.subr.mxu0 0.0
        %2257 = vmatpush1.msra.mxu0 0.0
        %2258 = vmatprep.subr.mxu0 0.0
        %2259 = vmatpush1.msra.mxu0 0.0
        %2260 = vmatprep.subr.mxu0 0.0
        %2261 = vmatpush1.msra.mxu0 0.0
        %2262 = vmatprep.subr.mxu0 0.0
        %2263 = vmatpush1.msra.mxu0 0.0
        %2264 = vmatprep.subr.mxu0 0.0
        %2265 = vmatpush1.msra.mxu0 0.0
        %2266 = vmatprep.subr.mxu0 0.0
        %2267 = vmatpush1.msra.mxu0 0.0
        %2268 = vmatprep.subr.mxu0 0.0
        %2269 = vmatpush1.msra.mxu0 0.0
        %2270 = vmatprep.subr.mxu0 0.0
        %2271 = vmatpush1.msra.mxu0 0.0
        %2272 = vmatprep.subr.mxu0 0.0
        %2273 = vmatpush1.msra.mxu0 %v2235
        %2274 = vmatprep.subr.mxu0 0.0
        %2275 = vmatpush1.msra.mxu0 %v2233
        %2276 = vmatprep.subr.mxu0 0.0
        %2277 = vmatpush2.msra.mxu0 0.0
        %2278 = vmatprep.subr.mxu0 0.0
        %2279 = vmatpush2.msra.mxu0 0.0
        %2280 = vmatprep.subr.mxu0 0.0
        %2281 = vmatpush2.msra.mxu0 0.0
        %2282 = vmatprep.subr.mxu0 0.0
        %2283 = vmatpush2.msra.mxu0 0.0
        %2284 = vmatprep.subr.mxu0 0.0
        %2285 = vmatpush2.msra.mxu0 0.0
        %2286 = vmatprep.subr.mxu0 0.0
        %2287 = vmatpush2.msra.mxu0 0.0
        %2288 = vmatprep.subr.mxu0 0.0
        %2289 = vmatpush2.msra.mxu0 0.0
        %2290 = vmatprep.subr.mxu0 0.0
        %2291 = vmatpush2.msra.mxu0 0.0
        %2292 = vmatprep.subr.mxu0 0.0
        %2293 = vmatpush2.msra.mxu0 0.0
        %2294 = vmatprep.subr.mxu0 0.0
        %2295 = vmatpush2.msra.mxu0 0.0
        %2296 = vmatprep.subr.mxu0 0.0
        %2297 = vmatpush2.msra.mxu0 0.0
        %2298 = vmatprep.subr.mxu0 0.0
        %2299 = vmatpush2.msra.mxu0 0.0
        %2300 = vmatprep.subr.mxu0 0.0
        %2301 = vmatpush2.msra.mxu0 0.0
        %2302 = vmatprep.subr.mxu0 0.0
        %2303 = vmatpush2.msra.mxu0 0.0
        %2304 = vmatprep.subr.mxu0 0.0
        %2305 = vmatpush2.msra.mxu0 0.0
        %2306 = vmatprep.subr.mxu0 0.0
        %2307 = vmatpush2.msra.mxu0 0.0
        %2308 = vmatprep.mubr.f32.mxu0 0.0
        %2309 = vmatmul.mubr.f32.gmra.mxu0 %v2239
        %v2310 = vpop.f32.mrf.mxu0
        %v2311 = vadd.f32 0.0, %v2310
        %v2312 = vpop.f32.mrf.mxu0
        %2313 = vmatprep.mubr.f32.mxu0 0.0
        %2314 = vmatmul.mubr.f32.gmra.mxu0 %v2242
        %v2315 = vpop.f32.mrf.mxu0
        %v2316 = vadd.f32 0.0, %v2315
        %v2317 = vpop.f32.mrf.mxu0
        %2318 = vdwg.mxu0
        %2321 = vrot.lane.b32.xlu0 %v2311, 16
        %v2322 = vpop.permute.xlu0 %2321
        %2323 = vrot.lane.b32.xlu0 %v2316, 16
        %v2324 = vpop.permute.xlu0 %2323
        %2327 = vst.msk [vmem:[#allocation2 + $0x10] sm:$0xff] %vm1437, %v2322
        %2328 = vst.msk [vmem:[#allocation2 + $0x18] sm:$0xff] %vm1437, %v2324
        %2329 = vrot.lane.b32.xlu0 %v674, 104
        %v2330 = vpop.permute.xlu0 %2329
        %2331 = vrot.lane.b32.xlu0 %v680, 104
        %v2332 = vpop.permute.xlu0 %2331
        %2333 = vrot.lane.b32.xlu0 %v676, 104
        %v2334 = vpop.permute.xlu0 %2333
        %2335 = vrot.lane.b32.xlu0 %v682, 104
        %v2336 = vpop.permute.xlu0 %2335
        %v2337 = vsel %vm792, %v2330, 0
        %v2339 = vsel %vm792, %v2332, 0
        %v2341 = vsel %vm792, %v2334, 0
        %v2343 = vsel %vm792, %v2336, 0
        %2345 = vmatprep.subr.mxu0 0.0
        %2346 = vmatpush1.xpose.msra.mxu0 0.0
        %2347 = vmatprep.subr.mxu0 0.0
        %2348 = vmatpush1.xpose.msra.mxu0 0.0
        %2349 = vmatprep.subr.mxu0 0.0
        %2350 = vmatpush1.xpose.msra.mxu0 0.0
        %2351 = vmatprep.subr.mxu0 0.0
        %2352 = vmatpush1.xpose.msra.mxu0 0.0
        %2353 = vmatprep.subr.mxu0 0.0
        %2354 = vmatpush1.xpose.msra.mxu0 0.0
        %2355 = vmatprep.subr.mxu0 0.0
        %2356 = vmatpush1.xpose.msra.mxu0 0.0
        %2357 = vmatprep.subr.mxu0 0.0
        %2358 = vmatpush1.xpose.msra.mxu0 0.0
        %2359 = vmatprep.subr.mxu0 0.0
        %2360 = vmatpush1.xpose.msra.mxu0 0.0
        %2361 = vmatprep.subr.mxu0 0.0
        %2362 = vmatpush1.xpose.msra.mxu0 0.0
        %2363 = vmatprep.subr.mxu0 0.0
        %2364 = vmatpush1.xpose.msra.mxu0 0.0
        %2365 = vmatprep.subr.mxu0 0.0
        %2366 = vmatpush1.xpose.msra.mxu0 0.0
        %2367 = vmatprep.subr.mxu0 0.0
        %2368 = vmatpush1.xpose.msra.mxu0 0.0
        %2369 = vmatprep.subr.mxu0 0.0
        %2370 = vmatpush1.xpose.msra.mxu0 0.0
        %2371 = vmatprep.subr.mxu0 0.0
        %2372 = vmatpush1.xpose.msra.mxu0 0.0
        %2373 = vmatprep.subr.mxu0 0.0
        %2374 = vmatpush1.xpose.msra.mxu0 %v2343
        %2375 = vmatprep.subr.mxu0 0.0
        %2376 = vmatpush1.xpose.msra.mxu0 %v2341
        %2377 = vmatprep.subr.mxu0 0.0
        %2378 = vmatpush2.xpose.msra.mxu0 0.0
        %2379 = vmatprep.subr.mxu0 0.0
        %2380 = vmatpush2.xpose.msra.mxu0 0.0
        %2381 = vmatprep.subr.mxu0 0.0
        %2382 = vmatpush2.xpose.msra.mxu0 0.0
        %2383 = vmatprep.subr.mxu0 0.0
        %2384 = vmatpush2.xpose.msra.mxu0 0.0
        %2385 = vmatprep.subr.mxu0 0.0
        %2386 = vmatpush2.xpose.msra.mxu0 0.0
        %2387 = vmatprep.subr.mxu0 0.0
        %2388 = vmatpush2.xpose.msra.mxu0 0.0
        %2389 = vmatprep.subr.mxu0 0.0
        %2390 = vmatpush2.xpose.msra.mxu0 0.0
        %2391 = vmatprep.subr.mxu0 0.0
        %2392 = vmatpush2.xpose.msra.mxu0 0.0
        %2393 = vmatprep.subr.mxu0 0.0
        %2394 = vmatpush2.xpose.msra.mxu0 0.0
        %2395 = vmatprep.subr.mxu0 0.0
        %2396 = vmatpush2.xpose.msra.mxu0 0.0
        %2397 = vmatprep.subr.mxu0 0.0
        %2398 = vmatpush2.xpose.msra.mxu0 0.0
        %2399 = vmatprep.subr.mxu0 0.0
        %2400 = vmatpush2.xpose.msra.mxu0 0.0
        %2401 = vmatprep.subr.mxu0 0.0
        %2402 = vmatpush2.xpose.msra.mxu0 0.0
        %2403 = vmatprep.subr.mxu0 0.0
        %2404 = vmatpush2.xpose.msra.mxu0 0.0
        %2405 = vmatprep.subr.mxu0 0.0
        %2406 = vmatpush2.xpose.msra.mxu0 0.0
        %2407 = vmatprep.subr.mxu0 0.0
        %2408 = vmatpush2.xpose.msra.mxu0 0.0
        %2409 = vmatprep.mubr.f32.mxu0 0.0
        %2410 = vmatmul.mubr.f32.gmra.mxu0 %v2337
        %v2411 = vpop.f32.mrf.mxu0
        %v2412 = vadd.f32 0.0, %v2411
        %v2413 = vpop.f32.mrf.mxu0
        %2414 = vmatprep.mubr.f32.mxu0 0.0
        %2415 = vmatmul.mubr.f32.gmra.mxu0 %v2339
        %v2416 = vpop.f32.mrf.mxu0
        %v2417 = vadd.f32 0.0, %v2416
        %v2418 = vpop.f32.mrf.mxu0
        %2419 = vdwg.mxu0
        %v2420 = vsub.f32 %v2412, %v1683
        %v2421 = vsub.f32 %v2417, %v1684
        %v2422 = vmul.f32 %v2420, 0.35355338
        %v2423 = vmul.f32 %v2421, 0.35355338
        %v2424 = vsel %vm884, %v2422, -inf
        %2425 = vmax.xlane.f32.xlu0 %v2424
        %v2426 = vpop.xlane.xlu0 %2425
        %v2427 = vsel %vm884, %v2423, -inf
        %2428 = vmax.xlane.f32.xlu0 %v2427
        %v2429 = vpop.xlane.xlu0 %2428
        %v2430 = vsub.f32 %v2422, %v2426
        %v2431 = vsub.f32 %v2423, %v2429
        %v2432 = vmul.f32 %v2430, 1.442695
        %v2433 = vpow.pop %v2432
        %v2434 = vmul.f32 %v2431, 1.442695
        %v2435 = vpow.pop %v2434
        %v2436 = vsel %vm884, %v2433, 0.0
        %2437 = vadd.xlane.f32.xlu0 %v2436
        %v2438 = vpop.xlane.xlu0 %2437
        %v2439 = vsel %vm884, %v2435, 0.0
        %2440 = vadd.xlane.f32.xlu0 %v2439
        %v2441 = vpop.xlane.xlu0 %2440
        %v2442 = vrcp.pop %v2438
        %v2443 = vrcp.pop %v2441
        %v2444 = vmul.f32 %v2438, %v2442
        %v2445 = vmul.f32 %v2441, %v2443
        %v2446 = vsub.f32 2.0, %v2444
        %v2447 = vsub.f32 2.0, %v2445
        %v2448 = vmul.f32 %v2442, %v2446
        %v2449 = vmul.f32 %v2443, %v2447
        %v2450 = vmul.f32 %v2433, %v2448
        %v2451 = vmul.f32 %v2435, %v2449
        %2452 = vrot.lane.b32.xlu0 %v761, 104
        %v2453 = vpop.permute.xlu0 %2452
        %2454 = vrot.lane.b32.xlu0 %v766, 104
        %v2455 = vpop.permute.xlu0 %2454
        %v2459 = vsel %vm884, %v2450, 0
        %v2462 = vsel %vm884, %v2451, 0
        %2464 = vmatprep.subr.mxu0 0.0
        %2465 = vmatpush1.msra.mxu0 0.0
        %2466 = vmatprep.subr.mxu0 0.0
        %2467 = vmatpush1.msra.mxu0 0.0
        %2468 = vmatprep.subr.mxu0 0.0
        %2469 = vmatpush1.msra.mxu0 0.0
        %2470 = vmatprep.subr.mxu0 0.0
        %2471 = vmatpush1.msra.mxu0 0.0
        %2472 = vmatprep.subr.mxu0 0.0
        %2473 = vmatpush1.msra.mxu0 0.0
        %2474 = vmatprep.subr.mxu0 0.0
        %2475 = vmatpush1.msra.mxu0 0.0
        %2476 = vmatprep.subr.mxu0 0.0
        %2477 = vmatpush1.msra.mxu0 0.0
        %2478 = vmatprep.subr.mxu0 0.0
        %2479 = vmatpush1.msra.mxu0 0.0
        %2480 = vmatprep.subr.mxu0 0.0
        %2481 = vmatpush1.msra.mxu0 0.0
        %2482 = vmatprep.subr.mxu0 0.0
        %2483 = vmatpush1.msra.mxu0 0.0
        %2484 = vmatprep.subr.mxu0 0.0
        %2485 = vmatpush1.msra.mxu0 0.0
        %2486 = vmatprep.subr.mxu0 0.0
        %2487 = vmatpush1.msra.mxu0 0.0
        %2488 = vmatprep.subr.mxu0 0.0
        %2489 = vmatpush1.msra.mxu0 0.0
        %2490 = vmatprep.subr.mxu0 0.0
        %2491 = vmatpush1.msra.mxu0 0.0
        %2492 = vmatprep.subr.mxu0 0.0
        %2493 = vmatpush1.msra.mxu0 %v2455
        %2494 = vmatprep.subr.mxu0 0.0
        %2495 = vmatpush1.msra.mxu0 %v2453
        %2496 = vmatprep.subr.mxu0 0.0
        %2497 = vmatpush2.msra.mxu0 0.0
        %2498 = vmatprep.subr.mxu0 0.0
        %2499 = vmatpush2.msra.mxu0 0.0
        %2500 = vmatprep.subr.mxu0 0.0
        %2501 = vmatpush2.msra.mxu0 0.0
        %2502 = vmatprep.subr.mxu0 0.0
        %2503 = vmatpush2.msra.mxu0 0.0
        %2504 = vmatprep.subr.mxu0 0.0
        %2505 = vmatpush2.msra.mxu0 0.0
        %2506 = vmatprep.subr.mxu0 0.0
        %2507 = vmatpush2.msra.mxu0 0.0
        %2508 = vmatprep.subr.mxu0 0.0
        %2509 = vmatpush2.msra.mxu0 0.0
        %2510 = vmatprep.subr.mxu0 0.0
        %2511 = vmatpush2.msra.mxu0 0.0
        %2512 = vmatprep.subr.mxu0 0.0
        %2513 = vmatpush2.msra.mxu0 0.0
        %2514 = vmatprep.subr.mxu0 0.0
        %2515 = vmatpush2.msra.mxu0 0.0
        %2516 = vmatprep.subr.mxu0 0.0
        %2517 = vmatpush2.msra.mxu0 0.0
        %2518 = vmatprep.subr.mxu0 0.0
        %2519 = vmatpush2.msra.mxu0 0.0
        %2520 = vmatprep.subr.mxu0 0.0
        %2521 = vmatpush2.msra.mxu0 0.0
        %2522 = vmatprep.subr.mxu0 0.0
        %2523 = vmatpush2.msra.mxu0 0.0
        %2524 = vmatprep.subr.mxu0 0.0
        %2525 = vmatpush2.msra.mxu0 0.0
        %2526 = vmatprep.subr.mxu0 0.0
        %2527 = vmatpush2.msra.mxu0 0.0
        %2528 = vmatprep.mubr.f32.mxu0 0.0
        %2529 = vmatmul.mubr.f32.gmra.mxu0 %v2459
        %v2530 = vpop.f32.mrf.mxu0
        %v2531 = vadd.f32 0.0, %v2530
        %v2532 = vpop.f32.mrf.mxu0
        %2533 = vmatprep.mubr.f32.mxu0 0.0
        %2534 = vmatmul.mubr.f32.gmra.mxu0 %v2462
        %v2535 = vpop.f32.mrf.mxu0
        %v2536 = vadd.f32 0.0, %v2535
        %v2537 = vpop.f32.mrf.mxu0
        %2538 = vdwg.mxu0
        %2541 = vrot.lane.b32.xlu0 %v2531, 24
        %v2542 = vpop.permute.xlu0 %2541
        %2543 = vrot.lane.b32.xlu0 %v2536, 24
        %v2544 = vpop.permute.xlu0 %2543
        %2547 = vst.msk [vmem:[#allocation2 + $0x10] sm:$0xff] %vm1658, %v2542
        %2548 = vst.msk [vmem:[#allocation2 + $0x18] sm:$0xff] %vm1658, %v2544
        %v2549 = vld [vmem:[#allocation2] sm:$0xff]
        %v2550 = vld [vmem:[#allocation2 + $0x8] sm:$0xff]
        %v2551 = vld [vmem:[#allocation2 + $0x10] sm:$0xff]
        %v2552 = vld [vmem:[#allocation2 + $0x18] sm:$0xff]
        %v2553 = vmul.f32 %v2549, %v773
        %v2554 = vmul.f32 %v2550, %v778
        %v2555 = vmul.f32 %v2551, %v1666
        %v2556 = vmul.f32 %v2552, %v1671
        %v2557 = vadd.f32 %v2553, %v526
        %v2558 = vadd.f32 %v2554, %v527
        %v2559 = vadd.f32 %v2555, %v528
        %v2560 = vadd.f32 %v2556, %v529
        %v2561 = vld [vmem:[%s5] sm:$0x1]
        %v2562 = vld [vmem:[%s6] sm:$0x1]
        %2563 = vadd.xlane.f32.xlu0 %v2557
        %v2564 = vpop.xlane.xlu0 %2563
        %2565 = vadd.xlane.f32.xlu0 %v2558
        %v2566 = vpop.xlane.xlu0 %2565
        %2567 = vadd.xlane.f32.xlu0 %v2559
        %v2568 = vpop.xlane.xlu0 %2567
        %2569 = vadd.xlane.f32.xlu0 %v2560
        %v2570 = vpop.xlane.xlu0 %2569
        %v2571 = vmul.f32 %v2564, 0.03125
        %v2572 = vmul.f32 %v2566, 0.03125
        %v2573 = vmul.f32 %v2568, 0.03125
        %v2574 = vmul.f32 %v2570, 0.03125
        %v2575 = vsub.f32 %v2557, %v2571
        %v2576 = vsub.f32 %v2558, %v2572
        %v2577 = vsub.f32 %v2559, %v2573
        %v2578 = vsub.f32 %v2560, %v2574
        %v2579 = vmul.f32 %v2575, %v2575
        %v2580 = vmul.f32 %v2576, %v2576
        %v2581 = vmul.f32 %v2577, %v2577
        %v2582 = vmul.f32 %v2578, %v2578
        %v2583 = vmul.f32 %v2579, %v517
        %v2584 = vmul.f32 %v2580, %v517
        %v2585 = vmul.f32 %v2581, %v517
        %v2586 = vmul.f32 %v2582, %v517
        %2587 = vadd.xlane.f32.xlu0 %v2583
        %v2588 = vpop.xlane.xlu0 %2587
        %2589 = vadd.xlane.f32.xlu0 %v2584
        %v2590 = vpop.xlane.xlu0 %2589
        %2591 = vadd.xlane.f32.xlu0 %v2585
        %v2592 = vpop.xlane.xlu0 %2591
        %2593 = vadd.xlane.f32.xlu0 %v2586
        %v2594 = vpop.xlane.xlu0 %2593
        %v2595 = vmul.f32 %v2588, 0.03125
        %v2596 = vmul.f32 %v2590, 0.03125
        %v2597 = vmul.f32 %v2592, 0.03125
        %v2598 = vmul.f32 %v2594, 0.03125
        %v2599 = vadd.f32 %v2595, 1e-05
        %v2600 = vadd.f32 %v2596, 1e-05
        %v2601 = vadd.f32 %v2597, 1e-05
        %v2602 = vadd.f32 %v2598, 1e-05
        %v2603 = vrsqrt.pop %v2599
        %v2604 = vrsqrt.pop %v2600
        %v2605 = vrsqrt.pop %v2601
        %v2606 = vrsqrt.pop %v2602
        %v2607 = vmul.f32 %v2575, %v2603
        %v2608 = vmul.f32 %v2576, %v2604
        %v2609 = vmul.f32 %v2577, %v2605
        %v2610 = vmul.f32 %v2578, %v2606
        %v2612 = vlaneseq
        %v2613 = vshrl.u32 %v2612, 7
        %v2614 = vsub.s32 0, %v2613
        %v2615 = vrot.slane %v2561, %v2614
        %v2617 = vmul.f32 %v2607, %v2615
        %v2618 = vmul.f32 %v2608, %v2615
        %v2619 = vmul.f32 %v2609, %v2615
        %v2620 = vmul.f32 %v2610, %v2615
        %v2622 = vlaneseq
        %v2623 = vshrl.u32 %v2622, 7
        %v2624 = vsub.s32 0, %v2623
        %v2625 = vrot.slane %v2562, %v2624
        %v2627 = vadd.f32 %v2617, %v2625
        %v2628 = vadd.f32 %v2618, %v2625
        %v2629 = vadd.f32 %v2619, %v2625
        %v2630 = vadd.f32 %v2620, %v2625
        %v2631 = vld [vmem:[%s7] sm:$0xff]
        %v2632 = vld [vmem:[%s7 + $0x8] sm:$0xff]
        %v2633 = vld [vmem:[%s7 + $0x10] sm:$0xff]
        %v2634 = vld [vmem:[%s7 + $0x18] sm:$0xff]
        %v2635 = vld [vmem:[%s7 + $0x20] sm:$0xff]
        %v2636 = vld [vmem:[%s7 + $0x28] sm:$0xff]
        %v2637 = vld [vmem:[%s7 + $0x30] sm:$0xff]
        %v2638 = vld [vmem:[%s7 + $0x38] sm:$0xff]
        %v2639 = vld [vmem:[%s7 + $0x40] sm:$0xff]
        %v2640 = vld [vmem:[%s7 + $0x48] sm:$0xff]
        %v2641 = vld [vmem:[%s7 + $0x50] sm:$0xff]
        %v2642 = vld [vmem:[%s7 + $0x58] sm:$0xff]
        %v2643 = vld [vmem:[%s7 + $0x60] sm:$0xff]
        %v2644 = vld [vmem:[%s7 + $0x68] sm:$0xff]
        %v2645 = vld [vmem:[%s7 + $0x70] sm:$0xff]
        %v2646 = vld [vmem:[%s7 + $0x78] sm:$0xff]
        %v2647 = vld [vmem:[%s8] sm:$0x1]
        %v2649 = vlaneseq
        %v2650 = vshrl.u32 %v2649, 7
        %v2651 = vsub.s32 0, %v2650
        %v2652 = vrot.slane %v2647, %v2651
        %2654 = vmatprep.subr.mxu0 0.0
        %2655 = vmatpush1.msra.mxu0 %v2646
        %2656 = vmatprep.subr.mxu0 0.0
        %2657 = vmatpush1.msra.mxu0 %v2645
        %2658 = vmatprep.subr.mxu0 0.0
        %2659 = vmatpush1.msra.mxu0 %v2644
        %2660 = vmatprep.subr.mxu0 0.0
        %2661 = vmatpush1.msra.mxu0 %v2643
        %2662 = vmatprep.subr.mxu0 0.0
        %2663 = vmatpush1.msra.mxu0 %v2642
        %2664 = vmatprep.subr.mxu0 0.0
        %2665 = vmatpush1.msra.mxu0 %v2641
        %2666 = vmatprep.subr.mxu0 0.0
        %2667 = vmatpush1.msra.mxu0 %v2640
        %2668 = vmatprep.subr.mxu0 0.0
        %2669 = vmatpush1.msra.mxu0 %v2639
        %2670 = vmatprep.subr.mxu0 0.0
        %2671 = vmatpush1.msra.mxu0 %v2638
        %2672 = vmatprep.subr.mxu0 0.0
        %2673 = vmatpush1.msra.mxu0 %v2637
        %2674 = vmatprep.subr.mxu0 0.0
        %2675 = vmatpush1.msra.mxu0 %v2636
        %2676 = vmatprep.subr.mxu0 0.0
        %2677 = vmatpush1.msra.mxu0 %v2635
        %2678 = vmatprep.subr.mxu0 0.0
        %2679 = vmatpush1.msra.mxu0 %v2634
        %2680 = vmatprep.subr.mxu0 0.0
        %2681 = vmatpush1.msra.mxu0 %v2633
        %2682 = vmatprep.subr.mxu0 0.0
        %2683 = vmatpush1.msra.mxu0 %v2632
        %2684 = vmatprep.subr.mxu0 0.0
        %2685 = vmatpush1.msra.mxu0 %v2631
        %2686 = vmatprep.subr.mxu0 0.0
        %2687 = vmatpush2.msra.mxu0 0.0
        %2688 = vmatprep.subr.mxu0 0.0
        %2689 = vmatpush2.msra.mxu0 0.0
        %2690 = vmatprep.subr.mxu0 0.0
        %2691 = vmatpush2.msra.mxu0 0.0
        %2692 = vmatprep.subr.mxu0 0.0
        %2693 = vmatpush2.msra.mxu0 0.0
        %2694 = vmatprep.subr.mxu0 0.0
        %2695 = vmatpush2.msra.mxu0 0.0
        %2696 = vmatprep.subr.mxu0 0.0
        %2697 = vmatpush2.msra.mxu0 0.0
        %2698 = vmatprep.subr.mxu0 0.0
        %2699 = vmatpush2.msra.mxu0 0.0
        %2700 = vmatprep.subr.mxu0 0.0
        %2701 = vmatpush2.msra.mxu0 0.0
        %2702 = vmatprep.subr.mxu0 0.0
        %2703 = vmatpush2.msra.mxu0 0.0
        %2704 = vmatprep.subr.mxu0 0.0
        %2705 = vmatpush2.msra.mxu0 0.0
        %2706 = vmatprep.subr.mxu0 0.0
        %2707 = vmatpush2.msra.mxu0 0.0
        %2708 = vmatprep.subr.mxu0 0.0
        %2709 = vmatpush2.msra.mxu0 0.0
        %2710 = vmatprep.subr.mxu0 0.0
        %2711 = vmatpush2.msra.mxu0 0.0
        %2712 = vmatprep.subr.mxu0 0.0
        %2713 = vmatpush2.msra.mxu0 0.0
        %2714 = vmatprep.subr.mxu0 0.0
        %2715 = vmatpush2.msra.mxu0 0.0
        %2716 = vmatprep.subr.mxu0 0.0
        %2717 = vmatpush2.msra.mxu0 0.0
        %2718 = vmatprep.mubr.f32.mxu0 0.0
        %2719 = vmatmul.mubr.f32.gmra.mxu0 %v2627
        %v2720 = vpop.f32.mrf.mxu0
        %v2721 = vadd.f32 %v2652, %v2720
        %v2722 = vpop.f32.mrf.mxu0
        %2723 = vmatprep.mubr.f32.mxu0 0.0
        %2724 = vmatmul.mubr.f32.gmra.mxu0 %v2628
        %v2725 = vpop.f32.mrf.mxu0
        %v2726 = vadd.f32 %v2652, %v2725
        %v2727 = vpop.f32.mrf.mxu0
        %2728 = vmatprep.mubr.f32.mxu0 0.0
        %2729 = vmatmul.mubr.f32.gmra.mxu0 %v2629
        %v2730 = vpop.f32.mrf.mxu0
        %v2731 = vadd.f32 %v2652, %v2730
        %v2732 = vpop.f32.mrf.mxu0
        %2733 = vmatprep.mubr.f32.mxu0 0.0
        %2734 = vmatmul.mubr.f32.gmra.mxu0 %v2630
        %v2735 = vpop.f32.mrf.mxu0
        %v2736 = vadd.f32 %v2652, %v2735
        %v2737 = vpop.f32.mrf.mxu0
        %2738 = vdwg.mxu0
        %v2739 = vmax.f32 %v2721, 0.0
        %v2740 = vmax.f32 %v2726, 0.0
        %v2741 = vmax.f32 %v2731, 0.0
        %v2742 = vmax.f32 %v2736, 0.0
        %v2743 = vld [vmem:[#allocation6] sm:$0xff]
        %v2744 = vld [vmem:[#allocation6 + $0x8] sm:$0xff]
        %v2745 = vld [vmem:[#allocation6 + $0x10] sm:$0xff]
        %v2746 = vld [vmem:[#allocation6 + $0x18] sm:$0xff]
        %v2747 = vld [vmem:[#allocation6 + $0x20] sm:$0xff]
        %v2748 = vld [vmem:[#allocation6 + $0x28] sm:$0xff]
        %v2749 = vld [vmem:[#allocation6 + $0x30] sm:$0xff]
        %v2750 = vld [vmem:[#allocation6 + $0x38] sm:$0xff]
        %v2751 = vld [vmem:[#allocation6 + $0x40] sm:$0xff]
        %v2752 = vld [vmem:[#allocation6 + $0x48] sm:$0xff]
        %v2753 = vld [vmem:[#allocation6 + $0x50] sm:$0xff]
        %v2754 = vld [vmem:[#allocation6 + $0x58] sm:$0xff]
        %v2755 = vld [vmem:[#allocation6 + $0x60] sm:$0xff]
        %v2756 = vld [vmem:[#allocation6 + $0x68] sm:$0xff]
        %v2757 = vld [vmem:[#allocation6 + $0x70] sm:$0xff]
        %v2758 = vld [vmem:[#allocation6 + $0x78] sm:$0xff]
        %v2759 = vld [vmem:[%s10] sm:$0x1]
        %v2761 = vlaneseq
        %v2762 = vshrl.u32 %v2761, 7
        %v2763 = vsub.s32 0, %v2762
        %v2764 = vrot.slane %v2759, %v2763
        %2766 = vmatprep.subr.mxu0 0.0
        %2767 = vmatpush1.msra.mxu0 %v2758
        %2768 = vmatprep.subr.mxu0 0.0
        %2769 = vmatpush1.msra.mxu0 %v2757
        %2770 = vmatprep.subr.mxu0 0.0
        %2771 = vmatpush1.msra.mxu0 %v2756
        %2772 = vmatprep.subr.mxu0 0.0
        %2773 = vmatpush1.msra.mxu0 %v2755
        %2774 = vmatprep.subr.mxu0 0.0
        %2775 = vmatpush1.msra.mxu0 %v2754
        %2776 = vmatprep.subr.mxu0 0.0
        %2777 = vmatpush1.msra.mxu0 %v2753
        %2778 = vmatprep.subr.mxu0 0.0
        %2779 = vmatpush1.msra.mxu0 %v2752
        %2780 = vmatprep.subr.mxu0 0.0
        %2781 = vmatpush1.msra.mxu0 %v2751
        %2782 = vmatprep.subr.mxu0 0.0
        %2783 = vmatpush1.msra.mxu0 %v2750
        %2784 = vmatprep.subr.mxu0 0.0
        %2785 = vmatpush1.msra.mxu0 %v2749
        %2786 = vmatprep.subr.mxu0 0.0
        %2787 = vmatpush1.msra.mxu0 %v2748
        %2788 = vmatprep.subr.mxu0 0.0
        %2789 = vmatpush1.msra.mxu0 %v2747
        %2790 = vmatprep.subr.mxu0 0.0
        %2791 = vmatpush1.msra.mxu0 %v2746
        %2792 = vmatprep.subr.mxu0 0.0
        %2793 = vmatpush1.msra.mxu0 %v2745
        %2794 = vmatprep.subr.mxu0 0.0
        %2795 = vmatpush1.msra.mxu0 %v2744
        %2796 = vmatprep.subr.mxu0 0.0
        %2797 = vmatpush1.msra.mxu0 %v2743
        %2798 = vmatprep.subr.mxu0 0.0
        %2799 = vmatpush2.msra.mxu0 0.0
        %2800 = vmatprep.subr.mxu0 0.0
        %2801 = vmatpush2.msra.mxu0 0.0
        %2802 = vmatprep.subr.mxu0 0.0
        %2803 = vmatpush2.msra.mxu0 0.0
        %2804 = vmatprep.subr.mxu0 0.0
        %2805 = vmatpush2.msra.mxu0 0.0
        %2806 = vmatprep.subr.mxu0 0.0
        %2807 = vmatpush2.msra.mxu0 0.0
        %2808 = vmatprep.subr.mxu0 0.0
        %2809 = vmatpush2.msra.mxu0 0.0
        %2810 = vmatprep.subr.mxu0 0.0
        %2811 = vmatpush2.msra.mxu0 0.0
        %2812 = vmatprep.subr.mxu0 0.0
        %2813 = vmatpush2.msra.mxu0 0.0
        %2814 = vmatprep.subr.mxu0 0.0
        %2815 = vmatpush2.msra.mxu0 0.0
        %2816 = vmatprep.subr.mxu0 0.0
        %2817 = vmatpush2.msra.mxu0 0.0
        %2818 = vmatprep.subr.mxu0 0.0
        %2819 = vmatpush2.msra.mxu0 0.0
        %2820 = vmatprep.subr.mxu0 0.0
        %2821 = vmatpush2.msra.mxu0 0.0
        %2822 = vmatprep.subr.mxu0 0.0
        %2823 = vmatpush2.msra.mxu0 0.0
        %2824 = vmatprep.subr.mxu0 0.0
        %2825 = vmatpush2.msra.mxu0 0.0
        %2826 = vmatprep.subr.mxu0 0.0
        %2827 = vmatpush2.msra.mxu0 0.0
        %2828 = vmatprep.subr.mxu0 0.0
        %2829 = vmatpush2.msra.mxu0 0.0
        %2830 = vmatprep.mubr.f32.mxu0 0.0
        %2831 = vmatmul.mubr.f32.gmra.mxu0 %v2739
        %v2832 = vpop.f32.mrf.mxu0
        %v2833 = vadd.f32 %v2764, %v2832
        %v2834 = vpop.f32.mrf.mxu0
        %2835 = vmatprep.mubr.f32.mxu0 0.0
        %2836 = vmatmul.mubr.f32.gmra.mxu0 %v2740
        %v2837 = vpop.f32.mrf.mxu0
        %v2838 = vadd.f32 %v2764, %v2837
        %v2839 = vpop.f32.mrf.mxu0
        %2840 = vmatprep.mubr.f32.mxu0 0.0
        %2841 = vmatmul.mubr.f32.gmra.mxu0 %v2741
        %v2842 = vpop.f32.mrf.mxu0
        %v2843 = vadd.f32 %v2764, %v2842
        %v2844 = vpop.f32.mrf.mxu0
        %2845 = vmatprep.mubr.f32.mxu0 0.0
        %2846 = vmatmul.mubr.f32.gmra.mxu0 %v2742
        %v2847 = vpop.f32.mrf.mxu0
        %v2848 = vadd.f32 %v2764, %v2847
        %v2849 = vpop.f32.mrf.mxu0
        %2850 = vdwg.mxu0
        %v2851 = vmul.f32 %v2833, %v773
        %v2852 = vmul.f32 %v2838, %v778
        %v2853 = vmul.f32 %v2843, %v1666
        %v2854 = vmul.f32 %v2848, %v1671
        %v2855 = vadd.f32 %v2851, %v2627
        %v2856 = vadd.f32 %v2852, %v2628
        %v2857 = vadd.f32 %v2853, %v2629
        %v2858 = vadd.f32 %v2854, %v2630
        %v2859 = vld [vmem:[%s11] sm:$0x1]
        %v2860 = vld [vmem:[%s12] sm:$0x1]
        %2861 = vadd.xlane.f32.xlu0 %v2855
        %v2862 = vpop.xlane.xlu0 %2861
        %2863 = vadd.xlane.f32.xlu0 %v2856
        %v2864 = vpop.xlane.xlu0 %2863
        %2865 = vadd.xlane.f32.xlu0 %v2857
        %v2866 = vpop.xlane.xlu0 %2865
        %2867 = vadd.xlane.f32.xlu0 %v2858
        %v2868 = vpop.xlane.xlu0 %2867
        %v2869 = vmul.f32 %v2862, 0.03125
        %v2870 = vmul.f32 %v2864, 0.03125
        %v2871 = vmul.f32 %v2866, 0.03125
        %v2872 = vmul.f32 %v2868, 0.03125
        %v2873 = vsub.f32 %v2855, %v2869
        %v2874 = vsub.f32 %v2856, %v2870
        %v2875 = vsub.f32 %v2857, %v2871
        %v2876 = vsub.f32 %v2858, %v2872
        %v2877 = vmul.f32 %v2873, %v2873
        %v2878 = vmul.f32 %v2874, %v2874
        %v2879 = vmul.f32 %v2875, %v2875
        %v2880 = vmul.f32 %v2876, %v2876
        %v2881 = vmul.f32 %v2877, %v517
        %v2882 = vmul.f32 %v2878, %v517
        %v2883 = vmul.f32 %v2879, %v517
        %v2884 = vmul.f32 %v2880, %v517
        %2885 = vadd.xlane.f32.xlu0 %v2881
        %v2886 = vpop.xlane.xlu0 %2885
        %2887 = vadd.xlane.f32.xlu0 %v2882
        %v2888 = vpop.xlane.xlu0 %2887
        %2889 = vadd.xlane.f32.xlu0 %v2883
        %v2890 = vpop.xlane.xlu0 %2889
        %2891 = vadd.xlane.f32.xlu0 %v2884
        %v2892 = vpop.xlane.xlu0 %2891
        %v2893 = vmul.f32 %v2886, 0.03125
        %v2894 = vmul.f32 %v2888, 0.03125
        %v2895 = vmul.f32 %v2890, 0.03125
        %v2896 = vmul.f32 %v2892, 0.03125
        %v2897 = vadd.f32 %v2893, 1e-05
        %v2898 = vadd.f32 %v2894, 1e-05
        %v2899 = vadd.f32 %v2895, 1e-05
        %v2900 = vadd.f32 %v2896, 1e-05
        %v2901 = vrsqrt.pop %v2897
        %v2902 = vrsqrt.pop %v2898
        %v2903 = vrsqrt.pop %v2899
        %v2904 = vrsqrt.pop %v2900
        %v2905 = vmul.f32 %v2873, %v2901
        %v2906 = vmul.f32 %v2874, %v2902
        %v2907 = vmul.f32 %v2875, %v2903
        %v2908 = vmul.f32 %v2876, %v2904
        %v2910 = vlaneseq
        %v2911 = vshrl.u32 %v2910, 7
        %v2912 = vsub.s32 0, %v2911
        %v2913 = vrot.slane %v2859, %v2912
        %v2915 = vmul.f32 %v2905, %v2913
        %v2916 = vmul.f32 %v2906, %v2913
        %v2917 = vmul.f32 %v2907, %v2913
        %v2918 = vmul.f32 %v2908, %v2913
        %v2920 = vlaneseq
        %v2921 = vshrl.u32 %v2920, 7
        %v2922 = vsub.s32 0, %v2921
        %v2923 = vrot.slane %v2860, %v2922
        %v2925 = vadd.f32 %v2915, %v2923
        %v2926 = vadd.f32 %v2916, %v2923
        %v2927 = vadd.f32 %v2917, %v2923
        %v2928 = vadd.f32 %v2918, %v2923
        %s2929 = scalar_lea.vmem [#allocation3], 384
        %v2930 = vld [vmem:[%s2929] sm:$0xff]
        %v2931 = vld [vmem:[%s2929 + $0x8] sm:$0xff]
        %v2932 = vld [vmem:[%s2929 + $0x10] sm:$0xff]
        %v2933 = vld [vmem:[%s2929 + $0x18] sm:$0xff]
        %v2934 = vld [vmem:[%s2929 + $0x20] sm:$0xff]
        %v2935 = vld [vmem:[%s2929 + $0x28] sm:$0xff]
        %v2936 = vld [vmem:[%s2929 + $0x30] sm:$0xff]
        %v2937 = vld [vmem:[%s2929 + $0x38] sm:$0xff]
        %v2938 = vld [vmem:[%s2929 + $0x40] sm:$0xff]
        %v2939 = vld [vmem:[%s2929 + $0x48] sm:$0xff]
        %v2940 = vld [vmem:[%s2929 + $0x50] sm:$0xff]
        %v2941 = vld [vmem:[%s2929 + $0x58] sm:$0xff]
        %v2942 = vld [vmem:[%s2929 + $0x60] sm:$0xff]
        %v2943 = vld [vmem:[%s2929 + $0x68] sm:$0xff]
        %v2944 = vld [vmem:[%s2929 + $0x70] sm:$0xff]
        %v2945 = vld [vmem:[%s2929 + $0x78] sm:$0xff]
        %v2946 = vld [vmem:[%s2929 + $0x80] sm:$0xff]
        %v2947 = vld [vmem:[%s2929 + $0x88] sm:$0xff]
        %v2948 = vld [vmem:[%s2929 + $0x90] sm:$0xff]
        %v2949 = vld [vmem:[%s2929 + $0x98] sm:$0xff]
        %v2950 = vld [vmem:[%s2929 + $0xa0] sm:$0xff]
        %v2951 = vld [vmem:[%s2929 + $0xa8] sm:$0xff]
        %v2952 = vld [vmem:[%s2929 + $0xb0] sm:$0xff]
        %v2953 = vld [vmem:[%s2929 + $0xb8] sm:$0xff]
        %v2954 = vld [vmem:[%s2929 + $0xc0] sm:$0xff]
        %v2955 = vld [vmem:[%s2929 + $0xc8] sm:$0xff]
        %v2956 = vld [vmem:[%s2929 + $0xd0] sm:$0xff]
        %v2957 = vld [vmem:[%s2929 + $0xd8] sm:$0xff]
        %v2958 = vld [vmem:[%s2929 + $0xe0] sm:$0xff]
        %v2959 = vld [vmem:[%s2929 + $0xe8] sm:$0xff]
        %v2960 = vld [vmem:[%s2929 + $0xf0] sm:$0xff]
        %v2961 = vld [vmem:[%s2929 + $0xf8] sm:$0xff]
        %v2962 = vld [vmem:[%s2929 + $0x100] sm:$0xff]
        %v2963 = vld [vmem:[%s2929 + $0x108] sm:$0xff]
        %v2964 = vld [vmem:[%s2929 + $0x110] sm:$0xff]
        %v2965 = vld [vmem:[%s2929 + $0x118] sm:$0xff]
        %v2966 = vld [vmem:[%s2929 + $0x120] sm:$0xff]
        %v2967 = vld [vmem:[%s2929 + $0x128] sm:$0xff]
        %v2968 = vld [vmem:[%s2929 + $0x130] sm:$0xff]
        %v2969 = vld [vmem:[%s2929 + $0x138] sm:$0xff]
        %v2970 = vld [vmem:[%s2929 + $0x140] sm:$0xff]
        %v2971 = vld [vmem:[%s2929 + $0x148] sm:$0xff]
        %v2972 = vld [vmem:[%s2929 + $0x150] sm:$0xff]
        %v2973 = vld [vmem:[%s2929 + $0x158] sm:$0xff]
        %v2974 = vld [vmem:[%s2929 + $0x160] sm:$0xff]
        %v2975 = vld [vmem:[%s2929 + $0x168] sm:$0xff]
        %v2976 = vld [vmem:[%s2929 + $0x170] sm:$0xff]
        %v2977 = vld [vmem:[%s2929 + $0x178] sm:$0xff]
        %s2978 = scalar_lea.vmem %s4, 3
        %v2979 = vld [vmem:[%s2978] sm:$0x7]
        %v2981 = vlaneseq
        %v2982 = vshrl.u32 %v2981, 7
        %v2983 = vsub.s32 0, %v2982
        %v2984 = vrot.slane %v2979, %v2983
        %v2985 = vlaneseq
        %v2986 = vshrl.u32 %v2985, 7
        %v2987 = vsub.s32 1, %v2986
        %v2988 = vrot.slane %v2979, %v2987
        %v2989 = vlaneseq
        %v2990 = vshrl.u32 %v2989, 7
        %v2991 = vsub.s32 2, %v2990
        %v2992 = vrot.slane %v2979, %v2991
        %2996 = vmatprep.subr.mxu0 %v2976
        %2997 = vmatpush1.msra.mxu0 %v2975
        %2998 = vmatprep.subr.mxu0 %v2973
        %2999 = vmatpush1.msra.mxu0 %v2972
        %3000 = vmatprep.subr.mxu0 %v2970
        %3001 = vmatpush1.msra.mxu0 %v2969
        %3002 = vmatprep.subr.mxu0 %v2967
        %3003 = vmatpush1.msra.mxu0 %v2966
        %3004 = vmatprep.subr.mxu0 %v2964
        %3005 = vmatpush1.msra.mxu0 %v2963
        %3006 = vmatprep.subr.mxu0 %v2961
        %3007 = vmatpush1.msra.mxu0 %v2960
        %3008 = vmatprep.subr.mxu0 %v2958
        %3009 = vmatpush1.msra.mxu0 %v2957
        %3010 = vmatprep.subr.mxu0 %v2955
        %3011 = vmatpush1.msra.mxu0 %v2954
        %3012 = vmatprep.subr.mxu0 %v2952
        %3013 = vmatpush1.msra.mxu0 %v2951
        %3014 = vmatprep.subr.mxu0 %v2949
        %3015 = vmatpush1.msra.mxu0 %v2948
        %3016 = vmatprep.subr.mxu0 %v2946
        %3017 = vmatpush1.msra.mxu0 %v2945
        %3018 = vmatprep.subr.mxu0 %v2943
        %3019 = vmatpush1.msra.mxu0 %v2942
        %3020 = vmatprep.subr.mxu0 %v2940
        %3021 = vmatpush1.msra.mxu0 %v2939
        %3022 = vmatprep.subr.mxu0 %v2937
        %3023 = vmatpush1.msra.mxu0 %v2936
        %3024 = vmatprep.subr.mxu0 %v2934
        %3025 = vmatpush1.msra.mxu0 %v2933
        %3026 = vmatprep.subr.mxu0 %v2931
        %3027 = vmatpush1.msra.mxu0 %v2930
        %3028 = vmatprep.subr.mxu0 0.0
        %3029 = vmatpush2.msra.mxu0 0.0
        %3030 = vmatprep.subr.mxu0 0.0
        %3031 = vmatpush2.msra.mxu0 0.0
        %3032 = vmatprep.subr.mxu0 0.0
        %3033 = vmatpush2.msra.mxu0 0.0
        %3034 = vmatprep.subr.mxu0 0.0
        %3035 = vmatpush2.msra.mxu0 0.0
        %3036 = vmatprep.subr.mxu0 0.0
        %3037 = vmatpush2.msra.mxu0 0.0
        %3038 = vmatprep.subr.mxu0 0.0
        %3039 = vmatpush2.msra.mxu0 0.0
        %3040 = vmatprep.subr.mxu0 0.0
        %3041 = vmatpush2.msra.mxu0 0.0
        %3042 = vmatprep.subr.mxu0 0.0
        %3043 = vmatpush2.msra.mxu0 0.0
        %3044 = vmatprep.subr.mxu0 0.0
        %3045 = vmatpush2.msra.mxu0 0.0
        %3046 = vmatprep.subr.mxu0 0.0
        %3047 = vmatpush2.msra.mxu0 0.0
        %3048 = vmatprep.subr.mxu0 0.0
        %3049 = vmatpush2.msra.mxu0 0.0
        %3050 = vmatprep.subr.mxu0 0.0
        %3051 = vmatpush2.msra.mxu0 0.0
        %3052 = vmatprep.subr.mxu0 0.0
        %3053 = vmatpush2.msra.mxu0 0.0
        %3054 = vmatprep.subr.mxu0 0.0
        %3055 = vmatpush2.msra.mxu0 0.0
        %3056 = vmatprep.subr.mxu0 0.0
        %3057 = vmatpush2.msra.mxu0 0.0
        %3058 = vmatprep.subr.mxu0 0.0
        %3059 = vmatpush2.msra.mxu0 0.0
        %3060 = vmatprep.mubr.f32.mxu0 0.0
        %3061 = vmatmul.mubr.f32.gmra.mxu0 %v2925
        %v3062 = vpop.f32.mrf.mxu0
        %v3063 = vadd.f32 %v2984, %v3062
        %v3064 = vpop.f32.mrf.mxu0
        %v3065 = vadd.f32 %v2988, %v3064
        %3066 = vmatprep.mubr.f32.mxu0 0.0
        %3067 = vmatmul.mubr.f32.gmra.mxu0 %v2926
        %v3068 = vpop.f32.mrf.mxu0
        %v3069 = vadd.f32 %v2984, %v3068
        %v3070 = vpop.f32.mrf.mxu0
        %v3071 = vadd.f32 %v2988, %v3070
        %3072 = vmatprep.mubr.f32.mxu0 0.0
        %3073 = vmatmul.mubr.f32.gmra.mxu0 %v2927
        %v3074 = vpop.f32.mrf.mxu0
        %v3075 = vadd.f32 %v2984, %v3074
        %v3076 = vpop.f32.mrf.mxu0
        %v3077 = vadd.f32 %v2988, %v3076
        %3078 = vmatprep.mubr.f32.mxu0 0.0
        %3079 = vmatmul.mubr.f32.gmra.mxu0 %v2928
        %v3080 = vpop.f32.mrf.mxu0
        %v3081 = vadd.f32 %v2984, %v3080
        %v3082 = vpop.f32.mrf.mxu0
        %v3083 = vadd.f32 %v2988, %v3082
        %3084 = vdwg.mxu0
        %3085 = vmatprep.subr.mxu0 0.0
        %3086 = vmatpush1.msra.mxu0 %v2977
        %3087 = vmatprep.subr.mxu0 0.0
        %3088 = vmatpush1.msra.mxu0 %v2974
        %3089 = vmatprep.subr.mxu0 0.0
        %3090 = vmatpush1.msra.mxu0 %v2971
        %3091 = vmatprep.subr.mxu0 0.0
        %3092 = vmatpush1.msra.mxu0 %v2968
        %3093 = vmatprep.subr.mxu0 0.0
        %3094 = vmatpush1.msra.mxu0 %v2965
        %3095 = vmatprep.subr.mxu0 0.0
        %3096 = vmatpush1.msra.mxu0 %v2962
        %3097 = vmatprep.subr.mxu0 0.0
        %3098 = vmatpush1.msra.mxu0 %v2959
        %3099 = vmatprep.subr.mxu0 0.0
        %3100 = vmatpush1.msra.mxu0 %v2956
        %3101 = vmatprep.subr.mxu0 0.0
        %3102 = vmatpush1.msra.mxu0 %v2953
        %3103 = vmatprep.subr.mxu0 0.0
        %3104 = vmatpush1.msra.mxu0 %v2950
        %3105 = vmatprep.subr.mxu0 0.0
        %3106 = vmatpush1.msra.mxu0 %v2947
        %3107 = vmatprep.subr.mxu0 0.0
        %3108 = vmatpush1.msra.mxu0 %v2944
        %3109 = vmatprep.subr.mxu0 0.0
        %3110 = vmatpush1.msra.mxu0 %v2941
        %3111 = vmatprep.subr.mxu0 0.0
        %3112 = vmatpush1.msra.mxu0 %v2938
        %3113 = vmatprep.subr.mxu0 0.0
        %3114 = vmatpush1.msra.mxu0 %v2935
        %3115 = vmatprep.subr.mxu0 0.0
        %3116 = vmatpush1.msra.mxu0 %v2932
        %3117 = vmatprep.subr.mxu0 0.0
        %3118 = vmatpush2.msra.mxu0 0.0
        %3119 = vmatprep.subr.mxu0 0.0
        %3120 = vmatpush2.msra.mxu0 0.0
        %3121 = vmatprep.subr.mxu0 0.0
        %3122 = vmatpush2.msra.mxu0 0.0
        %3123 = vmatprep.subr.mxu0 0.0
        %3124 = vmatpush2.msra.mxu0 0.0
        %3125 = vmatprep.subr.mxu0 0.0
        %3126 = vmatpush2.msra.mxu0 0.0
        %3127 = vmatprep.subr.mxu0 0.0
        %3128 = vmatpush2.msra.mxu0 0.0
        %3129 = vmatprep.subr.mxu0 0.0
        %3130 = vmatpush2.msra.mxu0 0.0
        %3131 = vmatprep.subr.mxu0 0.0
        %3132 = vmatpush2.msra.mxu0 0.0
        %3133 = vmatprep.subr.mxu0 0.0
        %3134 = vmatpush2.msra.mxu0 0.0
        %3135 = vmatprep.subr.mxu0 0.0
        %3136 = vmatpush2.msra.mxu0 0.0
        %3137 = vmatprep.subr.mxu0 0.0
        %3138 = vmatpush2.msra.mxu0 0.0
        %3139 = vmatprep.subr.mxu0 0.0
        %3140 = vmatpush2.msra.mxu0 0.0
        %3141 = vmatprep.subr.mxu0 0.0
        %3142 = vmatpush2.msra.mxu0 0.0
        %3143 = vmatprep.subr.mxu0 0.0
        %3144 = vmatpush2.msra.mxu0 0.0
        %3145 = vmatprep.subr.mxu0 0.0
        %3146 = vmatpush2.msra.mxu0 0.0
        %3147 = vmatprep.subr.mxu0 0.0
        %3148 = vmatpush2.msra.mxu0 0.0
        %3149 = vmatprep.mubr.f32.mxu0 0.0
        %3150 = vmatmul.mubr.f32.gmra.mxu0 %v2925
        %v3151 = vpop.f32.mrf.mxu0
        %v3152 = vadd.f32 %v2992, %v3151
        %v3153 = vpop.f32.mrf.mxu0
        %3154 = vmatprep.mubr.f32.mxu0 0.0
        %3155 = vmatmul.mubr.f32.gmra.mxu0 %v2926
        %v3156 = vpop.f32.mrf.mxu0
        %v3157 = vadd.f32 %v2992, %v3156
        %v3158 = vpop.f32.mrf.mxu0
        %3159 = vmatprep.mubr.f32.mxu0 0.0
        %3160 = vmatmul.mubr.f32.gmra.mxu0 %v2927
        %v3161 = vpop.f32.mrf.mxu0
        %v3162 = vadd.f32 %v2992, %v3161
        %v3163 = vpop.f32.mrf.mxu0
        %3164 = vmatprep.mubr.f32.mxu0 0.0
        %3165 = vmatmul.mubr.f32.gmra.mxu0 %v2928
        %v3166 = vpop.f32.mrf.mxu0
        %v3167 = vadd.f32 %v2992, %v3166
        %v3168 = vpop.f32.mrf.mxu0
        %3169 = vdwg.mxu0
        %v3170 = vld [vmem:[%s510] sm:$0x1]
        %v3172 = vlaneseq
        %v3173 = vshrl.u32 %v3172, 7
        %v3174 = vsub.s32 0, %v3173
        %v3175 = vrot.slane %v3170, %v3174
        %v3177 = vmul.f32 %v773, %v3175
        %v3178 = vmul.f32 %v778, %v3175
        %v3179 = vsub.f32 1.0, %v3177
        %v3180 = vsub.f32 1.0, %v3178
        %v3181 = vmul.f32 %v3179, 100000.0
        %v3182 = vmul.f32 %v3180, 100000.0
        %v3184 = vsel %vm792, %v3063, 0
        %v3187 = vsel %vm792, %v3069, 0
        %v3190 = vsel %vm792, %v3065, 0
        %v3193 = vsel %vm792, %v3071, 0
        %3195 = vmatprep.subr.mxu0 0.0
        %3196 = vmatpush1.xpose.msra.mxu0 0.0
        %3197 = vmatprep.subr.mxu0 0.0
        %3198 = vmatpush1.xpose.msra.mxu0 0.0
        %3199 = vmatprep.subr.mxu0 0.0
        %3200 = vmatpush1.xpose.msra.mxu0 0.0
        %3201 = vmatprep.subr.mxu0 0.0
        %3202 = vmatpush1.xpose.msra.mxu0 0.0
        %3203 = vmatprep.subr.mxu0 0.0
        %3204 = vmatpush1.xpose.msra.mxu0 0.0
        %3205 = vmatprep.subr.mxu0 0.0
        %3206 = vmatpush1.xpose.msra.mxu0 0.0
        %3207 = vmatprep.subr.mxu0 0.0
        %3208 = vmatpush1.xpose.msra.mxu0 0.0
        %3209 = vmatprep.subr.mxu0 0.0
        %3210 = vmatpush1.xpose.msra.mxu0 0.0
        %3211 = vmatprep.subr.mxu0 0.0
        %3212 = vmatpush1.xpose.msra.mxu0 0.0
        %3213 = vmatprep.subr.mxu0 0.0
        %3214 = vmatpush1.xpose.msra.mxu0 0.0
        %3215 = vmatprep.subr.mxu0 0.0
        %3216 = vmatpush1.xpose.msra.mxu0 0.0
        %3217 = vmatprep.subr.mxu0 0.0
        %3218 = vmatpush1.xpose.msra.mxu0 0.0
        %3219 = vmatprep.subr.mxu0 0.0
        %3220 = vmatpush1.xpose.msra.mxu0 0.0
        %3221 = vmatprep.subr.mxu0 0.0
        %3222 = vmatpush1.xpose.msra.mxu0 0.0
        %3223 = vmatprep.subr.mxu0 0.0
        %3224 = vmatpush1.xpose.msra.mxu0 %v3193
        %3225 = vmatprep.subr.mxu0 0.0
        %3226 = vmatpush1.xpose.msra.mxu0 %v3190
        %3227 = vmatprep.subr.mxu0 0.0
        %3228 = vmatpush2.xpose.msra.mxu0 0.0
        %3229 = vmatprep.subr.mxu0 0.0
        %3230 = vmatpush2.xpose.msra.mxu0 0.0
        %3231 = vmatprep.subr.mxu0 0.0
        %3232 = vmatpush2.xpose.msra.mxu0 0.0
        %3233 = vmatprep.subr.mxu0 0.0
        %3234 = vmatpush2.xpose.msra.mxu0 0.0
        %3235 = vmatprep.subr.mxu0 0.0
        %3236 = vmatpush2.xpose.msra.mxu0 0.0
        %3237 = vmatprep.subr.mxu0 0.0
        %3238 = vmatpush2.xpose.msra.mxu0 0.0
        %3239 = vmatprep.subr.mxu0 0.0
        %3240 = vmatpush2.xpose.msra.mxu0 0.0
        %3241 = vmatprep.subr.mxu0 0.0
        %3242 = vmatpush2.xpose.msra.mxu0 0.0
        %3243 = vmatprep.subr.mxu0 0.0
        %3244 = vmatpush2.xpose.msra.mxu0 0.0
        %3245 = vmatprep.subr.mxu0 0.0
        %3246 = vmatpush2.xpose.msra.mxu0 0.0
        %3247 = vmatprep.subr.mxu0 0.0
        %3248 = vmatpush2.xpose.msra.mxu0 0.0
        %3249 = vmatprep.subr.mxu0 0.0
        %3250 = vmatpush2.xpose.msra.mxu0 0.0
        %3251 = vmatprep.subr.mxu0 0.0
        %3252 = vmatpush2.xpose.msra.mxu0 0.0
        %3253 = vmatprep.subr.mxu0 0.0
        %3254 = vmatpush2.xpose.msra.mxu0 0.0
        %3255 = vmatprep.subr.mxu0 0.0
        %3256 = vmatpush2.xpose.msra.mxu0 0.0
        %3257 = vmatprep.subr.mxu0 0.0
        %3258 = vmatpush2.xpose.msra.mxu0 0.0
        %3259 = vmatprep.mubr.f32.mxu0 0.0
        %3260 = vmatmul.mubr.f32.gmra.mxu0 %v3184
        %v3261 = vpop.f32.mrf.mxu0
        %v3262 = vadd.f32 0.0, %v3261
        %v3263 = vpop.f32.mrf.mxu0
        %3264 = vmatprep.mubr.f32.mxu0 0.0
        %3265 = vmatmul.mubr.f32.gmra.mxu0 %v3187
        %v3266 = vpop.f32.mrf.mxu0
        %v3267 = vadd.f32 0.0, %v3266
        %v3268 = vpop.f32.mrf.mxu0
        %3269 = vdwg.mxu0
        %v3270 = vsub.f32 %v3262, %v3181
        %v3271 = vsub.f32 %v3267, %v3182
        %v3272 = vmul.f32 %v3270, 0.35355338
        %v3273 = vmul.f32 %v3271, 0.35355338
        %v3274 = vsel %vm884, %v3272, -inf
        %3275 = vmax.xlane.f32.xlu0 %v3274
        %v3276 = vpop.xlane.xlu0 %3275
        %v3277 = vsel %vm884, %v3273, -inf
        %3278 = vmax.xlane.f32.xlu0 %v3277
        %v3279 = vpop.xlane.xlu0 %3278
        %v3280 = vsub.f32 %v3272, %v3276
        %v3281 = vsub.f32 %v3273, %v3279
        %v3282 = vmul.f32 %v3280, 1.442695
        %v3283 = vpow.pop %v3282
        %v3284 = vmul.f32 %v3281, 1.442695
        %v3285 = vpow.pop %v3284
        %v3286 = vsel %vm884, %v3283, 0.0
        %3287 = vadd.xlane.f32.xlu0 %v3286
        %v3288 = vpop.xlane.xlu0 %3287
        %v3289 = vsel %vm884, %v3285, 0.0
        %3290 = vadd.xlane.f32.xlu0 %v3289
        %v3291 = vpop.xlane.xlu0 %3290
        %v3292 = vrcp.pop %v3288
        %v3293 = vrcp.pop %v3291
        %v3294 = vmul.f32 %v3288, %v3292
        %v3295 = vmul.f32 %v3291, %v3293
        %v3296 = vsub.f32 2.0, %v3294
        %v3297 = vsub.f32 2.0, %v3295
        %v3298 = vmul.f32 %v3292, %v3296
        %v3299 = vmul.f32 %v3293, %v3297
        %v3300 = vmul.f32 %v3283, %v3298
        %v3301 = vmul.f32 %v3285, %v3299
        %v3303 = vsel %vm884, %v3300, 0
        %v3306 = vsel %vm884, %v3301, 0
        %3308 = vmatprep.subr.mxu0 0.0
        %3309 = vmatpush1.msra.mxu0 0.0
        %3310 = vmatprep.subr.mxu0 0.0
        %3311 = vmatpush1.msra.mxu0 0.0
        %3312 = vmatprep.subr.mxu0 0.0
        %3313 = vmatpush1.msra.mxu0 0.0
        %3314 = vmatprep.subr.mxu0 0.0
        %3315 = vmatpush1.msra.mxu0 0.0
        %3316 = vmatprep.subr.mxu0 0.0
        %3317 = vmatpush1.msra.mxu0 0.0
        %3318 = vmatprep.subr.mxu0 0.0
        %3319 = vmatpush1.msra.mxu0 0.0
        %3320 = vmatprep.subr.mxu0 0.0
        %3321 = vmatpush1.msra.mxu0 0.0
        %3322 = vmatprep.subr.mxu0 0.0
        %3323 = vmatpush1.msra.mxu0 0.0
        %3324 = vmatprep.subr.mxu0 0.0
        %3325 = vmatpush1.msra.mxu0 0.0
        %3326 = vmatprep.subr.mxu0 0.0
        %3327 = vmatpush1.msra.mxu0 0.0
        %3328 = vmatprep.subr.mxu0 0.0
        %3329 = vmatpush1.msra.mxu0 0.0
        %3330 = vmatprep.subr.mxu0 0.0
        %3331 = vmatpush1.msra.mxu0 0.0
        %3332 = vmatprep.subr.mxu0 0.0
        %3333 = vmatpush1.msra.mxu0 0.0
        %3334 = vmatprep.subr.mxu0 0.0
        %3335 = vmatpush1.msra.mxu0 0.0
        %3336 = vmatprep.subr.mxu0 0.0
        %3337 = vmatpush1.msra.mxu0 %v3157
        %3338 = vmatprep.subr.mxu0 0.0
        %3339 = vmatpush1.msra.mxu0 %v3152
        %3340 = vmatprep.subr.mxu0 0.0
        %3341 = vmatpush2.msra.mxu0 0.0
        %3342 = vmatprep.subr.mxu0 0.0
        %3343 = vmatpush2.msra.mxu0 0.0
        %3344 = vmatprep.subr.mxu0 0.0
        %3345 = vmatpush2.msra.mxu0 0.0
        %3346 = vmatprep.subr.mxu0 0.0
        %3347 = vmatpush2.msra.mxu0 0.0
        %3348 = vmatprep.subr.mxu0 0.0
        %3349 = vmatpush2.msra.mxu0 0.0
        %3350 = vmatprep.subr.mxu0 0.0
        %3351 = vmatpush2.msra.mxu0 0.0
        %3352 = vmatprep.subr.mxu0 0.0
        %3353 = vmatpush2.msra.mxu0 0.0
        %3354 = vmatprep.subr.mxu0 0.0
        %3355 = vmatpush2.msra.mxu0 0.0
        %3356 = vmatprep.subr.mxu0 0.0
        %3357 = vmatpush2.msra.mxu0 0.0
        %3358 = vmatprep.subr.mxu0 0.0
        %3359 = vmatpush2.msra.mxu0 0.0
        %3360 = vmatprep.subr.mxu0 0.0
        %3361 = vmatpush2.msra.mxu0 0.0
        %3362 = vmatprep.subr.mxu0 0.0
        %3363 = vmatpush2.msra.mxu0 0.0
        %3364 = vmatprep.subr.mxu0 0.0
        %3365 = vmatpush2.msra.mxu0 0.0
        %3366 = vmatprep.subr.mxu0 0.0
        %3367 = vmatpush2.msra.mxu0 0.0
        %3368 = vmatprep.subr.mxu0 0.0
        %3369 = vmatpush2.msra.mxu0 0.0
        %3370 = vmatprep.subr.mxu0 0.0
        %3371 = vmatpush2.msra.mxu0 0.0
        %3372 = vmatprep.mubr.f32.mxu0 0.0
        %3373 = vmatmul.mubr.f32.gmra.mxu0 %v3303
        %v3374 = vpop.f32.mrf.mxu0
        %v3375 = vadd.f32 0.0, %v3374
        %v3376 = vpop.f32.mrf.mxu0
        %3377 = vmatprep.mubr.f32.mxu0 0.0
        %3378 = vmatmul.mubr.f32.gmra.mxu0 %v3306
        %v3379 = vpop.f32.mrf.mxu0
        %v3380 = vadd.f32 0.0, %v3379
        %v3381 = vpop.f32.mrf.mxu0
        %3382 = vdwg.mxu0
        %3383 = vst.msk [vmem:[#allocation2] sm:$0xff] %vm792, %v3375
        %3384 = vst.msk [vmem:[#allocation2 + $0x8] sm:$0xff] %vm792, %v3380
        %3385 = vrot.lane.b32.xlu0 %v3063, 120
        %v3386 = vpop.permute.xlu0 %3385
        %3387 = vrot.lane.b32.xlu0 %v3069, 120
        %v3388 = vpop.permute.xlu0 %3387
        %3389 = vrot.lane.b32.xlu0 %v3065, 120
        %v3390 = vpop.permute.xlu0 %3389
        %3391 = vrot.lane.b32.xlu0 %v3071, 120
        %v3392 = vpop.permute.xlu0 %3391
        %v3393 = vsel %vm792, %v3386, 0
        %v3395 = vsel %vm792, %v3388, 0
        %v3397 = vsel %vm792, %v3390, 0
        %v3399 = vsel %vm792, %v3392, 0
        %3401 = vmatprep.subr.mxu0 0.0
        %3402 = vmatpush1.xpose.msra.mxu0 0.0
        %3403 = vmatprep.subr.mxu0 0.0
        %3404 = vmatpush1.xpose.msra.mxu0 0.0
        %3405 = vmatprep.subr.mxu0 0.0
        %3406 = vmatpush1.xpose.msra.mxu0 0.0
        %3407 = vmatprep.subr.mxu0 0.0
        %3408 = vmatpush1.xpose.msra.mxu0 0.0
        %3409 = vmatprep.subr.mxu0 0.0
        %3410 = vmatpush1.xpose.msra.mxu0 0.0
        %3411 = vmatprep.subr.mxu0 0.0
        %3412 = vmatpush1.xpose.msra.mxu0 0.0
        %3413 = vmatprep.subr.mxu0 0.0
        %3414 = vmatpush1.xpose.msra.mxu0 0.0
        %3415 = vmatprep.subr.mxu0 0.0
        %3416 = vmatpush1.xpose.msra.mxu0 0.0
        %3417 = vmatprep.subr.mxu0 0.0
        %3418 = vmatpush1.xpose.msra.mxu0 0.0
        %3419 = vmatprep.subr.mxu0 0.0
        %3420 = vmatpush1.xpose.msra.mxu0 0.0
        %3421 = vmatprep.subr.mxu0 0.0
        %3422 = vmatpush1.xpose.msra.mxu0 0.0
        %3423 = vmatprep.subr.mxu0 0.0
        %3424 = vmatpush1.xpose.msra.mxu0 0.0
        %3425 = vmatprep.subr.mxu0 0.0
        %3426 = vmatpush1.xpose.msra.mxu0 0.0
        %3427 = vmatprep.subr.mxu0 0.0
        %3428 = vmatpush1.xpose.msra.mxu0 0.0
        %3429 = vmatprep.subr.mxu0 0.0
        %3430 = vmatpush1.xpose.msra.mxu0 %v3399
        %3431 = vmatprep.subr.mxu0 0.0
        %3432 = vmatpush1.xpose.msra.mxu0 %v3397
        %3433 = vmatprep.subr.mxu0 0.0
        %3434 = vmatpush2.xpose.msra.mxu0 0.0
        %3435 = vmatprep.subr.mxu0 0.0
        %3436 = vmatpush2.xpose.msra.mxu0 0.0
        %3437 = vmatprep.subr.mxu0 0.0
        %3438 = vmatpush2.xpose.msra.mxu0 0.0
        %3439 = vmatprep.subr.mxu0 0.0
        %3440 = vmatpush2.xpose.msra.mxu0 0.0
        %3441 = vmatprep.subr.mxu0 0.0
        %3442 = vmatpush2.xpose.msra.mxu0 0.0
        %3443 = vmatprep.subr.mxu0 0.0
        %3444 = vmatpush2.xpose.msra.mxu0 0.0
        %3445 = vmatprep.subr.mxu0 0.0
        %3446 = vmatpush2.xpose.msra.mxu0 0.0
        %3447 = vmatprep.subr.mxu0 0.0
        %3448 = vmatpush2.xpose.msra.mxu0 0.0
        %3449 = vmatprep.subr.mxu0 0.0
        %3450 = vmatpush2.xpose.msra.mxu0 0.0
        %3451 = vmatprep.subr.mxu0 0.0
        %3452 = vmatpush2.xpose.msra.mxu0 0.0
        %3453 = vmatprep.subr.mxu0 0.0
        %3454 = vmatpush2.xpose.msra.mxu0 0.0
        %3455 = vmatprep.subr.mxu0 0.0
        %3456 = vmatpush2.xpose.msra.mxu0 0.0
        %3457 = vmatprep.subr.mxu0 0.0
        %3458 = vmatpush2.xpose.msra.mxu0 0.0
        %3459 = vmatprep.subr.mxu0 0.0
        %3460 = vmatpush2.xpose.msra.mxu0 0.0
        %3461 = vmatprep.subr.mxu0 0.0
        %3462 = vmatpush2.xpose.msra.mxu0 0.0
        %3463 = vmatprep.subr.mxu0 0.0
        %3464 = vmatpush2.xpose.msra.mxu0 0.0
        %3465 = vmatprep.mubr.f32.mxu0 0.0
        %3466 = vmatmul.mubr.f32.gmra.mxu0 %v3393
        %v3467 = vpop.f32.mrf.mxu0
        %v3468 = vadd.f32 0.0, %v3467
        %v3469 = vpop.f32.mrf.mxu0
        %3470 = vmatprep.mubr.f32.mxu0 0.0
        %3471 = vmatmul.mubr.f32.gmra.mxu0 %v3395
        %v3472 = vpop.f32.mrf.mxu0
        %v3473 = vadd.f32 0.0, %v3472
        %v3474 = vpop.f32.mrf.mxu0
        %3475 = vdwg.mxu0
        %v3476 = vsub.f32 %v3468, %v3181
        %v3477 = vsub.f32 %v3473, %v3182
        %v3478 = vmul.f32 %v3476, 0.35355338
        %v3479 = vmul.f32 %v3477, 0.35355338
        %v3480 = vsel %vm884, %v3478, -inf
        %3481 = vmax.xlane.f32.xlu0 %v3480
        %v3482 = vpop.xlane.xlu0 %3481
        %v3483 = vsel %vm884, %v3479, -inf
        %3484 = vmax.xlane.f32.xlu0 %v3483
        %v3485 = vpop.xlane.xlu0 %3484
        %v3486 = vsub.f32 %v3478, %v3482
        %v3487 = vsub.f32 %v3479, %v3485
        %v3488 = vmul.f32 %v3486, 1.442695
        %v3489 = vpow.pop %v3488
        %v3490 = vmul.f32 %v3487, 1.442695
        %v3491 = vpow.pop %v3490
        %v3492 = vsel %vm884, %v3489, 0.0
        %3493 = vadd.xlane.f32.xlu0 %v3492
        %v3494 = vpop.xlane.xlu0 %3493
        %v3495 = vsel %vm884, %v3491, 0.0
        %3496 = vadd.xlane.f32.xlu0 %v3495
        %v3497 = vpop.xlane.xlu0 %3496
        %v3498 = vrcp.pop %v3494
        %v3499 = vrcp.pop %v3497
        %v3500 = vmul.f32 %v3494, %v3498
        %v3501 = vmul.f32 %v3497, %v3499
        %v3502 = vsub.f32 2.0, %v3500
        %v3503 = vsub.f32 2.0, %v3501
        %v3504 = vmul.f32 %v3498, %v3502
        %v3505 = vmul.f32 %v3499, %v3503
        %v3506 = vmul.f32 %v3489, %v3504
        %v3507 = vmul.f32 %v3491, %v3505
        %3510 = vrot.lane.b32.xlu0 %v3152, 120
        %v3511 = vpop.permute.xlu0 %3510
        %3512 = vrot.lane.b32.xlu0 %v3157, 120
        %v3513 = vpop.permute.xlu0 %3512
        %v3517 = vsel %vm884, %v3506, 0
        %v3520 = vsel %vm884, %v3507, 0
        %3522 = vmatprep.subr.mxu0 0.0
        %3523 = vmatpush1.msra.mxu0 0.0
        %3524 = vmatprep.subr.mxu0 0.0
        %3525 = vmatpush1.msra.mxu0 0.0
        %3526 = vmatprep.subr.mxu0 0.0
        %3527 = vmatpush1.msra.mxu0 0.0
        %3528 = vmatprep.subr.mxu0 0.0
        %3529 = vmatpush1.msra.mxu0 0.0
        %3530 = vmatprep.subr.mxu0 0.0
        %3531 = vmatpush1.msra.mxu0 0.0
        %3532 = vmatprep.subr.mxu0 0.0
        %3533 = vmatpush1.msra.mxu0 0.0
        %3534 = vmatprep.subr.mxu0 0.0
        %3535 = vmatpush1.msra.mxu0 0.0
        %3536 = vmatprep.subr.mxu0 0.0
        %3537 = vmatpush1.msra.mxu0 0.0
        %3538 = vmatprep.subr.mxu0 0.0
        %3539 = vmatpush1.msra.mxu0 0.0
        %3540 = vmatprep.subr.mxu0 0.0
        %3541 = vmatpush1.msra.mxu0 0.0
        %3542 = vmatprep.subr.mxu0 0.0
        %3543 = vmatpush1.msra.mxu0 0.0
        %3544 = vmatprep.subr.mxu0 0.0
        %3545 = vmatpush1.msra.mxu0 0.0
        %3546 = vmatprep.subr.mxu0 0.0
        %3547 = vmatpush1.msra.mxu0 0.0
        %3548 = vmatprep.subr.mxu0 0.0
        %3549 = vmatpush1.msra.mxu0 0.0
        %3550 = vmatprep.subr.mxu0 0.0
        %3551 = vmatpush1.msra.mxu0 %v3513
        %3552 = vmatprep.subr.mxu0 0.0
        %3553 = vmatpush1.msra.mxu0 %v3511
        %3554 = vmatprep.subr.mxu0 0.0
        %3555 = vmatpush2.msra.mxu0 0.0
        %3556 = vmatprep.subr.mxu0 0.0
        %3557 = vmatpush2.msra.mxu0 0.0
        %3558 = vmatprep.subr.mxu0 0.0
        %3559 = vmatpush2.msra.mxu0 0.0
        %3560 = vmatprep.subr.mxu0 0.0
        %3561 = vmatpush2.msra.mxu0 0.0
        %3562 = vmatprep.subr.mxu0 0.0
        %3563 = vmatpush2.msra.mxu0 0.0
        %3564 = vmatprep.subr.mxu0 0.0
        %3565 = vmatpush2.msra.mxu0 0.0
        %3566 = vmatprep.subr.mxu0 0.0
        %3567 = vmatpush2.msra.mxu0 0.0
        %3568 = vmatprep.subr.mxu0 0.0
        %3569 = vmatpush2.msra.mxu0 0.0
        %3570 = vmatprep.subr.mxu0 0.0
        %3571 = vmatpush2.msra.mxu0 0.0
        %3572 = vmatprep.subr.mxu0 0.0
        %3573 = vmatpush2.msra.mxu0 0.0
        %3574 = vmatprep.subr.mxu0 0.0
        %3575 = vmatpush2.msra.mxu0 0.0
        %3576 = vmatprep.subr.mxu0 0.0
        %3577 = vmatpush2.msra.mxu0 0.0
        %3578 = vmatprep.subr.mxu0 0.0
        %3579 = vmatpush2.msra.mxu0 0.0
        %3580 = vmatprep.subr.mxu0 0.0
        %3581 = vmatpush2.msra.mxu0 0.0
        %3582 = vmatprep.subr.mxu0 0.0
        %3583 = vmatpush2.msra.mxu0 0.0
        %3584 = vmatprep.subr.mxu0 0.0
        %3585 = vmatpush2.msra.mxu0 0.0
        %3586 = vmatprep.mubr.f32.mxu0 0.0
        %3587 = vmatmul.mubr.f32.gmra.mxu0 %v3517
        %v3588 = vpop.f32.mrf.mxu0
        %v3589 = vadd.f32 0.0, %v3588
        %v3590 = vpop.f32.mrf.mxu0
        %3591 = vmatprep.mubr.f32.mxu0 0.0
        %3592 = vmatmul.mubr.f32.gmra.mxu0 %v3520
        %v3593 = vpop.f32.mrf.mxu0
        %v3594 = vadd.f32 0.0, %v3593
        %v3595 = vpop.f32.mrf.mxu0
        %3596 = vdwg.mxu0
        %3599 = vrot.lane.b32.xlu0 %v3589, 8
        %v3600 = vpop.permute.xlu0 %3599
        %3601 = vrot.lane.b32.xlu0 %v3594, 8
        %v3602 = vpop.permute.xlu0 %3601
        %3605 = vst.msk [vmem:[#allocation2] sm:$0xff] %vm1216, %v3600
        %3606 = vst.msk [vmem:[#allocation2 + $0x8] sm:$0xff] %vm1216, %v3602
        %3607 = vrot.lane.b32.xlu0 %v3063, 112
        %v3608 = vpop.permute.xlu0 %3607
        %3609 = vrot.lane.b32.xlu0 %v3069, 112
        %v3610 = vpop.permute.xlu0 %3609
        %3611 = vrot.lane.b32.xlu0 %v3065, 112
        %v3612 = vpop.permute.xlu0 %3611
        %3613 = vrot.lane.b32.xlu0 %v3071, 112
        %v3614 = vpop.permute.xlu0 %3613
        %v3615 = vsel %vm792, %v3608, 0
        %v3617 = vsel %vm792, %v3610, 0
        %v3619 = vsel %vm792, %v3612, 0
        %v3621 = vsel %vm792, %v3614, 0
        %3623 = vmatprep.subr.mxu0 0.0
        %3624 = vmatpush1.xpose.msra.mxu0 0.0
        %3625 = vmatprep.subr.mxu0 0.0
        %3626 = vmatpush1.xpose.msra.mxu0 0.0
        %3627 = vmatprep.subr.mxu0 0.0
        %3628 = vmatpush1.xpose.msra.mxu0 0.0
        %3629 = vmatprep.subr.mxu0 0.0
        %3630 = vmatpush1.xpose.msra.mxu0 0.0
        %3631 = vmatprep.subr.mxu0 0.0
        %3632 = vmatpush1.xpose.msra.mxu0 0.0
        %3633 = vmatprep.subr.mxu0 0.0
        %3634 = vmatpush1.xpose.msra.mxu0 0.0
        %3635 = vmatprep.subr.mxu0 0.0
        %3636 = vmatpush1.xpose.msra.mxu0 0.0
        %3637 = vmatprep.subr.mxu0 0.0
        %3638 = vmatpush1.xpose.msra.mxu0 0.0
        %3639 = vmatprep.subr.mxu0 0.0
        %3640 = vmatpush1.xpose.msra.mxu0 0.0
        %3641 = vmatprep.subr.mxu0 0.0
        %3642 = vmatpush1.xpose.msra.mxu0 0.0
        %3643 = vmatprep.subr.mxu0 0.0
        %3644 = vmatpush1.xpose.msra.mxu0 0.0
        %3645 = vmatprep.subr.mxu0 0.0
        %3646 = vmatpush1.xpose.msra.mxu0 0.0
        %3647 = vmatprep.subr.mxu0 0.0
        %3648 = vmatpush1.xpose.msra.mxu0 0.0
        %3649 = vmatprep.subr.mxu0 0.0
        %3650 = vmatpush1.xpose.msra.mxu0 0.0
        %3651 = vmatprep.subr.mxu0 0.0
        %3652 = vmatpush1.xpose.msra.mxu0 %v3621
        %3653 = vmatprep.subr.mxu0 0.0
        %3654 = vmatpush1.xpose.msra.mxu0 %v3619
        %3655 = vmatprep.subr.mxu0 0.0
        %3656 = vmatpush2.xpose.msra.mxu0 0.0
        %3657 = vmatprep.subr.mxu0 0.0
        %3658 = vmatpush2.xpose.msra.mxu0 0.0
        %3659 = vmatprep.subr.mxu0 0.0
        %3660 = vmatpush2.xpose.msra.mxu0 0.0
        %3661 = vmatprep.subr.mxu0 0.0
        %3662 = vmatpush2.xpose.msra.mxu0 0.0
        %3663 = vmatprep.subr.mxu0 0.0
        %3664 = vmatpush2.xpose.msra.mxu0 0.0
        %3665 = vmatprep.subr.mxu0 0.0
        %3666 = vmatpush2.xpose.msra.mxu0 0.0
        %3667 = vmatprep.subr.mxu0 0.0
        %3668 = vmatpush2.xpose.msra.mxu0 0.0
        %3669 = vmatprep.subr.mxu0 0.0
        %3670 = vmatpush2.xpose.msra.mxu0 0.0
        %3671 = vmatprep.subr.mxu0 0.0
        %3672 = vmatpush2.xpose.msra.mxu0 0.0
        %3673 = vmatprep.subr.mxu0 0.0
        %3674 = vmatpush2.xpose.msra.mxu0 0.0
        %3675 = vmatprep.subr.mxu0 0.0
        %3676 = vmatpush2.xpose.msra.mxu0 0.0
        %3677 = vmatprep.subr.mxu0 0.0
        %3678 = vmatpush2.xpose.msra.mxu0 0.0
        %3679 = vmatprep.subr.mxu0 0.0
        %3680 = vmatpush2.xpose.msra.mxu0 0.0
        %3681 = vmatprep.subr.mxu0 0.0
        %3682 = vmatpush2.xpose.msra.mxu0 0.0
        %3683 = vmatprep.subr.mxu0 0.0
        %3684 = vmatpush2.xpose.msra.mxu0 0.0
        %3685 = vmatprep.subr.mxu0 0.0
        %3686 = vmatpush2.xpose.msra.mxu0 0.0
        %3687 = vmatprep.mubr.f32.mxu0 0.0
        %3688 = vmatmul.mubr.f32.gmra.mxu0 %v3615
        %v3689 = vpop.f32.mrf.mxu0
        %v3690 = vadd.f32 0.0, %v3689
        %v3691 = vpop.f32.mrf.mxu0
        %3692 = vmatprep.mubr.f32.mxu0 0.0
        %3693 = vmatmul.mubr.f32.gmra.mxu0 %v3617
        %v3694 = vpop.f32.mrf.mxu0
        %v3695 = vadd.f32 0.0, %v3694
        %v3696 = vpop.f32.mrf.mxu0
        %3697 = vdwg.mxu0
        %v3698 = vsub.f32 %v3690, %v3181
        %v3699 = vsub.f32 %v3695, %v3182
        %v3700 = vmul.f32 %v3698, 0.35355338
        %v3701 = vmul.f32 %v3699, 0.35355338
        %v3702 = vsel %vm884, %v3700, -inf
        %3703 = vmax.xlane.f32.xlu0 %v3702
        %v3704 = vpop.xlane.xlu0 %3703
        %v3705 = vsel %vm884, %v3701, -inf
        %3706 = vmax.xlane.f32.xlu0 %v3705
        %v3707 = vpop.xlane.xlu0 %3706
        %v3708 = vsub.f32 %v3700, %v3704
        %v3709 = vsub.f32 %v3701, %v3707
        %v3710 = vmul.f32 %v3708, 1.442695
        %v3711 = vpow.pop %v3710
        %v3712 = vmul.f32 %v3709, 1.442695
        %v3713 = vpow.pop %v3712
        %v3714 = vsel %vm884, %v3711, 0.0
        %3715 = vadd.xlane.f32.xlu0 %v3714
        %v3716 = vpop.xlane.xlu0 %3715
        %v3717 = vsel %vm884, %v3713, 0.0
        %3718 = vadd.xlane.f32.xlu0 %v3717
        %v3719 = vpop.xlane.xlu0 %3718
        %v3720 = vrcp.pop %v3716
        %v3721 = vrcp.pop %v3719
        %v3722 = vmul.f32 %v3716, %v3720
        %v3723 = vmul.f32 %v3719, %v3721
        %v3724 = vsub.f32 2.0, %v3722
        %v3725 = vsub.f32 2.0, %v3723
        %v3726 = vmul.f32 %v3720, %v3724
        %v3727 = vmul.f32 %v3721, %v3725
        %v3728 = vmul.f32 %v3711, %v3726
        %v3729 = vmul.f32 %v3713, %v3727
        %3730 = vrot.lane.b32.xlu0 %v3152, 112
        %v3731 = vpop.permute.xlu0 %3730
        %3732 = vrot.lane.b32.xlu0 %v3157, 112
        %v3733 = vpop.permute.xlu0 %3732
        %v3737 = vsel %vm884, %v3728, 0
        %v3740 = vsel %vm884, %v3729, 0
        %3742 = vmatprep.subr.mxu0 0.0
        %3743 = vmatpush1.msra.mxu0 0.0
        %3744 = vmatprep.subr.mxu0 0.0
        %3745 = vmatpush1.msra.mxu0 0.0
        %3746 = vmatprep.subr.mxu0 0.0
        %3747 = vmatpush1.msra.mxu0 0.0
        %3748 = vmatprep.subr.mxu0 0.0
        %3749 = vmatpush1.msra.mxu0 0.0
        %3750 = vmatprep.subr.mxu0 0.0
        %3751 = vmatpush1.msra.mxu0 0.0
        %3752 = vmatprep.subr.mxu0 0.0
        %3753 = vmatpush1.msra.mxu0 0.0
        %3754 = vmatprep.subr.mxu0 0.0
        %3755 = vmatpush1.msra.mxu0 0.0
        %3756 = vmatprep.subr.mxu0 0.0
        %3757 = vmatpush1.msra.mxu0 0.0
        %3758 = vmatprep.subr.mxu0 0.0
        %3759 = vmatpush1.msra.mxu0 0.0
        %3760 = vmatprep.subr.mxu0 0.0
        %3761 = vmatpush1.msra.mxu0 0.0
        %3762 = vmatprep.subr.mxu0 0.0
        %3763 = vmatpush1.msra.mxu0 0.0
        %3764 = vmatprep.subr.mxu0 0.0
        %3765 = vmatpush1.msra.mxu0 0.0
        %3766 = vmatprep.subr.mxu0 0.0
        %3767 = vmatpush1.msra.mxu0 0.0
        %3768 = vmatprep.subr.mxu0 0.0
        %3769 = vmatpush1.msra.mxu0 0.0
        %3770 = vmatprep.subr.mxu0 0.0
        %3771 = vmatpush1.msra.mxu0 %v3733
        %3772 = vmatprep.subr.mxu0 0.0
        %3773 = vmatpush1.msra.mxu0 %v3731
        %3774 = vmatprep.subr.mxu0 0.0
        %3775 = vmatpush2.msra.mxu0 0.0
        %3776 = vmatprep.subr.mxu0 0.0
        %3777 = vmatpush2.msra.mxu0 0.0
        %3778 = vmatprep.subr.mxu0 0.0
        %3779 = vmatpush2.msra.mxu0 0.0
        %3780 = vmatprep.subr.mxu0 0.0
        %3781 = vmatpush2.msra.mxu0 0.0
        %3782 = vmatprep.subr.mxu0 0.0
        %3783 = vmatpush2.msra.mxu0 0.0
        %3784 = vmatprep.subr.mxu0 0.0
        %3785 = vmatpush2.msra.mxu0 0.0
        %3786 = vmatprep.subr.mxu0 0.0
        %3787 = vmatpush2.msra.mxu0 0.0
        %3788 = vmatprep.subr.mxu0 0.0
        %3789 = vmatpush2.msra.mxu0 0.0
        %3790 = vmatprep.subr.mxu0 0.0
        %3791 = vmatpush2.msra.mxu0 0.0
        %3792 = vmatprep.subr.mxu0 0.0
        %3793 = vmatpush2.msra.mxu0 0.0
        %3794 = vmatprep.subr.mxu0 0.0
        %3795 = vmatpush2.msra.mxu0 0.0
        %3796 = vmatprep.subr.mxu0 0.0
        %3797 = vmatpush2.msra.mxu0 0.0
        %3798 = vmatprep.subr.mxu0 0.0
        %3799 = vmatpush2.msra.mxu0 0.0
        %3800 = vmatprep.subr.mxu0 0.0
        %3801 = vmatpush2.msra.mxu0 0.0
        %3802 = vmatprep.subr.mxu0 0.0
        %3803 = vmatpush2.msra.mxu0 0.0
        %3804 = vmatprep.subr.mxu0 0.0
        %3805 = vmatpush2.msra.mxu0 0.0
        %3806 = vmatprep.mubr.f32.mxu0 0.0
        %3807 = vmatmul.mubr.f32.gmra.mxu0 %v3737
        %v3808 = vpop.f32.mrf.mxu0
        %v3809 = vadd.f32 0.0, %v3808
        %v3810 = vpop.f32.mrf.mxu0
        %3811 = vmatprep.mubr.f32.mxu0 0.0
        %3812 = vmatmul.mubr.f32.gmra.mxu0 %v3740
        %v3813 = vpop.f32.mrf.mxu0
        %v3814 = vadd.f32 0.0, %v3813
        %v3815 = vpop.f32.mrf.mxu0
        %3816 = vdwg.mxu0
        %3819 = vrot.lane.b32.xlu0 %v3809, 16
        %v3820 = vpop.permute.xlu0 %3819
        %3821 = vrot.lane.b32.xlu0 %v3814, 16
        %v3822 = vpop.permute.xlu0 %3821
        %3825 = vst.msk [vmem:[#allocation2] sm:$0xff] %vm1437, %v3820
        %3826 = vst.msk [vmem:[#allocation2 + $0x8] sm:$0xff] %vm1437, %v3822
        %3827 = vrot.lane.b32.xlu0 %v3063, 104
        %v3828 = vpop.permute.xlu0 %3827
        %3829 = vrot.lane.b32.xlu0 %v3069, 104
        %v3830 = vpop.permute.xlu0 %3829
        %3831 = vrot.lane.b32.xlu0 %v3065, 104
        %v3832 = vpop.permute.xlu0 %3831
        %3833 = vrot.lane.b32.xlu0 %v3071, 104
        %v3834 = vpop.permute.xlu0 %3833
        %v3835 = vsel %vm792, %v3828, 0
        %v3837 = vsel %vm792, %v3830, 0
        %v3839 = vsel %vm792, %v3832, 0
        %v3841 = vsel %vm792, %v3834, 0
        %3843 = vmatprep.subr.mxu0 0.0
        %3844 = vmatpush1.xpose.msra.mxu0 0.0
        %3845 = vmatprep.subr.mxu0 0.0
        %3846 = vmatpush1.xpose.msra.mxu0 0.0
        %3847 = vmatprep.subr.mxu0 0.0
        %3848 = vmatpush1.xpose.msra.mxu0 0.0
        %3849 = vmatprep.subr.mxu0 0.0
        %3850 = vmatpush1.xpose.msra.mxu0 0.0
        %3851 = vmatprep.subr.mxu0 0.0
        %3852 = vmatpush1.xpose.msra.mxu0 0.0
        %3853 = vmatprep.subr.mxu0 0.0
        %3854 = vmatpush1.xpose.msra.mxu0 0.0
        %3855 = vmatprep.subr.mxu0 0.0
        %3856 = vmatpush1.xpose.msra.mxu0 0.0
        %3857 = vmatprep.subr.mxu0 0.0
        %3858 = vmatpush1.xpose.msra.mxu0 0.0
        %3859 = vmatprep.subr.mxu0 0.0
        %3860 = vmatpush1.xpose.msra.mxu0 0.0
        %3861 = vmatprep.subr.mxu0 0.0
        %3862 = vmatpush1.xpose.msra.mxu0 0.0
        %3863 = vmatprep.subr.mxu0 0.0
        %3864 = vmatpush1.xpose.msra.mxu0 0.0
        %3865 = vmatprep.subr.mxu0 0.0
        %3866 = vmatpush1.xpose.msra.mxu0 0.0
        %3867 = vmatprep.subr.mxu0 0.0
        %3868 = vmatpush1.xpose.msra.mxu0 0.0
        %3869 = vmatprep.subr.mxu0 0.0
        %3870 = vmatpush1.xpose.msra.mxu0 0.0
        %3871 = vmatprep.subr.mxu0 0.0
        %3872 = vmatpush1.xpose.msra.mxu0 %v3841
        %3873 = vmatprep.subr.mxu0 0.0
        %3874 = vmatpush1.xpose.msra.mxu0 %v3839
        %3875 = vmatprep.subr.mxu0 0.0
        %3876 = vmatpush2.xpose.msra.mxu0 0.0
        %3877 = vmatprep.subr.mxu0 0.0
        %3878 = vmatpush2.xpose.msra.mxu0 0.0
        %3879 = vmatprep.subr.mxu0 0.0
        %3880 = vmatpush2.xpose.msra.mxu0 0.0
        %3881 = vmatprep.subr.mxu0 0.0
        %3882 = vmatpush2.xpose.msra.mxu0 0.0
        %3883 = vmatprep.subr.mxu0 0.0
        %3884 = vmatpush2.xpose.msra.mxu0 0.0
        %3885 = vmatprep.subr.mxu0 0.0
        %3886 = vmatpush2.xpose.msra.mxu0 0.0
        %3887 = vmatprep.subr.mxu0 0.0
        %3888 = vmatpush2.xpose.msra.mxu0 0.0
        %3889 = vmatprep.subr.mxu0 0.0
        %3890 = vmatpush2.xpose.msra.mxu0 0.0
        %3891 = vmatprep.subr.mxu0 0.0
        %3892 = vmatpush2.xpose.msra.mxu0 0.0
        %3893 = vmatprep.subr.mxu0 0.0
        %3894 = vmatpush2.xpose.msra.mxu0 0.0
        %3895 = vmatprep.subr.mxu0 0.0
        %3896 = vmatpush2.xpose.msra.mxu0 0.0
        %3897 = vmatprep.subr.mxu0 0.0
        %3898 = vmatpush2.xpose.msra.mxu0 0.0
        %3899 = vmatprep.subr.mxu0 0.0
        %3900 = vmatpush2.xpose.msra.mxu0 0.0
        %3901 = vmatprep.subr.mxu0 0.0
        %3902 = vmatpush2.xpose.msra.mxu0 0.0
        %3903 = vmatprep.subr.mxu0 0.0
        %3904 = vmatpush2.xpose.msra.mxu0 0.0
        %3905 = vmatprep.subr.mxu0 0.0
        %3906 = vmatpush2.xpose.msra.mxu0 0.0
        %3907 = vmatprep.mubr.f32.mxu0 0.0
        %3908 = vmatmul.mubr.f32.gmra.mxu0 %v3835
        %v3909 = vpop.f32.mrf.mxu0
        %v3910 = vadd.f32 0.0, %v3909
        %v3911 = vpop.f32.mrf.mxu0
        %3912 = vmatprep.mubr.f32.mxu0 0.0
        %3913 = vmatmul.mubr.f32.gmra.mxu0 %v3837
        %v3914 = vpop.f32.mrf.mxu0
        %v3915 = vadd.f32 0.0, %v3914
        %v3916 = vpop.f32.mrf.mxu0
        %3917 = vdwg.mxu0
        %v3918 = vsub.f32 %v3910, %v3181
        %v3919 = vsub.f32 %v3915, %v3182
        %v3920 = vmul.f32 %v3918, 0.35355338
        %v3921 = vmul.f32 %v3919, 0.35355338
        %v3922 = vsel %vm884, %v3920, -inf
        %3923 = vmax.xlane.f32.xlu0 %v3922
        %v3924 = vpop.xlane.xlu0 %3923
        %v3925 = vsel %vm884, %v3921, -inf
        %3926 = vmax.xlane.f32.xlu0 %v3925
        %v3927 = vpop.xlane.xlu0 %3926
        %v3928 = vsub.f32 %v3920, %v3924
        %v3929 = vsub.f32 %v3921, %v3927
        %v3930 = vmul.f32 %v3928, 1.442695
        %v3931 = vpow.pop %v3930
        %v3932 = vmul.f32 %v3929, 1.442695
        %v3933 = vpow.pop %v3932
        %v3934 = vsel %vm884, %v3931, 0.0
        %3935 = vadd.xlane.f32.xlu0 %v3934
        %v3936 = vpop.xlane.xlu0 %3935
        %v3937 = vsel %vm884, %v3933, 0.0
        %3938 = vadd.xlane.f32.xlu0 %v3937
        %v3939 = vpop.xlane.xlu0 %3938
        %v3940 = vrcp.pop %v3936
        %v3941 = vrcp.pop %v3939
        %v3942 = vmul.f32 %v3936, %v3940
        %v3943 = vmul.f32 %v3939, %v3941
        %v3944 = vsub.f32 2.0, %v3942
        %v3945 = vsub.f32 2.0, %v3943
        %v3946 = vmul.f32 %v3940, %v3944
        %v3947 = vmul.f32 %v3941, %v3945
        %v3948 = vmul.f32 %v3931, %v3946
        %v3949 = vmul.f32 %v3933, %v3947
        %3950 = vrot.lane.b32.xlu0 %v3152, 104
        %v3951 = vpop.permute.xlu0 %3950
        %3952 = vrot.lane.b32.xlu0 %v3157, 104
        %v3953 = vpop.permute.xlu0 %3952
        %v3957 = vsel %vm884, %v3948, 0
        %v3960 = vsel %vm884, %v3949, 0
        %3962 = vmatprep.subr.mxu0 0.0
        %3963 = vmatpush1.msra.mxu0 0.0
        %3964 = vmatprep.subr.mxu0 0.0
        %3965 = vmatpush1.msra.mxu0 0.0
        %3966 = vmatprep.subr.mxu0 0.0
        %3967 = vmatpush1.msra.mxu0 0.0
        %3968 = vmatprep.subr.mxu0 0.0
        %3969 = vmatpush1.msra.mxu0 0.0
        %3970 = vmatprep.subr.mxu0 0.0
        %3971 = vmatpush1.msra.mxu0 0.0
        %3972 = vmatprep.subr.mxu0 0.0
        %3973 = vmatpush1.msra.mxu0 0.0
        %3974 = vmatprep.subr.mxu0 0.0
        %3975 = vmatpush1.msra.mxu0 0.0
        %3976 = vmatprep.subr.mxu0 0.0
        %3977 = vmatpush1.msra.mxu0 0.0
        %3978 = vmatprep.subr.mxu0 0.0
        %3979 = vmatpush1.msra.mxu0 0.0
        %3980 = vmatprep.subr.mxu0 0.0
        %3981 = vmatpush1.msra.mxu0 0.0
        %3982 = vmatprep.subr.mxu0 0.0
        %3983 = vmatpush1.msra.mxu0 0.0
        %3984 = vmatprep.subr.mxu0 0.0
        %3985 = vmatpush1.msra.mxu0 0.0
        %3986 = vmatprep.subr.mxu0 0.0
        %3987 = vmatpush1.msra.mxu0 0.0
        %3988 = vmatprep.subr.mxu0 0.0
        %3989 = vmatpush1.msra.mxu0 0.0
        %3990 = vmatprep.subr.mxu0 0.0
        %3991 = vmatpush1.msra.mxu0 %v3953
        %3992 = vmatprep.subr.mxu0 0.0
        %3993 = vmatpush1.msra.mxu0 %v3951
        %3994 = vmatprep.subr.mxu0 0.0
        %3995 = vmatpush2.msra.mxu0 0.0
        %3996 = vmatprep.subr.mxu0 0.0
        %3997 = vmatpush2.msra.mxu0 0.0
        %3998 = vmatprep.subr.mxu0 0.0
        %3999 = vmatpush2.msra.mxu0 0.0
        %4000 = vmatprep.subr.mxu0 0.0
        %4001 = vmatpush2.msra.mxu0 0.0
        %4002 = vmatprep.subr.mxu0 0.0
        %4003 = vmatpush2.msra.mxu0 0.0
        %4004 = vmatprep.subr.mxu0 0.0
        %4005 = vmatpush2.msra.mxu0 0.0
        %4006 = vmatprep.subr.mxu0 0.0
        %4007 = vmatpush2.msra.mxu0 0.0
        %4008 = vmatprep.subr.mxu0 0.0
        %4009 = vmatpush2.msra.mxu0 0.0
        %4010 = vmatprep.subr.mxu0 0.0
        %4011 = vmatpush2.msra.mxu0 0.0
        %4012 = vmatprep.subr.mxu0 0.0
        %4013 = vmatpush2.msra.mxu0 0.0
        %4014 = vmatprep.subr.mxu0 0.0
        %4015 = vmatpush2.msra.mxu0 0.0
        %4016 = vmatprep.subr.mxu0 0.0
        %4017 = vmatpush2.msra.mxu0 0.0
        %4018 = vmatprep.subr.mxu0 0.0
        %4019 = vmatpush2.msra.mxu0 0.0
        %4020 = vmatprep.subr.mxu0 0.0
        %4021 = vmatpush2.msra.mxu0 0.0
        %4022 = vmatprep.subr.mxu0 0.0
        %4023 = vmatpush2.msra.mxu0 0.0
        %4024 = vmatprep.subr.mxu0 0.0
        %4025 = vmatpush2.msra.mxu0 0.0
        %4026 = vmatprep.mubr.f32.mxu0 0.0
        %4027 = vmatmul.mubr.f32.gmra.mxu0 %v3957
        %v4028 = vpop.f32.mrf.mxu0
        %v4029 = vadd.f32 0.0, %v4028
        %v4030 = vpop.f32.mrf.mxu0
        %4031 = vmatprep.mubr.f32.mxu0 0.0
        %4032 = vmatmul.mubr.f32.gmra.mxu0 %v3960
        %v4033 = vpop.f32.mrf.mxu0
        %v4034 = vadd.f32 0.0, %v4033
        %v4035 = vpop.f32.mrf.mxu0
        %4036 = vdwg.mxu0
        %4039 = vrot.lane.b32.xlu0 %v4029, 24
        %v4040 = vpop.permute.xlu0 %4039
        %4041 = vrot.lane.b32.xlu0 %v4034, 24
        %v4042 = vpop.permute.xlu0 %4041
        %4045 = vst.msk [vmem:[#allocation2] sm:$0xff] %vm1658, %v4040
        %4046 = vst.msk [vmem:[#allocation2 + $0x8] sm:$0xff] %vm1658, %v4042
        %v4047 = vld [vmem:[%s1661] sm:$0x1]
        %v4049 = vlaneseq
        %v4050 = vshrl.u32 %v4049, 7
        %v4051 = vsub.s32 0, %v4050
        %v4052 = vrot.slane %v4047, %v4051
        %v4054 = vmul.f32 %v1666, %v4052
        %v4055 = vmul.f32 %v1671, %v4052
        %v4056 = vsub.f32 1.0, %v4054
        %v4057 = vsub.f32 1.0, %v4055
        %v4058 = vmul.f32 %v4056, 100000.0
        %v4059 = vmul.f32 %v4057, 100000.0
        %v4061 = vsel %vm792, %v3075, 0
        %v4064 = vsel %vm792, %v3081, 0
        %v4067 = vsel %vm792, %v3077, 0
        %v4070 = vsel %vm792, %v3083, 0
        %4072 = vmatprep.subr.mxu0 0.0
        %4073 = vmatpush1.xpose.msra.mxu0 0.0
        %4074 = vmatprep.subr.mxu0 0.0
        %4075 = vmatpush1.xpose.msra.mxu0 0.0
        %4076 = vmatprep.subr.mxu0 0.0
        %4077 = vmatpush1.xpose.msra.mxu0 0.0
        %4078 = vmatprep.subr.mxu0 0.0
        %4079 = vmatpush1.xpose.msra.mxu0 0.0
        %4080 = vmatprep.subr.mxu0 0.0
        %4081 = vmatpush1.xpose.msra.mxu0 0.0
        %4082 = vmatprep.subr.mxu0 0.0
        %4083 = vmatpush1.xpose.msra.mxu0 0.0
        %4084 = vmatprep.subr.mxu0 0.0
        %4085 = vmatpush1.xpose.msra.mxu0 0.0
        %4086 = vmatprep.subr.mxu0 0.0
        %4087 = vmatpush1.xpose.msra.mxu0 0.0
        %4088 = vmatprep.subr.mxu0 0.0
        %4089 = vmatpush1.xpose.msra.mxu0 0.0
        %4090 = vmatprep.subr.mxu0 0.0
        %4091 = vmatpush1.xpose.msra.mxu0 0.0
        %4092 = vmatprep.subr.mxu0 0.0
        %4093 = vmatpush1.xpose.msra.mxu0 0.0
        %4094 = vmatprep.subr.mxu0 0.0
        %4095 = vmatpush1.xpose.msra.mxu0 0.0
        %4096 = vmatprep.subr.mxu0 0.0
        %4097 = vmatpush1.xpose.msra.mxu0 0.0
        %4098 = vmatprep.subr.mxu0 0.0
        %4099 = vmatpush1.xpose.msra.mxu0 0.0
        %4100 = vmatprep.subr.mxu0 0.0
        %4101 = vmatpush1.xpose.msra.mxu0 %v4070
        %4102 = vmatprep.subr.mxu0 0.0
        %4103 = vmatpush1.xpose.msra.mxu0 %v4067
        %4104 = vmatprep.subr.mxu0 0.0
        %4105 = vmatpush2.xpose.msra.mxu0 0.0
        %4106 = vmatprep.subr.mxu0 0.0
        %4107 = vmatpush2.xpose.msra.mxu0 0.0
        %4108 = vmatprep.subr.mxu0 0.0
        %4109 = vmatpush2.xpose.msra.mxu0 0.0
        %4110 = vmatprep.subr.mxu0 0.0
        %4111 = vmatpush2.xpose.msra.mxu0 0.0
        %4112 = vmatprep.subr.mxu0 0.0
        %4113 = vmatpush2.xpose.msra.mxu0 0.0
        %4114 = vmatprep.subr.mxu0 0.0
        %4115 = vmatpush2.xpose.msra.mxu0 0.0
        %4116 = vmatprep.subr.mxu0 0.0
        %4117 = vmatpush2.xpose.msra.mxu0 0.0
        %4118 = vmatprep.subr.mxu0 0.0
        %4119 = vmatpush2.xpose.msra.mxu0 0.0
        %4120 = vmatprep.subr.mxu0 0.0
        %4121 = vmatpush2.xpose.msra.mxu0 0.0
        %4122 = vmatprep.subr.mxu0 0.0
        %4123 = vmatpush2.xpose.msra.mxu0 0.0
        %4124 = vmatprep.subr.mxu0 0.0
        %4125 = vmatpush2.xpose.msra.mxu0 0.0
        %4126 = vmatprep.subr.mxu0 0.0
        %4127 = vmatpush2.xpose.msra.mxu0 0.0
        %4128 = vmatprep.subr.mxu0 0.0
        %4129 = vmatpush2.xpose.msra.mxu0 0.0
        %4130 = vmatprep.subr.mxu0 0.0
        %4131 = vmatpush2.xpose.msra.mxu0 0.0
        %4132 = vmatprep.subr.mxu0 0.0
        %4133 = vmatpush2.xpose.msra.mxu0 0.0
        %4134 = vmatprep.subr.mxu0 0.0
        %4135 = vmatpush2.xpose.msra.mxu0 0.0
        %4136 = vmatprep.mubr.f32.mxu0 0.0
        %4137 = vmatmul.mubr.f32.gmra.mxu0 %v4061
        %v4138 = vpop.f32.mrf.mxu0
        %v4139 = vadd.f32 0.0, %v4138
        %v4140 = vpop.f32.mrf.mxu0
        %4141 = vmatprep.mubr.f32.mxu0 0.0
        %4142 = vmatmul.mubr.f32.gmra.mxu0 %v4064
        %v4143 = vpop.f32.mrf.mxu0
        %v4144 = vadd.f32 0.0, %v4143
        %v4145 = vpop.f32.mrf.mxu0
        %4146 = vdwg.mxu0
        %v4147 = vsub.f32 %v4139, %v4058
        %v4148 = vsub.f32 %v4144, %v4059
        %v4149 = vmul.f32 %v4147, 0.35355338
        %v4150 = vmul.f32 %v4148, 0.35355338
        %v4151 = vsel %vm884, %v4149, -inf
        %4152 = vmax.xlane.f32.xlu0 %v4151
        %v4153 = vpop.xlane.xlu0 %4152
        %v4154 = vsel %vm884, %v4150, -inf
        %4155 = vmax.xlane.f32.xlu0 %v4154
        %v4156 = vpop.xlane.xlu0 %4155
        %v4157 = vsub.f32 %v4149, %v4153
        %v4158 = vsub.f32 %v4150, %v4156
        %v4159 = vmul.f32 %v4157, 1.442695
        %v4160 = vpow.pop %v4159
        %v4161 = vmul.f32 %v4158, 1.442695
        %v4162 = vpow.pop %v4161
        %v4163 = vsel %vm884, %v4160, 0.0
        %4164 = vadd.xlane.f32.xlu0 %v4163
        %v4165 = vpop.xlane.xlu0 %4164
        %v4166 = vsel %vm884, %v4162, 0.0
        %4167 = vadd.xlane.f32.xlu0 %v4166
        %v4168 = vpop.xlane.xlu0 %4167
        %v4169 = vrcp.pop %v4165
        %v4170 = vrcp.pop %v4168
        %v4171 = vmul.f32 %v4165, %v4169
        %v4172 = vmul.f32 %v4168, %v4170
        %v4173 = vsub.f32 2.0, %v4171
        %v4174 = vsub.f32 2.0, %v4172
        %v4175 = vmul.f32 %v4169, %v4173
        %v4176 = vmul.f32 %v4170, %v4174
        %v4177 = vmul.f32 %v4160, %v4175
        %v4178 = vmul.f32 %v4162, %v4176
        %v4180 = vsel %vm884, %v4177, 0
        %v4183 = vsel %vm884, %v4178, 0
        %4185 = vmatprep.subr.mxu0 0.0
        %4186 = vmatpush1.msra.mxu0 0.0
        %4187 = vmatprep.subr.mxu0 0.0
        %4188 = vmatpush1.msra.mxu0 0.0
        %4189 = vmatprep.subr.mxu0 0.0
        %4190 = vmatpush1.msra.mxu0 0.0
        %4191 = vmatprep.subr.mxu0 0.0
        %4192 = vmatpush1.msra.mxu0 0.0
        %4193 = vmatprep.subr.mxu0 0.0
        %4194 = vmatpush1.msra.mxu0 0.0
        %4195 = vmatprep.subr.mxu0 0.0
        %4196 = vmatpush1.msra.mxu0 0.0
        %4197 = vmatprep.subr.mxu0 0.0
        %4198 = vmatpush1.msra.mxu0 0.0
        %4199 = vmatprep.subr.mxu0 0.0
        %4200 = vmatpush1.msra.mxu0 0.0
        %4201 = vmatprep.subr.mxu0 0.0
        %4202 = vmatpush1.msra.mxu0 0.0
        %4203 = vmatprep.subr.mxu0 0.0
        %4204 = vmatpush1.msra.mxu0 0.0
        %4205 = vmatprep.subr.mxu0 0.0
        %4206 = vmatpush1.msra.mxu0 0.0
        %4207 = vmatprep.subr.mxu0 0.0
        %4208 = vmatpush1.msra.mxu0 0.0
        %4209 = vmatprep.subr.mxu0 0.0
        %4210 = vmatpush1.msra.mxu0 0.0
        %4211 = vmatprep.subr.mxu0 0.0
        %4212 = vmatpush1.msra.mxu0 0.0
        %4213 = vmatprep.subr.mxu0 0.0
        %4214 = vmatpush1.msra.mxu0 %v3167
        %4215 = vmatprep.subr.mxu0 0.0
        %4216 = vmatpush1.msra.mxu0 %v3162
        %4217 = vmatprep.subr.mxu0 0.0
        %4218 = vmatpush2.msra.mxu0 0.0
        %4219 = vmatprep.subr.mxu0 0.0
        %4220 = vmatpush2.msra.mxu0 0.0
        %4221 = vmatprep.subr.mxu0 0.0
        %4222 = vmatpush2.msra.mxu0 0.0
        %4223 = vmatprep.subr.mxu0 0.0
        %4224 = vmatpush2.msra.mxu0 0.0
        %4225 = vmatprep.subr.mxu0 0.0
        %4226 = vmatpush2.msra.mxu0 0.0
        %4227 = vmatprep.subr.mxu0 0.0
        %4228 = vmatpush2.msra.mxu0 0.0
        %4229 = vmatprep.subr.mxu0 0.0
        %4230 = vmatpush2.msra.mxu0 0.0
        %4231 = vmatprep.subr.mxu0 0.0
        %4232 = vmatpush2.msra.mxu0 0.0
        %4233 = vmatprep.subr.mxu0 0.0
        %4234 = vmatpush2.msra.mxu0 0.0
        %4235 = vmatprep.subr.mxu0 0.0
        %4236 = vmatpush2.msra.mxu0 0.0
        %4237 = vmatprep.subr.mxu0 0.0
        %4238 = vmatpush2.msra.mxu0 0.0
        %4239 = vmatprep.subr.mxu0 0.0
        %4240 = vmatpush2.msra.mxu0 0.0
        %4241 = vmatprep.subr.mxu0 0.0
        %4242 = vmatpush2.msra.mxu0 0.0
        %4243 = vmatprep.subr.mxu0 0.0
        %4244 = vmatpush2.msra.mxu0 0.0
        %4245 = vmatprep.subr.mxu0 0.0
        %4246 = vmatpush2.msra.mxu0 0.0
        %4247 = vmatprep.subr.mxu0 0.0
        %4248 = vmatpush2.msra.mxu0 0.0
        %4249 = vmatprep.mubr.f32.mxu0 0.0
        %4250 = vmatmul.mubr.f32.gmra.mxu0 %v4180
        %v4251 = vpop.f32.mrf.mxu0
        %v4252 = vadd.f32 0.0, %v4251
        %v4253 = vpop.f32.mrf.mxu0
        %4254 = vmatprep.mubr.f32.mxu0 0.0
        %4255 = vmatmul.mubr.f32.gmra.mxu0 %v4183
        %v4256 = vpop.f32.mrf.mxu0
        %v4257 = vadd.f32 0.0, %v4256
        %v4258 = vpop.f32.mrf.mxu0
        %4259 = vdwg.mxu0
        %4260 = vst.msk [vmem:[#allocation2 + $0x10] sm:$0xff] %vm792, %v4252
        %4261 = vst.msk [vmem:[#allocation2 + $0x18] sm:$0xff] %vm792, %v4257
        %4262 = vrot.lane.b32.xlu0 %v3075, 120
        %v4263 = vpop.permute.xlu0 %4262
        %4264 = vrot.lane.b32.xlu0 %v3081, 120
        %v4265 = vpop.permute.xlu0 %4264
        %4266 = vrot.lane.b32.xlu0 %v3077, 120
        %v4267 = vpop.permute.xlu0 %4266
        %4268 = vrot.lane.b32.xlu0 %v3083, 120
        %v4269 = vpop.permute.xlu0 %4268
        %v4270 = vsel %vm792, %v4263, 0
        %v4272 = vsel %vm792, %v4265, 0
        %v4274 = vsel %vm792, %v4267, 0
        %v4276 = vsel %vm792, %v4269, 0
        %4278 = vmatprep.subr.mxu0 0.0
        %4279 = vmatpush1.xpose.msra.mxu0 0.0
        %4280 = vmatprep.subr.mxu0 0.0
        %4281 = vmatpush1.xpose.msra.mxu0 0.0
        %4282 = vmatprep.subr.mxu0 0.0
        %4283 = vmatpush1.xpose.msra.mxu0 0.0
        %4284 = vmatprep.subr.mxu0 0.0
        %4285 = vmatpush1.xpose.msra.mxu0 0.0
        %4286 = vmatprep.subr.mxu0 0.0
        %4287 = vmatpush1.xpose.msra.mxu0 0.0
        %4288 = vmatprep.subr.mxu0 0.0
        %4289 = vmatpush1.xpose.msra.mxu0 0.0
        %4290 = vmatprep.subr.mxu0 0.0
        %4291 = vmatpush1.xpose.msra.mxu0 0.0
        %4292 = vmatprep.subr.mxu0 0.0
        %4293 = vmatpush1.xpose.msra.mxu0 0.0
        %4294 = vmatprep.subr.mxu0 0.0
        %4295 = vmatpush1.xpose.msra.mxu0 0.0
        %4296 = vmatprep.subr.mxu0 0.0
        %4297 = vmatpush1.xpose.msra.mxu0 0.0
        %4298 = vmatprep.subr.mxu0 0.0
        %4299 = vmatpush1.xpose.msra.mxu0 0.0
        %4300 = vmatprep.subr.mxu0 0.0
        %4301 = vmatpush1.xpose.msra.mxu0 0.0
        %4302 = vmatprep.subr.mxu0 0.0
        %4303 = vmatpush1.xpose.msra.mxu0 0.0
        %4304 = vmatprep.subr.mxu0 0.0
        %4305 = vmatpush1.xpose.msra.mxu0 0.0
        %4306 = vmatprep.subr.mxu0 0.0
        %4307 = vmatpush1.xpose.msra.mxu0 %v4276
        %4308 = vmatprep.subr.mxu0 0.0
        %4309 = vmatpush1.xpose.msra.mxu0 %v4274
        %4310 = vmatprep.subr.mxu0 0.0
        %4311 = vmatpush2.xpose.msra.mxu0 0.0
        %4312 = vmatprep.subr.mxu0 0.0
        %4313 = vmatpush2.xpose.msra.mxu0 0.0
        %4314 = vmatprep.subr.mxu0 0.0
        %4315 = vmatpush2.xpose.msra.mxu0 0.0
        %4316 = vmatprep.subr.mxu0 0.0
        %4317 = vmatpush2.xpose.msra.mxu0 0.0
        %4318 = vmatprep.subr.mxu0 0.0
        %4319 = vmatpush2.xpose.msra.mxu0 0.0
        %4320 = vmatprep.subr.mxu0 0.0
        %4321 = vmatpush2.xpose.msra.mxu0 0.0
        %4322 = vmatprep.subr.mxu0 0.0
        %4323 = vmatpush2.xpose.msra.mxu0 0.0
        %4324 = vmatprep.subr.mxu0 0.0
        %4325 = vmatpush2.xpose.msra.mxu0 0.0
        %4326 = vmatprep.subr.mxu0 0.0
        %4327 = vmatpush2.xpose.msra.mxu0 0.0
        %4328 = vmatprep.subr.mxu0 0.0
        %4329 = vmatpush2.xpose.msra.mxu0 0.0
        %4330 = vmatprep.subr.mxu0 0.0
        %4331 = vmatpush2.xpose.msra.mxu0 0.0
        %4332 = vmatprep.subr.mxu0 0.0
        %4333 = vmatpush2.xpose.msra.mxu0 0.0
        %4334 = vmatprep.subr.mxu0 0.0
        %4335 = vmatpush2.xpose.msra.mxu0 0.0
        %4336 = vmatprep.subr.mxu0 0.0
        %4337 = vmatpush2.xpose.msra.mxu0 0.0
        %4338 = vmatprep.subr.mxu0 0.0
        %4339 = vmatpush2.xpose.msra.mxu0 0.0
        %4340 = vmatprep.subr.mxu0 0.0
        %4341 = vmatpush2.xpose.msra.mxu0 0.0
        %4342 = vmatprep.mubr.f32.mxu0 0.0
        %4343 = vmatmul.mubr.f32.gmra.mxu0 %v4270
        %v4344 = vpop.f32.mrf.mxu0
        %v4345 = vadd.f32 0.0, %v4344
        %v4346 = vpop.f32.mrf.mxu0
        %4347 = vmatprep.mubr.f32.mxu0 0.0
        %4348 = vmatmul.mubr.f32.gmra.mxu0 %v4272
        %v4349 = vpop.f32.mrf.mxu0
        %v4350 = vadd.f32 0.0, %v4349
        %v4351 = vpop.f32.mrf.mxu0
        %4352 = vdwg.mxu0
        %v4353 = vsub.f32 %v4345, %v4058
        %v4354 = vsub.f32 %v4350, %v4059
        %v4355 = vmul.f32 %v4353, 0.35355338
        %v4356 = vmul.f32 %v4354, 0.35355338
        %v4357 = vsel %vm884, %v4355, -inf
        %4358 = vmax.xlane.f32.xlu0 %v4357
        %v4359 = vpop.xlane.xlu0 %4358
        %v4360 = vsel %vm884, %v4356, -inf
        %4361 = vmax.xlane.f32.xlu0 %v4360
        %v4362 = vpop.xlane.xlu0 %4361
        %v4363 = vsub.f32 %v4355, %v4359
        %v4364 = vsub.f32 %v4356, %v4362
        %v4365 = vmul.f32 %v4363, 1.442695
        %v4366 = vpow.pop %v4365
        %v4367 = vmul.f32 %v4364, 1.442695
        %v4368 = vpow.pop %v4367
        %v4369 = vsel %vm884, %v4366, 0.0
        %4370 = vadd.xlane.f32.xlu0 %v4369
        %v4371 = vpop.xlane.xlu0 %4370
        %v4372 = vsel %vm884, %v4368, 0.0
        %4373 = vadd.xlane.f32.xlu0 %v4372
        %v4374 = vpop.xlane.xlu0 %4373
        %v4375 = vrcp.pop %v4371
        %v4376 = vrcp.pop %v4374
        %v4377 = vmul.f32 %v4371, %v4375
        %v4378 = vmul.f32 %v4374, %v4376
        %v4379 = vsub.f32 2.0, %v4377
        %v4380 = vsub.f32 2.0, %v4378
        %v4381 = vmul.f32 %v4375, %v4379
        %v4382 = vmul.f32 %v4376, %v4380
        %v4383 = vmul.f32 %v4366, %v4381
        %v4384 = vmul.f32 %v4368, %v4382
        %4387 = vrot.lane.b32.xlu0 %v3162, 120
        %v4388 = vpop.permute.xlu0 %4387
        %4389 = vrot.lane.b32.xlu0 %v3167, 120
        %v4390 = vpop.permute.xlu0 %4389
        %v4394 = vsel %vm884, %v4383, 0
        %v4397 = vsel %vm884, %v4384, 0
        %4399 = vmatprep.subr.mxu0 0.0
        %4400 = vmatpush1.msra.mxu0 0.0
        %4401 = vmatprep.subr.mxu0 0.0
        %4402 = vmatpush1.msra.mxu0 0.0
        %4403 = vmatprep.subr.mxu0 0.0
        %4404 = vmatpush1.msra.mxu0 0.0
        %4405 = vmatprep.subr.mxu0 0.0
        %4406 = vmatpush1.msra.mxu0 0.0
        %4407 = vmatprep.subr.mxu0 0.0
        %4408 = vmatpush1.msra.mxu0 0.0
        %4409 = vmatprep.subr.mxu0 0.0
        %4410 = vmatpush1.msra.mxu0 0.0
        %4411 = vmatprep.subr.mxu0 0.0
        %4412 = vmatpush1.msra.mxu0 0.0
        %4413 = vmatprep.subr.mxu0 0.0
        %4414 = vmatpush1.msra.mxu0 0.0
        %4415 = vmatprep.subr.mxu0 0.0
        %4416 = vmatpush1.msra.mxu0 0.0
        %4417 = vmatprep.subr.mxu0 0.0
        %4418 = vmatpush1.msra.mxu0 0.0
        %4419 = vmatprep.subr.mxu0 0.0
        %4420 = vmatpush1.msra.mxu0 0.0
        %4421 = vmatprep.subr.mxu0 0.0
        %4422 = vmatpush1.msra.mxu0 0.0
        %4423 = vmatprep.subr.mxu0 0.0
        %4424 = vmatpush1.msra.mxu0 0.0
        %4425 = vmatprep.subr.mxu0 0.0
        %4426 = vmatpush1.msra.mxu0 0.0
        %4427 = vmatprep.subr.mxu0 0.0
        %4428 = vmatpush1.msra.mxu0 %v4390
        %4429 = vmatprep.subr.mxu0 0.0
        %4430 = vmatpush1.msra.mxu0 %v4388
        %4431 = vmatprep.subr.mxu0 0.0
        %4432 = vmatpush2.msra.mxu0 0.0
        %4433 = vmatprep.subr.mxu0 0.0
        %4434 = vmatpush2.msra.mxu0 0.0
        %4435 = vmatprep.subr.mxu0 0.0
        %4436 = vmatpush2.msra.mxu0 0.0
        %4437 = vmatprep.subr.mxu0 0.0
        %4438 = vmatpush2.msra.mxu0 0.0
        %4439 = vmatprep.subr.mxu0 0.0
        %4440 = vmatpush2.msra.mxu0 0.0
        %4441 = vmatprep.subr.mxu0 0.0
        %4442 = vmatpush2.msra.mxu0 0.0
        %4443 = vmatprep.subr.mxu0 0.0
        %4444 = vmatpush2.msra.mxu0 0.0
        %4445 = vmatprep.subr.mxu0 0.0
        %4446 = vmatpush2.msra.mxu0 0.0
        %4447 = vmatprep.subr.mxu0 0.0
        %4448 = vmatpush2.msra.mxu0 0.0
        %4449 = vmatprep.subr.mxu0 0.0
        %4450 = vmatpush2.msra.mxu0 0.0
        %4451 = vmatprep.subr.mxu0 0.0
        %4452 = vmatpush2.msra.mxu0 0.0
        %4453 = vmatprep.subr.mxu0 0.0
        %4454 = vmatpush2.msra.mxu0 0.0
        %4455 = vmatprep.subr.mxu0 0.0
        %4456 = vmatpush2.msra.mxu0 0.0
        %4457 = vmatprep.subr.mxu0 0.0
        %4458 = vmatpush2.msra.mxu0 0.0
        %4459 = vmatprep.subr.mxu0 0.0
        %4460 = vmatpush2.msra.mxu0 0.0
        %4461 = vmatprep.subr.mxu0 0.0
        %4462 = vmatpush2.msra.mxu0 0.0
        %4463 = vmatprep.mubr.f32.mxu0 0.0
        %4464 = vmatmul.mubr.f32.gmra.mxu0 %v4394
        %v4465 = vpop.f32.mrf.mxu0
        %v4466 = vadd.f32 0.0, %v4465
        %v4467 = vpop.f32.mrf.mxu0
        %4468 = vmatprep.mubr.f32.mxu0 0.0
        %4469 = vmatmul.mubr.f32.gmra.mxu0 %v4397
        %v4470 = vpop.f32.mrf.mxu0
        %v4471 = vadd.f32 0.0, %v4470
        %v4472 = vpop.f32.mrf.mxu0
        %4473 = vdwg.mxu0
        %4476 = vrot.lane.b32.xlu0 %v4466, 8
        %v4477 = vpop.permute.xlu0 %4476
        %4478 = vrot.lane.b32.xlu0 %v4471, 8
        %v4479 = vpop.permute.xlu0 %4478
        %4482 = vst.msk [vmem:[#allocation2 + $0x10] sm:$0xff] %vm1216, %v4477
        %4483 = vst.msk [vmem:[#allocation2 + $0x18] sm:$0xff] %vm1216, %v4479
        %4484 = vrot.lane.b32.xlu0 %v3075, 112
        %v4485 = vpop.permute.xlu0 %4484
        %4486 = vrot.lane.b32.xlu0 %v3081, 112
        %v4487 = vpop.permute.xlu0 %4486
        %4488 = vrot.lane.b32.xlu0 %v3077, 112
        %v4489 = vpop.permute.xlu0 %4488
        %4490 = vrot.lane.b32.xlu0 %v3083, 112
        %v4491 = vpop.permute.xlu0 %4490
        %v4492 = vsel %vm792, %v4485, 0
        %v4494 = vsel %vm792, %v4487, 0
        %v4496 = vsel %vm792, %v4489, 0
        %v4498 = vsel %vm792, %v4491, 0
        %4500 = vmatprep.subr.mxu0 0.0
        %4501 = vmatpush1.xpose.msra.mxu0 0.0
        %4502 = vmatprep.subr.mxu0 0.0
        %4503 = vmatpush1.xpose.msra.mxu0 0.0
        %4504 = vmatprep.subr.mxu0 0.0
        %4505 = vmatpush1.xpose.msra.mxu0 0.0
        %4506 = vmatprep.subr.mxu0 0.0
        %4507 = vmatpush1.xpose.msra.mxu0 0.0
        %4508 = vmatprep.subr.mxu0 0.0
        %4509 = vmatpush1.xpose.msra.mxu0 0.0
        %4510 = vmatprep.subr.mxu0 0.0
        %4511 = vmatpush1.xpose.msra.mxu0 0.0
        %4512 = vmatprep.subr.mxu0 0.0
        %4513 = vmatpush1.xpose.msra.mxu0 0.0
        %4514 = vmatprep.subr.mxu0 0.0
        %4515 = vmatpush1.xpose.msra.mxu0 0.0
        %4516 = vmatprep.subr.mxu0 0.0
        %4517 = vmatpush1.xpose.msra.mxu0 0.0
        %4518 = vmatprep.subr.mxu0 0.0
        %4519 = vmatpush1.xpose.msra.mxu0 0.0
        %4520 = vmatprep.subr.mxu0 0.0
        %4521 = vmatpush1.xpose.msra.mxu0 0.0
        %4522 = vmatprep.subr.mxu0 0.0
        %4523 = vmatpush1.xpose.msra.mxu0 0.0
        %4524 = vmatprep.subr.mxu0 0.0
        %4525 = vmatpush1.xpose.msra.mxu0 0.0
        %4526 = vmatprep.subr.mxu0 0.0
        %4527 = vmatpush1.xpose.msra.mxu0 0.0
        %4528 = vmatprep.subr.mxu0 0.0
        %4529 = vmatpush1.xpose.msra.mxu0 %v4498
        %4530 = vmatprep.subr.mxu0 0.0
        %4531 = vmatpush1.xpose.msra.mxu0 %v4496
        %4532 = vmatprep.subr.mxu0 0.0
        %4533 = vmatpush2.xpose.msra.mxu0 0.0
        %4534 = vmatprep.subr.mxu0 0.0
        %4535 = vmatpush2.xpose.msra.mxu0 0.0
        %4536 = vmatprep.subr.mxu0 0.0
        %4537 = vmatpush2.xpose.msra.mxu0 0.0
        %4538 = vmatprep.subr.mxu0 0.0
        %4539 = vmatpush2.xpose.msra.mxu0 0.0
        %4540 = vmatprep.subr.mxu0 0.0
        %4541 = vmatpush2.xpose.msra.mxu0 0.0
        %4542 = vmatprep.subr.mxu0 0.0
        %4543 = vmatpush2.xpose.msra.mxu0 0.0
        %4544 = vmatprep.subr.mxu0 0.0
        %4545 = vmatpush2.xpose.msra.mxu0 0.0
        %4546 = vmatprep.subr.mxu0 0.0
        %4547 = vmatpush2.xpose.msra.mxu0 0.0
        %4548 = vmatprep.subr.mxu0 0.0
        %4549 = vmatpush2.xpose.msra.mxu0 0.0
        %4550 = vmatprep.subr.mxu0 0.0
        %4551 = vmatpush2.xpose.msra.mxu0 0.0
        %4552 = vmatprep.subr.mxu0 0.0
        %4553 = vmatpush2.xpose.msra.mxu0 0.0
        %4554 = vmatprep.subr.mxu0 0.0
        %4555 = vmatpush2.xpose.msra.mxu0 0.0
        %4556 = vmatprep.subr.mxu0 0.0
        %4557 = vmatpush2.xpose.msra.mxu0 0.0
        %4558 = vmatprep.subr.mxu0 0.0
        %4559 = vmatpush2.xpose.msra.mxu0 0.0
        %4560 = vmatprep.subr.mxu0 0.0
        %4561 = vmatpush2.xpose.msra.mxu0 0.0
        %4562 = vmatprep.subr.mxu0 0.0
        %4563 = vmatpush2.xpose.msra.mxu0 0.0
        %4564 = vmatprep.mubr.f32.mxu0 0.0
        %4565 = vmatmul.mubr.f32.gmra.mxu0 %v4492
        %v4566 = vpop.f32.mrf.mxu0
        %v4567 = vadd.f32 0.0, %v4566
        %v4568 = vpop.f32.mrf.mxu0
        %4569 = vmatprep.mubr.f32.mxu0 0.0
        %4570 = vmatmul.mubr.f32.gmra.mxu0 %v4494
        %v4571 = vpop.f32.mrf.mxu0
        %v4572 = vadd.f32 0.0, %v4571
        %v4573 = vpop.f32.mrf.mxu0
        %4574 = vdwg.mxu0
        %v4575 = vsub.f32 %v4567, %v4058
        %v4576 = vsub.f32 %v4572, %v4059
        %v4577 = vmul.f32 %v4575, 0.35355338
        %v4578 = vmul.f32 %v4576, 0.35355338
        %v4579 = vsel %vm884, %v4577, -inf
        %4580 = vmax.xlane.f32.xlu0 %v4579
        %v4581 = vpop.xlane.xlu0 %4580
        %v4582 = vsel %vm884, %v4578, -inf
        %4583 = vmax.xlane.f32.xlu0 %v4582
        %v4584 = vpop.xlane.xlu0 %4583
        %v4585 = vsub.f32 %v4577, %v4581
        %v4586 = vsub.f32 %v4578, %v4584
        %v4587 = vmul.f32 %v4585, 1.442695
        %v4588 = vpow.pop %v4587
        %v4589 = vmul.f32 %v4586, 1.442695
        %v4590 = vpow.pop %v4589
        %v4591 = vsel %vm884, %v4588, 0.0
        %4592 = vadd.xlane.f32.xlu0 %v4591
        %v4593 = vpop.xlane.xlu0 %4592
        %v4594 = vsel %vm884, %v4590, 0.0
        %4595 = vadd.xlane.f32.xlu0 %v4594
        %v4596 = vpop.xlane.xlu0 %4595
        %v4597 = vrcp.pop %v4593
        %v4598 = vrcp.pop %v4596
        %v4599 = vmul.f32 %v4593, %v4597
        %v4600 = vmul.f32 %v4596, %v4598
        %v4601 = vsub.f32 2.0, %v4599
        %v4602 = vsub.f32 2.0, %v4600
        %v4603 = vmul.f32 %v4597, %v4601
        %v4604 = vmul.f32 %v4598, %v4602
        %v4605 = vmul.f32 %v4588, %v4603
        %v4606 = vmul.f32 %v4590, %v4604
        %4607 = vrot.lane.b32.xlu0 %v3162, 112
        %v4608 = vpop.permute.xlu0 %4607
        %4609 = vrot.lane.b32.xlu0 %v3167, 112
        %v4610 = vpop.permute.xlu0 %4609
        %v4614 = vsel %vm884, %v4605, 0
        %v4617 = vsel %vm884, %v4606, 0
        %4619 = vmatprep.subr.mxu0 0.0
        %4620 = vmatpush1.msra.mxu0 0.0
        %4621 = vmatprep.subr.mxu0 0.0
        %4622 = vmatpush1.msra.mxu0 0.0
        %4623 = vmatprep.subr.mxu0 0.0
        %4624 = vmatpush1.msra.mxu0 0.0
        %4625 = vmatprep.subr.mxu0 0.0
        %4626 = vmatpush1.msra.mxu0 0.0
        %4627 = vmatprep.subr.mxu0 0.0
        %4628 = vmatpush1.msra.mxu0 0.0
        %4629 = vmatprep.subr.mxu0 0.0
        %4630 = vmatpush1.msra.mxu0 0.0
        %4631 = vmatprep.subr.mxu0 0.0
        %4632 = vmatpush1.msra.mxu0 0.0
        %4633 = vmatprep.subr.mxu0 0.0
        %4634 = vmatpush1.msra.mxu0 0.0
        %4635 = vmatprep.subr.mxu0 0.0
        %4636 = vmatpush1.msra.mxu0 0.0
        %4637 = vmatprep.subr.mxu0 0.0
        %4638 = vmatpush1.msra.mxu0 0.0
        %4639 = vmatprep.subr.mxu0 0.0
        %4640 = vmatpush1.msra.mxu0 0.0
        %4641 = vmatprep.subr.mxu0 0.0
        %4642 = vmatpush1.msra.mxu0 0.0
        %4643 = vmatprep.subr.mxu0 0.0
        %4644 = vmatpush1.msra.mxu0 0.0
        %4645 = vmatprep.subr.mxu0 0.0
        %4646 = vmatpush1.msra.mxu0 0.0
        %4647 = vmatprep.subr.mxu0 0.0
        %4648 = vmatpush1.msra.mxu0 %v4610
        %4649 = vmatprep.subr.mxu0 0.0
        %4650 = vmatpush1.msra.mxu0 %v4608
        %4651 = vmatprep.subr.mxu0 0.0
        %4652 = vmatpush2.msra.mxu0 0.0
        %4653 = vmatprep.subr.mxu0 0.0
        %4654 = vmatpush2.msra.mxu0 0.0
        %4655 = vmatprep.subr.mxu0 0.0
        %4656 = vmatpush2.msra.mxu0 0.0
        %4657 = vmatprep.subr.mxu0 0.0
        %4658 = vmatpush2.msra.mxu0 0.0
        %4659 = vmatprep.subr.mxu0 0.0
        %4660 = vmatpush2.msra.mxu0 0.0
        %4661 = vmatprep.subr.mxu0 0.0
        %4662 = vmatpush2.msra.mxu0 0.0
        %4663 = vmatprep.subr.mxu0 0.0
        %4664 = vmatpush2.msra.mxu0 0.0
        %4665 = vmatprep.subr.mxu0 0.0
        %4666 = vmatpush2.msra.mxu0 0.0
        %4667 = vmatprep.subr.mxu0 0.0
        %4668 = vmatpush2.msra.mxu0 0.0
        %4669 = vmatprep.subr.mxu0 0.0
        %4670 = vmatpush2.msra.mxu0 0.0
        %4671 = vmatprep.subr.mxu0 0.0
        %4672 = vmatpush2.msra.mxu0 0.0
        %4673 = vmatprep.subr.mxu0 0.0
        %4674 = vmatpush2.msra.mxu0 0.0
        %4675 = vmatprep.subr.mxu0 0.0
        %4676 = vmatpush2.msra.mxu0 0.0
        %4677 = vmatprep.subr.mxu0 0.0
        %4678 = vmatpush2.msra.mxu0 0.0
        %4679 = vmatprep.subr.mxu0 0.0
        %4680 = vmatpush2.msra.mxu0 0.0
        %4681 = vmatprep.subr.mxu0 0.0
        %4682 = vmatpush2.msra.mxu0 0.0
        %4683 = vmatprep.mubr.f32.mxu0 0.0
        %4684 = vmatmul.mubr.f32.gmra.mxu0 %v4614
        %v4685 = vpop.f32.mrf.mxu0
        %v4686 = vadd.f32 0.0, %v4685
        %v4687 = vpop.f32.mrf.mxu0
        %4688 = vmatprep.mubr.f32.mxu0 0.0
        %4689 = vmatmul.mubr.f32.gmra.mxu0 %v4617
        %v4690 = vpop.f32.mrf.mxu0
        %v4691 = vadd.f32 0.0, %v4690
        %v4692 = vpop.f32.mrf.mxu0
        %4693 = vdwg.mxu0
        %4696 = vrot.lane.b32.xlu0 %v4686, 16
        %v4697 = vpop.permute.xlu0 %4696
        %4698 = vrot.lane.b32.xlu0 %v4691, 16
        %v4699 = vpop.permute.xlu0 %4698
        %4702 = vst.msk [vmem:[#allocation2 + $0x10] sm:$0xff] %vm1437, %v4697
        %4703 = vst.msk [vmem:[#allocation2 + $0x18] sm:$0xff] %vm1437, %v4699
        %4704 = vrot.lane.b32.xlu0 %v3075, 104
        %v4705 = vpop.permute.xlu0 %4704
        %4706 = vrot.lane.b32.xlu0 %v3081, 104
        %v4707 = vpop.permute.xlu0 %4706
        %4708 = vrot.lane.b32.xlu0 %v3077, 104
        %v4709 = vpop.permute.xlu0 %4708
        %4710 = vrot.lane.b32.xlu0 %v3083, 104
        %v4711 = vpop.permute.xlu0 %4710
        %v4712 = vsel %vm792, %v4705, 0
        %v4714 = vsel %vm792, %v4707, 0
        %v4716 = vsel %vm792, %v4709, 0
        %v4718 = vsel %vm792, %v4711, 0
        %4720 = vmatprep.subr.mxu0 0.0
        %4721 = vmatpush1.xpose.msra.mxu0 0.0
        %4722 = vmatprep.subr.mxu0 0.0
        %4723 = vmatpush1.xpose.msra.mxu0 0.0
        %4724 = vmatprep.subr.mxu0 0.0
        %4725 = vmatpush1.xpose.msra.mxu0 0.0
        %4726 = vmatprep.subr.mxu0 0.0
        %4727 = vmatpush1.xpose.msra.mxu0 0.0
        %4728 = vmatprep.subr.mxu0 0.0
        %4729 = vmatpush1.xpose.msra.mxu0 0.0
        %4730 = vmatprep.subr.mxu0 0.0
        %4731 = vmatpush1.xpose.msra.mxu0 0.0
        %4732 = vmatprep.subr.mxu0 0.0
        %4733 = vmatpush1.xpose.msra.mxu0 0.0
        %4734 = vmatprep.subr.mxu0 0.0
        %4735 = vmatpush1.xpose.msra.mxu0 0.0
        %4736 = vmatprep.subr.mxu0 0.0
        %4737 = vmatpush1.xpose.msra.mxu0 0.0
        %4738 = vmatprep.subr.mxu0 0.0
        %4739 = vmatpush1.xpose.msra.mxu0 0.0
        %4740 = vmatprep.subr.mxu0 0.0
        %4741 = vmatpush1.xpose.msra.mxu0 0.0
        %4742 = vmatprep.subr.mxu0 0.0
        %4743 = vmatpush1.xpose.msra.mxu0 0.0
        %4744 = vmatprep.subr.mxu0 0.0
        %4745 = vmatpush1.xpose.msra.mxu0 0.0
        %4746 = vmatprep.subr.mxu0 0.0
        %4747 = vmatpush1.xpose.msra.mxu0 0.0
        %4748 = vmatprep.subr.mxu0 0.0
        %4749 = vmatpush1.xpose.msra.mxu0 %v4718
        %4750 = vmatprep.subr.mxu0 0.0
        %4751 = vmatpush1.xpose.msra.mxu0 %v4716
        %4752 = vmatprep.subr.mxu0 0.0
        %4753 = vmatpush2.xpose.msra.mxu0 0.0
        %4754 = vmatprep.subr.mxu0 0.0
        %4755 = vmatpush2.xpose.msra.mxu0 0.0
        %4756 = vmatprep.subr.mxu0 0.0
        %4757 = vmatpush2.xpose.msra.mxu0 0.0
        %4758 = vmatprep.subr.mxu0 0.0
        %4759 = vmatpush2.xpose.msra.mxu0 0.0
        %4760 = vmatprep.subr.mxu0 0.0
        %4761 = vmatpush2.xpose.msra.mxu0 0.0
        %4762 = vmatprep.subr.mxu0 0.0
        %4763 = vmatpush2.xpose.msra.mxu0 0.0
        %4764 = vmatprep.subr.mxu0 0.0
        %4765 = vmatpush2.xpose.msra.mxu0 0.0
        %4766 = vmatprep.subr.mxu0 0.0
        %4767 = vmatpush2.xpose.msra.mxu0 0.0
        %4768 = vmatprep.subr.mxu0 0.0
        %4769 = vmatpush2.xpose.msra.mxu0 0.0
        %4770 = vmatprep.subr.mxu0 0.0
        %4771 = vmatpush2.xpose.msra.mxu0 0.0
        %4772 = vmatprep.subr.mxu0 0.0
        %4773 = vmatpush2.xpose.msra.mxu0 0.0
        %4774 = vmatprep.subr.mxu0 0.0
        %4775 = vmatpush2.xpose.msra.mxu0 0.0
        %4776 = vmatprep.subr.mxu0 0.0
        %4777 = vmatpush2.xpose.msra.mxu0 0.0
        %4778 = vmatprep.subr.mxu0 0.0
        %4779 = vmatpush2.xpose.msra.mxu0 0.0
        %4780 = vmatprep.subr.mxu0 0.0
        %4781 = vmatpush2.xpose.msra.mxu0 0.0
        %4782 = vmatprep.subr.mxu0 0.0
        %4783 = vmatpush2.xpose.msra.mxu0 0.0
        %4784 = vmatprep.mubr.f32.mxu0 0.0
        %4785 = vmatmul.mubr.f32.gmra.mxu0 %v4712
        %v4786 = vpop.f32.mrf.mxu0
        %v4787 = vadd.f32 0.0, %v4786
        %v4788 = vpop.f32.mrf.mxu0
        %4789 = vmatprep.mubr.f32.mxu0 0.0
        %4790 = vmatmul.mubr.f32.gmra.mxu0 %v4714
        %v4791 = vpop.f32.mrf.mxu0
        %v4792 = vadd.f32 0.0, %v4791
        %v4793 = vpop.f32.mrf.mxu0
        %4794 = vdwg.mxu0
        %v4795 = vsub.f32 %v4787, %v4058
        %v4796 = vsub.f32 %v4792, %v4059
        %v4797 = vmul.f32 %v4795, 0.35355338
        %v4798 = vmul.f32 %v4796, 0.35355338
        %v4799 = vsel %vm884, %v4797, -inf
        %4800 = vmax.xlane.f32.xlu0 %v4799
        %v4801 = vpop.xlane.xlu0 %4800
        %v4802 = vsel %vm884, %v4798, -inf
        %4803 = vmax.xlane.f32.xlu0 %v4802
        %v4804 = vpop.xlane.xlu0 %4803
        %v4805 = vsub.f32 %v4797, %v4801
        %v4806 = vsub.f32 %v4798, %v4804
        %v4807 = vmul.f32 %v4805, 1.442695
        %v4808 = vpow.pop %v4807
        %v4809 = vmul.f32 %v4806, 1.442695
        %v4810 = vpow.pop %v4809
        %v4811 = vsel %vm884, %v4808, 0.0
        %4812 = vadd.xlane.f32.xlu0 %v4811
        %v4813 = vpop.xlane.xlu0 %4812
        %v4814 = vsel %vm884, %v4810, 0.0
        %4815 = vadd.xlane.f32.xlu0 %v4814
        %v4816 = vpop.xlane.xlu0 %4815
        %v4817 = vrcp.pop %v4813
        %v4818 = vrcp.pop %v4816
        %v4819 = vmul.f32 %v4813, %v4817
        %v4820 = vmul.f32 %v4816, %v4818
        %v4821 = vsub.f32 2.0, %v4819
        %v4822 = vsub.f32 2.0, %v4820
        %v4823 = vmul.f32 %v4817, %v4821
        %v4824 = vmul.f32 %v4818, %v4822
        %v4825 = vmul.f32 %v4808, %v4823
        %v4826 = vmul.f32 %v4810, %v4824
        %4827 = vrot.lane.b32.xlu0 %v3162, 104
        %v4828 = vpop.permute.xlu0 %4827
        %4829 = vrot.lane.b32.xlu0 %v3167, 104
        %v4830 = vpop.permute.xlu0 %4829
        %v4834 = vsel %vm884, %v4825, 0
        %v4837 = vsel %vm884, %v4826, 0
        %4839 = vmatprep.subr.mxu0 0.0
        %4840 = vmatpush1.msra.mxu0 0.0
        %4841 = vmatprep.subr.mxu0 0.0
        %4842 = vmatpush1.msra.mxu0 0.0
        %4843 = vmatprep.subr.mxu0 0.0
        %4844 = vmatpush1.msra.mxu0 0.0
        %4845 = vmatprep.subr.mxu0 0.0
        %4846 = vmatpush1.msra.mxu0 0.0
        %4847 = vmatprep.subr.mxu0 0.0
        %4848 = vmatpush1.msra.mxu0 0.0
        %4849 = vmatprep.subr.mxu0 0.0
        %4850 = vmatpush1.msra.mxu0 0.0
        %4851 = vmatprep.subr.mxu0 0.0
        %4852 = vmatpush1.msra.mxu0 0.0
        %4853 = vmatprep.subr.mxu0 0.0
        %4854 = vmatpush1.msra.mxu0 0.0
        %4855 = vmatprep.subr.mxu0 0.0
        %4856 = vmatpush1.msra.mxu0 0.0
        %4857 = vmatprep.subr.mxu0 0.0
        %4858 = vmatpush1.msra.mxu0 0.0
        %4859 = vmatprep.subr.mxu0 0.0
        %4860 = vmatpush1.msra.mxu0 0.0
        %4861 = vmatprep.subr.mxu0 0.0
        %4862 = vmatpush1.msra.mxu0 0.0
        %4863 = vmatprep.subr.mxu0 0.0
        %4864 = vmatpush1.msra.mxu0 0.0
        %4865 = vmatprep.subr.mxu0 0.0
        %4866 = vmatpush1.msra.mxu0 0.0
        %4867 = vmatprep.subr.mxu0 0.0
        %4868 = vmatpush1.msra.mxu0 %v4830
        %4869 = vmatprep.subr.mxu0 0.0
        %4870 = vmatpush1.msra.mxu0 %v4828
        %4871 = vmatprep.subr.mxu0 0.0
        %4872 = vmatpush2.msra.mxu0 0.0
        %4873 = vmatprep.subr.mxu0 0.0
        %4874 = vmatpush2.msra.mxu0 0.0
        %4875 = vmatprep.subr.mxu0 0.0
        %4876 = vmatpush2.msra.mxu0 0.0
        %4877 = vmatprep.subr.mxu0 0.0
        %4878 = vmatpush2.msra.mxu0 0.0
        %4879 = vmatprep.subr.mxu0 0.0
        %4880 = vmatpush2.msra.mxu0 0.0
        %4881 = vmatprep.subr.mxu0 0.0
        %4882 = vmatpush2.msra.mxu0 0.0
        %4883 = vmatprep.subr.mxu0 0.0
        %4884 = vmatpush2.msra.mxu0 0.0
        %4885 = vmatprep.subr.mxu0 0.0
        %4886 = vmatpush2.msra.mxu0 0.0
        %4887 = vmatprep.subr.mxu0 0.0
        %4888 = vmatpush2.msra.mxu0 0.0
        %4889 = vmatprep.subr.mxu0 0.0
        %4890 = vmatpush2.msra.mxu0 0.0
        %4891 = vmatprep.subr.mxu0 0.0
        %4892 = vmatpush2.msra.mxu0 0.0
        %4893 = vmatprep.subr.mxu0 0.0
        %4894 = vmatpush2.msra.mxu0 0.0
        %4895 = vmatprep.subr.mxu0 0.0
        %4896 = vmatpush2.msra.mxu0 0.0
        %4897 = vmatprep.subr.mxu0 0.0
        %4898 = vmatpush2.msra.mxu0 0.0
        %4899 = vmatprep.subr.mxu0 0.0
        %4900 = vmatpush2.msra.mxu0 0.0
        %4901 = vmatprep.subr.mxu0 0.0
        %4902 = vmatpush2.msra.mxu0 0.0
        %4903 = vmatprep.mubr.f32.mxu0 0.0
        %4904 = vmatmul.mubr.f32.gmra.mxu0 %v4834
        %v4905 = vpop.f32.mrf.mxu0
        %v4906 = vadd.f32 0.0, %v4905
        %v4907 = vpop.f32.mrf.mxu0
        %4908 = vmatprep.mubr.f32.mxu0 0.0
        %4909 = vmatmul.mubr.f32.gmra.mxu0 %v4837
        %v4910 = vpop.f32.mrf.mxu0
        %v4911 = vadd.f32 0.0, %v4910
        %v4912 = vpop.f32.mrf.mxu0
        %4913 = vdwg.mxu0
        %4916 = vrot.lane.b32.xlu0 %v4906, 24
        %v4917 = vpop.permute.xlu0 %4916
        %4918 = vrot.lane.b32.xlu0 %v4911, 24
        %v4919 = vpop.permute.xlu0 %4918
        %4922 = vst.msk [vmem:[#allocation2 + $0x10] sm:$0xff] %vm1658, %v4917
        %4923 = vst.msk [vmem:[#allocation2 + $0x18] sm:$0xff] %vm1658, %v4919
        %v4924 = vld [vmem:[#allocation2] sm:$0xff]
        %v4925 = vld [vmem:[#allocation2 + $0x8] sm:$0xff]
        %v4926 = vld [vmem:[#allocation2 + $0x10] sm:$0xff]
        %v4927 = vld [vmem:[#allocation2 + $0x18] sm:$0xff]
        %v4928 = vmul.f32 %v4924, %v773
        %v4929 = vmul.f32 %v4925, %v778
        %v4930 = vmul.f32 %v4926, %v1666
        %v4931 = vmul.f32 %v4927, %v1671
        %v4932 = vadd.f32 %v4928, %v2925
        %v4933 = vadd.f32 %v4929, %v2926
        %v4934 = vadd.f32 %v4930, %v2927
        %v4935 = vadd.f32 %v4931, %v2928
        %s4936 = scalar_lea.vmem %s5, 1
        %v4937 = vld [vmem:[%s4936] sm:$0x1]
        %s4938 = scalar_lea.vmem %s6, 1
        %v4939 = vld [vmem:[%s4938] sm:$0x1]
        %4940 = vadd.xlane.f32.xlu0 %v4932
        %v4941 = vpop.xlane.xlu0 %4940
        %4942 = vadd.xlane.f32.xlu0 %v4933
        %v4943 = vpop.xlane.xlu0 %4942
        %4944 = vadd.xlane.f32.xlu0 %v4934
        %v4945 = vpop.xlane.xlu0 %4944
        %4946 = vadd.xlane.f32.xlu0 %v4935
        %v4947 = vpop.xlane.xlu0 %4946
        %v4948 = vmul.f32 %v4941, 0.03125
        %v4949 = vmul.f32 %v4943, 0.03125
        %v4950 = vmul.f32 %v4945, 0.03125
        %v4951 = vmul.f32 %v4947, 0.03125
        %v4952 = vsub.f32 %v4932, %v4948
        %v4953 = vsub.f32 %v4933, %v4949
        %v4954 = vsub.f32 %v4934, %v4950
        %v4955 = vsub.f32 %v4935, %v4951
        %v4956 = vmul.f32 %v4952, %v4952
        %v4957 = vmul.f32 %v4953, %v4953
        %v4958 = vmul.f32 %v4954, %v4954
        %v4959 = vmul.f32 %v4955, %v4955
        %v4960 = vmul.f32 %v4956, %v517
        %v4961 = vmul.f32 %v4957, %v517
        %v4962 = vmul.f32 %v4958, %v517
        %v4963 = vmul.f32 %v4959, %v517
        %4964 = vadd.xlane.f32.xlu0 %v4960
        %v4965 = vpop.xlane.xlu0 %4964
        %4966 = vadd.xlane.f32.xlu0 %v4961
        %v4967 = vpop.xlane.xlu0 %4966
        %4968 = vadd.xlane.f32.xlu0 %v4962
        %v4969 = vpop.xlane.xlu0 %4968
        %4970 = vadd.xlane.f32.xlu0 %v4963
        %v4971 = vpop.xlane.xlu0 %4970
        %v4972 = vmul.f32 %v4965, 0.03125
        %v4973 = vmul.f32 %v4967, 0.03125
        %v4974 = vmul.f32 %v4969, 0.03125
        %v4975 = vmul.f32 %v4971, 0.03125
        %v4976 = vadd.f32 %v4972, 1e-05
        %v4977 = vadd.f32 %v4973, 1e-05
        %v4978 = vadd.f32 %v4974, 1e-05
        %v4979 = vadd.f32 %v4975, 1e-05
        %v4980 = vrsqrt.pop %v4976
        %v4981 = vrsqrt.pop %v4977
        %v4982 = vrsqrt.pop %v4978
        %v4983 = vrsqrt.pop %v4979
        %v4984 = vmul.f32 %v4952, %v4980
        %v4985 = vmul.f32 %v4953, %v4981
        %v4986 = vmul.f32 %v4954, %v4982
        %v4987 = vmul.f32 %v4955, %v4983
        %v4989 = vlaneseq
        %v4990 = vshrl.u32 %v4989, 7
        %v4991 = vsub.s32 0, %v4990
        %v4992 = vrot.slane %v4937, %v4991
        %v4994 = vmul.f32 %v4984, %v4992
        %v4995 = vmul.f32 %v4985, %v4992
        %v4996 = vmul.f32 %v4986, %v4992
        %v4997 = vmul.f32 %v4987, %v4992
        %v4999 = vlaneseq
        %v5000 = vshrl.u32 %v4999, 7
        %v5001 = vsub.s32 0, %v5000
        %v5002 = vrot.slane %v4939, %v5001
        %v5004 = vadd.f32 %v4994, %v5002
        %v5005 = vadd.f32 %v4995, %v5002
        %v5006 = vadd.f32 %v4996, %v5002
        %v5007 = vadd.f32 %v4997, %v5002
        %s5008 = scalar_lea.vmem %s7, 128
        %v5009 = vld [vmem:[%s5008] sm:$0xff]
        %v5010 = vld [vmem:[%s5008 + $0x8] sm:$0xff]
        %v5011 = vld [vmem:[%s5008 + $0x10] sm:$0xff]
        %v5012 = vld [vmem:[%s5008 + $0x18] sm:$0xff]
        %v5013 = vld [vmem:[%s5008 + $0x20] sm:$0xff]
        %v5014 = vld [vmem:[%s5008 + $0x28] sm:$0xff]
        %v5015 = vld [vmem:[%s5008 + $0x30] sm:$0xff]
        %v5016 = vld [vmem:[%s5008 + $0x38] sm:$0xff]
        %v5017 = vld [vmem:[%s5008 + $0x40] sm:$0xff]
        %v5018 = vld [vmem:[%s5008 + $0x48] sm:$0xff]
        %v5019 = vld [vmem:[%s5008 + $0x50] sm:$0xff]
        %v5020 = vld [vmem:[%s5008 + $0x58] sm:$0xff]
        %v5021 = vld [vmem:[%s5008 + $0x60] sm:$0xff]
        %v5022 = vld [vmem:[%s5008 + $0x68] sm:$0xff]
        %v5023 = vld [vmem:[%s5008 + $0x70] sm:$0xff]
        %v5024 = vld [vmem:[%s5008 + $0x78] sm:$0xff]
        %s5025 = scalar_lea.vmem %s8, 1
        %v5026 = vld [vmem:[%s5025] sm:$0x1]
        %v5028 = vlaneseq
        %v5029 = vshrl.u32 %v5028, 7
        %v5030 = vsub.s32 0, %v5029
        %v5031 = vrot.slane %v5026, %v5030
        %5033 = vmatprep.subr.mxu0 0.0
        %5034 = vmatpush1.msra.mxu0 %v5024
        %5035 = vmatprep.subr.mxu0 0.0
        %5036 = vmatpush1.msra.mxu0 %v5023
        %5037 = vmatprep.subr.mxu0 0.0
        %5038 = vmatpush1.msra.mxu0 %v5022
        %5039 = vmatprep.subr.mxu0 0.0
        %5040 = vmatpush1.msra.mxu0 %v5021
        %5041 = vmatprep.subr.mxu0 0.0
        %5042 = vmatpush1.msra.mxu0 %v5020
        %5043 = vmatprep.subr.mxu0 0.0
        %5044 = vmatpush1.msra.mxu0 %v5019
        %5045 = vmatprep.subr.mxu0 0.0
        %5046 = vmatpush1.msra.mxu0 %v5018
        %5047 = vmatprep.subr.mxu0 0.0
        %5048 = vmatpush1.msra.mxu0 %v5017
        %5049 = vmatprep.subr.mxu0 0.0
        %5050 = vmatpush1.msra.mxu0 %v5016
        %5051 = vmatprep.subr.mxu0 0.0
        %5052 = vmatpush1.msra.mxu0 %v5015
        %5053 = vmatprep.subr.mxu0 0.0
        %5054 = vmatpush1.msra.mxu0 %v5014
        %5055 = vmatprep.subr.mxu0 0.0
        %5056 = vmatpush1.msra.mxu0 %v5013
        %5057 = vmatprep.subr.mxu0 0.0
        %5058 = vmatpush1.msra.mxu0 %v5012
        %5059 = vmatprep.subr.mxu0 0.0
        %5060 = vmatpush1.msra.mxu0 %v5011
        %5061 = vmatprep.subr.mxu0 0.0
        %5062 = vmatpush1.msra.mxu0 %v5010
        %5063 = vmatprep.subr.mxu0 0.0
        %5064 = vmatpush1.msra.mxu0 %v5009
        %5065 = vmatprep.subr.mxu0 0.0
        %5066 = vmatpush2.msra.mxu0 0.0
        %5067 = vmatprep.subr.mxu0 0.0
        %5068 = vmatpush2.msra.mxu0 0.0
        %5069 = vmatprep.subr.mxu0 0.0
        %5070 = vmatpush2.msra.mxu0 0.0
        %5071 = vmatprep.subr.mxu0 0.0
        %5072 = vmatpush2.msra.mxu0 0.0
        %5073 = vmatprep.subr.mxu0 0.0
        %5074 = vmatpush2.msra.mxu0 0.0
        %5075 = vmatprep.subr.mxu0 0.0
        %5076 = vmatpush2.msra.mxu0 0.0
        %5077 = vmatprep.subr.mxu0 0.0
        %5078 = vmatpush2.msra.mxu0 0.0
        %5079 = vmatprep.subr.mxu0 0.0
        %5080 = vmatpush2.msra.mxu0 0.0
        %5081 = vmatprep.subr.mxu0 0.0
        %5082 = vmatpush2.msra.mxu0 0.0
        %5083 = vmatprep.subr.mxu0 0.0
        %5084 = vmatpush2.msra.mxu0 0.0
        %5085 = vmatprep.subr.mxu0 0.0
        %5086 = vmatpush2.msra.mxu0 0.0
        %5087 = vmatprep.subr.mxu0 0.0
        %5088 = vmatpush2.msra.mxu0 0.0
        %5089 = vmatprep.subr.mxu0 0.0
        %5090 = vmatpush2.msra.mxu0 0.0
        %5091 = vmatprep.subr.mxu0 0.0
        %5092 = vmatpush2.msra.mxu0 0.0
        %5093 = vmatprep.subr.mxu0 0.0
        %5094 = vmatpush2.msra.mxu0 0.0
        %5095 = vmatprep.subr.mxu0 0.0
        %5096 = vmatpush2.msra.mxu0 0.0
        %5097 = vmatprep.mubr.f32.mxu0 0.0
        %5098 = vmatmul.mubr.f32.gmra.mxu0 %v5004
        %v5099 = vpop.f32.mrf.mxu0
        %v5100 = vadd.f32 %v5031, %v5099
        %v5101 = vpop.f32.mrf.mxu0
        %5102 = vmatprep.mubr.f32.mxu0 0.0
        %5103 = vmatmul.mubr.f32.gmra.mxu0 %v5005
        %v5104 = vpop.f32.mrf.mxu0
        %v5105 = vadd.f32 %v5031, %v5104
        %v5106 = vpop.f32.mrf.mxu0
        %5107 = vmatprep.mubr.f32.mxu0 0.0
        %5108 = vmatmul.mubr.f32.gmra.mxu0 %v5006
        %v5109 = vpop.f32.mrf.mxu0
        %v5110 = vadd.f32 %v5031, %v5109
        %v5111 = vpop.f32.mrf.mxu0
        %5112 = vmatprep.mubr.f32.mxu0 0.0
        %5113 = vmatmul.mubr.f32.gmra.mxu0 %v5007
        %v5114 = vpop.f32.mrf.mxu0
        %v5115 = vadd.f32 %v5031, %v5114
        %v5116 = vpop.f32.mrf.mxu0
        %5117 = vdwg.mxu0
        %v5118 = vmax.f32 %v5100, 0.0
        %v5119 = vmax.f32 %v5105, 0.0
        %v5120 = vmax.f32 %v5110, 0.0
        %v5121 = vmax.f32 %v5115, 0.0
        %s5122 = scalar_lea.vmem [#allocation6], 128
        %v5123 = vld [vmem:[%s5122] sm:$0xff]
        %v5124 = vld [vmem:[%s5122 + $0x8] sm:$0xff]
        %v5125 = vld [vmem:[%s5122 + $0x10] sm:$0xff]
        %v5126 = vld [vmem:[%s5122 + $0x18] sm:$0xff]
        %v5127 = vld [vmem:[%s5122 + $0x20] sm:$0xff]
        %v5128 = vld [vmem:[%s5122 + $0x28] sm:$0xff]
        %v5129 = vld [vmem:[%s5122 + $0x30] sm:$0xff]
        %v5130 = vld [vmem:[%s5122 + $0x38] sm:$0xff]
        %v5131 = vld [vmem:[%s5122 + $0x40] sm:$0xff]
        %v5132 = vld [vmem:[%s5122 + $0x48] sm:$0xff]
        %v5133 = vld [vmem:[%s5122 + $0x50] sm:$0xff]
        %v5134 = vld [vmem:[%s5122 + $0x58] sm:$0xff]
        %v5135 = vld [vmem:[%s5122 + $0x60] sm:$0xff]
        %v5136 = vld [vmem:[%s5122 + $0x68] sm:$0xff]
        %v5137 = vld [vmem:[%s5122 + $0x70] sm:$0xff]
        %v5138 = vld [vmem:[%s5122 + $0x78] sm:$0xff]
        %s5139 = scalar_lea.vmem %s10, 1
        %v5140 = vld [vmem:[%s5139] sm:$0x1]
        %v5142 = vlaneseq
        %v5143 = vshrl.u32 %v5142, 7
        %v5144 = vsub.s32 0, %v5143
        %v5145 = vrot.slane %v5140, %v5144
        %5147 = vmatprep.subr.mxu0 0.0
        %5148 = vmatpush1.msra.mxu0 %v5138
        %5149 = vmatprep.subr.mxu0 0.0
        %5150 = vmatpush1.msra.mxu0 %v5137
        %5151 = vmatprep.subr.mxu0 0.0
        %5152 = vmatpush1.msra.mxu0 %v5136
        %5153 = vmatprep.subr.mxu0 0.0
        %5154 = vmatpush1.msra.mxu0 %v5135
        %5155 = vmatprep.subr.mxu0 0.0
        %5156 = vmatpush1.msra.mxu0 %v5134
        %5157 = vmatprep.subr.mxu0 0.0
        %5158 = vmatpush1.msra.mxu0 %v5133
        %5159 = vmatprep.subr.mxu0 0.0
        %5160 = vmatpush1.msra.mxu0 %v5132
        %5161 = vmatprep.subr.mxu0 0.0
        %5162 = vmatpush1.msra.mxu0 %v5131
        %5163 = vmatprep.subr.mxu0 0.0
        %5164 = vmatpush1.msra.mxu0 %v5130
        %5165 = vmatprep.subr.mxu0 0.0
        %5166 = vmatpush1.msra.mxu0 %v5129
        %5167 = vmatprep.subr.mxu0 0.0
        %5168 = vmatpush1.msra.mxu0 %v5128
        %5169 = vmatprep.subr.mxu0 0.0
        %5170 = vmatpush1.msra.mxu0 %v5127
        %5171 = vmatprep.subr.mxu0 0.0
        %5172 = vmatpush1.msra.mxu0 %v5126
        %5173 = vmatprep.subr.mxu0 0.0
        %5174 = vmatpush1.msra.mxu0 %v5125
        %5175 = vmatprep.subr.mxu0 0.0
        %5176 = vmatpush1.msra.mxu0 %v5124
        %5177 = vmatprep.subr.mxu0 0.0
        %5178 = vmatpush1.msra.mxu0 %v5123
        %5179 = vmatprep.subr.mxu0 0.0
        %5180 = vmatpush2.msra.mxu0 0.0
        %5181 = vmatprep.subr.mxu0 0.0
        %5182 = vmatpush2.msra.mxu0 0.0
        %5183 = vmatprep.subr.mxu0 0.0
        %5184 = vmatpush2.msra.mxu0 0.0
        %5185 = vmatprep.subr.mxu0 0.0
        %5186 = vmatpush2.msra.mxu0 0.0
        %5187 = vmatprep.subr.mxu0 0.0
        %5188 = vmatpush2.msra.mxu0 0.0
        %5189 = vmatprep.subr.mxu0 0.0
        %5190 = vmatpush2.msra.mxu0 0.0
        %5191 = vmatprep.subr.mxu0 0.0
        %5192 = vmatpush2.msra.mxu0 0.0
        %5193 = vmatprep.subr.mxu0 0.0
        %5194 = vmatpush2.msra.mxu0 0.0
        %5195 = vmatprep.subr.mxu0 0.0
        %5196 = vmatpush2.msra.mxu0 0.0
        %5197 = vmatprep.subr.mxu0 0.0
        %5198 = vmatpush2.msra.mxu0 0.0
        %5199 = vmatprep.subr.mxu0 0.0
        %5200 = vmatpush2.msra.mxu0 0.0
        %5201 = vmatprep.subr.mxu0 0.0
        %5202 = vmatpush2.msra.mxu0 0.0
        %5203 = vmatprep.subr.mxu0 0.0
        %5204 = vmatpush2.msra.mxu0 0.0
        %5205 = vmatprep.subr.mxu0 0.0
        %5206 = vmatpush2.msra.mxu0 0.0
        %5207 = vmatprep.subr.mxu0 0.0
        %5208 = vmatpush2.msra.mxu0 0.0
        %5209 = vmatprep.subr.mxu0 0.0
        %5210 = vmatpush2.msra.mxu0 0.0
        %5211 = vmatprep.mubr.f32.mxu0 0.0
        %5212 = vmatmul.mubr.f32.gmra.mxu0 %v5118
        %v5213 = vpop.f32.mrf.mxu0
        %v5214 = vadd.f32 %v5145, %v5213
        %v5215 = vpop.f32.mrf.mxu0
        %5216 = vmatprep.mubr.f32.mxu0 0.0
        %5217 = vmatmul.mubr.f32.gmra.mxu0 %v5119
        %v5218 = vpop.f32.mrf.mxu0
        %v5219 = vadd.f32 %v5145, %v5218
        %v5220 = vpop.f32.mrf.mxu0
        %5221 = vmatprep.mubr.f32.mxu0 0.0
        %5222 = vmatmul.mubr.f32.gmra.mxu0 %v5120
        %v5223 = vpop.f32.mrf.mxu0
        %v5224 = vadd.f32 %v5145, %v5223
        %v5225 = vpop.f32.mrf.mxu0
        %5226 = vmatprep.mubr.f32.mxu0 0.0
        %5227 = vmatmul.mubr.f32.gmra.mxu0 %v5121
        %v5228 = vpop.f32.mrf.mxu0
        %v5229 = vadd.f32 %v5145, %v5228
        %v5230 = vpop.f32.mrf.mxu0
        %5231 = vdwg.mxu0
        %v5232 = vmul.f32 %v5214, %v773
        %v5233 = vmul.f32 %v5219, %v778
        %v5234 = vmul.f32 %v5224, %v1666
        %v5235 = vmul.f32 %v5229, %v1671
        %v5236 = vadd.f32 %v5232, %v5004
        %v5237 = vadd.f32 %v5233, %v5005
        %v5238 = vadd.f32 %v5234, %v5006
        %v5239 = vadd.f32 %v5235, %v5007
        %s5240 = scalar_lea.vmem %s11, 1
        %v5241 = vld [vmem:[%s5240] sm:$0x1]
        %s5242 = scalar_lea.vmem %s12, 1
        %v5243 = vld [vmem:[%s5242] sm:$0x1]
        %5244 = vadd.xlane.f32.xlu0 %v5236
        %v5245 = vpop.xlane.xlu0 %5244
        %5246 = vadd.xlane.f32.xlu0 %v5237
        %v5247 = vpop.xlane.xlu0 %5246
        %5248 = vadd.xlane.f32.xlu0 %v5238
        %v5249 = vpop.xlane.xlu0 %5248
        %5250 = vadd.xlane.f32.xlu0 %v5239
        %v5251 = vpop.xlane.xlu0 %5250
        %v5252 = vmul.f32 %v5245, 0.03125
        %v5253 = vmul.f32 %v5247, 0.03125
        %v5254 = vmul.f32 %v5249, 0.03125
        %v5255 = vmul.f32 %v5251, 0.03125
        %v5256 = vsub.f32 %v5236, %v5252
        %v5257 = vsub.f32 %v5237, %v5253
        %v5258 = vsub.f32 %v5238, %v5254
        %v5259 = vsub.f32 %v5239, %v5255
        %v5260 = vmul.f32 %v5256, %v5256
        %v5261 = vmul.f32 %v5257, %v5257
        %v5262 = vmul.f32 %v5258, %v5258
        %v5263 = vmul.f32 %v5259, %v5259
        %v5264 = vmul.f32 %v5260, %v517
        %v5265 = vmul.f32 %v5261, %v517
        %v5266 = vmul.f32 %v5262, %v517
        %v5267 = vmul.f32 %v5263, %v517
        %5268 = vadd.xlane.f32.xlu0 %v5264
        %v5269 = vpop.xlane.xlu0 %5268
        %5270 = vadd.xlane.f32.xlu0 %v5265
        %v5271 = vpop.xlane.xlu0 %5270
        %5272 = vadd.xlane.f32.xlu0 %v5266
        %v5273 = vpop.xlane.xlu0 %5272
        %5274 = vadd.xlane.f32.xlu0 %v5267
        %v5275 = vpop.xlane.xlu0 %5274
        %v5276 = vmul.f32 %v5269, 0.03125
        %v5277 = vmul.f32 %v5271, 0.03125
        %v5278 = vmul.f32 %v5273, 0.03125
        %v5279 = vmul.f32 %v5275, 0.03125
        %v5280 = vadd.f32 %v5276, 1e-05
        %v5281 = vadd.f32 %v5277, 1e-05
        %v5282 = vadd.f32 %v5278, 1e-05
        %v5283 = vadd.f32 %v5279, 1e-05
        %v5284 = vrsqrt.pop %v5280
        %v5285 = vrsqrt.pop %v5281
        %v5286 = vrsqrt.pop %v5282
        %v5287 = vrsqrt.pop %v5283
        %v5288 = vmul.f32 %v5256, %v5284
        %v5289 = vmul.f32 %v5257, %v5285
        %v5290 = vmul.f32 %v5258, %v5286
        %v5291 = vmul.f32 %v5259, %v5287
        %v5293 = vlaneseq
        %v5294 = vshrl.u32 %v5293, 7
        %v5295 = vsub.s32 0, %v5294
        %v5296 = vrot.slane %v5241, %v5295
        %v5298 = vmul.f32 %v5288, %v5296
        %v5299 = vmul.f32 %v5289, %v5296
        %v5300 = vmul.f32 %v5290, %v5296
        %v5301 = vmul.f32 %v5291, %v5296
        %v5303 = vlaneseq
        %v5304 = vshrl.u32 %v5303, 7
        %v5305 = vsub.s32 0, %v5304
        %v5306 = vrot.slane %v5243, %v5305
        %v5308 = vadd.f32 %v5298, %v5306
        %v5309 = vadd.f32 %v5299, %v5306
        %v5310 = vadd.f32 %v5300, %v5306
        %v5311 = vadd.f32 %v5301, %v5306
        %5312 = vst [vmem:[%s494] sm:$0xff] %v5308
        %5313 = vst [vmem:[%s494 + $0x8] sm:$0xff] %v5309
        %5314 = vst [vmem:[%s494 + $0x10] sm:$0xff] %v5310
        %5315 = vst [vmem:[%s494 + $0x18] sm:$0xff] %v5311
        %s5316 = sand.u32 %s325, 1
        %s5317 = scalar_lea.sflag [#allocation5], %s5316
        %s5318 = sand.u32 %s325, 1
        %s5319 = smul.addr %s5318, 32
        %s5320 = scalar_lea.vmem [#allocation8], %s5319
        // Predicated region
        $region81: #{encoder_forward.1} parent=71 // pred_check
          %p5321 = pneg %p335
        $region82: #{encoder_forward.1} parent=71 // pred_check_branch
          %5323 = sbr.rel (%p5321) target = $region84
        $region83: #{encoder_forward.1} parent=71 // pred_region
          %s5324 = smul.u32 4, %s29
          %s5326 = ssub.s32 512, 512
          %5327 = vsyncadd %s5317, %s5326
          %s5328 = smul.addr %s5324, 128
          %s5329 = scalar_lea.hbm %s13, %s5328
          %s5330 = sshll.u32 %s5320, 4
          %s5331 = int_to_ptr.vmem [resolvable:$true] %s5330
          %5336 = dma.vmem_to_hbm [thread:$0]  %s5331, 512, %s5329, %s5317, 128, 128, 8
        $region84: #{encoder_forward.1} parent=71 // pred_fallthru
          _
      $region72: #{encoder_forward.1} parent=5 // pred_fallthru
        _
      %p5337 = scmp.le.s32.totalorder 2, %s24
      // Predicated region
      $region85: #{encoder_forward.1} parent=5 // pred_check
        %p5338 = pneg %p5337
      $region86: #{encoder_forward.1} parent=5 // pred_check_branch
        %5340 = sbr.rel (%p5338) target = $region88
      $region87: #{encoder_forward.1} parent=5 // pred_region
        %s5341 = ssub.s32 %s24, 2
        // Predicated region
        $region89: #{encoder_forward.1} parent=87 // pred_check
          %p5342 = pneg %p341
        $region90: #{encoder_forward.1} parent=87 // pred_check_branch
          %5344 = sbr.rel (%p5342) target = $region92
        $region91: #{encoder_forward.1} parent=87 // pred_region
          %s5345 = sand.u32 %s326, 1
          %s5346 = scalar_lea.sflag [#allocation5], %s5345
          %s5347 = sand.u32 %s326, 1
          %s5348 = smul.addr %s5347, 32
          %s5349 = scalar_lea.vmem [#allocation8], %s5348
          %5350 = dma.done %s5346, 512
        $region92: #{encoder_forward.1} parent=87 // pred_fallthru
          _
      $region88: #{encoder_forward.1} parent=5 // pred_fallthru
        _
    $region6: #{encoder_forward.1} parent=1 // loop_footer
      %s28 = sadd.s32 1, %s24
    $region7: #{encoder_forward.1} parent=1 // loop_footer_branch
      %23 = sbr.rel target = $region3
    $region8: #{encoder_forward.1} parent=1 // loop_exit
      _
    %5351 = vsyncpa [#allocation4], 1
    %s5352 = scalar_lea.sflag [#allocation4], 1
    %5353 = vsyncpa %s5352, 1
    %5354 = vsyncpa [#allocation7], 1
    %5355 = vsyncpa [#allocation5], 1
    %s5356 = scalar_lea.sflag [#allocation5], 1
    %5357 = vsyncpa %s5356, 1

</llo_original>
